<compile_context>
chip_gen: v6e
topology: v6e:2x2x1
jax: 0.10.0
libtpu: 0.0.40
codegen_flags: <defaults>
</compile_context>

<pallas_src>
import functools
import math

import jax
import jax.numpy as jnp
from jax.experimental import pallas as pl
from jax.experimental.pallas import tpu as pltpu


# ---------------------------------------------------------------------------
# Fused encoder-decoder Pallas kernel
# ---------------------------------------------------------------------------

def _rnn_enc_dec_kernel(src_emb_ref, tgt_emb_ref, src_len_ref, tgt_len_ref,
                        enc_w_ih_ref, enc_w_hh_ref, enc_b_ref,
                        dec_w_ih_ref, dec_w_hh_ref, dec_b_ref,
                        out_w_ref, out_b_ref,
                        logits_ref,
                        x_scr, gates_scr,
                        *, hidden, num_layers, t_src, t_tgt, batch, unroll):
    H = hidden
    B = batch

    def run_layer(x_in, T, w_ih, w_hh, b, h0, c0, len_v):
        """One LSTM layer over T steps.

        x_in: [T, B, H] f32 value, w_ih/w_hh: bf16, b: f32 [1, 4H],
        h0/c0: f32 [B, H], len_v: int32 [B, 1].
        Layer outputs (zeroed past each sequence length) are written to x_scr[:T].
        Returns (h_T, c_T) in f32."""
        # (1) cuDNN-style hoist: the input projection + bias of the whole layer is
        #     ONE [T*B, H] @ [H, 4H] bf16 MXU matmul with f32 accumulation.
        x2d = x_in.reshape(T * B, H).astype(jnp.bfloat16)
        gates_pre = (jnp.dot(x2d, w_ih, preferred_element_type=jnp.float32) + b)
        gates_scr[pl.ds(0, T)] = gates_pre.reshape(T, B, 4 * H)

        # (2) Serial recurrence; only h @ W_hh sits on the critical path per step.
        def step(t, carry):
            h_prev, c_prev = carry                                   # f32 [B, H]
            g = gates_scr[t] + jnp.dot(h_prev.astype(jnp.bfloat16), w_hh,
                                       preferred_element_type=jnp.float32)
            i = jax.nn.sigmoid(g[:, 0 * H:1 * H])
            f = jax.nn.sigmoid(g[:, 1 * H:2 * H])
            gg = jnp.tanh(g[:, 2 * H:3 * H])
            o = jax.nn.sigmoid(g[:, 3 * H:4 * H])
            c_new = f * c_prev + i * gg
            h_new = o * jnp.tanh(c_new)
            # Packed-sequence semantics: freeze state / zero output past length.
            # Selects instead of arithmetic blends (fewer VALU ops on the serial path).
            valid = t < len_v                                        # [B, 1] bool
            c_u = jnp.where(valid, c_new, c_prev)
            h_u = jnp.where(valid, h_new, h_prev)
            x_scr[t] = jnp.where(valid, h_new, 0.0)
            return (h_u, c_u)

        return jax.lax.fori_loop(0, T, step, (h0, c0), unroll=unroll)

    zeros = jnp.zeros((B, H), jnp.float32)
    src_len_v = src_len_ref[...]                                     # [B, 1] int32
    tgt_len_v = tgt_len_ref[...]                                     # [B, 1] int32

    # ---- Encoder stack (h0 = c0 = 0). Final per-layer states stay in vregs. ----
    enc_states = []
    for l in range(num_layers):
        x_in = src_emb_ref[...] if l == 0 else x_scr[pl.ds(0, t_src)]
        enc_states.append(
            run_layer(x_in, t_src,
                      enc_w_ih_ref[l], enc_w_hh_ref[l], enc_b_ref[l],
                      zeros, zeros, src_len_v))

    # ---- Decoder stack, initialized from encoder final states. ----
    for l in range(num_layers):
        y_in = tgt_emb_ref[...] if l == 0 else x_scr[pl.ds(0, t_tgt)]
        h0, c0 = enc_states[l]
        run_layer(y_in, t_tgt,
                  dec_w_ih_ref[l], dec_w_hh_ref[l], dec_b_ref[l],
                  h0, c0, tgt_len_v)

    # ---- Output projection: one [Tt*B, H] @ [H, Vpad] bf16 matmul, lane-dense out.
    dec_out = x_scr[pl.ds(0, t_tgt)].reshape(t_tgt * B, H).astype(jnp.bfloat16)
    v_pad = out_w_ref.shape[1]
    logits = (jnp.dot(dec_out, out_w_ref[...],
                      preferred_element_type=jnp.float32) + out_b_ref[...])
    logits_ref[...] = logits.reshape(t_tgt, B, v_pad).astype(logits_ref.dtype)


def _fused_forward(src_tbh, tgt_tbh, src_len_b1, tgt_len_b1,
                   enc_w_ih, enc_w_hh, enc_b,
                   dec_w_ih, dec_w_hh, dec_b,
                   out_w_pad, out_b_pad):
    Ts, Bp, H = src_tbh.shape
    Tt = tgt_tbh.shape[0]
    L = enc_w_ih.shape[0]
    Vp = out_w_pad.shape[1]
    Tmax = max(Ts, Tt)

    # Batch-tile grid axis: two "parallel" tiles when the padded batch allows it
    # (feeds both TensorCores on v7x); a single tile otherwise (v5e/v6e unchanged).
    if Bp >= 16 and (Bp // 2) % 8 == 0:
        bt = Bp // 2
    else:
        bt = Bp
    n_tiles = Bp // bt

    # Full unroll only for tiny T; cap at 8 otherwise to avoid vreg spills.
    unroll = True if Tmax <= 8 else 8

    kernel = functools.partial(_rnn_enc_dec_kernel, hidden=H, num_layers=L,
                               t_src=Ts, t_tgt=Tt, batch=bt, unroll=unroll)

    sb = pl.Buffered(1)   # single-buffer: nothing to pipeline for these blocks

    in_specs = [
        pl.BlockSpec((Ts, bt, H), lambda b: (0, b, 0), pipeline_mode=sb),   # src emb
        pl.BlockSpec((Tt, bt, H), lambda b: (0, b, 0), pipeline_mode=sb),   # tgt emb
        pl.BlockSpec((bt, 1), lambda b: (b, 0), pipeline_mode=sb),          # src_len
        pl.BlockSpec((bt, 1), lambda b: (b, 0), pipeline_mode=sb),          # tgt_len
        pl.BlockSpec((L, H, 4 * H), lambda b: (0, 0, 0), pipeline_mode=sb),  # enc W_ih
        pl.BlockSpec((L, H, 4 * H), lambda b: (0, 0, 0), pipeline_mode=sb),  # enc W_hh
        pl.BlockSpec((L, 1, 4 * H), lambda b: (0, 0, 0), pipeline_mode=sb),  # enc bias
        pl.BlockSpec((L, H, 4 * H), lambda b: (0, 0, 0), pipeline_mode=sb),  # dec W_ih
        pl.BlockSpec((L, H, 4 * H), lambda b: (0, 0, 0), pipeline_mode=sb),  # dec W_hh
        pl.BlockSpec((L, 1, 4 * H), lambda b: (0, 0, 0), pipeline_mode=sb),  # dec bias
        pl.BlockSpec((H, Vp), lambda b: (0, 0), pipeline_mode=sb),           # out W
        pl.BlockSpec((1, Vp), lambda b: (0, 0), pipeline_mode=sb),           # out b
    ]
    out_specs = pl.BlockSpec((Tt, bt, Vp), lambda b: (0, b, 0))

    # VMEM footprint (single-buffered inputs + double-buffered output + scratch),
    # with headroom; keeps the scoped limit above the real need on all generations.
    in_bytes = (Ts * bt * H * 4 + Tt * bt * H * 4 + 2 * bt * 4
                + 4 * L * H * 4 * H * 2 + 2 * L * 4 * H * 4
                + H * Vp * 2 + Vp * 4)
    out_bytes = 2 * Tt * bt * Vp * 4
    scratch_bytes = Tmax * bt * H * 4 + Tmax * bt * 4 * H * 4
    vmem_limit = int(min(128 * 1024 * 1024,
                         max(32 * 1024 * 1024,
                             int(1.5 * (in_bytes + out_bytes + scratch_bytes))
                             + 4 * 1024 * 1024)))

    return pl.pallas_call(
        kernel,
        out_shape=jax.ShapeDtypeStruct((Tt, Bp, Vp), jnp.float32),
        grid_spec=pltpu.PrefetchScalarGridSpec(
            num_scalar_prefetch=0,
            grid=(n_tiles,),
            in_specs=in_specs,
            out_specs=out_specs,
            scratch_shapes=[
                pltpu.VMEM((Tmax, bt, H), jnp.float32),       # layer activations
                pltpu.VMEM((Tmax, bt, 4 * H), jnp.float32),   # hoisted gate pre-acts
            ],
        ),
        compiler_params=pltpu.CompilerParams(
            dimension_semantics=("parallel",),
            vmem_limit_bytes=vmem_limit),
    )(src_tbh, tgt_tbh, src_len_b1, tgt_len_b1,
      enc_w_ih, enc_w_hh, enc_b, dec_w_ih, dec_w_hh, dec_b,
      out_w_pad, out_b_pad)


# ---------------------------------------------------------------------------
# Parameter construction (deterministic, mirrors PyTorch __init__ shapes/inits)
# ---------------------------------------------------------------------------

def init_params(key, n_input_tokens, n_out_tokens, state_size, num_layers):
    H = state_size
    V_in = n_input_tokens + 2
    V_out = n_out_tokens + 2
    keys = jax.random.split(key, 4 + 8 * num_layers)
    ki = iter(keys)

    def xavier(k, shape):
        bound = math.sqrt(6.0 / (shape[0] + shape[1]))
        return jax.random.uniform(k, shape, jnp.float32, -bound, bound)

    def lstm_uniform(k, shape):
        bound = 1.0 / math.sqrt(H)
        return jax.random.uniform(k, shape, jnp.float32, -bound, bound)

    params = {
        # nn.Embedding(n_input_tokens + 2, H), xavier_uniform_
        'input_embedding': xavier(next(ki), (V_in, H)),
        # nn.Embedding(n_out_tokens + 2, H), PyTorch default N(0, 1)
        'output_embedding': jax.random.normal(next(ki), (V_out, H), jnp.float32),
        # nn.Linear(H, n_out_tokens + 2): xavier weight, default-uniform bias.
        # Stored transposed for the kernel: [H, V_out].
        'out_w': xavier(next(ki), (V_out, H)).T,
        'out_b': jax.random.uniform(next(ki), (1, V_out), jnp.float32,
                                    -1.0 / math.sqrt(H), 1.0 / math.sqrt(H)),
    }
    # PyTorch LSTM stores weight_ih [4H, in], weight_hh [4H, H]; we keep the
    # transposed [in, 4H] layout for the kernel matmuls. Gate order: i, f, g, o.
    for which in ('enc', 'dec'):
        w_ihs, w_hhs, bs = [], [], []
        for _ in range(num_layers):
            w_ihs.append(lstm_uniform(next(ki), (H, 4 * H)))
            w_hhs.append(lstm_uniform(next(ki), (H, 4 * H)))
            b_ih = lstm_uniform(next(ki), (1, 4 * H))
            b_hh = lstm_uniform(next(ki), (1, 4 * H))
            bs.append(b_ih + b_hh)
        params[f'{which}_w_ih'] = jnp.stack(w_ihs)          # [L, H, 4H]
        params[f'{which}_w_hh'] = jnp.stack(w_hhs)          # [L, H, 4H]
        params[f'{which}_b'] = jnp.stack(bs)                # [L, 1, 4H]
    return params


# ---------------------------------------------------------------------------
# RNNEncDec.forward (teacher forcing path)
# ---------------------------------------------------------------------------

def rnn_enc_dec_forward(params, src, src_len, tgt, tgt_len):
    B, Ts = src.shape
    _, Tt = tgt.shape
    H = params['input_embedding'].shape[1]
    V_out = params['out_w'].shape[1]
    v_pad = ((V_out + 127) // 128) * 128
    bf16 = jnp.bfloat16

    # Embedding lookups (glue).
    src_emb = jnp.take(params['input_embedding'], src, axis=0)   # [B, Ts, H]
    tgt_emb = jnp.take(params['output_embedding'], tgt, axis=0)  # [B, Tt, H]

    # Pad batch to a multiple of 8 so the f32 scratch reshapes stay free views and
    # per-step stores are tile-aligned. Padded rows get length 0 (fully masked).
    Bp = ((B + 7) // 8) * 8
    pad_b = Bp - B

    src_tbh = jnp.pad(jnp.transpose(src_emb, (1, 0, 2)),
                      ((0, 0), (0, pad_b), (0, 0)))               # [Ts, Bp, H] f32
    tgt_tbh = jnp.pad(jnp.transpose(tgt_emb, (1, 0, 2)),
                      ((0, 0), (0, pad_b), (0, 0)))               # [Tt, Bp, H] f32
    src_len_b1 = jnp.pad(src_len.astype(jnp.int32), (0, pad_b))[:, None]   # [Bp, 1]
    tgt_len_b1 = jnp.pad(tgt_len.astype(jnp.int32), (0, pad_b))[:, None]   # [Bp, 1]

    # Weights to bf16 for the MXU (f32 accumulation in-kernel); biases stay f32.
    out_w_pad = jnp.pad(params['out_w'],
                        ((0, 0), (0, v_pad - V_out))).astype(bf16)
    out_b_pad = jnp.pad(params['out_b'], ((0, 0), (0, v_pad - V_out)))

    logits_tbv = _fused_forward(
        src_tbh, tgt_tbh, src_len_b1, tgt_len_b1,
        params['enc_w_ih'].astype(bf16), params['enc_w_hh'].astype(bf16),
        params['enc_b'],
        params['dec_w_ih'].astype(bf16), params['dec_w_hh'].astype(bf16),
        params['dec_b'],
        out_w_pad, out_b_pad)                                     # [Tt, Bp, Vpad]

    return jnp.transpose(logits_tbv, (1, 0, 2))[:B, :, :V_out]    # [B, Tt, V_out]

# TODO(synk): RNNModel internals (dropout, exact padded-output handling) are not
# shown in the reference; this implements standard stacked LSTM with length-masked
# state freezing (packed-sequence-equivalent final hidden states). Greedy decode
# (run_greedy) is not implemented.


if __name__ == "__main__":
    # Small, deterministic configuration.
    N_INPUT_TOKENS = 10
    N_OUT_TOKENS = 12
    STATE_SIZE = 128
    NUM_LAYERS = 2
    B, T_SRC, T_TGT = 8, 8, 8

    root = jax.random.PRNGKey(0)
    k_params, k_src, k_tgt = jax.random.split(root, 3)

    params = init_params(k_params, N_INPUT_TOKENS, N_OUT_TOKENS,
                         STATE_SIZE, NUM_LAYERS)

    src = jax.random.randint(k_src, (B, T_SRC), 0, N_INPUT_TOKENS, jnp.int32)
    tgt = jax.random.randint(k_tgt, (B, T_TGT), 0, N_OUT_TOKENS, jnp.int32)
    src_len = jnp.full((B,), T_SRC, jnp.int32)
    tgt_len = jnp.full((B,), T_TGT, jnp.int32)

    fwd = jax.jit(rnn_enc_dec_forward)
    logits = fwd(params, src, src_len, tgt, tgt_len)
    jax.block_until_ready(logits)

    assert logits.shape == (B, T_TGT, N_OUT_TOKENS + 2)
    assert bool(jnp.all(jnp.isfinite(logits)))
    print("KERNEL_OK")
</pallas_src>

<mosaic_0001>
module attributes {stable_mosaic.version = 11 : i64} {
  func.func @_rnn_enc_dec_kernel(%arg0: i32, %arg1: memref<8x8x128xf32, #tpu.memory_space<vmem>>, %arg2: memref<8x8x128xf32, #tpu.memory_space<vmem>>, %arg3: memref<8x1xi32, #tpu.memory_space<vmem>>, %arg4: memref<8x1xi32, #tpu.memory_space<vmem>>, %arg5: memref<2x128x512xbf16, #tpu.memory_space<vmem>>, %arg6: memref<2x128x512xbf16, #tpu.memory_space<vmem>>, %arg7: memref<2x1x512xf32, #tpu.memory_space<vmem>>, %arg8: memref<2x128x512xbf16, #tpu.memory_space<vmem>>, %arg9: memref<2x128x512xbf16, #tpu.memory_space<vmem>>, %arg10: memref<2x1x512xf32, #tpu.memory_space<vmem>>, %arg11: memref<128x128xbf16, #tpu.memory_space<vmem>>, %arg12: memref<1x128xf32, #tpu.memory_space<vmem>>, %arg13: memref<8x8x128xf32, #tpu.memory_space<vmem>>, %arg14: memref<8x8x128xf32, #tpu.memory_space<vmem>>, %arg15: memref<8x8x512xf32, #tpu.memory_space<vmem>>) attributes {dimension_semantics = [#tpu.dimension_semantics<parallel>], iteration_bounds = array<i64: 1>, scalar_prefetch = 0 : i64, scratch_operands = 2 : i64, tpu.core_type = #tpu.core_type<tc>, window_params = [{pipeline_mode = #tpu.pipeline_mode<synchronous>, transform_indices = @transform_0, window_bounds = array<i64: 8, 8, 128>}, {pipeline_mode = #tpu.pipeline_mode<synchronous>, transform_indices = @transform_1, window_bounds = array<i64: 8, 8, 128>}, {pipeline_mode = #tpu.pipeline_mode<synchronous>, transform_indices = @transform_2, window_bounds = array<i64: 8, 1>}, {pipeline_mode = #tpu.pipeline_mode<synchronous>, transform_indices = @transform_3, window_bounds = array<i64: 8, 1>}, {pipeline_mode = #tpu.pipeline_mode<synchronous>, transform_indices = @transform_4, window_bounds = array<i64: 2, 128, 512>}, {pipeline_mode = #tpu.pipeline_mode<synchronous>, transform_indices = @transform_5, window_bounds = array<i64: 2, 128, 512>}, {pipeline_mode = #tpu.pipeline_mode<synchronous>, transform_indices = @transform_6, window_bounds = array<i64: 2, 1, 512>}, {pipeline_mode = #tpu.pipeline_mode<synchronous>, transform_indices = @transform_7, window_bounds = array<i64: 2, 128, 512>}, {pipeline_mode = #tpu.pipeline_mode<synchronous>, transform_indices = @transform_8, window_bounds = array<i64: 2, 128, 512>}, {pipeline_mode = #tpu.pipeline_mode<synchronous>, transform_indices = @transform_9, window_bounds = array<i64: 2, 1, 512>}, {pipeline_mode = #tpu.pipeline_mode<synchronous>, transform_indices = @transform_10, window_bounds = array<i64: 128, 128>}, {pipeline_mode = #tpu.pipeline_mode<synchronous>, transform_indices = @transform_11, window_bounds = array<i64: 1, 128>}, {transform_indices = @transform_12, window_bounds = array<i64: 8, 8, 128>}]} {
    %cst = arith.constant 0.000000e+00 : f32
    %0 = vector.broadcast %cst : f32 to vector<8x128xf32>
    %c0 = arith.constant 0 : index
    %c0_0 = arith.constant 0 : index
    %1 = vector.load %arg3[%c0, %c0_0] : memref<8x1xi32, #tpu.memory_space<vmem>>, vector<8x1xi32>
    %c0_1 = arith.constant 0 : index
    %c0_2 = arith.constant 0 : index
    %2 = vector.load %arg4[%c0_1, %c0_2] : memref<8x1xi32, #tpu.memory_space<vmem>>, vector<8x1xi32>
    %c0_3 = arith.constant 0 : index
    %c0_4 = arith.constant 0 : index
    %c0_5 = arith.constant 0 : index
    %3 = vector.load %arg1[%c0_3, %c0_4, %c0_5] : memref<8x8x128xf32, #tpu.memory_space<vmem>>, vector<8x8x128xf32>
    %c0_6 = arith.constant 0 : index
    %c0_7 = arith.constant 0 : index
    %c0_8 = arith.constant 0 : index
    %4 = vector.load %arg5[%c0_6, %c0_7, %c0_8] : memref<2x128x512xbf16, #tpu.memory_space<vmem>>, vector<1x128x512xbf16>
    %5 = vector.shape_cast %4 : vector<1x128x512xbf16> to vector<128x512xbf16>
    %c0_9 = arith.constant 0 : index
    %c0_10 = arith.constant 0 : index
    %c0_11 = arith.constant 0 : index
    %6 = vector.load %arg6[%c0_9, %c0_10, %c0_11] : memref<2x128x512xbf16, #tpu.memory_space<vmem>>, vector<1x128x512xbf16>
    %7 = vector.shape_cast %6 : vector<1x128x512xbf16> to vector<128x512xbf16>
    %c0_12 = arith.constant 0 : index
    %c0_13 = arith.constant 0 : index
    %c0_14 = arith.constant 0 : index
    %8 = vector.load %arg7[%c0_12, %c0_13, %c0_14] : memref<2x1x512xf32, #tpu.memory_space<vmem>>, vector<1x1x512xf32>
    %9 = vector.shape_cast %8 : vector<1x1x512xf32> to vector<1x512xf32>
    %10 = vector.shape_cast %3 : vector<8x8x128xf32> to vector<64x128xf32>
    %11 = arith.truncf %10 : vector<64x128xf32> to vector<64x128xbf16>
    %cst_15 = arith.constant dense<0.000000e+00> : vector<64x512xf32>
    %12 = tpu.matmul %11, %5, %cst_15 {dimension_numbers = #tpu.dot_dimension_numbers<[1], [0], [0], [1], [0, 0, 1, 1], [], []>} : vector<64x128xbf16>, vector<128x512xbf16>, vector<64x512xf32> -> vector<64x512xf32>
    %13 = vector.broadcast %9 : vector<1x512xf32> to vector<64x512xf32>
    %14 = arith.addf %12, %13 : vector<64x512xf32>
    %15 = vector.shape_cast %14 : vector<64x512xf32> to vector<8x8x512xf32>
    %c0_16 = arith.constant 0 : index
    %c0_17 = arith.constant 0 : index
    %c0_18 = arith.constant 0 : index
    %16 = vector.load %arg15[%c0_16, %c0_17, %c0_18] : memref<8x8x512xf32, #tpu.memory_space<vmem>>, vector<8x8x512xf32>
    tpu.vector_store %arg15[%c0_16, %c0_17, %c0_18], %15 {strides = array<i32>} : memref<8x8x512xf32, #tpu.memory_space<vmem>>, vector<8x8x512xf32>,
    %c0_i32 = arith.constant 0 : i32
    %17 = arith.index_cast %c0_i32 : i32 to index
    %c0_19 = arith.constant 0 : index
    %c0_20 = arith.constant 0 : index
    %18 = vector.load %arg15[%17, %c0_19, %c0_20] : memref<8x8x512xf32, #tpu.memory_space<vmem>>, vector<1x8x512xf32>
    %19 = vector.shape_cast %18 : vector<1x8x512xf32> to vector<8x512xf32>
    %20 = arith.truncf %0 : vector<8x128xf32> to vector<8x128xbf16>
    %cst_21 = arith.constant dense<0.000000e+00> : vector<8x512xf32>
    %21 = tpu.matmul %20, %7, %cst_21 {dimension_numbers = #tpu.dot_dimension_numbers<[1], [0], [0], [1], [0, 0, 1, 1], [], []>} : vector<8x128xbf16>, vector<128x512xbf16>, vector<8x512xf32> -> vector<8x512xf32>
    %22 = arith.addf %19, %21 : vector<8x512xf32>
    %23 = vector.extract_strided_slice %22 {offsets = [0, 0], sizes = [8, 128], strides = [1, 1]} : vector<8x512xf32> to vector<8x128xf32>
    %24 = arith.negf %23 : vector<8x128xf32>
    %25 = math.exp %24 : vector<8x128xf32>
    %cst_22 = arith.constant 1.000000e+00 : f32
    %26 = vector.broadcast %cst_22 : f32 to vector<8x128xf32>
    %27 = arith.addf %26, %25 : vector<8x128xf32>
    %28 = arith.divf %26, %27 : vector<8x128xf32>
    %29 = vector.extract_strided_slice %22 {offsets = [0, 128], sizes = [8, 128], strides = [1, 1]} : vector<8x512xf32> to vector<8x128xf32>
    %30 = arith.negf %29 : vector<8x128xf32>
    %31 = math.exp %30 : vector<8x128xf32>
    %cst_23 = arith.constant 1.000000e+00 : f32
    %32 = vector.broadcast %cst_23 : f32 to vector<8x128xf32>
    %33 = arith.addf %32, %31 : vector<8x128xf32>
    %34 = arith.divf %32, %33 : vector<8x128xf32>
    %35 = vector.extract_strided_slice %22 {offsets = [0, 256], sizes = [8, 128], strides = [1, 1]} : vector<8x512xf32> to vector<8x128xf32>
    %36 = math.tanh %35 : vector<8x128xf32>
    %37 = vector.extract_strided_slice %22 {offsets = [0, 384], sizes = [8, 128], strides = [1, 1]} : vector<8x512xf32> to vector<8x128xf32>
    %38 = arith.negf %37 : vector<8x128xf32>
    %39 = math.exp %38 : vector<8x128xf32>
    %cst_24 = arith.constant 1.000000e+00 : f32
    %40 = vector.broadcast %cst_24 : f32 to vector<8x128xf32>
    %41 = arith.addf %40, %39 : vector<8x128xf32>
    %42 = arith.divf %40, %41 : vector<8x128xf32>
    %43 = arith.mulf %34, %0 : vector<8x128xf32>
    %44 = arith.mulf %28, %36 : vector<8x128xf32>
    %45 = arith.addf %43, %44 : vector<8x128xf32>
    %46 = math.tanh %45 : vector<8x128xf32>
    %47 = arith.mulf %42, %46 : vector<8x128xf32>
    %48 = vector.broadcast %c0_i32 : i32 to vector<8x1xi32>
    %49 = arith.cmpi slt, %48, %1 : vector<8x1xi32>
    %50 = vector.shape_cast %49 : vector<8x1xi1> to vector<8x1xi1>
    %51 = vector.broadcast %50 : vector<8x1xi1> to vector<8x128xi1>
    %52 = arith.select %51, %45, %0 : vector<8x128xi1>, vector<8x128xf32>
    %53 = vector.shape_cast %49 : vector<8x1xi1> to vector<8x1xi1>
    %54 = vector.broadcast %53 : vector<8x1xi1> to vector<8x128xi1>
    %55 = arith.select %54, %47, %0 : vector<8x128xi1>, vector<8x128xf32>
    %cst_25 = arith.constant 0.000000e+00 : f32
    %56 = vector.shape_cast %49 : vector<8x1xi1> to vector<8x1xi1>
    %57 = vector.broadcast %56 : vector<8x1xi1> to vector<8x128xi1>
    %58 = vector.broadcast %cst_25 : f32 to vector<8x128xf32>
    %59 = arith.select %57, %47, %58 : vector<8x128xi1>, vector<8x128xf32>
    %60 = arith.index_cast %c0_i32 : i32 to index
    %c0_26 = arith.constant 0 : index
    %c0_27 = arith.constant 0 : index
    %61 = vector.load %arg14[%60, %c0_26, %c0_27] : memref<8x8x128xf32, #tpu.memory_space<vmem>>, vector<1x8x128xf32>
    %62 = vector.shape_cast %61 : vector<1x8x128xf32> to vector<8x128xf32>
    %63 = vector.shape_cast %59 : vector<8x128xf32> to vector<1x8x128xf32>
    tpu.vector_store %arg14[%60, %c0_26, %c0_27], %63 {strides = array<i32>} : memref<8x8x128xf32, #tpu.memory_space<vmem>>, vector<1x8x128xf32>,
    %c1_i32 = arith.constant 1 : i32
    %64 = arith.index_cast %c1_i32 : i32 to index
    %c0_28 = arith.constant 0 : index
    %c0_29 = arith.constant 0 : index
    %65 = vector.load %arg15[%64, %c0_28, %c0_29] : memref<8x8x512xf32, #tpu.memory_space<vmem>>, vector<1x8x512xf32>
    %66 = vector.shape_cast %65 : vector<1x8x512xf32> to vector<8x512xf32>
    %67 = arith.truncf %55 : vector<8x128xf32> to vector<8x128xbf16>
    %cst_30 = arith.constant dense<0.000000e+00> : vector<8x512xf32>
    %68 = tpu.matmul %67, %7, %cst_30 {dimension_numbers = #tpu.dot_dimension_numbers<[1], [0], [0], [1], [0, 0, 1, 1], [], []>} : vector<8x128xbf16>, vector<128x512xbf16>, vector<8x512xf32> -> vector<8x512xf32>
    %69 = arith.addf %66, %68 : vector<8x512xf32>
    %70 = vector.extract_strided_slice %69 {offsets = [0, 0], sizes = [8, 128], strides = [1, 1]} : vector<8x512xf32> to vector<8x128xf32>
    %71 = arith.negf %70 : vector<8x128xf32>
    %72 = math.exp %71 : vector<8x128xf32>
    %cst_31 = arith.constant 1.000000e+00 : f32
    %73 = vector.broadcast %cst_31 : f32 to vector<8x128xf32>
    %74 = arith.addf %73, %72 : vector<8x128xf32>
    %75 = arith.divf %73, %74 : vector<8x128xf32>
    %76 = vector.extract_strided_slice %69 {offsets = [0, 128], sizes = [8, 128], strides = [1, 1]} : vector<8x512xf32> to vector<8x128xf32>
    %77 = arith.negf %76 : vector<8x128xf32>
    %78 = math.exp %77 : vector<8x128xf32>
    %cst_32 = arith.constant 1.000000e+00 : f32
    %79 = vector.broadcast %cst_32 : f32 to vector<8x128xf32>
    %80 = arith.addf %79, %78 : vector<8x128xf32>
    %81 = arith.divf %79, %80 : vector<8x128xf32>
    %82 = vector.extract_strided_slice %69 {offsets = [0, 256], sizes = [8, 128], strides = [1, 1]} : vector<8x512xf32> to vector<8x128xf32>
    %83 = math.tanh %82 : vector<8x128xf32>
    %84 = vector.extract_strided_slice %69 {offsets = [0, 384], sizes = [8, 128], strides = [1, 1]} : vector<8x512xf32> to vector<8x128xf32>
    %85 = arith.negf %84 : vector<8x128xf32>
    %86 = math.exp %85 : vector<8x128xf32>
    %cst_33 = arith.constant 1.000000e+00 : f32
    %87 = vector.broadcast %cst_33 : f32 to vector<8x128xf32>
    %88 = arith.addf %87, %86 : vector<8x128xf32>
    %89 = arith.divf %87, %88 : vector<8x128xf32>
    %90 = arith.mulf %81, %52 : vector<8x128xf32>
    %91 = arith.mulf %75, %83 : vector<8x128xf32>
    %92 = arith.addf %90, %91 : vector<8x128xf32>
    %93 = math.tanh %92 : vector<8x128xf32>
    %94 = arith.mulf %89, %93 : vector<8x128xf32>
    %95 = vector.broadcast %c1_i32 : i32 to vector<8x1xi32>
    %96 = arith.cmpi slt, %95, %1 : vector<8x1xi32>
    %97 = vector.shape_cast %96 : vector<8x1xi1> to vector<8x1xi1>
    %98 = vector.broadcast %97 : vector<8x1xi1> to vector<8x128xi1>
    %99 = arith.select %98, %92, %52 : vector<8x128xi1>, vector<8x128xf32>
    %100 = vector.shape_cast %96 : vector<8x1xi1> to vector<8x1xi1>
    %101 = vector.broadcast %100 : vector<8x1xi1> to vector<8x128xi1>
    %102 = arith.select %101, %94, %55 : vector<8x128xi1>, vector<8x128xf32>
    %cst_34 = arith.constant 0.000000e+00 : f32
    %103 = vector.shape_cast %96 : vector<8x1xi1> to vector<8x1xi1>
    %104 = vector.broadcast %103 : vector<8x1xi1> to vector<8x128xi1>
    %105 = vector.broadcast %cst_34 : f32 to vector<8x128xf32>
    %106 = arith.select %104, %94, %105 : vector<8x128xi1>, vector<8x128xf32>
    %107 = arith.index_cast %c1_i32 : i32 to index
    %c0_35 = arith.constant 0 : index
    %c0_36 = arith.constant 0 : index
    %108 = vector.load %arg14[%107, %c0_35, %c0_36] : memref<8x8x128xf32, #tpu.memory_space<vmem>>, vector<1x8x128xf32>
    %109 = vector.shape_cast %108 : vector<1x8x128xf32> to vector<8x128xf32>
    %110 = vector.shape_cast %106 : vector<8x128xf32> to vector<1x8x128xf32>
    tpu.vector_store %arg14[%107, %c0_35, %c0_36], %110 {strides = array<i32>} : memref<8x8x128xf32, #tpu.memory_space<vmem>>, vector<1x8x128xf32>,
    %c2_i32 = arith.constant 2 : i32
    %111 = arith.index_cast %c2_i32 : i32 to index
    %c0_37 = arith.constant 0 : index
    %c0_38 = arith.constant 0 : index
    %112 = vector.load %arg15[%111, %c0_37, %c0_38] : memref<8x8x512xf32, #tpu.memory_space<vmem>>, vector<1x8x512xf32>
    %113 = vector.shape_cast %112 : vector<1x8x512xf32> to vector<8x512xf32>
    %114 = arith.truncf %102 : vector<8x128xf32> to vector<8x128xbf16>
    %cst_39 = arith.constant dense<0.000000e+00> : vector<8x512xf32>
    %115 = tpu.matmul %114, %7, %cst_39 {dimension_numbers = #tpu.dot_dimension_numbers<[1], [0], [0], [1], [0, 0, 1, 1], [], []>} : vector<8x128xbf16>, vector<128x512xbf16>, vector<8x512xf32> -> vector<8x512xf32>
    %116 = arith.addf %113, %115 : vector<8x512xf32>
    %117 = vector.extract_strided_slice %116 {offsets = [0, 0], sizes = [8, 128], strides = [1, 1]} : vector<8x512xf32> to vector<8x128xf32>
    %118 = arith.negf %117 : vector<8x128xf32>
    %119 = math.exp %118 : vector<8x128xf32>
    %cst_40 = arith.constant 1.000000e+00 : f32
    %120 = vector.broadcast %cst_40 : f32 to vector<8x128xf32>
    %121 = arith.addf %120, %119 : vector<8x128xf32>
    %122 = arith.divf %120, %121 : vector<8x128xf32>
    %123 = vector.extract_strided_slice %116 {offsets = [0, 128], sizes = [8, 128], strides = [1, 1]} : vector<8x512xf32> to vector<8x128xf32>
    %124 = arith.negf %123 : vector<8x128xf32>
    %125 = math.exp %124 : vector<8x128xf32>
    %cst_41 = arith.constant 1.000000e+00 : f32
    %126 = vector.broadcast %cst_41 : f32 to vector<8x128xf32>
    %127 = arith.addf %126, %125 : vector<8x128xf32>
    %128 = arith.divf %126, %127 : vector<8x128xf32>
    %129 = vector.extract_strided_slice %116 {offsets = [0, 256], sizes = [8, 128], strides = [1, 1]} : vector<8x512xf32> to vector<8x128xf32>
    %130 = math.tanh %129 : vector<8x128xf32>
    %131 = vector.extract_strided_slice %116 {offsets = [0, 384], sizes = [8, 128], strides = [1, 1]} : vector<8x512xf32> to vector<8x128xf32>
    %132 = arith.negf %131 : vector<8x128xf32>
    %133 = math.exp %132 : vector<8x128xf32>
    %cst_42 = arith.constant 1.000000e+00 : f32
    %134 = vector.broadcast %cst_42 : f32 to vector<8x128xf32>
    %135 = arith.addf %134, %133 : vector<8x128xf32>
    %136 = arith.divf %134, %135 : vector<8x128xf32>
    %137 = arith.mulf %128, %99 : vector<8x128xf32>
    %138 = arith.mulf %122, %130 : vector<8x128xf32>
    %139 = arith.addf %137, %138 : vector<8x128xf32>
    %140 = math.tanh %139 : vector<8x128xf32>
    %141 = arith.mulf %136, %140 : vector<8x128xf32>
    %142 = vector.broadcast %c2_i32 : i32 to vector<8x1xi32>
    %143 = arith.cmpi slt, %142, %1 : vector<8x1xi32>
    %144 = vector.shape_cast %143 : vector<8x1xi1> to vector<8x1xi1>
    %145 = vector.broadcast %144 : vector<8x1xi1> to vector<8x128xi1>
    %146 = arith.select %145, %139, %99 : vector<8x128xi1>, vector<8x128xf32>
    %147 = vector.shape_cast %143 : vector<8x1xi1> to vector<8x1xi1>
    %148 = vector.broadcast %147 : vector<8x1xi1> to vector<8x128xi1>
    %149 = arith.select %148, %141, %102 : vector<8x128xi1>, vector<8x128xf32>
    %cst_43 = arith.constant 0.000000e+00 : f32
    %150 = vector.shape_cast %143 : vector<8x1xi1> to vector<8x1xi1>
    %151 = vector.broadcast %150 : vector<8x1xi1> to vector<8x128xi1>
    %152 = vector.broadcast %cst_43 : f32 to vector<8x128xf32>
    %153 = arith.select %151, %141, %152 : vector<8x128xi1>, vector<8x128xf32>
    %154 = arith.index_cast %c2_i32 : i32 to index
    %c0_44 = arith.constant 0 : index
    %c0_45 = arith.constant 0 : index
    %155 = vector.load %arg14[%154, %c0_44, %c0_45] : memref<8x8x128xf32, #tpu.memory_space<vmem>>, vector<1x8x128xf32>
    %156 = vector.shape_cast %155 : vector<1x8x128xf32> to vector<8x128xf32>
    %157 = vector.shape_cast %153 : vector<8x128xf32> to vector<1x8x128xf32>
    tpu.vector_store %arg14[%154, %c0_44, %c0_45], %157 {strides = array<i32>} : memref<8x8x128xf32, #tpu.memory_space<vmem>>, vector<1x8x128xf32>,
    %c3_i32 = arith.constant 3 : i32
    %158 = arith.index_cast %c3_i32 : i32 to index
    %c0_46 = arith.constant 0 : index
    %c0_47 = arith.constant 0 : index
    %159 = vector.load %arg15[%158, %c0_46, %c0_47] : memref<8x8x512xf32, #tpu.memory_space<vmem>>, vector<1x8x512xf32>
    %160 = vector.shape_cast %159 : vector<1x8x512xf32> to vector<8x512xf32>
    %161 = arith.truncf %149 : vector<8x128xf32> to vector<8x128xbf16>
    %cst_48 = arith.constant dense<0.000000e+00> : vector<8x512xf32>
    %162 = tpu.matmul %161, %7, %cst_48 {dimension_numbers = #tpu.dot_dimension_numbers<[1], [0], [0], [1], [0, 0, 1, 1], [], []>} : vector<8x128xbf16>, vector<128x512xbf16>, vector<8x512xf32> -> vector<8x512xf32>
    %163 = arith.addf %160, %162 : vector<8x512xf32>
    %164 = vector.extract_strided_slice %163 {offsets = [0, 0], sizes = [8, 128], strides = [1, 1]} : vector<8x512xf32> to vector<8x128xf32>
    %165 = arith.negf %164 : vector<8x128xf32>
    %166 = math.exp %165 : vector<8x128xf32>
    %cst_49 = arith.constant 1.000000e+00 : f32
    %167 = vector.broadcast %cst_49 : f32 to vector<8x128xf32>
    %168 = arith.addf %167, %166 : vector<8x128xf32>
    %169 = arith.divf %167, %168 : vector<8x128xf32>
    %170 = vector.extract_strided_slice %163 {offsets = [0, 128], sizes = [8, 128], strides = [1, 1]} : vector<8x512xf32> to vector<8x128xf32>
    %171 = arith.negf %170 : vector<8x128xf32>
    %172 = math.exp %171 : vector<8x128xf32>
    %cst_50 = arith.constant 1.000000e+00 : f32
    %173 = vector.broadcast %cst_50 : f32 to vector<8x128xf32>
    %174 = arith.addf %173, %172 : vector<8x128xf32>
    %175 = arith.divf %173, %174 : vector<8x128xf32>
    %176 = vector.extract_strided_slice %163 {offsets = [0, 256], sizes = [8, 128], strides = [1, 1]} : vector<8x512xf32> to vector<8x128xf32>
    %177 = math.tanh %176 : vector<8x128xf32>
    %178 = vector.extract_strided_slice %163 {offsets = [0, 384], sizes = [8, 128], strides = [1, 1]} : vector<8x512xf32> to vector<8x128xf32>
    %179 = arith.negf %178 : vector<8x128xf32>
    %180 = math.exp %179 : vector<8x128xf32>
    %cst_51 = arith.constant 1.000000e+00 : f32
    %181 = vector.broadcast %cst_51 : f32 to vector<8x128xf32>
    %182 = arith.addf %181, %180 : vector<8x128xf32>
    %183 = arith.divf %181, %182 : vector<8x128xf32>
    %184 = arith.mulf %175, %146 : vector<8x128xf32>
    %185 = arith.mulf %169, %177 : vector<8x128xf32>
    %186 = arith.addf %184, %185 : vector<8x128xf32>
    %187 = math.tanh %186 : vector<8x128xf32>
    %188 = arith.mulf %183, %187 : vector<8x128xf32>
    %189 = vector.broadcast %c3_i32 : i32 to vector<8x1xi32>
    %190 = arith.cmpi slt, %189, %1 : vector<8x1xi32>
    %191 = vector.shape_cast %190 : vector<8x1xi1> to vector<8x1xi1>
    %192 = vector.broadcast %191 : vector<8x1xi1> to vector<8x128xi1>
    %193 = arith.select %192, %186, %146 : vector<8x128xi1>, vector<8x128xf32>
    %194 = vector.shape_cast %190 : vector<8x1xi1> to vector<8x1xi1>
    %195 = vector.broadcast %194 : vector<8x1xi1> to vector<8x128xi1>
    %196 = arith.select %195, %188, %149 : vector<8x128xi1>, vector<8x128xf32>
    %cst_52 = arith.constant 0.000000e+00 : f32
    %197 = vector.shape_cast %190 : vector<8x1xi1> to vector<8x1xi1>
    %198 = vector.broadcast %197 : vector<8x1xi1> to vector<8x128xi1>
    %199 = vector.broadcast %cst_52 : f32 to vector<8x128xf32>
    %200 = arith.select %198, %188, %199 : vector<8x128xi1>, vector<8x128xf32>
    %201 = arith.index_cast %c3_i32 : i32 to index
    %c0_53 = arith.constant 0 : index
    %c0_54 = arith.constant 0 : index
    %202 = vector.load %arg14[%201, %c0_53, %c0_54] : memref<8x8x128xf32, #tpu.memory_space<vmem>>, vector<1x8x128xf32>
    %203 = vector.shape_cast %202 : vector<1x8x128xf32> to vector<8x128xf32>
    %204 = vector.shape_cast %200 : vector<8x128xf32> to vector<1x8x128xf32>
    tpu.vector_store %arg14[%201, %c0_53, %c0_54], %204 {strides = array<i32>} : memref<8x8x128xf32, #tpu.memory_space<vmem>>, vector<1x8x128xf32>,
    %c4_i32 = arith.constant 4 : i32
    %205 = arith.index_cast %c4_i32 : i32 to index
    %c0_55 = arith.constant 0 : index
    %c0_56 = arith.constant 0 : index
    %206 = vector.load %arg15[%205, %c0_55, %c0_56] : memref<8x8x512xf32, #tpu.memory_space<vmem>>, vector<1x8x512xf32>
    %207 = vector.shape_cast %206 : vector<1x8x512xf32> to vector<8x512xf32>
    %208 = arith.truncf %196 : vector<8x128xf32> to vector<8x128xbf16>
    %cst_57 = arith.constant dense<0.000000e+00> : vector<8x512xf32>
    %209 = tpu.matmul %208, %7, %cst_57 {dimension_numbers = #tpu.dot_dimension_numbers<[1], [0], [0], [1], [0, 0, 1, 1], [], []>} : vector<8x128xbf16>, vector<128x512xbf16>, vector<8x512xf32> -> vector<8x512xf32>
    %210 = arith.addf %207, %209 : vector<8x512xf32>
    %211 = vector.extract_strided_slice %210 {offsets = [0, 0], sizes = [8, 128], strides = [1, 1]} : vector<8x512xf32> to vector<8x128xf32>
    %212 = arith.negf %211 : vector<8x128xf32>
    %213 = math.exp %212 : vector<8x128xf32>
    %cst_58 = arith.constant 1.000000e+00 : f32
    %214 = vector.broadcast %cst_58 : f32 to vector<8x128xf32>
    %215 = arith.addf %214, %213 : vector<8x128xf32>
    %216 = arith.divf %214, %215 : vector<8x128xf32>
    %217 = vector.extract_strided_slice %210 {offsets = [0, 128], sizes = [8, 128], strides = [1, 1]} : vector<8x512xf32> to vector<8x128xf32>
    %218 = arith.negf %217 : vector<8x128xf32>
    %219 = math.exp %218 : vector<8x128xf32>
    %cst_59 = arith.constant 1.000000e+00 : f32
    %220 = vector.broadcast %cst_59 : f32 to vector<8x128xf32>
    %221 = arith.addf %220, %219 : vector<8x128xf32>
    %222 = arith.divf %220, %221 : vector<8x128xf32>
    %223 = vector.extract_strided_slice %210 {offsets = [0, 256], sizes = [8, 128], strides = [1, 1]} : vector<8x512xf32> to vector<8x128xf32>
    %224 = math.tanh %223 : vector<8x128xf32>
    %225 = vector.extract_strided_slice %210 {offsets = [0, 384], sizes = [8, 128], strides = [1, 1]} : vector<8x512xf32> to vector<8x128xf32>
    %226 = arith.negf %225 : vector<8x128xf32>
    %227 = math.exp %226 : vector<8x128xf32>
    %cst_60 = arith.constant 1.000000e+00 : f32
    %228 = vector.broadcast %cst_60 : f32 to vector<8x128xf32>
    %229 = arith.addf %228, %227 : vector<8x128xf32>
    %230 = arith.divf %228, %229 : vector<8x128xf32>
    %231 = arith.mulf %222, %193 : vector<8x128xf32>
    %232 = arith.mulf %216, %224 : vector<8x128xf32>
    %233 = arith.addf %231, %232 : vector<8x128xf32>
    %234 = math.tanh %233 : vector<8x128xf32>
    %235 = arith.mulf %230, %234 : vector<8x128xf32>
    %236 = vector.broadcast %c4_i32 : i32 to vector<8x1xi32>
    %237 = arith.cmpi slt, %236, %1 : vector<8x1xi32>
    %238 = vector.shape_cast %237 : vector<8x1xi1> to vector<8x1xi1>
    %239 = vector.broadcast %238 : vector<8x1xi1> to vector<8x128xi1>
    %240 = arith.select %239, %233, %193 : vector<8x128xi1>, vector<8x128xf32>
    %241 = vector.shape_cast %237 : vector<8x1xi1> to vector<8x1xi1>
    %242 = vector.broadcast %241 : vector<8x1xi1> to vector<8x128xi1>
    %243 = arith.select %242, %235, %196 : vector<8x128xi1>, vector<8x128xf32>
    %cst_61 = arith.constant 0.000000e+00 : f32
    %244 = vector.shape_cast %237 : vector<8x1xi1> to vector<8x1xi1>
    %245 = vector.broadcast %244 : vector<8x1xi1> to vector<8x128xi1>
    %246 = vector.broadcast %cst_61 : f32 to vector<8x128xf32>
    %247 = arith.select %245, %235, %246 : vector<8x128xi1>, vector<8x128xf32>
    %248 = arith.index_cast %c4_i32 : i32 to index
    %c0_62 = arith.constant 0 : index
    %c0_63 = arith.constant 0 : index
    %249 = vector.load %arg14[%248, %c0_62, %c0_63] : memref<8x8x128xf32, #tpu.memory_space<vmem>>, vector<1x8x128xf32>
    %250 = vector.shape_cast %249 : vector<1x8x128xf32> to vector<8x128xf32>
    %251 = vector.shape_cast %247 : vector<8x128xf32> to vector<1x8x128xf32>
    tpu.vector_store %arg14[%248, %c0_62, %c0_63], %251 {strides = array<i32>} : memref<8x8x128xf32, #tpu.memory_space<vmem>>, vector<1x8x128xf32>,
    %c5_i32 = arith.constant 5 : i32
    %252 = arith.index_cast %c5_i32 : i32 to index
    %c0_64 = arith.constant 0 : index
    %c0_65 = arith.constant 0 : index
    %253 = vector.load %arg15[%252, %c0_64, %c0_65] : memref<8x8x512xf32, #tpu.memory_space<vmem>>, vector<1x8x512xf32>
    %254 = vector.shape_cast %253 : vector<1x8x512xf32> to vector<8x512xf32>
    %255 = arith.truncf %243 : vector<8x128xf32> to vector<8x128xbf16>
    %cst_66 = arith.constant dense<0.000000e+00> : vector<8x512xf32>
    %256 = tpu.matmul %255, %7, %cst_66 {dimension_numbers = #tpu.dot_dimension_numbers<[1], [0], [0], [1], [0, 0, 1, 1], [], []>} : vector<8x128xbf16>, vector<128x512xbf16>, vector<8x512xf32> -> vector<8x512xf32>
    %257 = arith.addf %254, %256 : vector<8x512xf32>
    %258 = vector.extract_strided_slice %257 {offsets = [0, 0], sizes = [8, 128], strides = [1, 1]} : vector<8x512xf32> to vector<8x128xf32>
    %259 = arith.negf %258 : vector<8x128xf32>
    %260 = math.exp %259 : vector<8x128xf32>
    %cst_67 = arith.constant 1.000000e+00 : f32
    %261 = vector.broadcast %cst_67 : f32 to vector<8x128xf32>
    %262 = arith.addf %261, %260 : vector<8x128xf32>
    %263 = arith.divf %261, %262 : vector<8x128xf32>
    %264 = vector.extract_strided_slice %257 {offsets = [0, 128], sizes = [8, 128], strides = [1, 1]} : vector<8x512xf32> to vector<8x128xf32>
    %265 = arith.negf %264 : vector<8x128xf32>
    %266 = math.exp %265 : vector<8x128xf32>
    %cst_68 = arith.constant 1.000000e+00 : f32
    %267 = vector.broadcast %cst_68 : f32 to vector<8x128xf32>
    %268 = arith.addf %267, %266 : vector<8x128xf32>
    %269 = arith.divf %267, %268 : vector<8x128xf32>
    %270 = vector.extract_strided_slice %257 {offsets = [0, 256], sizes = [8, 128], strides = [1, 1]} : vector<8x512xf32> to vector<8x128xf32>
    %271 = math.tanh %270 : vector<8x128xf32>
    %272 = vector.extract_strided_slice %257 {offsets = [0, 384], sizes = [8, 128], strides = [1, 1]} : vector<8x512xf32> to vector<8x128xf32>
    %273 = arith.negf %272 : vector<8x128xf32>
    %274 = math.exp %273 : vector<8x128xf32>
    %cst_69 = arith.constant 1.000000e+00 : f32
    %275 = vector.broadcast %cst_69 : f32 to vector<8x128xf32>
    %276 = arith.addf %275, %274 : vector<8x128xf32>
    %277 = arith.divf %275, %276 : vector<8x128xf32>
    %278 = arith.mulf %269, %240 : vector<8x128xf32>
    %279 = arith.mulf %263, %271 : vector<8x128xf32>
    %280 = arith.addf %278, %279 : vector<8x128xf32>
    %281 = math.tanh %280 : vector<8x128xf32>
    %282 = arith.mulf %277, %281 : vector<8x128xf32>
    %283 = vector.broadcast %c5_i32 : i32 to vector<8x1xi32>
    %284 = arith.cmpi slt, %283, %1 : vector<8x1xi32>
    %285 = vector.shape_cast %284 : vector<8x1xi1> to vector<8x1xi1>
    %286 = vector.broadcast %285 : vector<8x1xi1> to vector<8x128xi1>
    %287 = arith.select %286, %280, %240 : vector<8x128xi1>, vector<8x128xf32>
    %288 = vector.shape_cast %284 : vector<8x1xi1> to vector<8x1xi1>
    %289 = vector.broadcast %288 : vector<8x1xi1> to vector<8x128xi1>
    %290 = arith.select %289, %282, %243 : vector<8x128xi1>, vector<8x128xf32>
    %cst_70 = arith.constant 0.000000e+00 : f32
    %291 = vector.shape_cast %284 : vector<8x1xi1> to vector<8x1xi1>
    %292 = vector.broadcast %291 : vector<8x1xi1> to vector<8x128xi1>
    %293 = vector.broadcast %cst_70 : f32 to vector<8x128xf32>
    %294 = arith.select %292, %282, %293 : vector<8x128xi1>, vector<8x128xf32>
    %295 = arith.index_cast %c5_i32 : i32 to index
    %c0_71 = arith.constant 0 : index
    %c0_72 = arith.constant 0 : index
    %296 = vector.load %arg14[%295, %c0_71, %c0_72] : memref<8x8x128xf32, #tpu.memory_space<vmem>>, vector<1x8x128xf32>
    %297 = vector.shape_cast %296 : vector<1x8x128xf32> to vector<8x128xf32>
    %298 = vector.shape_cast %294 : vector<8x128xf32> to vector<1x8x128xf32>
    tpu.vector_store %arg14[%295, %c0_71, %c0_72], %298 {strides = array<i32>} : memref<8x8x128xf32, #tpu.memory_space<vmem>>, vector<1x8x128xf32>,
    %c6_i32 = arith.constant 6 : i32
    %299 = arith.index_cast %c6_i32 : i32 to index
    %c0_73 = arith.constant 0 : index
    %c0_74 = arith.constant 0 : index
    %300 = vector.load %arg15[%299, %c0_73, %c0_74] : memref<8x8x512xf32, #tpu.memory_space<vmem>>, vector<1x8x512xf32>
    %301 = vector.shape_cast %300 : vector<1x8x512xf32> to vector<8x512xf32>
    %302 = arith.truncf %290 : vector<8x128xf32> to vector<8x128xbf16>
    %cst_75 = arith.constant dense<0.000000e+00> : vector<8x512xf32>
    %303 = tpu.matmul %302, %7, %cst_75 {dimension_numbers = #tpu.dot_dimension_numbers<[1], [0], [0], [1], [0, 0, 1, 1], [], []>} : vector<8x128xbf16>, vector<128x512xbf16>, vector<8x512xf32> -> vector<8x512xf32>
    %304 = arith.addf %301, %303 : vector<8x512xf32>
    %305 = vector.extract_strided_slice %304 {offsets = [0, 0], sizes = [8, 128], strides = [1, 1]} : vector<8x512xf32> to vector<8x128xf32>
    %306 = arith.negf %305 : vector<8x128xf32>
    %307 = math.exp %306 : vector<8x128xf32>
    %cst_76 = arith.constant 1.000000e+00 : f32
    %308 = vector.broadcast %cst_76 : f32 to vector<8x128xf32>
    %309 = arith.addf %308, %307 : vector<8x128xf32>
    %310 = arith.divf %308, %309 : vector<8x128xf32>
    %311 = vector.extract_strided_slice %304 {offsets = [0, 128], sizes = [8, 128], strides = [1, 1]} : vector<8x512xf32> to vector<8x128xf32>
    %312 = arith.negf %311 : vector<8x128xf32>
    %313 = math.exp %312 : vector<8x128xf32>
    %cst_77 = arith.constant 1.000000e+00 : f32
    %314 = vector.broadcast %cst_77 : f32 to vector<8x128xf32>
    %315 = arith.addf %314, %313 : vector<8x128xf32>
    %316 = arith.divf %314, %315 : vector<8x128xf32>
    %317 = vector.extract_strided_slice %304 {offsets = [0, 256], sizes = [8, 128], strides = [1, 1]} : vector<8x512xf32> to vector<8x128xf32>
    %318 = math.tanh %317 : vector<8x128xf32>
    %319 = vector.extract_strided_slice %304 {offsets = [0, 384], sizes = [8, 128], strides = [1, 1]} : vector<8x512xf32> to vector<8x128xf32>
    %320 = arith.negf %319 : vector<8x128xf32>
    %321 = math.exp %320 : vector<8x128xf32>
    %cst_78 = arith.constant 1.000000e+00 : f32
    %322 = vector.broadcast %cst_78 : f32 to vector<8x128xf32>
    %323 = arith.addf %322, %321 : vector<8x128xf32>
    %324 = arith.divf %322, %323 : vector<8x128xf32>
    %325 = arith.mulf %316, %287 : vector<8x128xf32>
    %326 = arith.mulf %310, %318 : vector<8x128xf32>
    %327 = arith.addf %325, %326 : vector<8x128xf32>
    %328 = math.tanh %327 : vector<8x128xf32>
    %329 = arith.mulf %324, %328 : vector<8x128xf32>
    %330 = vector.broadcast %c6_i32 : i32 to vector<8x1xi32>
    %331 = arith.cmpi slt, %330, %1 : vector<8x1xi32>
    %332 = vector.shape_cast %331 : vector<8x1xi1> to vector<8x1xi1>
    %333 = vector.broadcast %332 : vector<8x1xi1> to vector<8x128xi1>
    %334 = arith.select %333, %327, %287 : vector<8x128xi1>, vector<8x128xf32>
    %335 = vector.shape_cast %331 : vector<8x1xi1> to vector<8x1xi1>
    %336 = vector.broadcast %335 : vector<8x1xi1> to vector<8x128xi1>
    %337 = arith.select %336, %329, %290 : vector<8x128xi1>, vector<8x128xf32>
    %cst_79 = arith.constant 0.000000e+00 : f32
    %338 = vector.shape_cast %331 : vector<8x1xi1> to vector<8x1xi1>
    %339 = vector.broadcast %338 : vector<8x1xi1> to vector<8x128xi1>
    %340 = vector.broadcast %cst_79 : f32 to vector<8x128xf32>
    %341 = arith.select %339, %329, %340 : vector<8x128xi1>, vector<8x128xf32>
    %342 = arith.index_cast %c6_i32 : i32 to index
    %c0_80 = arith.constant 0 : index
    %c0_81 = arith.constant 0 : index
    %343 = vector.load %arg14[%342, %c0_80, %c0_81] : memref<8x8x128xf32, #tpu.memory_space<vmem>>, vector<1x8x128xf32>
    %344 = vector.shape_cast %343 : vector<1x8x128xf32> to vector<8x128xf32>
    %345 = vector.shape_cast %341 : vector<8x128xf32> to vector<1x8x128xf32>
    tpu.vector_store %arg14[%342, %c0_80, %c0_81], %345 {strides = array<i32>} : memref<8x8x128xf32, #tpu.memory_space<vmem>>, vector<1x8x128xf32>,
    %c7_i32 = arith.constant 7 : i32
    %346 = arith.index_cast %c7_i32 : i32 to index
    %c0_82 = arith.constant 0 : index
    %c0_83 = arith.constant 0 : index
    %347 = vector.load %arg15[%346, %c0_82, %c0_83] : memref<8x8x512xf32, #tpu.memory_space<vmem>>, vector<1x8x512xf32>
    %348 = vector.shape_cast %347 : vector<1x8x512xf32> to vector<8x512xf32>
    %349 = arith.truncf %337 : vector<8x128xf32> to vector<8x128xbf16>
    %cst_84 = arith.constant dense<0.000000e+00> : vector<8x512xf32>
    %350 = tpu.matmul %349, %7, %cst_84 {dimension_numbers = #tpu.dot_dimension_numbers<[1], [0], [0], [1], [0, 0, 1, 1], [], []>} : vector<8x128xbf16>, vector<128x512xbf16>, vector<8x512xf32> -> vector<8x512xf32>
    %351 = arith.addf %348, %350 : vector<8x512xf32>
    %352 = vector.extract_strided_slice %351 {offsets = [0, 0], sizes = [8, 128], strides = [1, 1]} : vector<8x512xf32> to vector<8x128xf32>
    %353 = arith.negf %352 : vector<8x128xf32>
    %354 = math.exp %353 : vector<8x128xf32>
    %cst_85 = arith.constant 1.000000e+00 : f32
    %355 = vector.broadcast %cst_85 : f32 to vector<8x128xf32>
    %356 = arith.addf %355, %354 : vector<8x128xf32>
    %357 = arith.divf %355, %356 : vector<8x128xf32>
    %358 = vector.extract_strided_slice %351 {offsets = [0, 128], sizes = [8, 128], strides = [1, 1]} : vector<8x512xf32> to vector<8x128xf32>
    %359 = arith.negf %358 : vector<8x128xf32>
    %360 = math.exp %359 : vector<8x128xf32>
    %cst_86 = arith.constant 1.000000e+00 : f32
    %361 = vector.broadcast %cst_86 : f32 to vector<8x128xf32>
    %362 = arith.addf %361, %360 : vector<8x128xf32>
    %363 = arith.divf %361, %362 : vector<8x128xf32>
    %364 = vector.extract_strided_slice %351 {offsets = [0, 256], sizes = [8, 128], strides = [1, 1]} : vector<8x512xf32> to vector<8x128xf32>
    %365 = math.tanh %364 : vector<8x128xf32>
    %366 = vector.extract_strided_slice %351 {offsets = [0, 384], sizes = [8, 128], strides = [1, 1]} : vector<8x512xf32> to vector<8x128xf32>
    %367 = arith.negf %366 : vector<8x128xf32>
    %368 = math.exp %367 : vector<8x128xf32>
    %cst_87 = arith.constant 1.000000e+00 : f32
    %369 = vector.broadcast %cst_87 : f32 to vector<8x128xf32>
    %370 = arith.addf %369, %368 : vector<8x128xf32>
    %371 = arith.divf %369, %370 : vector<8x128xf32>
    %372 = arith.mulf %363, %334 : vector<8x128xf32>
    %373 = arith.mulf %357, %365 : vector<8x128xf32>
    %374 = arith.addf %372, %373 : vector<8x128xf32>
    %375 = math.tanh %374 : vector<8x128xf32>
    %376 = arith.mulf %371, %375 : vector<8x128xf32>
    %377 = vector.broadcast %c7_i32 : i32 to vector<8x1xi32>
    %378 = arith.cmpi slt, %377, %1 : vector<8x1xi32>
    %379 = vector.shape_cast %378 : vector<8x1xi1> to vector<8x1xi1>
    %380 = vector.broadcast %379 : vector<8x1xi1> to vector<8x128xi1>
    %381 = arith.select %380, %374, %334 : vector<8x128xi1>, vector<8x128xf32>
    %382 = vector.shape_cast %378 : vector<8x1xi1> to vector<8x1xi1>
    %383 = vector.broadcast %382 : vector<8x1xi1> to vector<8x128xi1>
    %384 = arith.select %383, %376, %337 : vector<8x128xi1>, vector<8x128xf32>
    %cst_88 = arith.constant 0.000000e+00 : f32
    %385 = vector.shape_cast %378 : vector<8x1xi1> to vector<8x1xi1>
    %386 = vector.broadcast %385 : vector<8x1xi1> to vector<8x128xi1>
    %387 = vector.broadcast %cst_88 : f32 to vector<8x128xf32>
    %388 = arith.select %386, %376, %387 : vector<8x128xi1>, vector<8x128xf32>
    %389 = arith.index_cast %c7_i32 : i32 to index
    %c0_89 = arith.constant 0 : index
    %c0_90 = arith.constant 0 : index
    %390 = vector.load %arg14[%389, %c0_89, %c0_90] : memref<8x8x128xf32, #tpu.memory_space<vmem>>, vector<1x8x128xf32>
    %391 = vector.shape_cast %390 : vector<1x8x128xf32> to vector<8x128xf32>
    %392 = vector.shape_cast %388 : vector<8x128xf32> to vector<1x8x128xf32>
    tpu.vector_store %arg14[%389, %c0_89, %c0_90], %392 {strides = array<i32>} : memref<8x8x128xf32, #tpu.memory_space<vmem>>, vector<1x8x128xf32>,
    %c8_i32 = arith.constant 8 : i32
    %c0_91 = arith.constant 0 : index
    %c0_92 = arith.constant 0 : index
    %c0_93 = arith.constant 0 : index
    %393 = vector.load %arg14[%c0_91, %c0_92, %c0_93] : memref<8x8x128xf32, #tpu.memory_space<vmem>>, vector<8x8x128xf32>
    %c1 = arith.constant 1 : index
    %c0_94 = arith.constant 0 : index
    %c0_95 = arith.constant 0 : index
    %394 = vector.load %arg5[%c1, %c0_94, %c0_95] : memref<2x128x512xbf16, #tpu.memory_space<vmem>>, vector<1x128x512xbf16>
    %395 = vector.shape_cast %394 : vector<1x128x512xbf16> to vector<128x512xbf16>
    %c1_96 = arith.constant 1 : index
    %c0_97 = arith.constant 0 : index
    %c0_98 = arith.constant 0 : index
    %396 = vector.load %arg6[%c1_96, %c0_97, %c0_98] : memref<2x128x512xbf16, #tpu.memory_space<vmem>>, vector<1x128x512xbf16>
    %397 = vector.shape_cast %396 : vector<1x128x512xbf16> to vector<128x512xbf16>
    %c1_99 = arith.constant 1 : index
    %c0_100 = arith.constant 0 : index
    %c0_101 = arith.constant 0 : index
    %398 = vector.load %arg7[%c1_99, %c0_100, %c0_101] : memref<2x1x512xf32, #tpu.memory_space<vmem>>, vector<1x1x512xf32>
    %399 = vector.shape_cast %398 : vector<1x1x512xf32> to vector<1x512xf32>
    %400 = vector.shape_cast %393 : vector<8x8x128xf32> to vector<64x128xf32>
    %401 = arith.truncf %400 : vector<64x128xf32> to vector<64x128xbf16>
    %cst_102 = arith.constant dense<0.000000e+00> : vector<64x512xf32>
    %402 = tpu.matmul %401, %395, %cst_102 {dimension_numbers = #tpu.dot_dimension_numbers<[1], [0], [0], [1], [0, 0, 1, 1], [], []>} : vector<64x128xbf16>, vector<128x512xbf16>, vector<64x512xf32> -> vector<64x512xf32>
    %403 = vector.broadcast %399 : vector<1x512xf32> to vector<64x512xf32>
    %404 = arith.addf %402, %403 : vector<64x512xf32>
    %405 = vector.shape_cast %404 : vector<64x512xf32> to vector<8x8x512xf32>
    %c0_103 = arith.constant 0 : index
    %c0_104 = arith.constant 0 : index
    %c0_105 = arith.constant 0 : index
    %406 = vector.load %arg15[%c0_103, %c0_104, %c0_105] : memref<8x8x512xf32, #tpu.memory_space<vmem>>, vector<8x8x512xf32>
    tpu.vector_store %arg15[%c0_103, %c0_104, %c0_105], %405 {strides = array<i32>} : memref<8x8x512xf32, #tpu.memory_space<vmem>>, vector<8x8x512xf32>,
    %c0_i32_106 = arith.constant 0 : i32
    %407 = arith.index_cast %c0_i32_106 : i32 to index
    %c0_107 = arith.constant 0 : index
    %c0_108 = arith.constant 0 : index
    %408 = vector.load %arg15[%407, %c0_107, %c0_108] : memref<8x8x512xf32, #tpu.memory_space<vmem>>, vector<1x8x512xf32>
    %409 = vector.shape_cast %408 : vector<1x8x512xf32> to vector<8x512xf32>
    %410 = arith.truncf %0 : vector<8x128xf32> to vector<8x128xbf16>
    %cst_109 = arith.constant dense<0.000000e+00> : vector<8x512xf32>
    %411 = tpu.matmul %410, %397, %cst_109 {dimension_numbers = #tpu.dot_dimension_numbers<[1], [0], [0], [1], [0, 0, 1, 1], [], []>} : vector<8x128xbf16>, vector<128x512xbf16>, vector<8x512xf32> -> vector<8x512xf32>
    %412 = arith.addf %409, %411 : vector<8x512xf32>
    %413 = vector.extract_strided_slice %412 {offsets = [0, 0], sizes = [8, 128], strides = [1, 1]} : vector<8x512xf32> to vector<8x128xf32>
    %414 = arith.negf %413 : vector<8x128xf32>
    %415 = math.exp %414 : vector<8x128xf32>
    %cst_110 = arith.constant 1.000000e+00 : f32
    %416 = vector.broadcast %cst_110 : f32 to vector<8x128xf32>
    %417 = arith.addf %416, %415 : vector<8x128xf32>
    %418 = arith.divf %416, %417 : vector<8x128xf32>
    %419 = vector.extract_strided_slice %412 {offsets = [0, 128], sizes = [8, 128], strides = [1, 1]} : vector<8x512xf32> to vector<8x128xf32>
    %420 = arith.negf %419 : vector<8x128xf32>
    %421 = math.exp %420 : vector<8x128xf32>
    %cst_111 = arith.constant 1.000000e+00 : f32
    %422 = vector.broadcast %cst_111 : f32 to vector<8x128xf32>
    %423 = arith.addf %422, %421 : vector<8x128xf32>
    %424 = arith.divf %422, %423 : vector<8x128xf32>
    %425 = vector.extract_strided_slice %412 {offsets = [0, 256], sizes = [8, 128], strides = [1, 1]} : vector<8x512xf32> to vector<8x128xf32>
    %426 = math.tanh %425 : vector<8x128xf32>
    %427 = vector.extract_strided_slice %412 {offsets = [0, 384], sizes = [8, 128], strides = [1, 1]} : vector<8x512xf32> to vector<8x128xf32>
    %428 = arith.negf %427 : vector<8x128xf32>
    %429 = math.exp %428 : vector<8x128xf32>
    %cst_112 = arith.constant 1.000000e+00 : f32
    %430 = vector.broadcast %cst_112 : f32 to vector<8x128xf32>
    %431 = arith.addf %430, %429 : vector<8x128xf32>
    %432 = arith.divf %430, %431 : vector<8x128xf32>
    %433 = arith.mulf %424, %0 : vector<8x128xf32>
    %434 = arith.mulf %418, %426 : vector<8x128xf32>
    %435 = arith.addf %433, %434 : vector<8x128xf32>
    %436 = math.tanh %435 : vector<8x128xf32>
    %437 = arith.mulf %432, %436 : vector<8x128xf32>
    %438 = vector.broadcast %c0_i32_106 : i32 to vector<8x1xi32>
    %439 = arith.cmpi slt, %438, %1 : vector<8x1xi32>
    %440 = vector.shape_cast %439 : vector<8x1xi1> to vector<8x1xi1>
    %441 = vector.broadcast %440 : vector<8x1xi1> to vector<8x128xi1>
    %442 = arith.select %441, %435, %0 : vector<8x128xi1>, vector<8x128xf32>
    %443 = vector.shape_cast %439 : vector<8x1xi1> to vector<8x1xi1>
    %444 = vector.broadcast %443 : vector<8x1xi1> to vector<8x128xi1>
    %445 = arith.select %444, %437, %0 : vector<8x128xi1>, vector<8x128xf32>
    %cst_113 = arith.constant 0.000000e+00 : f32
    %446 = vector.shape_cast %439 : vector<8x1xi1> to vector<8x1xi1>
    %447 = vector.broadcast %446 : vector<8x1xi1> to vector<8x128xi1>
    %448 = vector.broadcast %cst_113 : f32 to vector<8x128xf32>
    %449 = arith.select %447, %437, %448 : vector<8x128xi1>, vector<8x128xf32>
    %450 = arith.index_cast %c0_i32_106 : i32 to index
    %c0_114 = arith.constant 0 : index
    %c0_115 = arith.constant 0 : index
    %451 = vector.load %arg14[%450, %c0_114, %c0_115] : memref<8x8x128xf32, #tpu.memory_space<vmem>>, vector<1x8x128xf32>
    %452 = vector.shape_cast %451 : vector<1x8x128xf32> to vector<8x128xf32>
    %453 = vector.shape_cast %449 : vector<8x128xf32> to vector<1x8x128xf32>
    tpu.vector_store %arg14[%450, %c0_114, %c0_115], %453 {strides = array<i32>} : memref<8x8x128xf32, #tpu.memory_space<vmem>>, vector<1x8x128xf32>,
    %c1_i32_116 = arith.constant 1 : i32
    %454 = arith.index_cast %c1_i32_116 : i32 to index
    %c0_117 = arith.constant 0 : index
    %c0_118 = arith.constant 0 : index
    %455 = vector.load %arg15[%454, %c0_117, %c0_118] : memref<8x8x512xf32, #tpu.memory_space<vmem>>, vector<1x8x512xf32>
    %456 = vector.shape_cast %455 : vector<1x8x512xf32> to vector<8x512xf32>
    %457 = arith.truncf %445 : vector<8x128xf32> to vector<8x128xbf16>
    %cst_119 = arith.constant dense<0.000000e+00> : vector<8x512xf32>
    %458 = tpu.matmul %457, %397, %cst_119 {dimension_numbers = #tpu.dot_dimension_numbers<[1], [0], [0], [1], [0, 0, 1, 1], [], []>} : vector<8x128xbf16>, vector<128x512xbf16>, vector<8x512xf32> -> vector<8x512xf32>
    %459 = arith.addf %456, %458 : vector<8x512xf32>
    %460 = vector.extract_strided_slice %459 {offsets = [0, 0], sizes = [8, 128], strides = [1, 1]} : vector<8x512xf32> to vector<8x128xf32>
    %461 = arith.negf %460 : vector<8x128xf32>
    %462 = math.exp %461 : vector<8x128xf32>
    %cst_120 = arith.constant 1.000000e+00 : f32
    %463 = vector.broadcast %cst_120 : f32 to vector<8x128xf32>
    %464 = arith.addf %463, %462 : vector<8x128xf32>
    %465 = arith.divf %463, %464 : vector<8x128xf32>
    %466 = vector.extract_strided_slice %459 {offsets = [0, 128], sizes = [8, 128], strides = [1, 1]} : vector<8x512xf32> to vector<8x128xf32>
    %467 = arith.negf %466 : vector<8x128xf32>
    %468 = math.exp %467 : vector<8x128xf32>
    %cst_121 = arith.constant 1.000000e+00 : f32
    %469 = vector.broadcast %cst_121 : f32 to vector<8x128xf32>
    %470 = arith.addf %469, %468 : vector<8x128xf32>
    %471 = arith.divf %469, %470 : vector<8x128xf32>
    %472 = vector.extract_strided_slice %459 {offsets = [0, 256], sizes = [8, 128], strides = [1, 1]} : vector<8x512xf32> to vector<8x128xf32>
    %473 = math.tanh %472 : vector<8x128xf32>
    %474 = vector.extract_strided_slice %459 {offsets = [0, 384], sizes = [8, 128], strides = [1, 1]} : vector<8x512xf32> to vector<8x128xf32>
    %475 = arith.negf %474 : vector<8x128xf32>
    %476 = math.exp %475 : vector<8x128xf32>
    %cst_122 = arith.constant 1.000000e+00 : f32
    %477 = vector.broadcast %cst_122 : f32 to vector<8x128xf32>
    %478 = arith.addf %477, %476 : vector<8x128xf32>
    %479 = arith.divf %477, %478 : vector<8x128xf32>
    %480 = arith.mulf %471, %442 : vector<8x128xf32>
    %481 = arith.mulf %465, %473 : vector<8x128xf32>
    %482 = arith.addf %480, %481 : vector<8x128xf32>
    %483 = math.tanh %482 : vector<8x128xf32>
    %484 = arith.mulf %479, %483 : vector<8x128xf32>
    %485 = vector.broadcast %c1_i32_116 : i32 to vector<8x1xi32>
    %486 = arith.cmpi slt, %485, %1 : vector<8x1xi32>
    %487 = vector.shape_cast %486 : vector<8x1xi1> to vector<8x1xi1>
    %488 = vector.broadcast %487 : vector<8x1xi1> to vector<8x128xi1>
    %489 = arith.select %488, %482, %442 : vector<8x128xi1>, vector<8x128xf32>
    %490 = vector.shape_cast %486 : vector<8x1xi1> to vector<8x1xi1>
    %491 = vector.broadcast %490 : vector<8x1xi1> to vector<8x128xi1>
    %492 = arith.select %491, %484, %445 : vector<8x128xi1>, vector<8x128xf32>
    %cst_123 = arith.constant 0.000000e+00 : f32
    %493 = vector.shape_cast %486 : vector<8x1xi1> to vector<8x1xi1>
    %494 = vector.broadcast %493 : vector<8x1xi1> to vector<8x128xi1>
    %495 = vector.broadcast %cst_123 : f32 to vector<8x128xf32>
    %496 = arith.select %494, %484, %495 : vector<8x128xi1>, vector<8x128xf32>
    %497 = arith.index_cast %c1_i32_116 : i32 to index
    %c0_124 = arith.constant 0 : index
    %c0_125 = arith.constant 0 : index
    %498 = vector.load %arg14[%497, %c0_124, %c0_125] : memref<8x8x128xf32, #tpu.memory_space<vmem>>, vector<1x8x128xf32>
    %499 = vector.shape_cast %498 : vector<1x8x128xf32> to vector<8x128xf32>
    %500 = vector.shape_cast %496 : vector<8x128xf32> to vector<1x8x128xf32>
    tpu.vector_store %arg14[%497, %c0_124, %c0_125], %500 {strides = array<i32>} : memref<8x8x128xf32, #tpu.memory_space<vmem>>, vector<1x8x128xf32>,
    %c2_i32_126 = arith.constant 2 : i32
    %501 = arith.index_cast %c2_i32_126 : i32 to index
    %c0_127 = arith.constant 0 : index
    %c0_128 = arith.constant 0 : index
    %502 = vector.load %arg15[%501, %c0_127, %c0_128] : memref<8x8x512xf32, #tpu.memory_space<vmem>>, vector<1x8x512xf32>
    %503 = vector.shape_cast %502 : vector<1x8x512xf32> to vector<8x512xf32>
    %504 = arith.truncf %492 : vector<8x128xf32> to vector<8x128xbf16>
    %cst_129 = arith.constant dense<0.000000e+00> : vector<8x512xf32>
    %505 = tpu.matmul %504, %397, %cst_129 {dimension_numbers = #tpu.dot_dimension_numbers<[1], [0], [0], [1], [0, 0, 1, 1], [], []>} : vector<8x128xbf16>, vector<128x512xbf16>, vector<8x512xf32> -> vector<8x512xf32>
    %506 = arith.addf %503, %505 : vector<8x512xf32>
    %507 = vector.extract_strided_slice %506 {offsets = [0, 0], sizes = [8, 128], strides = [1, 1]} : vector<8x512xf32> to vector<8x128xf32>
    %508 = arith.negf %507 : vector<8x128xf32>
    %509 = math.exp %508 : vector<8x128xf32>
    %cst_130 = arith.constant 1.000000e+00 : f32
    %510 = vector.broadcast %cst_130 : f32 to vector<8x128xf32>
    %511 = arith.addf %510, %509 : vector<8x128xf32>
    %512 = arith.divf %510, %511 : vector<8x128xf32>
    %513 = vector.extract_strided_slice %506 {offsets = [0, 128], sizes = [8, 128], strides = [1, 1]} : vector<8x512xf32> to vector<8x128xf32>
    %514 = arith.negf %513 : vector<8x128xf32>
    %515 = math.exp %514 : vector<8x128xf32>
    %cst_131 = arith.constant 1.000000e+00 : f32
    %516 = vector.broadcast %cst_131 : f32 to vector<8x128xf32>
    %517 = arith.addf %516, %515 : vector<8x128xf32>
    %518 = arith.divf %516, %517 : vector<8x128xf32>
    %519 = vector.extract_strided_slice %506 {offsets = [0, 256], sizes = [8, 128], strides = [1, 1]} : vector<8x512xf32> to vector<8x128xf32>
    %520 = math.tanh %519 : vector<8x128xf32>
    %521 = vector.extract_strided_slice %506 {offsets = [0, 384], sizes = [8, 128], strides = [1, 1]} : vector<8x512xf32> to vector<8x128xf32>
    %522 = arith.negf %521 : vector<8x128xf32>
    %523 = math.exp %522 : vector<8x128xf32>
    %cst_132 = arith.constant 1.000000e+00 : f32
    %524 = vector.broadcast %cst_132 : f32 to vector<8x128xf32>
    %525 = arith.addf %524, %523 : vector<8x128xf32>
    %526 = arith.divf %524, %525 : vector<8x128xf32>
    %527 = arith.mulf %518, %489 : vector<8x128xf32>
    %528 = arith.mulf %512, %520 : vector<8x128xf32>
    %529 = arith.addf %527, %528 : vector<8x128xf32>
    %530 = math.tanh %529 : vector<8x128xf32>
    %531 = arith.mulf %526, %530 : vector<8x128xf32>
    %532 = vector.broadcast %c2_i32_126 : i32 to vector<8x1xi32>
    %533 = arith.cmpi slt, %532, %1 : vector<8x1xi32>
    %534 = vector.shape_cast %533 : vector<8x1xi1> to vector<8x1xi1>
    %535 = vector.broadcast %534 : vector<8x1xi1> to vector<8x128xi1>
    %536 = arith.select %535, %529, %489 : vector<8x128xi1>, vector<8x128xf32>
    %537 = vector.shape_cast %533 : vector<8x1xi1> to vector<8x1xi1>
    %538 = vector.broadcast %537 : vector<8x1xi1> to vector<8x128xi1>
    %539 = arith.select %538, %531, %492 : vector<8x128xi1>, vector<8x128xf32>
    %cst_133 = arith.constant 0.000000e+00 : f32
    %540 = vector.shape_cast %533 : vector<8x1xi1> to vector<8x1xi1>
    %541 = vector.broadcast %540 : vector<8x1xi1> to vector<8x128xi1>
    %542 = vector.broadcast %cst_133 : f32 to vector<8x128xf32>
    %543 = arith.select %541, %531, %542 : vector<8x128xi1>, vector<8x128xf32>
    %544 = arith.index_cast %c2_i32_126 : i32 to index
    %c0_134 = arith.constant 0 : index
    %c0_135 = arith.constant 0 : index
    %545 = vector.load %arg14[%544, %c0_134, %c0_135] : memref<8x8x128xf32, #tpu.memory_space<vmem>>, vector<1x8x128xf32>
    %546 = vector.shape_cast %545 : vector<1x8x128xf32> to vector<8x128xf32>
    %547 = vector.shape_cast %543 : vector<8x128xf32> to vector<1x8x128xf32>
    tpu.vector_store %arg14[%544, %c0_134, %c0_135], %547 {strides = array<i32>} : memref<8x8x128xf32, #tpu.memory_space<vmem>>, vector<1x8x128xf32>,
    %c3_i32_136 = arith.constant 3 : i32
    %548 = arith.index_cast %c3_i32_136 : i32 to index
    %c0_137 = arith.constant 0 : index
    %c0_138 = arith.constant 0 : index
    %549 = vector.load %arg15[%548, %c0_137, %c0_138] : memref<8x8x512xf32, #tpu.memory_space<vmem>>, vector<1x8x512xf32>
    %550 = vector.shape_cast %549 : vector<1x8x512xf32> to vector<8x512xf32>
    %551 = arith.truncf %539 : vector<8x128xf32> to vector<8x128xbf16>
    %cst_139 = arith.constant dense<0.000000e+00> : vector<8x512xf32>
    %552 = tpu.matmul %551, %397, %cst_139 {dimension_numbers = #tpu.dot_dimension_numbers<[1], [0], [0], [1], [0, 0, 1, 1], [], []>} : vector<8x128xbf16>, vector<128x512xbf16>, vector<8x512xf32> -> vector<8x512xf32>
    %553 = arith.addf %550, %552 : vector<8x512xf32>
    %554 = vector.extract_strided_slice %553 {offsets = [0, 0], sizes = [8, 128], strides = [1, 1]} : vector<8x512xf32> to vector<8x128xf32>
    %555 = arith.negf %554 : vector<8x128xf32>
    %556 = math.exp %555 : vector<8x128xf32>
    %cst_140 = arith.constant 1.000000e+00 : f32
    %557 = vector.broadcast %cst_140 : f32 to vector<8x128xf32>
    %558 = arith.addf %557, %556 : vector<8x128xf32>
    %559 = arith.divf %557, %558 : vector<8x128xf32>
    %560 = vector.extract_strided_slice %553 {offsets = [0, 128], sizes = [8, 128], strides = [1, 1]} : vector<8x512xf32> to vector<8x128xf32>
    %561 = arith.negf %560 : vector<8x128xf32>
    %562 = math.exp %561 : vector<8x128xf32>
    %cst_141 = arith.constant 1.000000e+00 : f32
    %563 = vector.broadcast %cst_141 : f32 to vector<8x128xf32>
    %564 = arith.addf %563, %562 : vector<8x128xf32>
    %565 = arith.divf %563, %564 : vector<8x128xf32>
    %566 = vector.extract_strided_slice %553 {offsets = [0, 256], sizes = [8, 128], strides = [1, 1]} : vector<8x512xf32> to vector<8x128xf32>
    %567 = math.tanh %566 : vector<8x128xf32>
    %568 = vector.extract_strided_slice %553 {offsets = [0, 384], sizes = [8, 128], strides = [1, 1]} : vector<8x512xf32> to vector<8x128xf32>
    %569 = arith.negf %568 : vector<8x128xf32>
    %570 = math.exp %569 : vector<8x128xf32>
    %cst_142 = arith.constant 1.000000e+00 : f32
    %571 = vector.broadcast %cst_142 : f32 to vector<8x128xf32>
    %572 = arith.addf %571, %570 : vector<8x128xf32>
    %573 = arith.divf %571, %572 : vector<8x128xf32>
    %574 = arith.mulf %565, %536 : vector<8x128xf32>
    %575 = arith.mulf %559, %567 : vector<8x128xf32>
    %576 = arith.addf %574, %575 : vector<8x128xf32>
    %577 = math.tanh %576 : vector<8x128xf32>
    %578 = arith.mulf %573, %577 : vector<8x128xf32>
    %579 = vector.broadcast %c3_i32_136 : i32 to vector<8x1xi32>
    %580 = arith.cmpi slt, %579, %1 : vector<8x1xi32>
    %581 = vector.shape_cast %580 : vector<8x1xi1> to vector<8x1xi1>
    %582 = vector.broadcast %581 : vector<8x1xi1> to vector<8x128xi1>
    %583 = arith.select %582, %576, %536 : vector<8x128xi1>, vector<8x128xf32>
    %584 = vector.shape_cast %580 : vector<8x1xi1> to vector<8x1xi1>
    %585 = vector.broadcast %584 : vector<8x1xi1> to vector<8x128xi1>
    %586 = arith.select %585, %578, %539 : vector<8x128xi1>, vector<8x128xf32>
    %cst_143 = arith.constant 0.000000e+00 : f32
    %587 = vector.shape_cast %580 : vector<8x1xi1> to vector<8x1xi1>
    %588 = vector.broadcast %587 : vector<8x1xi1> to vector<8x128xi1>
    %589 = vector.broadcast %cst_143 : f32 to vector<8x128xf32>
    %590 = arith.select %588, %578, %589 : vector<8x128xi1>, vector<8x128xf32>
    %591 = arith.index_cast %c3_i32_136 : i32 to index
    %c0_144 = arith.constant 0 : index
    %c0_145 = arith.constant 0 : index
    %592 = vector.load %arg14[%591, %c0_144, %c0_145] : memref<8x8x128xf32, #tpu.memory_space<vmem>>, vector<1x8x128xf32>
    %593 = vector.shape_cast %592 : vector<1x8x128xf32> to vector<8x128xf32>
    %594 = vector.shape_cast %590 : vector<8x128xf32> to vector<1x8x128xf32>
    tpu.vector_store %arg14[%591, %c0_144, %c0_145], %594 {strides = array<i32>} : memref<8x8x128xf32, #tpu.memory_space<vmem>>, vector<1x8x128xf32>,
    %c4_i32_146 = arith.constant 4 : i32
    %595 = arith.index_cast %c4_i32_146 : i32 to index
    %c0_147 = arith.constant 0 : index
    %c0_148 = arith.constant 0 : index
    %596 = vector.load %arg15[%595, %c0_147, %c0_148] : memref<8x8x512xf32, #tpu.memory_space<vmem>>, vector<1x8x512xf32>
    %597 = vector.shape_cast %596 : vector<1x8x512xf32> to vector<8x512xf32>
    %598 = arith.truncf %586 : vector<8x128xf32> to vector<8x128xbf16>
    %cst_149 = arith.constant dense<0.000000e+00> : vector<8x512xf32>
    %599 = tpu.matmul %598, %397, %cst_149 {dimension_numbers = #tpu.dot_dimension_numbers<[1], [0], [0], [1], [0, 0, 1, 1], [], []>} : vector<8x128xbf16>, vector<128x512xbf16>, vector<8x512xf32> -> vector<8x512xf32>
    %600 = arith.addf %597, %599 : vector<8x512xf32>
    %601 = vector.extract_strided_slice %600 {offsets = [0, 0], sizes = [8, 128], strides = [1, 1]} : vector<8x512xf32> to vector<8x128xf32>
    %602 = arith.negf %601 : vector<8x128xf32>
    %603 = math.exp %602 : vector<8x128xf32>
    %cst_150 = arith.constant 1.000000e+00 : f32
    %604 = vector.broadcast %cst_150 : f32 to vector<8x128xf32>
    %605 = arith.addf %604, %603 : vector<8x128xf32>
    %606 = arith.divf %604, %605 : vector<8x128xf32>
    %607 = vector.extract_strided_slice %600 {offsets = [0, 128], sizes = [8, 128], strides = [1, 1]} : vector<8x512xf32> to vector<8x128xf32>
    %608 = arith.negf %607 : vector<8x128xf32>
    %609 = math.exp %608 : vector<8x128xf32>
    %cst_151 = arith.constant 1.000000e+00 : f32
    %610 = vector.broadcast %cst_151 : f32 to vector<8x128xf32>
    %611 = arith.addf %610, %609 : vector<8x128xf32>
    %612 = arith.divf %610, %611 : vector<8x128xf32>
    %613 = vector.extract_strided_slice %600 {offsets = [0, 256], sizes = [8, 128], strides = [1, 1]} : vector<8x512xf32> to vector<8x128xf32>
    %614 = math.tanh %613 : vector<8x128xf32>
    %615 = vector.extract_strided_slice %600 {offsets = [0, 384], sizes = [8, 128], strides = [1, 1]} : vector<8x512xf32> to vector<8x128xf32>
    %616 = arith.negf %615 : vector<8x128xf32>
    %617 = math.exp %616 : vector<8x128xf32>
    %cst_152 = arith.constant 1.000000e+00 : f32
    %618 = vector.broadcast %cst_152 : f32 to vector<8x128xf32>
    %619 = arith.addf %618, %617 : vector<8x128xf32>
    %620 = arith.divf %618, %619 : vector<8x128xf32>
    %621 = arith.mulf %612, %583 : vector<8x128xf32>
    %622 = arith.mulf %606, %614 : vector<8x128xf32>
    %623 = arith.addf %621, %622 : vector<8x128xf32>
    %624 = math.tanh %623 : vector<8x128xf32>
    %625 = arith.mulf %620, %624 : vector<8x128xf32>
    %626 = vector.broadcast %c4_i32_146 : i32 to vector<8x1xi32>
    %627 = arith.cmpi slt, %626, %1 : vector<8x1xi32>
    %628 = vector.shape_cast %627 : vector<8x1xi1> to vector<8x1xi1>
    %629 = vector.broadcast %628 : vector<8x1xi1> to vector<8x128xi1>
    %630 = arith.select %629, %623, %583 : vector<8x128xi1>, vector<8x128xf32>
    %631 = vector.shape_cast %627 : vector<8x1xi1> to vector<8x1xi1>
    %632 = vector.broadcast %631 : vector<8x1xi1> to vector<8x128xi1>
    %633 = arith.select %632, %625, %586 : vector<8x128xi1>, vector<8x128xf32>
    %cst_153 = arith.constant 0.000000e+00 : f32
    %634 = vector.shape_cast %627 : vector<8x1xi1> to vector<8x1xi1>
    %635 = vector.broadcast %634 : vector<8x1xi1> to vector<8x128xi1>
    %636 = vector.broadcast %cst_153 : f32 to vector<8x128xf32>
    %637 = arith.select %635, %625, %636 : vector<8x128xi1>, vector<8x128xf32>
    %638 = arith.index_cast %c4_i32_146 : i32 to index
    %c0_154 = arith.constant 0 : index
    %c0_155 = arith.constant 0 : index
    %639 = vector.load %arg14[%638, %c0_154, %c0_155] : memref<8x8x128xf32, #tpu.memory_space<vmem>>, vector<1x8x128xf32>
    %640 = vector.shape_cast %639 : vector<1x8x128xf32> to vector<8x128xf32>
    %641 = vector.shape_cast %637 : vector<8x128xf32> to vector<1x8x128xf32>
    tpu.vector_store %arg14[%638, %c0_154, %c0_155], %641 {strides = array<i32>} : memref<8x8x128xf32, #tpu.memory_space<vmem>>, vector<1x8x128xf32>,
    %c5_i32_156 = arith.constant 5 : i32
    %642 = arith.index_cast %c5_i32_156 : i32 to index
    %c0_157 = arith.constant 0 : index
    %c0_158 = arith.constant 0 : index
    %643 = vector.load %arg15[%642, %c0_157, %c0_158] : memref<8x8x512xf32, #tpu.memory_space<vmem>>, vector<1x8x512xf32>
    %644 = vector.shape_cast %643 : vector<1x8x512xf32> to vector<8x512xf32>
    %645 = arith.truncf %633 : vector<8x128xf32> to vector<8x128xbf16>
    %cst_159 = arith.constant dense<0.000000e+00> : vector<8x512xf32>
    %646 = tpu.matmul %645, %397, %cst_159 {dimension_numbers = #tpu.dot_dimension_numbers<[1], [0], [0], [1], [0, 0, 1, 1], [], []>} : vector<8x128xbf16>, vector<128x512xbf16>, vector<8x512xf32> -> vector<8x512xf32>
    %647 = arith.addf %644, %646 : vector<8x512xf32>
    %648 = vector.extract_strided_slice %647 {offsets = [0, 0], sizes = [8, 128], strides = [1, 1]} : vector<8x512xf32> to vector<8x128xf32>
    %649 = arith.negf %648 : vector<8x128xf32>
    %650 = math.exp %649 : vector<8x128xf32>
    %cst_160 = arith.constant 1.000000e+00 : f32
    %651 = vector.broadcast %cst_160 : f32 to vector<8x128xf32>
    %652 = arith.addf %651, %650 : vector<8x128xf32>
    %653 = arith.divf %651, %652 : vector<8x128xf32>
    %654 = vector.extract_strided_slice %647 {offsets = [0, 128], sizes = [8, 128], strides = [1, 1]} : vector<8x512xf32> to vector<8x128xf32>
    %655 = arith.negf %654 : vector<8x128xf32>
    %656 = math.exp %655 : vector<8x128xf32>
    %cst_161 = arith.constant 1.000000e+00 : f32
    %657 = vector.broadcast %cst_161 : f32 to vector<8x128xf32>
    %658 = arith.addf %657, %656 : vector<8x128xf32>
    %659 = arith.divf %657, %658 : vector<8x128xf32>
    %660 = vector.extract_strided_slice %647 {offsets = [0, 256], sizes = [8, 128], strides = [1, 1]} : vector<8x512xf32> to vector<8x128xf32>
    %661 = math.tanh %660 : vector<8x128xf32>
    %662 = vector.extract_strided_slice %647 {offsets = [0, 384], sizes = [8, 128], strides = [1, 1]} : vector<8x512xf32> to vector<8x128xf32>
    %663 = arith.negf %662 : vector<8x128xf32>
    %664 = math.exp %663 : vector<8x128xf32>
    %cst_162 = arith.constant 1.000000e+00 : f32
    %665 = vector.broadcast %cst_162 : f32 to vector<8x128xf32>
    %666 = arith.addf %665, %664 : vector<8x128xf32>
    %667 = arith.divf %665, %666 : vector<8x128xf32>
    %668 = arith.mulf %659, %630 : vector<8x128xf32>
    %669 = arith.mulf %653, %661 : vector<8x128xf32>
    %670 = arith.addf %668, %669 : vector<8x128xf32>
    %671 = math.tanh %670 : vector<8x128xf32>
    %672 = arith.mulf %667, %671 : vector<8x128xf32>
    %673 = vector.broadcast %c5_i32_156 : i32 to vector<8x1xi32>
    %674 = arith.cmpi slt, %673, %1 : vector<8x1xi32>
    %675 = vector.shape_cast %674 : vector<8x1xi1> to vector<8x1xi1>
    %676 = vector.broadcast %675 : vector<8x1xi1> to vector<8x128xi1>
    %677 = arith.select %676, %670, %630 : vector<8x128xi1>, vector<8x128xf32>
    %678 = vector.shape_cast %674 : vector<8x1xi1> to vector<8x1xi1>
    %679 = vector.broadcast %678 : vector<8x1xi1> to vector<8x128xi1>
    %680 = arith.select %679, %672, %633 : vector<8x128xi1>, vector<8x128xf32>
    %cst_163 = arith.constant 0.000000e+00 : f32
    %681 = vector.shape_cast %674 : vector<8x1xi1> to vector<8x1xi1>
    %682 = vector.broadcast %681 : vector<8x1xi1> to vector<8x128xi1>
    %683 = vector.broadcast %cst_163 : f32 to vector<8x128xf32>
    %684 = arith.select %682, %672, %683 : vector<8x128xi1>, vector<8x128xf32>
    %685 = arith.index_cast %c5_i32_156 : i32 to index
    %c0_164 = arith.constant 0 : index
    %c0_165 = arith.constant 0 : index
    %686 = vector.load %arg14[%685, %c0_164, %c0_165] : memref<8x8x128xf32, #tpu.memory_space<vmem>>, vector<1x8x128xf32>
    %687 = vector.shape_cast %686 : vector<1x8x128xf32> to vector<8x128xf32>
    %688 = vector.shape_cast %684 : vector<8x128xf32> to vector<1x8x128xf32>
    tpu.vector_store %arg14[%685, %c0_164, %c0_165], %688 {strides = array<i32>} : memref<8x8x128xf32, #tpu.memory_space<vmem>>, vector<1x8x128xf32>,
    %c6_i32_166 = arith.constant 6 : i32
    %689 = arith.index_cast %c6_i32_166 : i32 to index
    %c0_167 = arith.constant 0 : index
    %c0_168 = arith.constant 0 : index
    %690 = vector.load %arg15[%689, %c0_167, %c0_168] : memref<8x8x512xf32, #tpu.memory_space<vmem>>, vector<1x8x512xf32>
    %691 = vector.shape_cast %690 : vector<1x8x512xf32> to vector<8x512xf32>
    %692 = arith.truncf %680 : vector<8x128xf32> to vector<8x128xbf16>
    %cst_169 = arith.constant dense<0.000000e+00> : vector<8x512xf32>
    %693 = tpu.matmul %692, %397, %cst_169 {dimension_numbers = #tpu.dot_dimension_numbers<[1], [0], [0], [1], [0, 0, 1, 1], [], []>} : vector<8x128xbf16>, vector<128x512xbf16>, vector<8x512xf32> -> vector<8x512xf32>
    %694 = arith.addf %691, %693 : vector<8x512xf32>
    %695 = vector.extract_strided_slice %694 {offsets = [0, 0], sizes = [8, 128], strides = [1, 1]} : vector<8x512xf32> to vector<8x128xf32>
    %696 = arith.negf %695 : vector<8x128xf32>
    %697 = math.exp %696 : vector<8x128xf32>
    %cst_170 = arith.constant 1.000000e+00 : f32
    %698 = vector.broadcast %cst_170 : f32 to vector<8x128xf32>
    %699 = arith.addf %698, %697 : vector<8x128xf32>
    %700 = arith.divf %698, %699 : vector<8x128xf32>
    %701 = vector.extract_strided_slice %694 {offsets = [0, 128], sizes = [8, 128], strides = [1, 1]} : vector<8x512xf32> to vector<8x128xf32>
    %702 = arith.negf %701 : vector<8x128xf32>
    %703 = math.exp %702 : vector<8x128xf32>
    %cst_171 = arith.constant 1.000000e+00 : f32
    %704 = vector.broadcast %cst_171 : f32 to vector<8x128xf32>
    %705 = arith.addf %704, %703 : vector<8x128xf32>
    %706 = arith.divf %704, %705 : vector<8x128xf32>
    %707 = vector.extract_strided_slice %694 {offsets = [0, 256], sizes = [8, 128], strides = [1, 1]} : vector<8x512xf32> to vector<8x128xf32>
    %708 = math.tanh %707 : vector<8x128xf32>
    %709 = vector.extract_strided_slice %694 {offsets = [0, 384], sizes = [8, 128], strides = [1, 1]} : vector<8x512xf32> to vector<8x128xf32>
    %710 = arith.negf %709 : vector<8x128xf32>
    %711 = math.exp %710 : vector<8x128xf32>
    %cst_172 = arith.constant 1.000000e+00 : f32
    %712 = vector.broadcast %cst_172 : f32 to vector<8x128xf32>
    %713 = arith.addf %712, %711 : vector<8x128xf32>
    %714 = arith.divf %712, %713 : vector<8x128xf32>
    %715 = arith.mulf %706, %677 : vector<8x128xf32>
    %716 = arith.mulf %700, %708 : vector<8x128xf32>
    %717 = arith.addf %715, %716 : vector<8x128xf32>
    %718 = math.tanh %717 : vector<8x128xf32>
    %719 = arith.mulf %714, %718 : vector<8x128xf32>
    %720 = vector.broadcast %c6_i32_166 : i32 to vector<8x1xi32>
    %721 = arith.cmpi slt, %720, %1 : vector<8x1xi32>
    %722 = vector.shape_cast %721 : vector<8x1xi1> to vector<8x1xi1>
    %723 = vector.broadcast %722 : vector<8x1xi1> to vector<8x128xi1>
    %724 = arith.select %723, %717, %677 : vector<8x128xi1>, vector<8x128xf32>
    %725 = vector.shape_cast %721 : vector<8x1xi1> to vector<8x1xi1>
    %726 = vector.broadcast %725 : vector<8x1xi1> to vector<8x128xi1>
    %727 = arith.select %726, %719, %680 : vector<8x128xi1>, vector<8x128xf32>
    %cst_173 = arith.constant 0.000000e+00 : f32
    %728 = vector.shape_cast %721 : vector<8x1xi1> to vector<8x1xi1>
    %729 = vector.broadcast %728 : vector<8x1xi1> to vector<8x128xi1>
    %730 = vector.broadcast %cst_173 : f32 to vector<8x128xf32>
    %731 = arith.select %729, %719, %730 : vector<8x128xi1>, vector<8x128xf32>
    %732 = arith.index_cast %c6_i32_166 : i32 to index
    %c0_174 = arith.constant 0 : index
    %c0_175 = arith.constant 0 : index
    %733 = vector.load %arg14[%732, %c0_174, %c0_175] : memref<8x8x128xf32, #tpu.memory_space<vmem>>, vector<1x8x128xf32>
    %734 = vector.shape_cast %733 : vector<1x8x128xf32> to vector<8x128xf32>
    %735 = vector.shape_cast %731 : vector<8x128xf32> to vector<1x8x128xf32>
    tpu.vector_store %arg14[%732, %c0_174, %c0_175], %735 {strides = array<i32>} : memref<8x8x128xf32, #tpu.memory_space<vmem>>, vector<1x8x128xf32>,
    %c7_i32_176 = arith.constant 7 : i32
    %736 = arith.index_cast %c7_i32_176 : i32 to index
    %c0_177 = arith.constant 0 : index
    %c0_178 = arith.constant 0 : index
    %737 = vector.load %arg15[%736, %c0_177, %c0_178] : memref<8x8x512xf32, #tpu.memory_space<vmem>>, vector<1x8x512xf32>
    %738 = vector.shape_cast %737 : vector<1x8x512xf32> to vector<8x512xf32>
    %739 = arith.truncf %727 : vector<8x128xf32> to vector<8x128xbf16>
    %cst_179 = arith.constant dense<0.000000e+00> : vector<8x512xf32>
    %740 = tpu.matmul %739, %397, %cst_179 {dimension_numbers = #tpu.dot_dimension_numbers<[1], [0], [0], [1], [0, 0, 1, 1], [], []>} : vector<8x128xbf16>, vector<128x512xbf16>, vector<8x512xf32> -> vector<8x512xf32>
    %741 = arith.addf %738, %740 : vector<8x512xf32>
    %742 = vector.extract_strided_slice %741 {offsets = [0, 0], sizes = [8, 128], strides = [1, 1]} : vector<8x512xf32> to vector<8x128xf32>
    %743 = arith.negf %742 : vector<8x128xf32>
    %744 = math.exp %743 : vector<8x128xf32>
    %cst_180 = arith.constant 1.000000e+00 : f32
    %745 = vector.broadcast %cst_180 : f32 to vector<8x128xf32>
    %746 = arith.addf %745, %744 : vector<8x128xf32>
    %747 = arith.divf %745, %746 : vector<8x128xf32>
    %748 = vector.extract_strided_slice %741 {offsets = [0, 128], sizes = [8, 128], strides = [1, 1]} : vector<8x512xf32> to vector<8x128xf32>
    %749 = arith.negf %748 : vector<8x128xf32>
    %750 = math.exp %749 : vector<8x128xf32>
    %cst_181 = arith.constant 1.000000e+00 : f32
    %751 = vector.broadcast %cst_181 : f32 to vector<8x128xf32>
    %752 = arith.addf %751, %750 : vector<8x128xf32>
    %753 = arith.divf %751, %752 : vector<8x128xf32>
    %754 = vector.extract_strided_slice %741 {offsets = [0, 256], sizes = [8, 128], strides = [1, 1]} : vector<8x512xf32> to vector<8x128xf32>
    %755 = math.tanh %754 : vector<8x128xf32>
    %756 = vector.extract_strided_slice %741 {offsets = [0, 384], sizes = [8, 128], strides = [1, 1]} : vector<8x512xf32> to vector<8x128xf32>
    %757 = arith.negf %756 : vector<8x128xf32>
    %758 = math.exp %757 : vector<8x128xf32>
    %cst_182 = arith.constant 1.000000e+00 : f32
    %759 = vector.broadcast %cst_182 : f32 to vector<8x128xf32>
    %760 = arith.addf %759, %758 : vector<8x128xf32>
    %761 = arith.divf %759, %760 : vector<8x128xf32>
    %762 = arith.mulf %753, %724 : vector<8x128xf32>
    %763 = arith.mulf %747, %755 : vector<8x128xf32>
    %764 = arith.addf %762, %763 : vector<8x128xf32>
    %765 = math.tanh %764 : vector<8x128xf32>
    %766 = arith.mulf %761, %765 : vector<8x128xf32>
    %767 = vector.broadcast %c7_i32_176 : i32 to vector<8x1xi32>
    %768 = arith.cmpi slt, %767, %1 : vector<8x1xi32>
    %769 = vector.shape_cast %768 : vector<8x1xi1> to vector<8x1xi1>
    %770 = vector.broadcast %769 : vector<8x1xi1> to vector<8x128xi1>
    %771 = arith.select %770, %764, %724 : vector<8x128xi1>, vector<8x128xf32>
    %772 = vector.shape_cast %768 : vector<8x1xi1> to vector<8x1xi1>
    %773 = vector.broadcast %772 : vector<8x1xi1> to vector<8x128xi1>
    %774 = arith.select %773, %766, %727 : vector<8x128xi1>, vector<8x128xf32>
    %cst_183 = arith.constant 0.000000e+00 : f32
    %775 = vector.shape_cast %768 : vector<8x1xi1> to vector<8x1xi1>
    %776 = vector.broadcast %775 : vector<8x1xi1> to vector<8x128xi1>
    %777 = vector.broadcast %cst_183 : f32 to vector<8x128xf32>
    %778 = arith.select %776, %766, %777 : vector<8x128xi1>, vector<8x128xf32>
    %779 = arith.index_cast %c7_i32_176 : i32 to index
    %c0_184 = arith.constant 0 : index
    %c0_185 = arith.constant 0 : index
    %780 = vector.load %arg14[%779, %c0_184, %c0_185] : memref<8x8x128xf32, #tpu.memory_space<vmem>>, vector<1x8x128xf32>
    %781 = vector.shape_cast %780 : vector<1x8x128xf32> to vector<8x128xf32>
    %782 = vector.shape_cast %778 : vector<8x128xf32> to vector<1x8x128xf32>
    tpu.vector_store %arg14[%779, %c0_184, %c0_185], %782 {strides = array<i32>} : memref<8x8x128xf32, #tpu.memory_space<vmem>>, vector<1x8x128xf32>,
    %c8_i32_186 = arith.constant 8 : i32
    %c0_187 = arith.constant 0 : index
    %c0_188 = arith.constant 0 : index
    %c0_189 = arith.constant 0 : index
    %783 = vector.load %arg2[%c0_187, %c0_188, %c0_189] : memref<8x8x128xf32, #tpu.memory_space<vmem>>, vector<8x8x128xf32>
    %c0_190 = arith.constant 0 : index
    %c0_191 = arith.constant 0 : index
    %c0_192 = arith.constant 0 : index
    %784 = vector.load %arg8[%c0_190, %c0_191, %c0_192] : memref<2x128x512xbf16, #tpu.memory_space<vmem>>, vector<1x128x512xbf16>
    %785 = vector.shape_cast %784 : vector<1x128x512xbf16> to vector<128x512xbf16>
    %c0_193 = arith.constant 0 : index
    %c0_194 = arith.constant 0 : index
    %c0_195 = arith.constant 0 : index
    %786 = vector.load %arg9[%c0_193, %c0_194, %c0_195] : memref<2x128x512xbf16, #tpu.memory_space<vmem>>, vector<1x128x512xbf16>
    %787 = vector.shape_cast %786 : vector<1x128x512xbf16> to vector<128x512xbf16>
    %c0_196 = arith.constant 0 : index
    %c0_197 = arith.constant 0 : index
    %c0_198 = arith.constant 0 : index
    %788 = vector.load %arg10[%c0_196, %c0_197, %c0_198] : memref<2x1x512xf32, #tpu.memory_space<vmem>>, vector<1x1x512xf32>
    %789 = vector.shape_cast %788 : vector<1x1x512xf32> to vector<1x512xf32>
    %790 = vector.shape_cast %783 : vector<8x8x128xf32> to vector<64x128xf32>
    %791 = arith.truncf %790 : vector<64x128xf32> to vector<64x128xbf16>
    %cst_199 = arith.constant dense<0.000000e+00> : vector<64x512xf32>
    %792 = tpu.matmul %791, %785, %cst_199 {dimension_numbers = #tpu.dot_dimension_numbers<[1], [0], [0], [1], [0, 0, 1, 1], [], []>} : vector<64x128xbf16>, vector<128x512xbf16>, vector<64x512xf32> -> vector<64x512xf32>
    %793 = vector.broadcast %789 : vector<1x512xf32> to vector<64x512xf32>
    %794 = arith.addf %792, %793 : vector<64x512xf32>
    %795 = vector.shape_cast %794 : vector<64x512xf32> to vector<8x8x512xf32>
    %c0_200 = arith.constant 0 : index
    %c0_201 = arith.constant 0 : index
    %c0_202 = arith.constant 0 : index
    %796 = vector.load %arg15[%c0_200, %c0_201, %c0_202] : memref<8x8x512xf32, #tpu.memory_space<vmem>>, vector<8x8x512xf32>
    tpu.vector_store %arg15[%c0_200, %c0_201, %c0_202], %795 {strides = array<i32>} : memref<8x8x512xf32, #tpu.memory_space<vmem>>, vector<8x8x512xf32>,
    %c0_i32_203 = arith.constant 0 : i32
    %797 = arith.index_cast %c0_i32_203 : i32 to index
    %c0_204 = arith.constant 0 : index
    %c0_205 = arith.constant 0 : index
    %798 = vector.load %arg15[%797, %c0_204, %c0_205] : memref<8x8x512xf32, #tpu.memory_space<vmem>>, vector<1x8x512xf32>
    %799 = vector.shape_cast %798 : vector<1x8x512xf32> to vector<8x512xf32>
    %800 = arith.truncf %384 : vector<8x128xf32> to vector<8x128xbf16>
    %cst_206 = arith.constant dense<0.000000e+00> : vector<8x512xf32>
    %801 = tpu.matmul %800, %787, %cst_206 {dimension_numbers = #tpu.dot_dimension_numbers<[1], [0], [0], [1], [0, 0, 1, 1], [], []>} : vector<8x128xbf16>, vector<128x512xbf16>, vector<8x512xf32> -> vector<8x512xf32>
    %802 = arith.addf %799, %801 : vector<8x512xf32>
    %803 = vector.extract_strided_slice %802 {offsets = [0, 0], sizes = [8, 128], strides = [1, 1]} : vector<8x512xf32> to vector<8x128xf32>
    %804 = arith.negf %803 : vector<8x128xf32>
    %805 = math.exp %804 : vector<8x128xf32>
    %cst_207 = arith.constant 1.000000e+00 : f32
    %806 = vector.broadcast %cst_207 : f32 to vector<8x128xf32>
    %807 = arith.addf %806, %805 : vector<8x128xf32>
    %808 = arith.divf %806, %807 : vector<8x128xf32>
    %809 = vector.extract_strided_slice %802 {offsets = [0, 128], sizes = [8, 128], strides = [1, 1]} : vector<8x512xf32> to vector<8x128xf32>
    %810 = arith.negf %809 : vector<8x128xf32>
    %811 = math.exp %810 : vector<8x128xf32>
    %cst_208 = arith.constant 1.000000e+00 : f32
    %812 = vector.broadcast %cst_208 : f32 to vector<8x128xf32>
    %813 = arith.addf %812, %811 : vector<8x128xf32>
    %814 = arith.divf %812, %813 : vector<8x128xf32>
    %815 = vector.extract_strided_slice %802 {offsets = [0, 256], sizes = [8, 128], strides = [1, 1]} : vector<8x512xf32> to vector<8x128xf32>
    %816 = math.tanh %815 : vector<8x128xf32>
    %817 = vector.extract_strided_slice %802 {offsets = [0, 384], sizes = [8, 128], strides = [1, 1]} : vector<8x512xf32> to vector<8x128xf32>
    %818 = arith.negf %817 : vector<8x128xf32>
    %819 = math.exp %818 : vector<8x128xf32>
    %cst_209 = arith.constant 1.000000e+00 : f32
    %820 = vector.broadcast %cst_209 : f32 to vector<8x128xf32>
    %821 = arith.addf %820, %819 : vector<8x128xf32>
    %822 = arith.divf %820, %821 : vector<8x128xf32>
    %823 = arith.mulf %814, %381 : vector<8x128xf32>
    %824 = arith.mulf %808, %816 : vector<8x128xf32>
    %825 = arith.addf %823, %824 : vector<8x128xf32>
    %826 = math.tanh %825 : vector<8x128xf32>
    %827 = arith.mulf %822, %826 : vector<8x128xf32>
    %828 = vector.broadcast %c0_i32_203 : i32 to vector<8x1xi32>
    %829 = arith.cmpi slt, %828, %2 : vector<8x1xi32>
    %830 = vector.shape_cast %829 : vector<8x1xi1> to vector<8x1xi1>
    %831 = vector.broadcast %830 : vector<8x1xi1> to vector<8x128xi1>
    %832 = arith.select %831, %825, %381 : vector<8x128xi1>, vector<8x128xf32>
    %833 = vector.shape_cast %829 : vector<8x1xi1> to vector<8x1xi1>
    %834 = vector.broadcast %833 : vector<8x1xi1> to vector<8x128xi1>
    %835 = arith.select %834, %827, %384 : vector<8x128xi1>, vector<8x128xf32>
    %cst_210 = arith.constant 0.000000e+00 : f32
    %836 = vector.shape_cast %829 : vector<8x1xi1> to vector<8x1xi1>
    %837 = vector.broadcast %836 : vector<8x1xi1> to vector<8x128xi1>
    %838 = vector.broadcast %cst_210 : f32 to vector<8x128xf32>
    %839 = arith.select %837, %827, %838 : vector<8x128xi1>, vector<8x128xf32>
    %840 = arith.index_cast %c0_i32_203 : i32 to index
    %c0_211 = arith.constant 0 : index
    %c0_212 = arith.constant 0 : index
    %841 = vector.load %arg14[%840, %c0_211, %c0_212] : memref<8x8x128xf32, #tpu.memory_space<vmem>>, vector<1x8x128xf32>
    %842 = vector.shape_cast %841 : vector<1x8x128xf32> to vector<8x128xf32>
    %843 = vector.shape_cast %839 : vector<8x128xf32> to vector<1x8x128xf32>
    tpu.vector_store %arg14[%840, %c0_211, %c0_212], %843 {strides = array<i32>} : memref<8x8x128xf32, #tpu.memory_space<vmem>>, vector<1x8x128xf32>,
    %c1_i32_213 = arith.constant 1 : i32
    %844 = arith.index_cast %c1_i32_213 : i32 to index
    %c0_214 = arith.constant 0 : index
    %c0_215 = arith.constant 0 : index
    %845 = vector.load %arg15[%844, %c0_214, %c0_215] : memref<8x8x512xf32, #tpu.memory_space<vmem>>, vector<1x8x512xf32>
    %846 = vector.shape_cast %845 : vector<1x8x512xf32> to vector<8x512xf32>
    %847 = arith.truncf %835 : vector<8x128xf32> to vector<8x128xbf16>
    %cst_216 = arith.constant dense<0.000000e+00> : vector<8x512xf32>
    %848 = tpu.matmul %847, %787, %cst_216 {dimension_numbers = #tpu.dot_dimension_numbers<[1], [0], [0], [1], [0, 0, 1, 1], [], []>} : vector<8x128xbf16>, vector<128x512xbf16>, vector<8x512xf32> -> vector<8x512xf32>
    %849 = arith.addf %846, %848 : vector<8x512xf32>
    %850 = vector.extract_strided_slice %849 {offsets = [0, 0], sizes = [8, 128], strides = [1, 1]} : vector<8x512xf32> to vector<8x128xf32>
    %851 = arith.negf %850 : vector<8x128xf32>
    %852 = math.exp %851 : vector<8x128xf32>
    %cst_217 = arith.constant 1.000000e+00 : f32
    %853 = vector.broadcast %cst_217 : f32 to vector<8x128xf32>
    %854 = arith.addf %853, %852 : vector<8x128xf32>
    %855 = arith.divf %853, %854 : vector<8x128xf32>
    %856 = vector.extract_strided_slice %849 {offsets = [0, 128], sizes = [8, 128], strides = [1, 1]} : vector<8x512xf32> to vector<8x128xf32>
    %857 = arith.negf %856 : vector<8x128xf32>
    %858 = math.exp %857 : vector<8x128xf32>
    %cst_218 = arith.constant 1.000000e+00 : f32
    %859 = vector.broadcast %cst_218 : f32 to vector<8x128xf32>
    %860 = arith.addf %859, %858 : vector<8x128xf32>
    %861 = arith.divf %859, %860 : vector<8x128xf32>
    %862 = vector.extract_strided_slice %849 {offsets = [0, 256], sizes = [8, 128], strides = [1, 1]} : vector<8x512xf32> to vector<8x128xf32>
    %863 = math.tanh %862 : vector<8x128xf32>
    %864 = vector.extract_strided_slice %849 {offsets = [0, 384], sizes = [8, 128], strides = [1, 1]} : vector<8x512xf32> to vector<8x128xf32>
    %865 = arith.negf %864 : vector<8x128xf32>
    %866 = math.exp %865 : vector<8x128xf32>
    %cst_219 = arith.constant 1.000000e+00 : f32
    %867 = vector.broadcast %cst_219 : f32 to vector<8x128xf32>
    %868 = arith.addf %867, %866 : vector<8x128xf32>
    %869 = arith.divf %867, %868 : vector<8x128xf32>
    %870 = arith.mulf %861, %832 : vector<8x128xf32>
    %871 = arith.mulf %855, %863 : vector<8x128xf32>
    %872 = arith.addf %870, %871 : vector<8x128xf32>
    %873 = math.tanh %872 : vector<8x128xf32>
    %874 = arith.mulf %869, %873 : vector<8x128xf32>
    %875 = vector.broadcast %c1_i32_213 : i32 to vector<8x1xi32>
    %876 = arith.cmpi slt, %875, %2 : vector<8x1xi32>
    %877 = vector.shape_cast %876 : vector<8x1xi1> to vector<8x1xi1>
    %878 = vector.broadcast %877 : vector<8x1xi1> to vector<8x128xi1>
    %879 = arith.select %878, %872, %832 : vector<8x128xi1>, vector<8x128xf32>
    %880 = vector.shape_cast %876 : vector<8x1xi1> to vector<8x1xi1>
    %881 = vector.broadcast %880 : vector<8x1xi1> to vector<8x128xi1>
    %882 = arith.select %881, %874, %835 : vector<8x128xi1>, vector<8x128xf32>
    %cst_220 = arith.constant 0.000000e+00 : f32
    %883 = vector.shape_cast %876 : vector<8x1xi1> to vector<8x1xi1>
    %884 = vector.broadcast %883 : vector<8x1xi1> to vector<8x128xi1>
    %885 = vector.broadcast %cst_220 : f32 to vector<8x128xf32>
    %886 = arith.select %884, %874, %885 : vector<8x128xi1>, vector<8x128xf32>
    %887 = arith.index_cast %c1_i32_213 : i32 to index
    %c0_221 = arith.constant 0 : index
    %c0_222 = arith.constant 0 : index
    %888 = vector.load %arg14[%887, %c0_221, %c0_222] : memref<8x8x128xf32, #tpu.memory_space<vmem>>, vector<1x8x128xf32>
    %889 = vector.shape_cast %888 : vector<1x8x128xf32> to vector<8x128xf32>
    %890 = vector.shape_cast %886 : vector<8x128xf32> to vector<1x8x128xf32>
    tpu.vector_store %arg14[%887, %c0_221, %c0_222], %890 {strides = array<i32>} : memref<8x8x128xf32, #tpu.memory_space<vmem>>, vector<1x8x128xf32>,
    %c2_i32_223 = arith.constant 2 : i32
    %891 = arith.index_cast %c2_i32_223 : i32 to index
    %c0_224 = arith.constant 0 : index
    %c0_225 = arith.constant 0 : index
    %892 = vector.load %arg15[%891, %c0_224, %c0_225] : memref<8x8x512xf32, #tpu.memory_space<vmem>>, vector<1x8x512xf32>
    %893 = vector.shape_cast %892 : vector<1x8x512xf32> to vector<8x512xf32>
    %894 = arith.truncf %882 : vector<8x128xf32> to vector<8x128xbf16>
    %cst_226 = arith.constant dense<0.000000e+00> : vector<8x512xf32>
    %895 = tpu.matmul %894, %787, %cst_226 {dimension_numbers = #tpu.dot_dimension_numbers<[1], [0], [0], [1], [0, 0, 1, 1], [], []>} : vector<8x128xbf16>, vector<128x512xbf16>, vector<8x512xf32> -> vector<8x512xf32>
    %896 = arith.addf %893, %895 : vector<8x512xf32>
    %897 = vector.extract_strided_slice %896 {offsets = [0, 0], sizes = [8, 128], strides = [1, 1]} : vector<8x512xf32> to vector<8x128xf32>
    %898 = arith.negf %897 : vector<8x128xf32>
    %899 = math.exp %898 : vector<8x128xf32>
    %cst_227 = arith.constant 1.000000e+00 : f32
    %900 = vector.broadcast %cst_227 : f32 to vector<8x128xf32>
    %901 = arith.addf %900, %899 : vector<8x128xf32>
    %902 = arith.divf %900, %901 : vector<8x128xf32>
    %903 = vector.extract_strided_slice %896 {offsets = [0, 128], sizes = [8, 128], strides = [1, 1]} : vector<8x512xf32> to vector<8x128xf32>
    %904 = arith.negf %903 : vector<8x128xf32>
    %905 = math.exp %904 : vector<8x128xf32>
    %cst_228 = arith.constant 1.000000e+00 : f32
    %906 = vector.broadcast %cst_228 : f32 to vector<8x128xf32>
    %907 = arith.addf %906, %905 : vector<8x128xf32>
    %908 = arith.divf %906, %907 : vector<8x128xf32>
    %909 = vector.extract_strided_slice %896 {offsets = [0, 256], sizes = [8, 128], strides = [1, 1]} : vector<8x512xf32> to vector<8x128xf32>
    %910 = math.tanh %909 : vector<8x128xf32>
    %911 = vector.extract_strided_slice %896 {offsets = [0, 384], sizes = [8, 128], strides = [1, 1]} : vector<8x512xf32> to vector<8x128xf32>
    %912 = arith.negf %911 : vector<8x128xf32>
    %913 = math.exp %912 : vector<8x128xf32>
    %cst_229 = arith.constant 1.000000e+00 : f32
    %914 = vector.broadcast %cst_229 : f32 to vector<8x128xf32>
    %915 = arith.addf %914, %913 : vector<8x128xf32>
    %916 = arith.divf %914, %915 : vector<8x128xf32>
    %917 = arith.mulf %908, %879 : vector<8x128xf32>
    %918 = arith.mulf %902, %910 : vector<8x128xf32>
    %919 = arith.addf %917, %918 : vector<8x128xf32>
    %920 = math.tanh %919 : vector<8x128xf32>
    %921 = arith.mulf %916, %920 : vector<8x128xf32>
    %922 = vector.broadcast %c2_i32_223 : i32 to vector<8x1xi32>
    %923 = arith.cmpi slt, %922, %2 : vector<8x1xi32>
    %924 = vector.shape_cast %923 : vector<8x1xi1> to vector<8x1xi1>
    %925 = vector.broadcast %924 : vector<8x1xi1> to vector<8x128xi1>
    %926 = arith.select %925, %919, %879 : vector<8x128xi1>, vector<8x128xf32>
    %927 = vector.shape_cast %923 : vector<8x1xi1> to vector<8x1xi1>
    %928 = vector.broadcast %927 : vector<8x1xi1> to vector<8x128xi1>
    %929 = arith.select %928, %921, %882 : vector<8x128xi1>, vector<8x128xf32>
    %cst_230 = arith.constant 0.000000e+00 : f32
    %930 = vector.shape_cast %923 : vector<8x1xi1> to vector<8x1xi1>
    %931 = vector.broadcast %930 : vector<8x1xi1> to vector<8x128xi1>
    %932 = vector.broadcast %cst_230 : f32 to vector<8x128xf32>
    %933 = arith.select %931, %921, %932 : vector<8x128xi1>, vector<8x128xf32>
    %934 = arith.index_cast %c2_i32_223 : i32 to index
    %c0_231 = arith.constant 0 : index
    %c0_232 = arith.constant 0 : index
    %935 = vector.load %arg14[%934, %c0_231, %c0_232] : memref<8x8x128xf32, #tpu.memory_space<vmem>>, vector<1x8x128xf32>
    %936 = vector.shape_cast %935 : vector<1x8x128xf32> to vector<8x128xf32>
    %937 = vector.shape_cast %933 : vector<8x128xf32> to vector<1x8x128xf32>
    tpu.vector_store %arg14[%934, %c0_231, %c0_232], %937 {strides = array<i32>} : memref<8x8x128xf32, #tpu.memory_space<vmem>>, vector<1x8x128xf32>,
    %c3_i32_233 = arith.constant 3 : i32
    %938 = arith.index_cast %c3_i32_233 : i32 to index
    %c0_234 = arith.constant 0 : index
    %c0_235 = arith.constant 0 : index
    %939 = vector.load %arg15[%938, %c0_234, %c0_235] : memref<8x8x512xf32, #tpu.memory_space<vmem>>, vector<1x8x512xf32>
    %940 = vector.shape_cast %939 : vector<1x8x512xf32> to vector<8x512xf32>
    %941 = arith.truncf %929 : vector<8x128xf32> to vector<8x128xbf16>
    %cst_236 = arith.constant dense<0.000000e+00> : vector<8x512xf32>
    %942 = tpu.matmul %941, %787, %cst_236 {dimension_numbers = #tpu.dot_dimension_numbers<[1], [0], [0], [1], [0, 0, 1, 1], [], []>} : vector<8x128xbf16>, vector<128x512xbf16>, vector<8x512xf32> -> vector<8x512xf32>
    %943 = arith.addf %940, %942 : vector<8x512xf32>
    %944 = vector.extract_strided_slice %943 {offsets = [0, 0], sizes = [8, 128], strides = [1, 1]} : vector<8x512xf32> to vector<8x128xf32>
    %945 = arith.negf %944 : vector<8x128xf32>
    %946 = math.exp %945 : vector<8x128xf32>
    %cst_237 = arith.constant 1.000000e+00 : f32
    %947 = vector.broadcast %cst_237 : f32 to vector<8x128xf32>
    %948 = arith.addf %947, %946 : vector<8x128xf32>
    %949 = arith.divf %947, %948 : vector<8x128xf32>
    %950 = vector.extract_strided_slice %943 {offsets = [0, 128], sizes = [8, 128], strides = [1, 1]} : vector<8x512xf32> to vector<8x128xf32>
    %951 = arith.negf %950 : vector<8x128xf32>
    %952 = math.exp %951 : vector<8x128xf32>
    %cst_238 = arith.constant 1.000000e+00 : f32
    %953 = vector.broadcast %cst_238 : f32 to vector<8x128xf32>
    %954 = arith.addf %953, %952 : vector<8x128xf32>
    %955 = arith.divf %953, %954 : vector<8x128xf32>
    %956 = vector.extract_strided_slice %943 {offsets = [0, 256], sizes = [8, 128], strides = [1, 1]} : vector<8x512xf32> to vector<8x128xf32>
    %957 = math.tanh %956 : vector<8x128xf32>
    %958 = vector.extract_strided_slice %943 {offsets = [0, 384], sizes = [8, 128], strides = [1, 1]} : vector<8x512xf32> to vector<8x128xf32>
    %959 = arith.negf %958 : vector<8x128xf32>
    %960 = math.exp %959 : vector<8x128xf32>
    %cst_239 = arith.constant 1.000000e+00 : f32
    %961 = vector.broadcast %cst_239 : f32 to vector<8x128xf32>
    %962 = arith.addf %961, %960 : vector<8x128xf32>
    %963 = arith.divf %961, %962 : vector<8x128xf32>
    %964 = arith.mulf %955, %926 : vector<8x128xf32>
    %965 = arith.mulf %949, %957 : vector<8x128xf32>
    %966 = arith.addf %964, %965 : vector<8x128xf32>
    %967 = math.tanh %966 : vector<8x128xf32>
    %968 = arith.mulf %963, %967 : vector<8x128xf32>
    %969 = vector.broadcast %c3_i32_233 : i32 to vector<8x1xi32>
    %970 = arith.cmpi slt, %969, %2 : vector<8x1xi32>
    %971 = vector.shape_cast %970 : vector<8x1xi1> to vector<8x1xi1>
    %972 = vector.broadcast %971 : vector<8x1xi1> to vector<8x128xi1>
    %973 = arith.select %972, %966, %926 : vector<8x128xi1>, vector<8x128xf32>
    %974 = vector.shape_cast %970 : vector<8x1xi1> to vector<8x1xi1>
    %975 = vector.broadcast %974 : vector<8x1xi1> to vector<8x128xi1>
    %976 = arith.select %975, %968, %929 : vector<8x128xi1>, vector<8x128xf32>
    %cst_240 = arith.constant 0.000000e+00 : f32
    %977 = vector.shape_cast %970 : vector<8x1xi1> to vector<8x1xi1>
    %978 = vector.broadcast %977 : vector<8x1xi1> to vector<8x128xi1>
    %979 = vector.broadcast %cst_240 : f32 to vector<8x128xf32>
    %980 = arith.select %978, %968, %979 : vector<8x128xi1>, vector<8x128xf32>
    %981 = arith.index_cast %c3_i32_233 : i32 to index
    %c0_241 = arith.constant 0 : index
    %c0_242 = arith.constant 0 : index
    %982 = vector.load %arg14[%981, %c0_241, %c0_242] : memref<8x8x128xf32, #tpu.memory_space<vmem>>, vector<1x8x128xf32>
    %983 = vector.shape_cast %982 : vector<1x8x128xf32> to vector<8x128xf32>
    %984 = vector.shape_cast %980 : vector<8x128xf32> to vector<1x8x128xf32>
    tpu.vector_store %arg14[%981, %c0_241, %c0_242], %984 {strides = array<i32>} : memref<8x8x128xf32, #tpu.memory_space<vmem>>, vector<1x8x128xf32>,
    %c4_i32_243 = arith.constant 4 : i32
    %985 = arith.index_cast %c4_i32_243 : i32 to index
    %c0_244 = arith.constant 0 : index
    %c0_245 = arith.constant 0 : index
    %986 = vector.load %arg15[%985, %c0_244, %c0_245] : memref<8x8x512xf32, #tpu.memory_space<vmem>>, vector<1x8x512xf32>
    %987 = vector.shape_cast %986 : vector<1x8x512xf32> to vector<8x512xf32>
    %988 = arith.truncf %976 : vector<8x128xf32> to vector<8x128xbf16>
    %cst_246 = arith.constant dense<0.000000e+00> : vector<8x512xf32>
    %989 = tpu.matmul %988, %787, %cst_246 {dimension_numbers = #tpu.dot_dimension_numbers<[1], [0], [0], [1], [0, 0, 1, 1], [], []>} : vector<8x128xbf16>, vector<128x512xbf16>, vector<8x512xf32> -> vector<8x512xf32>
    %990 = arith.addf %987, %989 : vector<8x512xf32>
    %991 = vector.extract_strided_slice %990 {offsets = [0, 0], sizes = [8, 128], strides = [1, 1]} : vector<8x512xf32> to vector<8x128xf32>
    %992 = arith.negf %991 : vector<8x128xf32>
    %993 = math.exp %992 : vector<8x128xf32>
    %cst_247 = arith.constant 1.000000e+00 : f32
    %994 = vector.broadcast %cst_247 : f32 to vector<8x128xf32>
    %995 = arith.addf %994, %993 : vector<8x128xf32>
    %996 = arith.divf %994, %995 : vector<8x128xf32>
    %997 = vector.extract_strided_slice %990 {offsets = [0, 128], sizes = [8, 128], strides = [1, 1]} : vector<8x512xf32> to vector<8x128xf32>
    %998 = arith.negf %997 : vector<8x128xf32>
    %999 = math.exp %998 : vector<8x128xf32>
    %cst_248 = arith.constant 1.000000e+00 : f32
    %1000 = vector.broadcast %cst_248 : f32 to vector<8x128xf32>
    %1001 = arith.addf %1000, %999 : vector<8x128xf32>
    %1002 = arith.divf %1000, %1001 : vector<8x128xf32>
    %1003 = vector.extract_strided_slice %990 {offsets = [0, 256], sizes = [8, 128], strides = [1, 1]} : vector<8x512xf32> to vector<8x128xf32>
    %1004 = math.tanh %1003 : vector<8x128xf32>
    %1005 = vector.extract_strided_slice %990 {offsets = [0, 384], sizes = [8, 128], strides = [1, 1]} : vector<8x512xf32> to vector<8x128xf32>
    %1006 = arith.negf %1005 : vector<8x128xf32>
    %1007 = math.exp %1006 : vector<8x128xf32>
    %cst_249 = arith.constant 1.000000e+00 : f32
    %1008 = vector.broadcast %cst_249 : f32 to vector<8x128xf32>
    %1009 = arith.addf %1008, %1007 : vector<8x128xf32>
    %1010 = arith.divf %1008, %1009 : vector<8x128xf32>
    %1011 = arith.mulf %1002, %973 : vector<8x128xf32>
    %1012 = arith.mulf %996, %1004 : vector<8x128xf32>
    %1013 = arith.addf %1011, %1012 : vector<8x128xf32>
    %1014 = math.tanh %1013 : vector<8x128xf32>
    %1015 = arith.mulf %1010, %1014 : vector<8x128xf32>
    %1016 = vector.broadcast %c4_i32_243 : i32 to vector<8x1xi32>
    %1017 = arith.cmpi slt, %1016, %2 : vector<8x1xi32>
    %1018 = vector.shape_cast %1017 : vector<8x1xi1> to vector<8x1xi1>
    %1019 = vector.broadcast %1018 : vector<8x1xi1> to vector<8x128xi1>
    %1020 = arith.select %1019, %1013, %973 : vector<8x128xi1>, vector<8x128xf32>
    %1021 = vector.shape_cast %1017 : vector<8x1xi1> to vector<8x1xi1>
    %1022 = vector.broadcast %1021 : vector<8x1xi1> to vector<8x128xi1>
    %1023 = arith.select %1022, %1015, %976 : vector<8x128xi1>, vector<8x128xf32>
    %cst_250 = arith.constant 0.000000e+00 : f32
    %1024 = vector.shape_cast %1017 : vector<8x1xi1> to vector<8x1xi1>
    %1025 = vector.broadcast %1024 : vector<8x1xi1> to vector<8x128xi1>
    %1026 = vector.broadcast %cst_250 : f32 to vector<8x128xf32>
    %1027 = arith.select %1025, %1015, %1026 : vector<8x128xi1>, vector<8x128xf32>
    %1028 = arith.index_cast %c4_i32_243 : i32 to index
    %c0_251 = arith.constant 0 : index
    %c0_252 = arith.constant 0 : index
    %1029 = vector.load %arg14[%1028, %c0_251, %c0_252] : memref<8x8x128xf32, #tpu.memory_space<vmem>>, vector<1x8x128xf32>
    %1030 = vector.shape_cast %1029 : vector<1x8x128xf32> to vector<8x128xf32>
    %1031 = vector.shape_cast %1027 : vector<8x128xf32> to vector<1x8x128xf32>
    tpu.vector_store %arg14[%1028, %c0_251, %c0_252], %1031 {strides = array<i32>} : memref<8x8x128xf32, #tpu.memory_space<vmem>>, vector<1x8x128xf32>,
    %c5_i32_253 = arith.constant 5 : i32
    %1032 = arith.index_cast %c5_i32_253 : i32 to index
    %c0_254 = arith.constant 0 : index
    %c0_255 = arith.constant 0 : index
    %1033 = vector.load %arg15[%1032, %c0_254, %c0_255] : memref<8x8x512xf32, #tpu.memory_space<vmem>>, vector<1x8x512xf32>
    %1034 = vector.shape_cast %1033 : vector<1x8x512xf32> to vector<8x512xf32>
    %1035 = arith.truncf %1023 : vector<8x128xf32> to vector<8x128xbf16>
    %cst_256 = arith.constant dense<0.000000e+00> : vector<8x512xf32>
    %1036 = tpu.matmul %1035, %787, %cst_256 {dimension_numbers = #tpu.dot_dimension_numbers<[1], [0], [0], [1], [0, 0, 1, 1], [], []>} : vector<8x128xbf16>, vector<128x512xbf16>, vector<8x512xf32> -> vector<8x512xf32>
    %1037 = arith.addf %1034, %1036 : vector<8x512xf32>
    %1038 = vector.extract_strided_slice %1037 {offsets = [0, 0], sizes = [8, 128], strides = [1, 1]} : vector<8x512xf32> to vector<8x128xf32>
    %1039 = arith.negf %1038 : vector<8x128xf32>
    %1040 = math.exp %1039 : vector<8x128xf32>
    %cst_257 = arith.constant 1.000000e+00 : f32
    %1041 = vector.broadcast %cst_257 : f32 to vector<8x128xf32>
    %1042 = arith.addf %1041, %1040 : vector<8x128xf32>
    %1043 = arith.divf %1041, %1042 : vector<8x128xf32>
    %1044 = vector.extract_strided_slice %1037 {offsets = [0, 128], sizes = [8, 128], strides = [1, 1]} : vector<8x512xf32> to vector<8x128xf32>
    %1045 = arith.negf %1044 : vector<8x128xf32>
    %1046 = math.exp %1045 : vector<8x128xf32>
    %cst_258 = arith.constant 1.000000e+00 : f32
    %1047 = vector.broadcast %cst_258 : f32 to vector<8x128xf32>
    %1048 = arith.addf %1047, %1046 : vector<8x128xf32>
    %1049 = arith.divf %1047, %1048 : vector<8x128xf32>
    %1050 = vector.extract_strided_slice %1037 {offsets = [0, 256], sizes = [8, 128], strides = [1, 1]} : vector<8x512xf32> to vector<8x128xf32>
    %1051 = math.tanh %1050 : vector<8x128xf32>
    %1052 = vector.extract_strided_slice %1037 {offsets = [0, 384], sizes = [8, 128], strides = [1, 1]} : vector<8x512xf32> to vector<8x128xf32>
    %1053 = arith.negf %1052 : vector<8x128xf32>
    %1054 = math.exp %1053 : vector<8x128xf32>
    %cst_259 = arith.constant 1.000000e+00 : f32
    %1055 = vector.broadcast %cst_259 : f32 to vector<8x128xf32>
    %1056 = arith.addf %1055, %1054 : vector<8x128xf32>
    %1057 = arith.divf %1055, %1056 : vector<8x128xf32>
    %1058 = arith.mulf %1049, %1020 : vector<8x128xf32>
    %1059 = arith.mulf %1043, %1051 : vector<8x128xf32>
    %1060 = arith.addf %1058, %1059 : vector<8x128xf32>
    %1061 = math.tanh %1060 : vector<8x128xf32>
    %1062 = arith.mulf %1057, %1061 : vector<8x128xf32>
    %1063 = vector.broadcast %c5_i32_253 : i32 to vector<8x1xi32>
    %1064 = arith.cmpi slt, %1063, %2 : vector<8x1xi32>
    %1065 = vector.shape_cast %1064 : vector<8x1xi1> to vector<8x1xi1>
    %1066 = vector.broadcast %1065 : vector<8x1xi1> to vector<8x128xi1>
    %1067 = arith.select %1066, %1060, %1020 : vector<8x128xi1>, vector<8x128xf32>
    %1068 = vector.shape_cast %1064 : vector<8x1xi1> to vector<8x1xi1>
    %1069 = vector.broadcast %1068 : vector<8x1xi1> to vector<8x128xi1>
    %1070 = arith.select %1069, %1062, %1023 : vector<8x128xi1>, vector<8x128xf32>
    %cst_260 = arith.constant 0.000000e+00 : f32
    %1071 = vector.shape_cast %1064 : vector<8x1xi1> to vector<8x1xi1>
    %1072 = vector.broadcast %1071 : vector<8x1xi1> to vector<8x128xi1>
    %1073 = vector.broadcast %cst_260 : f32 to vector<8x128xf32>
    %1074 = arith.select %1072, %1062, %1073 : vector<8x128xi1>, vector<8x128xf32>
    %1075 = arith.index_cast %c5_i32_253 : i32 to index
    %c0_261 = arith.constant 0 : index
    %c0_262 = arith.constant 0 : index
    %1076 = vector.load %arg14[%1075, %c0_261, %c0_262] : memref<8x8x128xf32, #tpu.memory_space<vmem>>, vector<1x8x128xf32>
    %1077 = vector.shape_cast %1076 : vector<1x8x128xf32> to vector<8x128xf32>
    %1078 = vector.shape_cast %1074 : vector<8x128xf32> to vector<1x8x128xf32>
    tpu.vector_store %arg14[%1075, %c0_261, %c0_262], %1078 {strides = array<i32>} : memref<8x8x128xf32, #tpu.memory_space<vmem>>, vector<1x8x128xf32>,
    %c6_i32_263 = arith.constant 6 : i32
    %1079 = arith.index_cast %c6_i32_263 : i32 to index
    %c0_264 = arith.constant 0 : index
    %c0_265 = arith.constant 0 : index
    %1080 = vector.load %arg15[%1079, %c0_264, %c0_265] : memref<8x8x512xf32, #tpu.memory_space<vmem>>, vector<1x8x512xf32>
    %1081 = vector.shape_cast %1080 : vector<1x8x512xf32> to vector<8x512xf32>
    %1082 = arith.truncf %1070 : vector<8x128xf32> to vector<8x128xbf16>
    %cst_266 = arith.constant dense<0.000000e+00> : vector<8x512xf32>
    %1083 = tpu.matmul %1082, %787, %cst_266 {dimension_numbers = #tpu.dot_dimension_numbers<[1], [0], [0], [1], [0, 0, 1, 1], [], []>} : vector<8x128xbf16>, vector<128x512xbf16>, vector<8x512xf32> -> vector<8x512xf32>
    %1084 = arith.addf %1081, %1083 : vector<8x512xf32>
    %1085 = vector.extract_strided_slice %1084 {offsets = [0, 0], sizes = [8, 128], strides = [1, 1]} : vector<8x512xf32> to vector<8x128xf32>
    %1086 = arith.negf %1085 : vector<8x128xf32>
    %1087 = math.exp %1086 : vector<8x128xf32>
    %cst_267 = arith.constant 1.000000e+00 : f32
    %1088 = vector.broadcast %cst_267 : f32 to vector<8x128xf32>
    %1089 = arith.addf %1088, %1087 : vector<8x128xf32>
    %1090 = arith.divf %1088, %1089 : vector<8x128xf32>
    %1091 = vector.extract_strided_slice %1084 {offsets = [0, 128], sizes = [8, 128], strides = [1, 1]} : vector<8x512xf32> to vector<8x128xf32>
    %1092 = arith.negf %1091 : vector<8x128xf32>
    %1093 = math.exp %1092 : vector<8x128xf32>
    %cst_268 = arith.constant 1.000000e+00 : f32
    %1094 = vector.broadcast %cst_268 : f32 to vector<8x128xf32>
    %1095 = arith.addf %1094, %1093 : vector<8x128xf32>
    %1096 = arith.divf %1094, %1095 : vector<8x128xf32>
    %1097 = vector.extract_strided_slice %1084 {offsets = [0, 256], sizes = [8, 128], strides = [1, 1]} : vector<8x512xf32> to vector<8x128xf32>
    %1098 = math.tanh %1097 : vector<8x128xf32>
    %1099 = vector.extract_strided_slice %1084 {offsets = [0, 384], sizes = [8, 128], strides = [1, 1]} : vector<8x512xf32> to vector<8x128xf32>
    %1100 = arith.negf %1099 : vector<8x128xf32>
    %1101 = math.exp %1100 : vector<8x128xf32>
    %cst_269 = arith.constant 1.000000e+00 : f32
    %1102 = vector.broadcast %cst_269 : f32 to vector<8x128xf32>
    %1103 = arith.addf %1102, %1101 : vector<8x128xf32>
    %1104 = arith.divf %1102, %1103 : vector<8x128xf32>
    %1105 = arith.mulf %1096, %1067 : vector<8x128xf32>
    %1106 = arith.mulf %1090, %1098 : vector<8x128xf32>
    %1107 = arith.addf %1105, %1106 : vector<8x128xf32>
    %1108 = math.tanh %1107 : vector<8x128xf32>
    %1109 = arith.mulf %1104, %1108 : vector<8x128xf32>
    %1110 = vector.broadcast %c6_i32_263 : i32 to vector<8x1xi32>
    %1111 = arith.cmpi slt, %1110, %2 : vector<8x1xi32>
    %1112 = vector.shape_cast %1111 : vector<8x1xi1> to vector<8x1xi1>
    %1113 = vector.broadcast %1112 : vector<8x1xi1> to vector<8x128xi1>
    %1114 = arith.select %1113, %1107, %1067 : vector<8x128xi1>, vector<8x128xf32>
    %1115 = vector.shape_cast %1111 : vector<8x1xi1> to vector<8x1xi1>
    %1116 = vector.broadcast %1115 : vector<8x1xi1> to vector<8x128xi1>
    %1117 = arith.select %1116, %1109, %1070 : vector<8x128xi1>, vector<8x128xf32>
    %cst_270 = arith.constant 0.000000e+00 : f32
    %1118 = vector.shape_cast %1111 : vector<8x1xi1> to vector<8x1xi1>
    %1119 = vector.broadcast %1118 : vector<8x1xi1> to vector<8x128xi1>
    %1120 = vector.broadcast %cst_270 : f32 to vector<8x128xf32>
    %1121 = arith.select %1119, %1109, %1120 : vector<8x128xi1>, vector<8x128xf32>
    %1122 = arith.index_cast %c6_i32_263 : i32 to index
    %c0_271 = arith.constant 0 : index
    %c0_272 = arith.constant 0 : index
    %1123 = vector.load %arg14[%1122, %c0_271, %c0_272] : memref<8x8x128xf32, #tpu.memory_space<vmem>>, vector<1x8x128xf32>
    %1124 = vector.shape_cast %1123 : vector<1x8x128xf32> to vector<8x128xf32>
    %1125 = vector.shape_cast %1121 : vector<8x128xf32> to vector<1x8x128xf32>
    tpu.vector_store %arg14[%1122, %c0_271, %c0_272], %1125 {strides = array<i32>} : memref<8x8x128xf32, #tpu.memory_space<vmem>>, vector<1x8x128xf32>,
    %c7_i32_273 = arith.constant 7 : i32
    %1126 = arith.index_cast %c7_i32_273 : i32 to index
    %c0_274 = arith.constant 0 : index
    %c0_275 = arith.constant 0 : index
    %1127 = vector.load %arg15[%1126, %c0_274, %c0_275] : memref<8x8x512xf32, #tpu.memory_space<vmem>>, vector<1x8x512xf32>
    %1128 = vector.shape_cast %1127 : vector<1x8x512xf32> to vector<8x512xf32>
    %1129 = arith.truncf %1117 : vector<8x128xf32> to vector<8x128xbf16>
    %cst_276 = arith.constant dense<0.000000e+00> : vector<8x512xf32>
    %1130 = tpu.matmul %1129, %787, %cst_276 {dimension_numbers = #tpu.dot_dimension_numbers<[1], [0], [0], [1], [0, 0, 1, 1], [], []>} : vector<8x128xbf16>, vector<128x512xbf16>, vector<8x512xf32> -> vector<8x512xf32>
    %1131 = arith.addf %1128, %1130 : vector<8x512xf32>
    %1132 = vector.extract_strided_slice %1131 {offsets = [0, 0], sizes = [8, 128], strides = [1, 1]} : vector<8x512xf32> to vector<8x128xf32>
    %1133 = arith.negf %1132 : vector<8x128xf32>
    %1134 = math.exp %1133 : vector<8x128xf32>
    %cst_277 = arith.constant 1.000000e+00 : f32
    %1135 = vector.broadcast %cst_277 : f32 to vector<8x128xf32>
    %1136 = arith.addf %1135, %1134 : vector<8x128xf32>
    %1137 = arith.divf %1135, %1136 : vector<8x128xf32>
    %1138 = vector.extract_strided_slice %1131 {offsets = [0, 128], sizes = [8, 128], strides = [1, 1]} : vector<8x512xf32> to vector<8x128xf32>
    %1139 = arith.negf %1138 : vector<8x128xf32>
    %1140 = math.exp %1139 : vector<8x128xf32>
    %cst_278 = arith.constant 1.000000e+00 : f32
    %1141 = vector.broadcast %cst_278 : f32 to vector<8x128xf32>
    %1142 = arith.addf %1141, %1140 : vector<8x128xf32>
    %1143 = arith.divf %1141, %1142 : vector<8x128xf32>
    %1144 = vector.extract_strided_slice %1131 {offsets = [0, 256], sizes = [8, 128], strides = [1, 1]} : vector<8x512xf32> to vector<8x128xf32>
    %1145 = math.tanh %1144 : vector<8x128xf32>
    %1146 = vector.extract_strided_slice %1131 {offsets = [0, 384], sizes = [8, 128], strides = [1, 1]} : vector<8x512xf32> to vector<8x128xf32>
    %1147 = arith.negf %1146 : vector<8x128xf32>
    %1148 = math.exp %1147 : vector<8x128xf32>
    %cst_279 = arith.constant 1.000000e+00 : f32
    %1149 = vector.broadcast %cst_279 : f32 to vector<8x128xf32>
    %1150 = arith.addf %1149, %1148 : vector<8x128xf32>
    %1151 = arith.divf %1149, %1150 : vector<8x128xf32>
    %1152 = arith.mulf %1143, %1114 : vector<8x128xf32>
    %1153 = arith.mulf %1137, %1145 : vector<8x128xf32>
    %1154 = arith.addf %1152, %1153 : vector<8x128xf32>
    %1155 = math.tanh %1154 : vector<8x128xf32>
    %1156 = arith.mulf %1151, %1155 : vector<8x128xf32>
    %1157 = vector.broadcast %c7_i32_273 : i32 to vector<8x1xi32>
    %1158 = arith.cmpi slt, %1157, %2 : vector<8x1xi32>
    %1159 = vector.shape_cast %1158 : vector<8x1xi1> to vector<8x1xi1>
    %1160 = vector.broadcast %1159 : vector<8x1xi1> to vector<8x128xi1>
    %1161 = arith.select %1160, %1154, %1114 : vector<8x128xi1>, vector<8x128xf32>
    %1162 = vector.shape_cast %1158 : vector<8x1xi1> to vector<8x1xi1>
    %1163 = vector.broadcast %1162 : vector<8x1xi1> to vector<8x128xi1>
    %1164 = arith.select %1163, %1156, %1117 : vector<8x128xi1>, vector<8x128xf32>
    %cst_280 = arith.constant 0.000000e+00 : f32
    %1165 = vector.shape_cast %1158 : vector<8x1xi1> to vector<8x1xi1>
    %1166 = vector.broadcast %1165 : vector<8x1xi1> to vector<8x128xi1>
    %1167 = vector.broadcast %cst_280 : f32 to vector<8x128xf32>
    %1168 = arith.select %1166, %1156, %1167 : vector<8x128xi1>, vector<8x128xf32>
    %1169 = arith.index_cast %c7_i32_273 : i32 to index
    %c0_281 = arith.constant 0 : index
    %c0_282 = arith.constant 0 : index
    %1170 = vector.load %arg14[%1169, %c0_281, %c0_282] : memref<8x8x128xf32, #tpu.memory_space<vmem>>, vector<1x8x128xf32>
    %1171 = vector.shape_cast %1170 : vector<1x8x128xf32> to vector<8x128xf32>
    %1172 = vector.shape_cast %1168 : vector<8x128xf32> to vector<1x8x128xf32>
    tpu.vector_store %arg14[%1169, %c0_281, %c0_282], %1172 {strides = array<i32>} : memref<8x8x128xf32, #tpu.memory_space<vmem>>, vector<1x8x128xf32>,
    %c8_i32_283 = arith.constant 8 : i32
    %c0_284 = arith.constant 0 : index
    %c0_285 = arith.constant 0 : index
    %c0_286 = arith.constant 0 : index
    %1173 = vector.load %arg14[%c0_284, %c0_285, %c0_286] : memref<8x8x128xf32, #tpu.memory_space<vmem>>, vector<8x8x128xf32>
    %c1_287 = arith.constant 1 : index
    %c0_288 = arith.constant 0 : index
    %c0_289 = arith.constant 0 : index
    %1174 = vector.load %arg8[%c1_287, %c0_288, %c0_289] : memref<2x128x512xbf16, #tpu.memory_space<vmem>>, vector<1x128x512xbf16>
    %1175 = vector.shape_cast %1174 : vector<1x128x512xbf16> to vector<128x512xbf16>
    %c1_290 = arith.constant 1 : index
    %c0_291 = arith.constant 0 : index
    %c0_292 = arith.constant 0 : index
    %1176 = vector.load %arg9[%c1_290, %c0_291, %c0_292] : memref<2x128x512xbf16, #tpu.memory_space<vmem>>, vector<1x128x512xbf16>
    %1177 = vector.shape_cast %1176 : vector<1x128x512xbf16> to vector<128x512xbf16>
    %c1_293 = arith.constant 1 : index
    %c0_294 = arith.constant 0 : index
    %c0_295 = arith.constant 0 : index
    %1178 = vector.load %arg10[%c1_293, %c0_294, %c0_295] : memref<2x1x512xf32, #tpu.memory_space<vmem>>, vector<1x1x512xf32>
    %1179 = vector.shape_cast %1178 : vector<1x1x512xf32> to vector<1x512xf32>
    %1180 = vector.shape_cast %1173 : vector<8x8x128xf32> to vector<64x128xf32>
    %1181 = arith.truncf %1180 : vector<64x128xf32> to vector<64x128xbf16>
    %cst_296 = arith.constant dense<0.000000e+00> : vector<64x512xf32>
    %1182 = tpu.matmul %1181, %1175, %cst_296 {dimension_numbers = #tpu.dot_dimension_numbers<[1], [0], [0], [1], [0, 0, 1, 1], [], []>} : vector<64x128xbf16>, vector<128x512xbf16>, vector<64x512xf32> -> vector<64x512xf32>
    %1183 = vector.broadcast %1179 : vector<1x512xf32> to vector<64x512xf32>
    %1184 = arith.addf %1182, %1183 : vector<64x512xf32>
    %1185 = vector.shape_cast %1184 : vector<64x512xf32> to vector<8x8x512xf32>
    %c0_297 = arith.constant 0 : index
    %c0_298 = arith.constant 0 : index
    %c0_299 = arith.constant 0 : index
    %1186 = vector.load %arg15[%c0_297, %c0_298, %c0_299] : memref<8x8x512xf32, #tpu.memory_space<vmem>>, vector<8x8x512xf32>
    tpu.vector_store %arg15[%c0_297, %c0_298, %c0_299], %1185 {strides = array<i32>} : memref<8x8x512xf32, #tpu.memory_space<vmem>>, vector<8x8x512xf32>,
    %c0_i32_300 = arith.constant 0 : i32
    %1187 = arith.index_cast %c0_i32_300 : i32 to index
    %c0_301 = arith.constant 0 : index
    %c0_302 = arith.constant 0 : index
    %1188 = vector.load %arg15[%1187, %c0_301, %c0_302] : memref<8x8x512xf32, #tpu.memory_space<vmem>>, vector<1x8x512xf32>
    %1189 = vector.shape_cast %1188 : vector<1x8x512xf32> to vector<8x512xf32>
    %1190 = arith.truncf %774 : vector<8x128xf32> to vector<8x128xbf16>
    %cst_303 = arith.constant dense<0.000000e+00> : vector<8x512xf32>
    %1191 = tpu.matmul %1190, %1177, %cst_303 {dimension_numbers = #tpu.dot_dimension_numbers<[1], [0], [0], [1], [0, 0, 1, 1], [], []>} : vector<8x128xbf16>, vector<128x512xbf16>, vector<8x512xf32> -> vector<8x512xf32>
    %1192 = arith.addf %1189, %1191 : vector<8x512xf32>
    %1193 = vector.extract_strided_slice %1192 {offsets = [0, 0], sizes = [8, 128], strides = [1, 1]} : vector<8x512xf32> to vector<8x128xf32>
    %1194 = arith.negf %1193 : vector<8x128xf32>
    %1195 = math.exp %1194 : vector<8x128xf32>
    %cst_304 = arith.constant 1.000000e+00 : f32
    %1196 = vector.broadcast %cst_304 : f32 to vector<8x128xf32>
    %1197 = arith.addf %1196, %1195 : vector<8x128xf32>
    %1198 = arith.divf %1196, %1197 : vector<8x128xf32>
    %1199 = vector.extract_strided_slice %1192 {offsets = [0, 128], sizes = [8, 128], strides = [1, 1]} : vector<8x512xf32> to vector<8x128xf32>
    %1200 = arith.negf %1199 : vector<8x128xf32>
    %1201 = math.exp %1200 : vector<8x128xf32>
    %cst_305 = arith.constant 1.000000e+00 : f32
    %1202 = vector.broadcast %cst_305 : f32 to vector<8x128xf32>
    %1203 = arith.addf %1202, %1201 : vector<8x128xf32>
    %1204 = arith.divf %1202, %1203 : vector<8x128xf32>
    %1205 = vector.extract_strided_slice %1192 {offsets = [0, 256], sizes = [8, 128], strides = [1, 1]} : vector<8x512xf32> to vector<8x128xf32>
    %1206 = math.tanh %1205 : vector<8x128xf32>
    %1207 = vector.extract_strided_slice %1192 {offsets = [0, 384], sizes = [8, 128], strides = [1, 1]} : vector<8x512xf32> to vector<8x128xf32>
    %1208 = arith.negf %1207 : vector<8x128xf32>
    %1209 = math.exp %1208 : vector<8x128xf32>
    %cst_306 = arith.constant 1.000000e+00 : f32
    %1210 = vector.broadcast %cst_306 : f32 to vector<8x128xf32>
    %1211 = arith.addf %1210, %1209 : vector<8x128xf32>
    %1212 = arith.divf %1210, %1211 : vector<8x128xf32>
    %1213 = arith.mulf %1204, %771 : vector<8x128xf32>
    %1214 = arith.mulf %1198, %1206 : vector<8x128xf32>
    %1215 = arith.addf %1213, %1214 : vector<8x128xf32>
    %1216 = math.tanh %1215 : vector<8x128xf32>
    %1217 = arith.mulf %1212, %1216 : vector<8x128xf32>
    %1218 = vector.broadcast %c0_i32_300 : i32 to vector<8x1xi32>
    %1219 = arith.cmpi slt, %1218, %2 : vector<8x1xi32>
    %1220 = vector.shape_cast %1219 : vector<8x1xi1> to vector<8x1xi1>
    %1221 = vector.broadcast %1220 : vector<8x1xi1> to vector<8x128xi1>
    %1222 = arith.select %1221, %1215, %771 : vector<8x128xi1>, vector<8x128xf32>
    %1223 = vector.shape_cast %1219 : vector<8x1xi1> to vector<8x1xi1>
    %1224 = vector.broadcast %1223 : vector<8x1xi1> to vector<8x128xi1>
    %1225 = arith.select %1224, %1217, %774 : vector<8x128xi1>, vector<8x128xf32>
    %cst_307 = arith.constant 0.000000e+00 : f32
    %1226 = vector.shape_cast %1219 : vector<8x1xi1> to vector<8x1xi1>
    %1227 = vector.broadcast %1226 : vector<8x1xi1> to vector<8x128xi1>
    %1228 = vector.broadcast %cst_307 : f32 to vector<8x128xf32>
    %1229 = arith.select %1227, %1217, %1228 : vector<8x128xi1>, vector<8x128xf32>
    %1230 = arith.index_cast %c0_i32_300 : i32 to index
    %c0_308 = arith.constant 0 : index
    %c0_309 = arith.constant 0 : index
    %1231 = vector.load %arg14[%1230, %c0_308, %c0_309] : memref<8x8x128xf32, #tpu.memory_space<vmem>>, vector<1x8x128xf32>
    %1232 = vector.shape_cast %1231 : vector<1x8x128xf32> to vector<8x128xf32>
    %1233 = vector.shape_cast %1229 : vector<8x128xf32> to vector<1x8x128xf32>
    tpu.vector_store %arg14[%1230, %c0_308, %c0_309], %1233 {strides = array<i32>} : memref<8x8x128xf32, #tpu.memory_space<vmem>>, vector<1x8x128xf32>,
    %c1_i32_310 = arith.constant 1 : i32
    %1234 = arith.index_cast %c1_i32_310 : i32 to index
    %c0_311 = arith.constant 0 : index
    %c0_312 = arith.constant 0 : index
    %1235 = vector.load %arg15[%1234, %c0_311, %c0_312] : memref<8x8x512xf32, #tpu.memory_space<vmem>>, vector<1x8x512xf32>
    %1236 = vector.shape_cast %1235 : vector<1x8x512xf32> to vector<8x512xf32>
    %1237 = arith.truncf %1225 : vector<8x128xf32> to vector<8x128xbf16>
    %cst_313 = arith.constant dense<0.000000e+00> : vector<8x512xf32>
    %1238 = tpu.matmul %1237, %1177, %cst_313 {dimension_numbers = #tpu.dot_dimension_numbers<[1], [0], [0], [1], [0, 0, 1, 1], [], []>} : vector<8x128xbf16>, vector<128x512xbf16>, vector<8x512xf32> -> vector<8x512xf32>
    %1239 = arith.addf %1236, %1238 : vector<8x512xf32>
    %1240 = vector.extract_strided_slice %1239 {offsets = [0, 0], sizes = [8, 128], strides = [1, 1]} : vector<8x512xf32> to vector<8x128xf32>
    %1241 = arith.negf %1240 : vector<8x128xf32>
    %1242 = math.exp %1241 : vector<8x128xf32>
    %cst_314 = arith.constant 1.000000e+00 : f32
    %1243 = vector.broadcast %cst_314 : f32 to vector<8x128xf32>
    %1244 = arith.addf %1243, %1242 : vector<8x128xf32>
    %1245 = arith.divf %1243, %1244 : vector<8x128xf32>
    %1246 = vector.extract_strided_slice %1239 {offsets = [0, 128], sizes = [8, 128], strides = [1, 1]} : vector<8x512xf32> to vector<8x128xf32>
    %1247 = arith.negf %1246 : vector<8x128xf32>
    %1248 = math.exp %1247 : vector<8x128xf32>
    %cst_315 = arith.constant 1.000000e+00 : f32
    %1249 = vector.broadcast %cst_315 : f32 to vector<8x128xf32>
    %1250 = arith.addf %1249, %1248 : vector<8x128xf32>
    %1251 = arith.divf %1249, %1250 : vector<8x128xf32>
    %1252 = vector.extract_strided_slice %1239 {offsets = [0, 256], sizes = [8, 128], strides = [1, 1]} : vector<8x512xf32> to vector<8x128xf32>
    %1253 = math.tanh %1252 : vector<8x128xf32>
    %1254 = vector.extract_strided_slice %1239 {offsets = [0, 384], sizes = [8, 128], strides = [1, 1]} : vector<8x512xf32> to vector<8x128xf32>
    %1255 = arith.negf %1254 : vector<8x128xf32>
    %1256 = math.exp %1255 : vector<8x128xf32>
    %cst_316 = arith.constant 1.000000e+00 : f32
    %1257 = vector.broadcast %cst_316 : f32 to vector<8x128xf32>
    %1258 = arith.addf %1257, %1256 : vector<8x128xf32>
    %1259 = arith.divf %1257, %1258 : vector<8x128xf32>
    %1260 = arith.mulf %1251, %1222 : vector<8x128xf32>
    %1261 = arith.mulf %1245, %1253 : vector<8x128xf32>
    %1262 = arith.addf %1260, %1261 : vector<8x128xf32>
    %1263 = math.tanh %1262 : vector<8x128xf32>
    %1264 = arith.mulf %1259, %1263 : vector<8x128xf32>
    %1265 = vector.broadcast %c1_i32_310 : i32 to vector<8x1xi32>
    %1266 = arith.cmpi slt, %1265, %2 : vector<8x1xi32>
    %1267 = vector.shape_cast %1266 : vector<8x1xi1> to vector<8x1xi1>
    %1268 = vector.broadcast %1267 : vector<8x1xi1> to vector<8x128xi1>
    %1269 = arith.select %1268, %1262, %1222 : vector<8x128xi1>, vector<8x128xf32>
    %1270 = vector.shape_cast %1266 : vector<8x1xi1> to vector<8x1xi1>
    %1271 = vector.broadcast %1270 : vector<8x1xi1> to vector<8x128xi1>
    %1272 = arith.select %1271, %1264, %1225 : vector<8x128xi1>, vector<8x128xf32>
    %cst_317 = arith.constant 0.000000e+00 : f32
    %1273 = vector.shape_cast %1266 : vector<8x1xi1> to vector<8x1xi1>
    %1274 = vector.broadcast %1273 : vector<8x1xi1> to vector<8x128xi1>
    %1275 = vector.broadcast %cst_317 : f32 to vector<8x128xf32>
    %1276 = arith.select %1274, %1264, %1275 : vector<8x128xi1>, vector<8x128xf32>
    %1277 = arith.index_cast %c1_i32_310 : i32 to index
    %c0_318 = arith.constant 0 : index
    %c0_319 = arith.constant 0 : index
    %1278 = vector.load %arg14[%1277, %c0_318, %c0_319] : memref<8x8x128xf32, #tpu.memory_space<vmem>>, vector<1x8x128xf32>
    %1279 = vector.shape_cast %1278 : vector<1x8x128xf32> to vector<8x128xf32>
    %1280 = vector.shape_cast %1276 : vector<8x128xf32> to vector<1x8x128xf32>
    tpu.vector_store %arg14[%1277, %c0_318, %c0_319], %1280 {strides = array<i32>} : memref<8x8x128xf32, #tpu.memory_space<vmem>>, vector<1x8x128xf32>,
    %c2_i32_320 = arith.constant 2 : i32
    %1281 = arith.index_cast %c2_i32_320 : i32 to index
    %c0_321 = arith.constant 0 : index
    %c0_322 = arith.constant 0 : index
    %1282 = vector.load %arg15[%1281, %c0_321, %c0_322] : memref<8x8x512xf32, #tpu.memory_space<vmem>>, vector<1x8x512xf32>
    %1283 = vector.shape_cast %1282 : vector<1x8x512xf32> to vector<8x512xf32>
    %1284 = arith.truncf %1272 : vector<8x128xf32> to vector<8x128xbf16>
    %cst_323 = arith.constant dense<0.000000e+00> : vector<8x512xf32>
    %1285 = tpu.matmul %1284, %1177, %cst_323 {dimension_numbers = #tpu.dot_dimension_numbers<[1], [0], [0], [1], [0, 0, 1, 1], [], []>} : vector<8x128xbf16>, vector<128x512xbf16>, vector<8x512xf32> -> vector<8x512xf32>
    %1286 = arith.addf %1283, %1285 : vector<8x512xf32>
    %1287 = vector.extract_strided_slice %1286 {offsets = [0, 0], sizes = [8, 128], strides = [1, 1]} : vector<8x512xf32> to vector<8x128xf32>
    %1288 = arith.negf %1287 : vector<8x128xf32>
    %1289 = math.exp %1288 : vector<8x128xf32>
    %cst_324 = arith.constant 1.000000e+00 : f32
    %1290 = vector.broadcast %cst_324 : f32 to vector<8x128xf32>
    %1291 = arith.addf %1290, %1289 : vector<8x128xf32>
    %1292 = arith.divf %1290, %1291 : vector<8x128xf32>
    %1293 = vector.extract_strided_slice %1286 {offsets = [0, 128], sizes = [8, 128], strides = [1, 1]} : vector<8x512xf32> to vector<8x128xf32>
    %1294 = arith.negf %1293 : vector<8x128xf32>
    %1295 = math.exp %1294 : vector<8x128xf32>
    %cst_325 = arith.constant 1.000000e+00 : f32
    %1296 = vector.broadcast %cst_325 : f32 to vector<8x128xf32>
    %1297 = arith.addf %1296, %1295 : vector<8x128xf32>
    %1298 = arith.divf %1296, %1297 : vector<8x128xf32>
    %1299 = vector.extract_strided_slice %1286 {offsets = [0, 256], sizes = [8, 128], strides = [1, 1]} : vector<8x512xf32> to vector<8x128xf32>
    %1300 = math.tanh %1299 : vector<8x128xf32>
    %1301 = vector.extract_strided_slice %1286 {offsets = [0, 384], sizes = [8, 128], strides = [1, 1]} : vector<8x512xf32> to vector<8x128xf32>
    %1302 = arith.negf %1301 : vector<8x128xf32>
    %1303 = math.exp %1302 : vector<8x128xf32>
    %cst_326 = arith.constant 1.000000e+00 : f32
    %1304 = vector.broadcast %cst_326 : f32 to vector<8x128xf32>
    %1305 = arith.addf %1304, %1303 : vector<8x128xf32>
    %1306 = arith.divf %1304, %1305 : vector<8x128xf32>
    %1307 = arith.mulf %1298, %1269 : vector<8x128xf32>
    %1308 = arith.mulf %1292, %1300 : vector<8x128xf32>
    %1309 = arith.addf %1307, %1308 : vector<8x128xf32>
    %1310 = math.tanh %1309 : vector<8x128xf32>
    %1311 = arith.mulf %1306, %1310 : vector<8x128xf32>
    %1312 = vector.broadcast %c2_i32_320 : i32 to vector<8x1xi32>
    %1313 = arith.cmpi slt, %1312, %2 : vector<8x1xi32>
    %1314 = vector.shape_cast %1313 : vector<8x1xi1> to vector<8x1xi1>
    %1315 = vector.broadcast %1314 : vector<8x1xi1> to vector<8x128xi1>
    %1316 = arith.select %1315, %1309, %1269 : vector<8x128xi1>, vector<8x128xf32>
    %1317 = vector.shape_cast %1313 : vector<8x1xi1> to vector<8x1xi1>
    %1318 = vector.broadcast %1317 : vector<8x1xi1> to vector<8x128xi1>
    %1319 = arith.select %1318, %1311, %1272 : vector<8x128xi1>, vector<8x128xf32>
    %cst_327 = arith.constant 0.000000e+00 : f32
    %1320 = vector.shape_cast %1313 : vector<8x1xi1> to vector<8x1xi1>
    %1321 = vector.broadcast %1320 : vector<8x1xi1> to vector<8x128xi1>
    %1322 = vector.broadcast %cst_327 : f32 to vector<8x128xf32>
    %1323 = arith.select %1321, %1311, %1322 : vector<8x128xi1>, vector<8x128xf32>
    %1324 = arith.index_cast %c2_i32_320 : i32 to index
    %c0_328 = arith.constant 0 : index
    %c0_329 = arith.constant 0 : index
    %1325 = vector.load %arg14[%1324, %c0_328, %c0_329] : memref<8x8x128xf32, #tpu.memory_space<vmem>>, vector<1x8x128xf32>
    %1326 = vector.shape_cast %1325 : vector<1x8x128xf32> to vector<8x128xf32>
    %1327 = vector.shape_cast %1323 : vector<8x128xf32> to vector<1x8x128xf32>
    tpu.vector_store %arg14[%1324, %c0_328, %c0_329], %1327 {strides = array<i32>} : memref<8x8x128xf32, #tpu.memory_space<vmem>>, vector<1x8x128xf32>,
    %c3_i32_330 = arith.constant 3 : i32
    %1328 = arith.index_cast %c3_i32_330 : i32 to index
    %c0_331 = arith.constant 0 : index
    %c0_332 = arith.constant 0 : index
    %1329 = vector.load %arg15[%1328, %c0_331, %c0_332] : memref<8x8x512xf32, #tpu.memory_space<vmem>>, vector<1x8x512xf32>
    %1330 = vector.shape_cast %1329 : vector<1x8x512xf32> to vector<8x512xf32>
    %1331 = arith.truncf %1319 : vector<8x128xf32> to vector<8x128xbf16>
    %cst_333 = arith.constant dense<0.000000e+00> : vector<8x512xf32>
    %1332 = tpu.matmul %1331, %1177, %cst_333 {dimension_numbers = #tpu.dot_dimension_numbers<[1], [0], [0], [1], [0, 0, 1, 1], [], []>} : vector<8x128xbf16>, vector<128x512xbf16>, vector<8x512xf32> -> vector<8x512xf32>
    %1333 = arith.addf %1330, %1332 : vector<8x512xf32>
    %1334 = vector.extract_strided_slice %1333 {offsets = [0, 0], sizes = [8, 128], strides = [1, 1]} : vector<8x512xf32> to vector<8x128xf32>
    %1335 = arith.negf %1334 : vector<8x128xf32>
    %1336 = math.exp %1335 : vector<8x128xf32>
    %cst_334 = arith.constant 1.000000e+00 : f32
    %1337 = vector.broadcast %cst_334 : f32 to vector<8x128xf32>
    %1338 = arith.addf %1337, %1336 : vector<8x128xf32>
    %1339 = arith.divf %1337, %1338 : vector<8x128xf32>
    %1340 = vector.extract_strided_slice %1333 {offsets = [0, 128], sizes = [8, 128], strides = [1, 1]} : vector<8x512xf32> to vector<8x128xf32>
    %1341 = arith.negf %1340 : vector<8x128xf32>
    %1342 = math.exp %1341 : vector<8x128xf32>
    %cst_335 = arith.constant 1.000000e+00 : f32
    %1343 = vector.broadcast %cst_335 : f32 to vector<8x128xf32>
    %1344 = arith.addf %1343, %1342 : vector<8x128xf32>
    %1345 = arith.divf %1343, %1344 : vector<8x128xf32>
    %1346 = vector.extract_strided_slice %1333 {offsets = [0, 256], sizes = [8, 128], strides = [1, 1]} : vector<8x512xf32> to vector<8x128xf32>
    %1347 = math.tanh %1346 : vector<8x128xf32>
    %1348 = vector.extract_strided_slice %1333 {offsets = [0, 384], sizes = [8, 128], strides = [1, 1]} : vector<8x512xf32> to vector<8x128xf32>
    %1349 = arith.negf %1348 : vector<8x128xf32>
    %1350 = math.exp %1349 : vector<8x128xf32>
    %cst_336 = arith.constant 1.000000e+00 : f32
    %1351 = vector.broadcast %cst_336 : f32 to vector<8x128xf32>
    %1352 = arith.addf %1351, %1350 : vector<8x128xf32>
    %1353 = arith.divf %1351, %1352 : vector<8x128xf32>
    %1354 = arith.mulf %1345, %1316 : vector<8x128xf32>
    %1355 = arith.mulf %1339, %1347 : vector<8x128xf32>
    %1356 = arith.addf %1354, %1355 : vector<8x128xf32>
    %1357 = math.tanh %1356 : vector<8x128xf32>
    %1358 = arith.mulf %1353, %1357 : vector<8x128xf32>
    %1359 = vector.broadcast %c3_i32_330 : i32 to vector<8x1xi32>
    %1360 = arith.cmpi slt, %1359, %2 : vector<8x1xi32>
    %1361 = vector.shape_cast %1360 : vector<8x1xi1> to vector<8x1xi1>
    %1362 = vector.broadcast %1361 : vector<8x1xi1> to vector<8x128xi1>
    %1363 = arith.select %1362, %1356, %1316 : vector<8x128xi1>, vector<8x128xf32>
    %1364 = vector.shape_cast %1360 : vector<8x1xi1> to vector<8x1xi1>
    %1365 = vector.broadcast %1364 : vector<8x1xi1> to vector<8x128xi1>
    %1366 = arith.select %1365, %1358, %1319 : vector<8x128xi1>, vector<8x128xf32>
    %cst_337 = arith.constant 0.000000e+00 : f32
    %1367 = vector.shape_cast %1360 : vector<8x1xi1> to vector<8x1xi1>
    %1368 = vector.broadcast %1367 : vector<8x1xi1> to vector<8x128xi1>
    %1369 = vector.broadcast %cst_337 : f32 to vector<8x128xf32>
    %1370 = arith.select %1368, %1358, %1369 : vector<8x128xi1>, vector<8x128xf32>
    %1371 = arith.index_cast %c3_i32_330 : i32 to index
    %c0_338 = arith.constant 0 : index
    %c0_339 = arith.constant 0 : index
    %1372 = vector.load %arg14[%1371, %c0_338, %c0_339] : memref<8x8x128xf32, #tpu.memory_space<vmem>>, vector<1x8x128xf32>
    %1373 = vector.shape_cast %1372 : vector<1x8x128xf32> to vector<8x128xf32>
    %1374 = vector.shape_cast %1370 : vector<8x128xf32> to vector<1x8x128xf32>
    tpu.vector_store %arg14[%1371, %c0_338, %c0_339], %1374 {strides = array<i32>} : memref<8x8x128xf32, #tpu.memory_space<vmem>>, vector<1x8x128xf32>,
    %c4_i32_340 = arith.constant 4 : i32
    %1375 = arith.index_cast %c4_i32_340 : i32 to index
    %c0_341 = arith.constant 0 : index
    %c0_342 = arith.constant 0 : index
    %1376 = vector.load %arg15[%1375, %c0_341, %c0_342] : memref<8x8x512xf32, #tpu.memory_space<vmem>>, vector<1x8x512xf32>
    %1377 = vector.shape_cast %1376 : vector<1x8x512xf32> to vector<8x512xf32>
    %1378 = arith.truncf %1366 : vector<8x128xf32> to vector<8x128xbf16>
    %cst_343 = arith.constant dense<0.000000e+00> : vector<8x512xf32>
    %1379 = tpu.matmul %1378, %1177, %cst_343 {dimension_numbers = #tpu.dot_dimension_numbers<[1], [0], [0], [1], [0, 0, 1, 1], [], []>} : vector<8x128xbf16>, vector<128x512xbf16>, vector<8x512xf32> -> vector<8x512xf32>
    %1380 = arith.addf %1377, %1379 : vector<8x512xf32>
    %1381 = vector.extract_strided_slice %1380 {offsets = [0, 0], sizes = [8, 128], strides = [1, 1]} : vector<8x512xf32> to vector<8x128xf32>
    %1382 = arith.negf %1381 : vector<8x128xf32>
    %1383 = math.exp %1382 : vector<8x128xf32>
    %cst_344 = arith.constant 1.000000e+00 : f32
    %1384 = vector.broadcast %cst_344 : f32 to vector<8x128xf32>
    %1385 = arith.addf %1384, %1383 : vector<8x128xf32>
    %1386 = arith.divf %1384, %1385 : vector<8x128xf32>
    %1387 = vector.extract_strided_slice %1380 {offsets = [0, 128], sizes = [8, 128], strides = [1, 1]} : vector<8x512xf32> to vector<8x128xf32>
    %1388 = arith.negf %1387 : vector<8x128xf32>
    %1389 = math.exp %1388 : vector<8x128xf32>
    %cst_345 = arith.constant 1.000000e+00 : f32
    %1390 = vector.broadcast %cst_345 : f32 to vector<8x128xf32>
    %1391 = arith.addf %1390, %1389 : vector<8x128xf32>
    %1392 = arith.divf %1390, %1391 : vector<8x128xf32>
    %1393 = vector.extract_strided_slice %1380 {offsets = [0, 256], sizes = [8, 128], strides = [1, 1]} : vector<8x512xf32> to vector<8x128xf32>
    %1394 = math.tanh %1393 : vector<8x128xf32>
    %1395 = vector.extract_strided_slice %1380 {offsets = [0, 384], sizes = [8, 128], strides = [1, 1]} : vector<8x512xf32> to vector<8x128xf32>
    %1396 = arith.negf %1395 : vector<8x128xf32>
    %1397 = math.exp %1396 : vector<8x128xf32>
    %cst_346 = arith.constant 1.000000e+00 : f32
    %1398 = vector.broadcast %cst_346 : f32 to vector<8x128xf32>
    %1399 = arith.addf %1398, %1397 : vector<8x128xf32>
    %1400 = arith.divf %1398, %1399 : vector<8x128xf32>
    %1401 = arith.mulf %1392, %1363 : vector<8x128xf32>
    %1402 = arith.mulf %1386, %1394 : vector<8x128xf32>
    %1403 = arith.addf %1401, %1402 : vector<8x128xf32>
    %1404 = math.tanh %1403 : vector<8x128xf32>
    %1405 = arith.mulf %1400, %1404 : vector<8x128xf32>
    %1406 = vector.broadcast %c4_i32_340 : i32 to vector<8x1xi32>
    %1407 = arith.cmpi slt, %1406, %2 : vector<8x1xi32>
    %1408 = vector.shape_cast %1407 : vector<8x1xi1> to vector<8x1xi1>
    %1409 = vector.broadcast %1408 : vector<8x1xi1> to vector<8x128xi1>
    %1410 = arith.select %1409, %1403, %1363 : vector<8x128xi1>, vector<8x128xf32>
    %1411 = vector.shape_cast %1407 : vector<8x1xi1> to vector<8x1xi1>
    %1412 = vector.broadcast %1411 : vector<8x1xi1> to vector<8x128xi1>
    %1413 = arith.select %1412, %1405, %1366 : vector<8x128xi1>, vector<8x128xf32>
    %cst_347 = arith.constant 0.000000e+00 : f32
    %1414 = vector.shape_cast %1407 : vector<8x1xi1> to vector<8x1xi1>
    %1415 = vector.broadcast %1414 : vector<8x1xi1> to vector<8x128xi1>
    %1416 = vector.broadcast %cst_347 : f32 to vector<8x128xf32>
    %1417 = arith.select %1415, %1405, %1416 : vector<8x128xi1>, vector<8x128xf32>
    %1418 = arith.index_cast %c4_i32_340 : i32 to index
    %c0_348 = arith.constant 0 : index
    %c0_349 = arith.constant 0 : index
    %1419 = vector.load %arg14[%1418, %c0_348, %c0_349] : memref<8x8x128xf32, #tpu.memory_space<vmem>>, vector<1x8x128xf32>
    %1420 = vector.shape_cast %1419 : vector<1x8x128xf32> to vector<8x128xf32>
    %1421 = vector.shape_cast %1417 : vector<8x128xf32> to vector<1x8x128xf32>
    tpu.vector_store %arg14[%1418, %c0_348, %c0_349], %1421 {strides = array<i32>} : memref<8x8x128xf32, #tpu.memory_space<vmem>>, vector<1x8x128xf32>,
    %c5_i32_350 = arith.constant 5 : i32
    %1422 = arith.index_cast %c5_i32_350 : i32 to index
    %c0_351 = arith.constant 0 : index
    %c0_352 = arith.constant 0 : index
    %1423 = vector.load %arg15[%1422, %c0_351, %c0_352] : memref<8x8x512xf32, #tpu.memory_space<vmem>>, vector<1x8x512xf32>
    %1424 = vector.shape_cast %1423 : vector<1x8x512xf32> to vector<8x512xf32>
    %1425 = arith.truncf %1413 : vector<8x128xf32> to vector<8x128xbf16>
    %cst_353 = arith.constant dense<0.000000e+00> : vector<8x512xf32>
    %1426 = tpu.matmul %1425, %1177, %cst_353 {dimension_numbers = #tpu.dot_dimension_numbers<[1], [0], [0], [1], [0, 0, 1, 1], [], []>} : vector<8x128xbf16>, vector<128x512xbf16>, vector<8x512xf32> -> vector<8x512xf32>
    %1427 = arith.addf %1424, %1426 : vector<8x512xf32>
    %1428 = vector.extract_strided_slice %1427 {offsets = [0, 0], sizes = [8, 128], strides = [1, 1]} : vector<8x512xf32> to vector<8x128xf32>
    %1429 = arith.negf %1428 : vector<8x128xf32>
    %1430 = math.exp %1429 : vector<8x128xf32>
    %cst_354 = arith.constant 1.000000e+00 : f32
    %1431 = vector.broadcast %cst_354 : f32 to vector<8x128xf32>
    %1432 = arith.addf %1431, %1430 : vector<8x128xf32>
    %1433 = arith.divf %1431, %1432 : vector<8x128xf32>
    %1434 = vector.extract_strided_slice %1427 {offsets = [0, 128], sizes = [8, 128], strides = [1, 1]} : vector<8x512xf32> to vector<8x128xf32>
    %1435 = arith.negf %1434 : vector<8x128xf32>
    %1436 = math.exp %1435 : vector<8x128xf32>
    %cst_355 = arith.constant 1.000000e+00 : f32
    %1437 = vector.broadcast %cst_355 : f32 to vector<8x128xf32>
    %1438 = arith.addf %1437, %1436 : vector<8x128xf32>
    %1439 = arith.divf %1437, %1438 : vector<8x128xf32>
    %1440 = vector.extract_strided_slice %1427 {offsets = [0, 256], sizes = [8, 128], strides = [1, 1]} : vector<8x512xf32> to vector<8x128xf32>
    %1441 = math.tanh %1440 : vector<8x128xf32>
    %1442 = vector.extract_strided_slice %1427 {offsets = [0, 384], sizes = [8, 128], strides = [1, 1]} : vector<8x512xf32> to vector<8x128xf32>
    %1443 = arith.negf %1442 : vector<8x128xf32>
    %1444 = math.exp %1443 : vector<8x128xf32>
    %cst_356 = arith.constant 1.000000e+00 : f32
    %1445 = vector.broadcast %cst_356 : f32 to vector<8x128xf32>
    %1446 = arith.addf %1445, %1444 : vector<8x128xf32>
    %1447 = arith.divf %1445, %1446 : vector<8x128xf32>
    %1448 = arith.mulf %1439, %1410 : vector<8x128xf32>
    %1449 = arith.mulf %1433, %1441 : vector<8x128xf32>
    %1450 = arith.addf %1448, %1449 : vector<8x128xf32>
    %1451 = math.tanh %1450 : vector<8x128xf32>
    %1452 = arith.mulf %1447, %1451 : vector<8x128xf32>
    %1453 = vector.broadcast %c5_i32_350 : i32 to vector<8x1xi32>
    %1454 = arith.cmpi slt, %1453, %2 : vector<8x1xi32>
    %1455 = vector.shape_cast %1454 : vector<8x1xi1> to vector<8x1xi1>
    %1456 = vector.broadcast %1455 : vector<8x1xi1> to vector<8x128xi1>
    %1457 = arith.select %1456, %1450, %1410 : vector<8x128xi1>, vector<8x128xf32>
    %1458 = vector.shape_cast %1454 : vector<8x1xi1> to vector<8x1xi1>
    %1459 = vector.broadcast %1458 : vector<8x1xi1> to vector<8x128xi1>
    %1460 = arith.select %1459, %1452, %1413 : vector<8x128xi1>, vector<8x128xf32>
    %cst_357 = arith.constant 0.000000e+00 : f32
    %1461 = vector.shape_cast %1454 : vector<8x1xi1> to vector<8x1xi1>
    %1462 = vector.broadcast %1461 : vector<8x1xi1> to vector<8x128xi1>
    %1463 = vector.broadcast %cst_357 : f32 to vector<8x128xf32>
    %1464 = arith.select %1462, %1452, %1463 : vector<8x128xi1>, vector<8x128xf32>
    %1465 = arith.index_cast %c5_i32_350 : i32 to index
    %c0_358 = arith.constant 0 : index
    %c0_359 = arith.constant 0 : index
    %1466 = vector.load %arg14[%1465, %c0_358, %c0_359] : memref<8x8x128xf32, #tpu.memory_space<vmem>>, vector<1x8x128xf32>
    %1467 = vector.shape_cast %1466 : vector<1x8x128xf32> to vector<8x128xf32>
    %1468 = vector.shape_cast %1464 : vector<8x128xf32> to vector<1x8x128xf32>
    tpu.vector_store %arg14[%1465, %c0_358, %c0_359], %1468 {strides = array<i32>} : memref<8x8x128xf32, #tpu.memory_space<vmem>>, vector<1x8x128xf32>,
    %c6_i32_360 = arith.constant 6 : i32
    %1469 = arith.index_cast %c6_i32_360 : i32 to index
    %c0_361 = arith.constant 0 : index
    %c0_362 = arith.constant 0 : index
    %1470 = vector.load %arg15[%1469, %c0_361, %c0_362] : memref<8x8x512xf32, #tpu.memory_space<vmem>>, vector<1x8x512xf32>
    %1471 = vector.shape_cast %1470 : vector<1x8x512xf32> to vector<8x512xf32>
    %1472 = arith.truncf %1460 : vector<8x128xf32> to vector<8x128xbf16>
    %cst_363 = arith.constant dense<0.000000e+00> : vector<8x512xf32>
    %1473 = tpu.matmul %1472, %1177, %cst_363 {dimension_numbers = #tpu.dot_dimension_numbers<[1], [0], [0], [1], [0, 0, 1, 1], [], []>} : vector<8x128xbf16>, vector<128x512xbf16>, vector<8x512xf32> -> vector<8x512xf32>
    %1474 = arith.addf %1471, %1473 : vector<8x512xf32>
    %1475 = vector.extract_strided_slice %1474 {offsets = [0, 0], sizes = [8, 128], strides = [1, 1]} : vector<8x512xf32> to vector<8x128xf32>
    %1476 = arith.negf %1475 : vector<8x128xf32>
    %1477 = math.exp %1476 : vector<8x128xf32>
    %cst_364 = arith.constant 1.000000e+00 : f32
    %1478 = vector.broadcast %cst_364 : f32 to vector<8x128xf32>
    %1479 = arith.addf %1478, %1477 : vector<8x128xf32>
    %1480 = arith.divf %1478, %1479 : vector<8x128xf32>
    %1481 = vector.extract_strided_slice %1474 {offsets = [0, 128], sizes = [8, 128], strides = [1, 1]} : vector<8x512xf32> to vector<8x128xf32>
    %1482 = arith.negf %1481 : vector<8x128xf32>
    %1483 = math.exp %1482 : vector<8x128xf32>
    %cst_365 = arith.constant 1.000000e+00 : f32
    %1484 = vector.broadcast %cst_365 : f32 to vector<8x128xf32>
    %1485 = arith.addf %1484, %1483 : vector<8x128xf32>
    %1486 = arith.divf %1484, %1485 : vector<8x128xf32>
    %1487 = vector.extract_strided_slice %1474 {offsets = [0, 256], sizes = [8, 128], strides = [1, 1]} : vector<8x512xf32> to vector<8x128xf32>
    %1488 = math.tanh %1487 : vector<8x128xf32>
    %1489 = vector.extract_strided_slice %1474 {offsets = [0, 384], sizes = [8, 128], strides = [1, 1]} : vector<8x512xf32> to vector<8x128xf32>
    %1490 = arith.negf %1489 : vector<8x128xf32>
    %1491 = math.exp %1490 : vector<8x128xf32>
    %cst_366 = arith.constant 1.000000e+00 : f32
    %1492 = vector.broadcast %cst_366 : f32 to vector<8x128xf32>
    %1493 = arith.addf %1492, %1491 : vector<8x128xf32>
    %1494 = arith.divf %1492, %1493 : vector<8x128xf32>
    %1495 = arith.mulf %1486, %1457 : vector<8x128xf32>
    %1496 = arith.mulf %1480, %1488 : vector<8x128xf32>
    %1497 = arith.addf %1495, %1496 : vector<8x128xf32>
    %1498 = math.tanh %1497 : vector<8x128xf32>
    %1499 = arith.mulf %1494, %1498 : vector<8x128xf32>
    %1500 = vector.broadcast %c6_i32_360 : i32 to vector<8x1xi32>
    %1501 = arith.cmpi slt, %1500, %2 : vector<8x1xi32>
    %1502 = vector.shape_cast %1501 : vector<8x1xi1> to vector<8x1xi1>
    %1503 = vector.broadcast %1502 : vector<8x1xi1> to vector<8x128xi1>
    %1504 = arith.select %1503, %1497, %1457 : vector<8x128xi1>, vector<8x128xf32>
    %1505 = vector.shape_cast %1501 : vector<8x1xi1> to vector<8x1xi1>
    %1506 = vector.broadcast %1505 : vector<8x1xi1> to vector<8x128xi1>
    %1507 = arith.select %1506, %1499, %1460 : vector<8x128xi1>, vector<8x128xf32>
    %cst_367 = arith.constant 0.000000e+00 : f32
    %1508 = vector.shape_cast %1501 : vector<8x1xi1> to vector<8x1xi1>
    %1509 = vector.broadcast %1508 : vector<8x1xi1> to vector<8x128xi1>
    %1510 = vector.broadcast %cst_367 : f32 to vector<8x128xf32>
    %1511 = arith.select %1509, %1499, %1510 : vector<8x128xi1>, vector<8x128xf32>
    %1512 = arith.index_cast %c6_i32_360 : i32 to index
    %c0_368 = arith.constant 0 : index
    %c0_369 = arith.constant 0 : index
    %1513 = vector.load %arg14[%1512, %c0_368, %c0_369] : memref<8x8x128xf32, #tpu.memory_space<vmem>>, vector<1x8x128xf32>
    %1514 = vector.shape_cast %1513 : vector<1x8x128xf32> to vector<8x128xf32>
    %1515 = vector.shape_cast %1511 : vector<8x128xf32> to vector<1x8x128xf32>
    tpu.vector_store %arg14[%1512, %c0_368, %c0_369], %1515 {strides = array<i32>} : memref<8x8x128xf32, #tpu.memory_space<vmem>>, vector<1x8x128xf32>,
    %c7_i32_370 = arith.constant 7 : i32
    %1516 = arith.index_cast %c7_i32_370 : i32 to index
    %c0_371 = arith.constant 0 : index
    %c0_372 = arith.constant 0 : index
    %1517 = vector.load %arg15[%1516, %c0_371, %c0_372] : memref<8x8x512xf32, #tpu.memory_space<vmem>>, vector<1x8x512xf32>
    %1518 = vector.shape_cast %1517 : vector<1x8x512xf32> to vector<8x512xf32>
    %1519 = arith.truncf %1507 : vector<8x128xf32> to vector<8x128xbf16>
    %cst_373 = arith.constant dense<0.000000e+00> : vector<8x512xf32>
    %1520 = tpu.matmul %1519, %1177, %cst_373 {dimension_numbers = #tpu.dot_dimension_numbers<[1], [0], [0], [1], [0, 0, 1, 1], [], []>} : vector<8x128xbf16>, vector<128x512xbf16>, vector<8x512xf32> -> vector<8x512xf32>
    %1521 = arith.addf %1518, %1520 : vector<8x512xf32>
    %1522 = vector.extract_strided_slice %1521 {offsets = [0, 0], sizes = [8, 128], strides = [1, 1]} : vector<8x512xf32> to vector<8x128xf32>
    %1523 = arith.negf %1522 : vector<8x128xf32>
    %1524 = math.exp %1523 : vector<8x128xf32>
    %cst_374 = arith.constant 1.000000e+00 : f32
    %1525 = vector.broadcast %cst_374 : f32 to vector<8x128xf32>
    %1526 = arith.addf %1525, %1524 : vector<8x128xf32>
    %1527 = arith.divf %1525, %1526 : vector<8x128xf32>
    %1528 = vector.extract_strided_slice %1521 {offsets = [0, 128], sizes = [8, 128], strides = [1, 1]} : vector<8x512xf32> to vector<8x128xf32>
    %1529 = arith.negf %1528 : vector<8x128xf32>
    %1530 = math.exp %1529 : vector<8x128xf32>
    %cst_375 = arith.constant 1.000000e+00 : f32
    %1531 = vector.broadcast %cst_375 : f32 to vector<8x128xf32>
    %1532 = arith.addf %1531, %1530 : vector<8x128xf32>
    %1533 = arith.divf %1531, %1532 : vector<8x128xf32>
    %1534 = vector.extract_strided_slice %1521 {offsets = [0, 256], sizes = [8, 128], strides = [1, 1]} : vector<8x512xf32> to vector<8x128xf32>
    %1535 = math.tanh %1534 : vector<8x128xf32>
    %1536 = vector.extract_strided_slice %1521 {offsets = [0, 384], sizes = [8, 128], strides = [1, 1]} : vector<8x512xf32> to vector<8x128xf32>
    %1537 = arith.negf %1536 : vector<8x128xf32>
    %1538 = math.exp %1537 : vector<8x128xf32>
    %cst_376 = arith.constant 1.000000e+00 : f32
    %1539 = vector.broadcast %cst_376 : f32 to vector<8x128xf32>
    %1540 = arith.addf %1539, %1538 : vector<8x128xf32>
    %1541 = arith.divf %1539, %1540 : vector<8x128xf32>
    %1542 = arith.mulf %1533, %1504 : vector<8x128xf32>
    %1543 = arith.mulf %1527, %1535 : vector<8x128xf32>
    %1544 = arith.addf %1542, %1543 : vector<8x128xf32>
    %1545 = math.tanh %1544 : vector<8x128xf32>
    %1546 = arith.mulf %1541, %1545 : vector<8x128xf32>
    %1547 = vector.broadcast %c7_i32_370 : i32 to vector<8x1xi32>
    %1548 = arith.cmpi slt, %1547, %2 : vector<8x1xi32>
    %1549 = vector.shape_cast %1548 : vector<8x1xi1> to vector<8x1xi1>
    %1550 = vector.broadcast %1549 : vector<8x1xi1> to vector<8x128xi1>
    %1551 = arith.select %1550, %1544, %1504 : vector<8x128xi1>, vector<8x128xf32>
    %1552 = vector.shape_cast %1548 : vector<8x1xi1> to vector<8x1xi1>
    %1553 = vector.broadcast %1552 : vector<8x1xi1> to vector<8x128xi1>
    %1554 = arith.select %1553, %1546, %1507 : vector<8x128xi1>, vector<8x128xf32>
    %cst_377 = arith.constant 0.000000e+00 : f32
    %1555 = vector.shape_cast %1548 : vector<8x1xi1> to vector<8x1xi1>
    %1556 = vector.broadcast %1555 : vector<8x1xi1> to vector<8x128xi1>
    %1557 = vector.broadcast %cst_377 : f32 to vector<8x128xf32>
    %1558 = arith.select %1556, %1546, %1557 : vector<8x128xi1>, vector<8x128xf32>
    %1559 = arith.index_cast %c7_i32_370 : i32 to index
    %c0_378 = arith.constant 0 : index
    %c0_379 = arith.constant 0 : index
    %1560 = vector.load %arg14[%1559, %c0_378, %c0_379] : memref<8x8x128xf32, #tpu.memory_space<vmem>>, vector<1x8x128xf32>
    %1561 = vector.shape_cast %1560 : vector<1x8x128xf32> to vector<8x128xf32>
    %1562 = vector.shape_cast %1558 : vector<8x128xf32> to vector<1x8x128xf32>
    tpu.vector_store %arg14[%1559, %c0_378, %c0_379], %1562 {strides = array<i32>} : memref<8x8x128xf32, #tpu.memory_space<vmem>>, vector<1x8x128xf32>,
    %c8_i32_380 = arith.constant 8 : i32
    %c0_381 = arith.constant 0 : index
    %c0_382 = arith.constant 0 : index
    %c0_383 = arith.constant 0 : index
    %1563 = vector.load %arg14[%c0_381, %c0_382, %c0_383] : memref<8x8x128xf32, #tpu.memory_space<vmem>>, vector<8x8x128xf32>
    %1564 = vector.shape_cast %1563 : vector<8x8x128xf32> to vector<64x128xf32>
    %1565 = arith.truncf %1564 : vector<64x128xf32> to vector<64x128xbf16>
    %c0_384 = arith.constant 0 : index
    %c0_385 = arith.constant 0 : index
    %1566 = vector.load %arg11[%c0_384, %c0_385] : memref<128x128xbf16, #tpu.memory_space<vmem>>, vector<128x128xbf16>
    %cst_386 = arith.constant dense<0.000000e+00> : vector<64x128xf32>
    %1567 = tpu.matmul %1565, %1566, %cst_386 {dimension_numbers = #tpu.dot_dimension_numbers<[1], [0], [0], [1], [0, 0, 1, 1], [], []>} : vector<64x128xbf16>, vector<128x128xbf16>, vector<64x128xf32> -> vector<64x128xf32>
    %c0_387 = arith.constant 0 : index
    %c0_388 = arith.constant 0 : index
    %1568 = vector.load %arg12[%c0_387, %c0_388] : memref<1x128xf32, #tpu.memory_space<vmem>>, vector<1x128xf32>
    %1569 = vector.broadcast %1568 : vector<1x128xf32> to vector<64x128xf32>
    %1570 = arith.addf %1567, %1569 : vector<64x128xf32>
    %1571 = vector.shape_cast %1570 : vector<64x128xf32> to vector<8x8x128xf32>
    %c0_389 = arith.constant 0 : index
    %c0_390 = arith.constant 0 : index
    %c0_391 = arith.constant 0 : index
    %1572 = vector.load %arg13[%c0_389, %c0_390, %c0_391] : memref<8x8x128xf32, #tpu.memory_space<vmem>>, vector<8x8x128xf32>
    tpu.vector_store %arg13[%c0_389, %c0_390, %c0_391], %1571 {strides = array<i32>} : memref<8x8x128xf32, #tpu.memory_space<vmem>>, vector<8x8x128xf32>,
    return
  }
  func.func @transform_0(%arg0: i32) -> (i32, i32, i32) {
    %c0_i32 = arith.constant 0 : i32
    %c0_i32_0 = arith.constant 0 : i32
    %c0_i32_1 = arith.constant 0 : i32
    return %c0_i32, %arg0, %c0_i32_0 : i32, i32, i32
  }
  func.func @transform_1(%arg0: i32) -> (i32, i32, i32) {
    %c0_i32 = arith.constant 0 : i32
    %c0_i32_0 = arith.constant 0 : i32
    %c0_i32_1 = arith.constant 0 : i32
    return %c0_i32, %arg0, %c0_i32_0 : i32, i32, i32
  }
  func.func @transform_2(%arg0: i32) -> (i32, i32) {
    %c0_i32 = arith.constant 0 : i32
    %c0_i32_0 = arith.constant 0 : i32
    return %arg0, %c0_i32 : i32, i32
  }
  func.func @transform_3(%arg0: i32) -> (i32, i32) {
    %c0_i32 = arith.constant 0 : i32
    %c0_i32_0 = arith.constant 0 : i32
    return %arg0, %c0_i32 : i32, i32
  }
  func.func @transform_4(%arg0: i32) -> (i32, i32, i32) {
    %c0_i32 = arith.constant 0 : i32
    %c0_i32_0 = arith.constant 0 : i32
    %c0_i32_1 = arith.constant 0 : i32
    %c0_i32_2 = arith.constant 0 : i32
    return %c0_i32, %c0_i32_0, %c0_i32_1 : i32, i32, i32
  }
  func.func @transform_5(%arg0: i32) -> (i32, i32, i32) {
    %c0_i32 = arith.constant 0 : i32
    %c0_i32_0 = arith.constant 0 : i32
    %c0_i32_1 = arith.constant 0 : i32
    %c0_i32_2 = arith.constant 0 : i32
    return %c0_i32, %c0_i32_0, %c0_i32_1 : i32, i32, i32
  }
  func.func @transform_6(%arg0: i32) -> (i32, i32, i32) {
    %c0_i32 = arith.constant 0 : i32
    %c0_i32_0 = arith.constant 0 : i32
    %c0_i32_1 = arith.constant 0 : i32
    %c0_i32_2 = arith.constant 0 : i32
    return %c0_i32, %c0_i32_0, %c0_i32_1 : i32, i32, i32
  }
  func.func @transform_7(%arg0: i32) -> (i32, i32, i32) {
    %c0_i32 = arith.constant 0 : i32
    %c0_i32_0 = arith.constant 0 : i32
    %c0_i32_1 = arith.constant 0 : i32
    %c0_i32_2 = arith.constant 0 : i32
    return %c0_i32, %c0_i32_0, %c0_i32_1 : i32, i32, i32
  }
  func.func @transform_8(%arg0: i32) -> (i32, i32, i32) {
    %c0_i32 = arith.constant 0 : i32
    %c0_i32_0 = arith.constant 0 : i32
    %c0_i32_1 = arith.constant 0 : i32
    %c0_i32_2 = arith.constant 0 : i32
    return %c0_i32, %c0_i32_0, %c0_i32_1 : i32, i32, i32
  }
  func.func @transform_9(%arg0: i32) -> (i32, i32, i32) {
    %c0_i32 = arith.constant 0 : i32
    %c0_i32_0 = arith.constant 0 : i32
    %c0_i32_1 = arith.constant 0 : i32
    %c0_i32_2 = arith.constant 0 : i32
    return %c0_i32, %c0_i32_0, %c0_i32_1 : i32, i32, i32
  }
  func.func @transform_10(%arg0: i32) -> (i32, i32) {
    %c0_i32 = arith.constant 0 : i32
    %c0_i32_0 = arith.constant 0 : i32
    %c0_i32_1 = arith.constant 0 : i32
    return %c0_i32, %c0_i32_0 : i32, i32
  }
  func.func @transform_11(%arg0: i32) -> (i32, i32) {
    %c0_i32 = arith.constant 0 : i32
    %c0_i32_0 = arith.constant 0 : i32
    %c0_i32_1 = arith.constant 0 : i32
    return %c0_i32, %c0_i32_0 : i32, i32
  }
  func.func @transform_12(%arg0: i32) -> (i32, i32, i32) {
    %c0_i32 = arith.constant 0 : i32
    %c0_i32_0 = arith.constant 0 : i32
    %c0_i32_1 = arith.constant 0 : i32
    return %c0_i32, %arg0, %c0_i32_0 : i32, i32, i32
  }
}

</mosaic_0001>

<llo_original>
// kernel: rnn_enc_dec_forward.1
$region0: #{rnn_enc_dec_forward.1}
  #allocation0 [shape = 'u32[]', space=smem, size = 0x4, offset = 0x4, fixed_abs, tag = 'smem constant byte address 0x4 - core index']
  #allocation1 [shape = 'u32[144,128]{1,0:T(1,128)}', space=vmem, size = 0x12000, scoped, tag = 'internal scratch']
  #allocation2 [shape = 'f32[8,8,128]{2,1,0:T(8,128)}', space=vmem, size = 0x8000, scoped, tag = 'scratch operand']
  #allocation3 [shape = 'f32[8,8,512]{2,1,0:T(8,128)}', space=vmem, size = 0x20000, scoped, tag = 'scratch operand']
  %s0 = inlined_call_operand.vmem [shape: f32[8,8,128], index: 0, kind: input, shape index: {}]
  %s1 = inlined_call_operand.vmem [shape: f32[8,8,128], index: 1, kind: input, shape index: {}]
  %s2 = inlined_call_operand.vmem [shape: s32[8,1], index: 2, kind: input, shape index: {}]
  %s3 = inlined_call_operand.vmem [shape: s32[8,1], index: 3, kind: input, shape index: {}]
  %s4 = inlined_call_operand.vmem [shape: bf16[2,128,512], index: 4, kind: input, shape index: {}]
  %s5 = inlined_call_operand.vmem [shape: bf16[2,128,512], index: 5, kind: input, shape index: {}]
  %s6 = inlined_call_operand.vmem [shape: f32[2,1,512], index: 6, kind: input, shape index: {}]
  %s7 = inlined_call_operand.vmem [shape: bf16[2,128,512], index: 7, kind: input, shape index: {}]
  %s8 = inlined_call_operand.vmem [shape: bf16[2,128,512], index: 8, kind: input, shape index: {}]
  %s9 = inlined_call_operand.vmem [shape: f32[2,1,512], index: 9, kind: input, shape index: {}]
  %s10 = inlined_call_operand.vmem [shape: bf16[128,128], index: 10, kind: input, shape index: {}]
  %s11 = inlined_call_operand.vmem [shape: f32[1,128], index: 11, kind: input, shape index: {}]
  %s12 = inlined_call_operand.vmem [shape: f32[8,8,128], index: 12, kind: output, shape index: {}]
  %s13 = sld [smem:[#allocation0]]
  $region58: #{rnn_enc_dec_forward.1} parent=0
    _
  %s15 = ssub.s32 1, %s13
  %s16 = scalar_select 0, %s15, %s13
  // Predicated region
  $region2: #{rnn_enc_dec_forward.1} parent=0 // pred_check
    _
  $region3: #{rnn_enc_dec_forward.1} parent=0 // pred_check_branch
    %18 = sbr.rel (0) target = $region5
  $region4: #{rnn_enc_dec_forward.1} parent=0 // pred_region
    _
  $region5: #{rnn_enc_dec_forward.1} parent=0 // pred_fallthru
    _
  // Predicated region
  $region6: #{rnn_enc_dec_forward.1} parent=0 // pred_check
    _
  $region7: #{rnn_enc_dec_forward.1} parent=0 // pred_check_branch
    %20 = sbr.rel (0) target = $region9
  $region8: #{rnn_enc_dec_forward.1} parent=0 // pred_region
    _
  $region9: #{rnn_enc_dec_forward.1} parent=0 // pred_fallthru
    _
  // Predicated region
  $region10: #{rnn_enc_dec_forward.1} parent=0 // pred_check
    _
  $region11: #{rnn_enc_dec_forward.1} parent=0 // pred_check_branch
    %22 = sbr.rel (0) target = $region13
  $region12: #{rnn_enc_dec_forward.1} parent=0 // pred_region
    _
  $region13: #{rnn_enc_dec_forward.1} parent=0 // pred_fallthru
    _
  // Predicated region
  $region14: #{rnn_enc_dec_forward.1} parent=0 // pred_check
    _
  $region15: #{rnn_enc_dec_forward.1} parent=0 // pred_check_branch
    %24 = sbr.rel (0) target = $region17
  $region16: #{rnn_enc_dec_forward.1} parent=0 // pred_region
    _
  $region17: #{rnn_enc_dec_forward.1} parent=0 // pred_fallthru
    _
  // Predicated region
  $region18: #{rnn_enc_dec_forward.1} parent=0 // pred_check
    _
  $region19: #{rnn_enc_dec_forward.1} parent=0 // pred_check_branch
    %26 = sbr.rel (0) target = $region21
  $region20: #{rnn_enc_dec_forward.1} parent=0 // pred_region
    _
  $region21: #{rnn_enc_dec_forward.1} parent=0 // pred_fallthru
    _
  // Predicated region
  $region22: #{rnn_enc_dec_forward.1} parent=0 // pred_check
    _
  $region23: #{rnn_enc_dec_forward.1} parent=0 // pred_check_branch
    %28 = sbr.rel (0) target = $region25
  $region24: #{rnn_enc_dec_forward.1} parent=0 // pred_region
    _
  $region25: #{rnn_enc_dec_forward.1} parent=0 // pred_fallthru
    _
  // Predicated region
  $region26: #{rnn_enc_dec_forward.1} parent=0 // pred_check
    _
  $region27: #{rnn_enc_dec_forward.1} parent=0 // pred_check_branch
    %30 = sbr.rel (0) target = $region29
  $region28: #{rnn_enc_dec_forward.1} parent=0 // pred_region
    _
  $region29: #{rnn_enc_dec_forward.1} parent=0 // pred_fallthru
    _
  // Predicated region
  $region30: #{rnn_enc_dec_forward.1} parent=0 // pred_check
    _
  $region31: #{rnn_enc_dec_forward.1} parent=0 // pred_check_branch
    %32 = sbr.rel (0) target = $region33
  $region32: #{rnn_enc_dec_forward.1} parent=0 // pred_region
    _
  $region33: #{rnn_enc_dec_forward.1} parent=0 // pred_fallthru
    _
  // Predicated region
  $region34: #{rnn_enc_dec_forward.1} parent=0 // pred_check
    _
  $region35: #{rnn_enc_dec_forward.1} parent=0 // pred_check_branch
    %34 = sbr.rel (0) target = $region37
  $region36: #{rnn_enc_dec_forward.1} parent=0 // pred_region
    _
  $region37: #{rnn_enc_dec_forward.1} parent=0 // pred_fallthru
    _
  // Predicated region
  $region38: #{rnn_enc_dec_forward.1} parent=0 // pred_check
    _
  $region39: #{rnn_enc_dec_forward.1} parent=0 // pred_check_branch
    %36 = sbr.rel (0) target = $region41
  $region40: #{rnn_enc_dec_forward.1} parent=0 // pred_region
    _
  $region41: #{rnn_enc_dec_forward.1} parent=0 // pred_fallthru
    _
  // Predicated region
  $region42: #{rnn_enc_dec_forward.1} parent=0 // pred_check
    _
  $region43: #{rnn_enc_dec_forward.1} parent=0 // pred_check_branch
    %38 = sbr.rel (0) target = $region45
  $region44: #{rnn_enc_dec_forward.1} parent=0 // pred_region
    _
  $region45: #{rnn_enc_dec_forward.1} parent=0 // pred_fallthru
    _
  // Predicated region
  $region46: #{rnn_enc_dec_forward.1} parent=0 // pred_check
    _
  $region47: #{rnn_enc_dec_forward.1} parent=0 // pred_check_branch
    %40 = sbr.rel (0) target = $region49
  $region48: #{rnn_enc_dec_forward.1} parent=0 // pred_region
    _
  $region49: #{rnn_enc_dec_forward.1} parent=0 // pred_fallthru
    _
  %v42 = vld [vmem:[%s2] sm:$0xff]
  %v43 = vld [vmem:[%s3] sm:$0xff]
  %v44 = vld [vmem:[%s0] sm:$0xff]
  %v45 = vld [vmem:[%s0 + $0x8] sm:$0xff]
  %v46 = vld [vmem:[%s0 + $0x10] sm:$0xff]
  %v47 = vld [vmem:[%s0 + $0x18] sm:$0xff]
  %v48 = vld [vmem:[%s0 + $0x20] sm:$0xff]
  %v49 = vld [vmem:[%s0 + $0x28] sm:$0xff]
  %v50 = vld [vmem:[%s0 + $0x30] sm:$0xff]
  %v51 = vld [vmem:[%s0 + $0x38] sm:$0xff]
  %v52 = vld [vmem:[%s4] sm:$0xff]
  %v53 = vld [vmem:[%s4 + $0x8] sm:$0xff]
  %v54 = vld [vmem:[%s4 + $0x10] sm:$0xff]
  %v55 = vld [vmem:[%s4 + $0x18] sm:$0xff]
  %v56 = vld [vmem:[%s4 + $0x20] sm:$0xff]
  %v57 = vld [vmem:[%s4 + $0x28] sm:$0xff]
  %v58 = vld [vmem:[%s4 + $0x30] sm:$0xff]
  %v59 = vld [vmem:[%s4 + $0x38] sm:$0xff]
  %v60 = vld [vmem:[%s4 + $0x40] sm:$0xff]
  %v61 = vld [vmem:[%s4 + $0x48] sm:$0xff]
  %v62 = vld [vmem:[%s4 + $0x50] sm:$0xff]
  %v63 = vld [vmem:[%s4 + $0x58] sm:$0xff]
  %v64 = vld [vmem:[%s4 + $0x60] sm:$0xff]
  %v65 = vld [vmem:[%s4 + $0x68] sm:$0xff]
  %v66 = vld [vmem:[%s4 + $0x70] sm:$0xff]
  %v67 = vld [vmem:[%s4 + $0x78] sm:$0xff]
  %v68 = vld [vmem:[%s4 + $0x80] sm:$0xff]
  %v69 = vld [vmem:[%s4 + $0x88] sm:$0xff]
  %v70 = vld [vmem:[%s4 + $0x90] sm:$0xff]
  %v71 = vld [vmem:[%s4 + $0x98] sm:$0xff]
  %v72 = vld [vmem:[%s4 + $0xa0] sm:$0xff]
  %v73 = vld [vmem:[%s4 + $0xa8] sm:$0xff]
  %v74 = vld [vmem:[%s4 + $0xb0] sm:$0xff]
  %v75 = vld [vmem:[%s4 + $0xb8] sm:$0xff]
  %v76 = vld [vmem:[%s4 + $0xc0] sm:$0xff]
  %v77 = vld [vmem:[%s4 + $0xc8] sm:$0xff]
  %v78 = vld [vmem:[%s4 + $0xd0] sm:$0xff]
  %v79 = vld [vmem:[%s4 + $0xd8] sm:$0xff]
  %v80 = vld [vmem:[%s4 + $0xe0] sm:$0xff]
  %v81 = vld [vmem:[%s4 + $0xe8] sm:$0xff]
  %v82 = vld [vmem:[%s4 + $0xf0] sm:$0xff]
  %v83 = vld [vmem:[%s4 + $0xf8] sm:$0xff]
  %v84 = vld [vmem:[%s5] sm:$0xff]
  %v85 = vld [vmem:[%s5 + $0x8] sm:$0xff]
  %v86 = vld [vmem:[%s5 + $0x10] sm:$0xff]
  %v87 = vld [vmem:[%s5 + $0x18] sm:$0xff]
  %v88 = vld [vmem:[%s5 + $0x20] sm:$0xff]
  %v89 = vld [vmem:[%s5 + $0x28] sm:$0xff]
  %v90 = vld [vmem:[%s5 + $0x30] sm:$0xff]
  %v91 = vld [vmem:[%s5 + $0x38] sm:$0xff]
  %v92 = vld [vmem:[%s5 + $0x40] sm:$0xff]
  %v93 = vld [vmem:[%s5 + $0x48] sm:$0xff]
  %v94 = vld [vmem:[%s5 + $0x50] sm:$0xff]
  %v95 = vld [vmem:[%s5 + $0x58] sm:$0xff]
  %v96 = vld [vmem:[%s5 + $0x60] sm:$0xff]
  %v97 = vld [vmem:[%s5 + $0x68] sm:$0xff]
  %v98 = vld [vmem:[%s5 + $0x70] sm:$0xff]
  %v99 = vld [vmem:[%s5 + $0x78] sm:$0xff]
  %v100 = vld [vmem:[%s5 + $0x80] sm:$0xff]
  %v101 = vld [vmem:[%s5 + $0x88] sm:$0xff]
  %v102 = vld [vmem:[%s5 + $0x90] sm:$0xff]
  %v103 = vld [vmem:[%s5 + $0x98] sm:$0xff]
  %v104 = vld [vmem:[%s5 + $0xa0] sm:$0xff]
  %v105 = vld [vmem:[%s5 + $0xa8] sm:$0xff]
  %v106 = vld [vmem:[%s5 + $0xb0] sm:$0xff]
  %v107 = vld [vmem:[%s5 + $0xb8] sm:$0xff]
  %v108 = vld [vmem:[%s5 + $0xc0] sm:$0xff]
  %v109 = vld [vmem:[%s5 + $0xc8] sm:$0xff]
  %v110 = vld [vmem:[%s5 + $0xd0] sm:$0xff]
  %v111 = vld [vmem:[%s5 + $0xd8] sm:$0xff]
  %v112 = vld [vmem:[%s5 + $0xe0] sm:$0xff]
  %v113 = vld [vmem:[%s5 + $0xe8] sm:$0xff]
  %v114 = vld [vmem:[%s5 + $0xf0] sm:$0xff]
  %v115 = vld [vmem:[%s5 + $0xf8] sm:$0xff]
  %v116 = vld [vmem:[%s6] sm:$0xf]
  %v117 = vpack.c.bf16 %v45, %v44
  %v118 = vpack.c.bf16 %v47, %v46
  %v119 = vpack.c.bf16 %v49, %v48
  %v120 = vpack.c.bf16 %v51, %v50
  %v122 = vlaneseq
  %v123 = vshrl.u32 %v122, 7
  %v124 = vsub.s32 0, %v123
  %v125 = vrot.slane %v116, %v124
  %v126 = vlaneseq
  %v127 = vshrl.u32 %v126, 7
  %v128 = vsub.s32 1, %v127
  %v129 = vrot.slane %v116, %v128
  %v130 = vlaneseq
  %v131 = vshrl.u32 %v130, 7
  %v132 = vsub.s32 2, %v131
  %v133 = vrot.slane %v116, %v132
  %v134 = vlaneseq
  %v135 = vshrl.u32 %v134, 7
  %v136 = vsub.s32 3, %v135
  %v137 = vrot.slane %v116, %v136
  %v174 = vunpack.c.l.b16 %v52
  %v175 = vunpack.c.h.b16 %v52
  %v176 = vunpack.c.l.b16 %v53
  %v177 = vunpack.c.h.b16 %v53
  %v178 = vunpack.c.l.b16 %v54
  %v179 = vunpack.c.h.b16 %v54
  %v180 = vunpack.c.l.b16 %v55
  %v181 = vunpack.c.h.b16 %v55
  %v182 = vunpack.c.l.b16 %v56
  %v183 = vunpack.c.h.b16 %v56
  %v184 = vunpack.c.l.b16 %v57
  %v185 = vunpack.c.h.b16 %v57
  %v186 = vunpack.c.l.b16 %v58
  %v187 = vunpack.c.h.b16 %v58
  %v188 = vunpack.c.l.b16 %v59
  %v189 = vunpack.c.h.b16 %v59
  %v190 = vunpack.c.l.b16 %v60
  %v191 = vunpack.c.h.b16 %v60
  %v192 = vunpack.c.l.b16 %v61
  %v193 = vunpack.c.h.b16 %v61
  %v194 = vunpack.c.l.b16 %v62
  %v195 = vunpack.c.h.b16 %v62
  %v196 = vunpack.c.l.b16 %v63
  %v197 = vunpack.c.h.b16 %v63
  %v198 = vunpack.c.l.b16 %v64
  %v199 = vunpack.c.h.b16 %v64
  %v200 = vunpack.c.l.b16 %v65
  %v201 = vunpack.c.h.b16 %v65
  %v202 = vunpack.c.l.b16 %v66
  %v203 = vunpack.c.h.b16 %v66
  %v204 = vunpack.c.l.b16 %v67
  %v205 = vunpack.c.h.b16 %v67
  %v206 = vunpack.c.l.b16 %v68
  %v207 = vunpack.c.h.b16 %v68
  %v208 = vunpack.c.l.b16 %v69
  %v209 = vunpack.c.h.b16 %v69
  %v210 = vunpack.c.l.b16 %v70
  %v211 = vunpack.c.h.b16 %v70
  %v212 = vunpack.c.l.b16 %v71
  %v213 = vunpack.c.h.b16 %v71
  %v214 = vunpack.c.l.b16 %v72
  %v215 = vunpack.c.h.b16 %v72
  %v216 = vunpack.c.l.b16 %v73
  %v217 = vunpack.c.h.b16 %v73
  %v218 = vunpack.c.l.b16 %v74
  %v219 = vunpack.c.h.b16 %v74
  %v220 = vunpack.c.l.b16 %v75
  %v221 = vunpack.c.h.b16 %v75
  %v222 = vunpack.c.l.b16 %v76
  %v223 = vunpack.c.h.b16 %v76
  %v224 = vunpack.c.l.b16 %v77
  %v225 = vunpack.c.h.b16 %v77
  %v226 = vunpack.c.l.b16 %v78
  %v227 = vunpack.c.h.b16 %v78
  %v228 = vunpack.c.l.b16 %v79
  %v229 = vunpack.c.h.b16 %v79
  %v230 = vunpack.c.l.b16 %v80
  %v231 = vunpack.c.h.b16 %v80
  %v232 = vunpack.c.l.b16 %v81
  %v233 = vunpack.c.h.b16 %v81
  %v234 = vunpack.c.l.b16 %v82
  %v235 = vunpack.c.h.b16 %v82
  %v236 = vunpack.c.l.b16 %v83
  %v237 = vunpack.c.h.b16 %v83
  %v238 = vpack.c.b16 %v178, %v174
  %v239 = vpack.c.b16 %v179, %v175
  %v240 = vpack.c.b16 %v180, %v176
  %v241 = vpack.c.b16 %v181, %v177
  %v242 = vpack.c.b16 %v186, %v182
  %v243 = vpack.c.b16 %v187, %v183
  %v244 = vpack.c.b16 %v188, %v184
  %v245 = vpack.c.b16 %v189, %v185
  %v246 = vpack.c.b16 %v194, %v190
  %v247 = vpack.c.b16 %v195, %v191
  %v248 = vpack.c.b16 %v196, %v192
  %v249 = vpack.c.b16 %v197, %v193
  %v250 = vpack.c.b16 %v202, %v198
  %v251 = vpack.c.b16 %v203, %v199
  %v252 = vpack.c.b16 %v204, %v200
  %v253 = vpack.c.b16 %v205, %v201
  %v254 = vpack.c.b16 %v210, %v206
  %v255 = vpack.c.b16 %v211, %v207
  %v256 = vpack.c.b16 %v212, %v208
  %v257 = vpack.c.b16 %v213, %v209
  %v258 = vpack.c.b16 %v218, %v214
  %v259 = vpack.c.b16 %v219, %v215
  %v260 = vpack.c.b16 %v220, %v216
  %v261 = vpack.c.b16 %v221, %v217
  %v262 = vpack.c.b16 %v226, %v222
  %v263 = vpack.c.b16 %v227, %v223
  %v264 = vpack.c.b16 %v228, %v224
  %v265 = vpack.c.b16 %v229, %v225
  %v266 = vpack.c.b16 %v234, %v230
  %v267 = vpack.c.b16 %v235, %v231
  %v268 = vpack.c.b16 %v236, %v232
  %v269 = vpack.c.b16 %v237, %v233
  %302 = vmatprep.subr.bf16.mxu0 %v267
  %303 = vmatpush1.bf16.msra.mxu0 %v266
  %304 = vmatprep.subr.bf16.mxu0 %v263
  %305 = vmatpush1.bf16.msra.mxu0 %v262
  %306 = vmatprep.subr.bf16.mxu0 %v259
  %307 = vmatpush1.bf16.msra.mxu0 %v258
  %308 = vmatprep.subr.bf16.mxu0 %v255
  %309 = vmatpush1.bf16.msra.mxu0 %v254
  %310 = vmatprep.subr.bf16.mxu0 %v251
  %311 = vmatpush1.bf16.msra.mxu0 %v250
  %312 = vmatprep.subr.bf16.mxu0 %v247
  %313 = vmatpush1.bf16.msra.mxu0 %v246
  %314 = vmatprep.subr.bf16.mxu0 %v243
  %315 = vmatpush1.bf16.msra.mxu0 %v242
  %316 = vmatprep.subr.bf16.mxu0 %v239
  %317 = vmatpush1.bf16.msra.mxu0 %v238
  %318 = vmatprep.subr.bf16.mxu0 0
  %319 = vmatpush2.bf16.msra.mxu0 0
  %320 = vmatprep.subr.bf16.mxu0 0
  %321 = vmatpush2.bf16.msra.mxu0 0
  %322 = vmatprep.subr.bf16.mxu0 0
  %323 = vmatpush2.bf16.msra.mxu0 0
  %324 = vmatprep.subr.bf16.mxu0 0
  %325 = vmatpush2.bf16.msra.mxu0 0
  %326 = vmatprep.subr.bf16.mxu0 0
  %327 = vmatpush2.bf16.msra.mxu0 0
  %328 = vmatprep.subr.bf16.mxu0 0
  %329 = vmatpush2.bf16.msra.mxu0 0
  %330 = vmatprep.subr.bf16.mxu0 0
  %331 = vmatpush2.bf16.msra.mxu0 0
  %332 = vmatprep.subr.bf16.mxu0 0
  %333 = vmatpush2.bf16.msra.mxu0 0
  %334 = vmatprep.mubr.bf16.mxu0 0
  %335 = vmatmul.mubr.bf16.gmra.mxu0 %v117
  %v336 = vpop.f32.mrf.mxu0
  %v337 = vadd.f32 %v125, %v336
  %v338 = vpop.f32.mrf.mxu0
  %v339 = vadd.f32 %v129, %v338
  %v340 = vpop.f32.mrf.mxu0
  %v341 = vadd.f32 %v125, %v340
  %v342 = vpop.f32.mrf.mxu0
  %v343 = vadd.f32 %v129, %v342
  %344 = vmatprep.mubr.bf16.mxu0 0
  %345 = vmatmul.mubr.bf16.gmra.mxu0 %v118
  %v346 = vpop.f32.mrf.mxu0
  %v347 = vadd.f32 %v125, %v346
  %v348 = vpop.f32.mrf.mxu0
  %v349 = vadd.f32 %v129, %v348
  %v350 = vpop.f32.mrf.mxu0
  %v351 = vadd.f32 %v125, %v350
  %v352 = vpop.f32.mrf.mxu0
  %v353 = vadd.f32 %v129, %v352
  %354 = vmatprep.mubr.bf16.mxu0 0
  %355 = vmatmul.mubr.bf16.gmra.mxu0 %v119
  %v356 = vpop.f32.mrf.mxu0
  %v357 = vadd.f32 %v125, %v356
  %v358 = vpop.f32.mrf.mxu0
  %v359 = vadd.f32 %v129, %v358
  %v360 = vpop.f32.mrf.mxu0
  %v361 = vadd.f32 %v125, %v360
  %v362 = vpop.f32.mrf.mxu0
  %v363 = vadd.f32 %v129, %v362
  %364 = vmatprep.mubr.bf16.mxu0 0
  %365 = vmatmul.mubr.bf16.gmra.mxu0 %v120
  %v366 = vpop.f32.mrf.mxu0
  %v367 = vadd.f32 %v125, %v366
  %v368 = vpop.f32.mrf.mxu0
  %v369 = vadd.f32 %v129, %v368
  %v370 = vpop.f32.mrf.mxu0
  %v371 = vadd.f32 %v125, %v370
  %v372 = vpop.f32.mrf.mxu0
  %v373 = vadd.f32 %v129, %v372
  %374 = vdwg.mxu0
  %375 = vmatprep.subr.bf16.mxu0 %v269
  %376 = vmatpush1.bf16.msra.mxu0 %v268
  %377 = vmatprep.subr.bf16.mxu0 %v265
  %378 = vmatpush1.bf16.msra.mxu0 %v264
  %379 = vmatprep.subr.bf16.mxu0 %v261
  %380 = vmatpush1.bf16.msra.mxu0 %v260
  %381 = vmatprep.subr.bf16.mxu0 %v257
  %382 = vmatpush1.bf16.msra.mxu0 %v256
  %383 = vmatprep.subr.bf16.mxu0 %v253
  %384 = vmatpush1.bf16.msra.mxu0 %v252
  %385 = vmatprep.subr.bf16.mxu0 %v249
  %386 = vmatpush1.bf16.msra.mxu0 %v248
  %387 = vmatprep.subr.bf16.mxu0 %v245
  %388 = vmatpush1.bf16.msra.mxu0 %v244
  %389 = vmatprep.subr.bf16.mxu0 %v241
  %390 = vmatpush1.bf16.msra.mxu0 %v240
  %391 = vmatprep.subr.bf16.mxu0 0
  %392 = vmatpush2.bf16.msra.mxu0 0
  %393 = vmatprep.subr.bf16.mxu0 0
  %394 = vmatpush2.bf16.msra.mxu0 0
  %395 = vmatprep.subr.bf16.mxu0 0
  %396 = vmatpush2.bf16.msra.mxu0 0
  %397 = vmatprep.subr.bf16.mxu0 0
  %398 = vmatpush2.bf16.msra.mxu0 0
  %399 = vmatprep.subr.bf16.mxu0 0
  %400 = vmatpush2.bf16.msra.mxu0 0
  %401 = vmatprep.subr.bf16.mxu0 0
  %402 = vmatpush2.bf16.msra.mxu0 0
  %403 = vmatprep.subr.bf16.mxu0 0
  %404 = vmatpush2.bf16.msra.mxu0 0
  %405 = vmatprep.subr.bf16.mxu0 0
  %406 = vmatpush2.bf16.msra.mxu0 0
  %407 = vmatprep.mubr.bf16.mxu0 0
  %408 = vmatmul.mubr.bf16.gmra.mxu0 %v117
  %v409 = vpop.f32.mrf.mxu0
  %v410 = vadd.f32 %v133, %v409
  %v411 = vpop.f32.mrf.mxu0
  %v412 = vadd.f32 %v137, %v411
  %v413 = vpop.f32.mrf.mxu0
  %v414 = vadd.f32 %v133, %v413
  %v415 = vpop.f32.mrf.mxu0
  %v416 = vadd.f32 %v137, %v415
  %417 = vmatprep.mubr.bf16.mxu0 0
  %418 = vmatmul.mubr.bf16.gmra.mxu0 %v118
  %v419 = vpop.f32.mrf.mxu0
  %v420 = vadd.f32 %v133, %v419
  %v421 = vpop.f32.mrf.mxu0
  %v422 = vadd.f32 %v137, %v421
  %v423 = vpop.f32.mrf.mxu0
  %v424 = vadd.f32 %v133, %v423
  %v425 = vpop.f32.mrf.mxu0
  %v426 = vadd.f32 %v137, %v425
  %427 = vmatprep.mubr.bf16.mxu0 0
  %428 = vmatmul.mubr.bf16.gmra.mxu0 %v119
  %v429 = vpop.f32.mrf.mxu0
  %v430 = vadd.f32 %v133, %v429
  %v431 = vpop.f32.mrf.mxu0
  %v432 = vadd.f32 %v137, %v431
  %v433 = vpop.f32.mrf.mxu0
  %v434 = vadd.f32 %v133, %v433
  %v435 = vpop.f32.mrf.mxu0
  %v436 = vadd.f32 %v137, %v435
  %437 = vmatprep.mubr.bf16.mxu0 0
  %438 = vmatmul.mubr.bf16.gmra.mxu0 %v120
  %v439 = vpop.f32.mrf.mxu0
  %v440 = vadd.f32 %v133, %v439
  %v441 = vpop.f32.mrf.mxu0
  %v442 = vadd.f32 %v137, %v441
  %v443 = vpop.f32.mrf.mxu0
  %v444 = vadd.f32 %v133, %v443
  %v445 = vpop.f32.mrf.mxu0
  %v446 = vadd.f32 %v137, %v445
  %447 = vdwg.mxu0
  %448 = vst [vmem:[#allocation3] sm:$0xff] %v337
  %449 = vst [vmem:[#allocation3 + $0x8] sm:$0xff] %v339
  %450 = vst [vmem:[#allocation3 + $0x10] sm:$0xff] %v410
  %451 = vst [vmem:[#allocation3 + $0x18] sm:$0xff] %v412
  %452 = vst [vmem:[#allocation3 + $0x20] sm:$0xff] %v341
  %453 = vst [vmem:[#allocation3 + $0x28] sm:$0xff] %v343
  %454 = vst [vmem:[#allocation3 + $0x30] sm:$0xff] %v414
  %455 = vst [vmem:[#allocation3 + $0x38] sm:$0xff] %v416
  %456 = vst [vmem:[#allocation3 + $0x40] sm:$0xff] %v347
  %457 = vst [vmem:[#allocation3 + $0x48] sm:$0xff] %v349
  %458 = vst [vmem:[#allocation3 + $0x50] sm:$0xff] %v420
  %459 = vst [vmem:[#allocation3 + $0x58] sm:$0xff] %v422
  %460 = vst [vmem:[#allocation3 + $0x60] sm:$0xff] %v351
  %461 = vst [vmem:[#allocation3 + $0x68] sm:$0xff] %v353
  %462 = vst [vmem:[#allocation3 + $0x70] sm:$0xff] %v424
  %463 = vst [vmem:[#allocation3 + $0x78] sm:$0xff] %v426
  %464 = vst [vmem:[#allocation3 + $0x80] sm:$0xff] %v357
  %465 = vst [vmem:[#allocation3 + $0x88] sm:$0xff] %v359
  %466 = vst [vmem:[#allocation3 + $0x90] sm:$0xff] %v430
  %467 = vst [vmem:[#allocation3 + $0x98] sm:$0xff] %v432
  %468 = vst [vmem:[#allocation3 + $0xa0] sm:$0xff] %v361
  %469 = vst [vmem:[#allocation3 + $0xa8] sm:$0xff] %v363
  %470 = vst [vmem:[#allocation3 + $0xb0] sm:$0xff] %v434
  %471 = vst [vmem:[#allocation3 + $0xb8] sm:$0xff] %v436
  %472 = vst [vmem:[#allocation3 + $0xc0] sm:$0xff] %v367
  %473 = vst [vmem:[#allocation3 + $0xc8] sm:$0xff] %v369
  %474 = vst [vmem:[#allocation3 + $0xd0] sm:$0xff] %v440
  %475 = vst [vmem:[#allocation3 + $0xd8] sm:$0xff] %v442
  %476 = vst [vmem:[#allocation3 + $0xe0] sm:$0xff] %v371
  %477 = vst [vmem:[#allocation3 + $0xe8] sm:$0xff] %v373
  %478 = vst [vmem:[#allocation3 + $0xf0] sm:$0xff] %v444
  %479 = vst [vmem:[#allocation3 + $0xf8] sm:$0xff] %v446
  %v480 = vld [vmem:[#allocation3] sm:$0xff]
  %v481 = vld [vmem:[#allocation3 + $0x8] sm:$0xff]
  %v482 = vld [vmem:[#allocation3 + $0x10] sm:$0xff]
  %v483 = vld [vmem:[#allocation3 + $0x18] sm:$0xff]
  %v516 = vunpack.c.l.b16 %v84
  %v517 = vunpack.c.h.b16 %v84
  %v518 = vunpack.c.l.b16 %v85
  %v519 = vunpack.c.h.b16 %v85
  %v520 = vunpack.c.l.b16 %v86
  %v521 = vunpack.c.h.b16 %v86
  %v522 = vunpack.c.l.b16 %v87
  %v523 = vunpack.c.h.b16 %v87
  %v524 = vunpack.c.l.b16 %v88
  %v525 = vunpack.c.h.b16 %v88
  %v526 = vunpack.c.l.b16 %v89
  %v527 = vunpack.c.h.b16 %v89
  %v528 = vunpack.c.l.b16 %v90
  %v529 = vunpack.c.h.b16 %v90
  %v530 = vunpack.c.l.b16 %v91
  %v531 = vunpack.c.h.b16 %v91
  %v532 = vunpack.c.l.b16 %v92
  %v533 = vunpack.c.h.b16 %v92
  %v534 = vunpack.c.l.b16 %v93
  %v535 = vunpack.c.h.b16 %v93
  %v536 = vunpack.c.l.b16 %v94
  %v537 = vunpack.c.h.b16 %v94
  %v538 = vunpack.c.l.b16 %v95
  %v539 = vunpack.c.h.b16 %v95
  %v540 = vunpack.c.l.b16 %v96
  %v541 = vunpack.c.h.b16 %v96
  %v542 = vunpack.c.l.b16 %v97
  %v543 = vunpack.c.h.b16 %v97
  %v544 = vunpack.c.l.b16 %v98
  %v545 = vunpack.c.h.b16 %v98
  %v546 = vunpack.c.l.b16 %v99
  %v547 = vunpack.c.h.b16 %v99
  %v548 = vunpack.c.l.b16 %v100
  %v549 = vunpack.c.h.b16 %v100
  %v550 = vunpack.c.l.b16 %v101
  %v551 = vunpack.c.h.b16 %v101
  %v552 = vunpack.c.l.b16 %v102
  %v553 = vunpack.c.h.b16 %v102
  %v554 = vunpack.c.l.b16 %v103
  %v555 = vunpack.c.h.b16 %v103
  %v556 = vunpack.c.l.b16 %v104
  %v557 = vunpack.c.h.b16 %v104
  %v558 = vunpack.c.l.b16 %v105
  %v559 = vunpack.c.h.b16 %v105
  %v560 = vunpack.c.l.b16 %v106
  %v561 = vunpack.c.h.b16 %v106
  %v562 = vunpack.c.l.b16 %v107
  %v563 = vunpack.c.h.b16 %v107
  %v564 = vunpack.c.l.b16 %v108
  %v565 = vunpack.c.h.b16 %v108
  %v566 = vunpack.c.l.b16 %v109
  %v567 = vunpack.c.h.b16 %v109
  %v568 = vunpack.c.l.b16 %v110
  %v569 = vunpack.c.h.b16 %v110
  %v570 = vunpack.c.l.b16 %v111
  %v571 = vunpack.c.h.b16 %v111
  %v572 = vunpack.c.l.b16 %v112
  %v573 = vunpack.c.h.b16 %v112
  %v574 = vunpack.c.l.b16 %v113
  %v575 = vunpack.c.h.b16 %v113
  %v576 = vunpack.c.l.b16 %v114
  %v577 = vunpack.c.h.b16 %v114
  %v578 = vunpack.c.l.b16 %v115
  %v579 = vunpack.c.h.b16 %v115
  %v580 = vpack.c.b16 %v520, %v516
  %v581 = vpack.c.b16 %v521, %v517
  %v582 = vpack.c.b16 %v522, %v518
  %v583 = vpack.c.b16 %v523, %v519
  %v584 = vpack.c.b16 %v528, %v524
  %v585 = vpack.c.b16 %v529, %v525
  %v586 = vpack.c.b16 %v530, %v526
  %v587 = vpack.c.b16 %v531, %v527
  %v588 = vpack.c.b16 %v536, %v532
  %v589 = vpack.c.b16 %v537, %v533
  %v590 = vpack.c.b16 %v538, %v534
  %v591 = vpack.c.b16 %v539, %v535
  %v592 = vpack.c.b16 %v544, %v540
  %v593 = vpack.c.b16 %v545, %v541
  %v594 = vpack.c.b16 %v546, %v542
  %v595 = vpack.c.b16 %v547, %v543
  %v596 = vpack.c.b16 %v552, %v548
  %v597 = vpack.c.b16 %v553, %v549
  %v598 = vpack.c.b16 %v554, %v550
  %v599 = vpack.c.b16 %v555, %v551
  %v600 = vpack.c.b16 %v560, %v556
  %v601 = vpack.c.b16 %v561, %v557
  %v602 = vpack.c.b16 %v562, %v558
  %v603 = vpack.c.b16 %v563, %v559
  %v604 = vpack.c.b16 %v568, %v564
  %v605 = vpack.c.b16 %v569, %v565
  %v606 = vpack.c.b16 %v570, %v566
  %v607 = vpack.c.b16 %v571, %v567
  %v608 = vpack.c.b16 %v576, %v572
  %v609 = vpack.c.b16 %v577, %v573
  %v610 = vpack.c.b16 %v578, %v574
  %v611 = vpack.c.b16 %v579, %v575
  %644 = vmatprep.subr.bf16.mxu0 %v609
  %645 = vmatpush1.bf16.msra.mxu0 %v608
  %646 = vmatprep.subr.bf16.mxu0 %v605
  %647 = vmatpush1.bf16.msra.mxu0 %v604
  %648 = vmatprep.subr.bf16.mxu0 %v601
  %649 = vmatpush1.bf16.msra.mxu0 %v600
  %650 = vmatprep.subr.bf16.mxu0 %v597
  %651 = vmatpush1.bf16.msra.mxu0 %v596
  %652 = vmatprep.subr.bf16.mxu0 %v593
  %653 = vmatpush1.bf16.msra.mxu0 %v592
  %654 = vmatprep.subr.bf16.mxu0 %v589
  %655 = vmatpush1.bf16.msra.mxu0 %v588
  %656 = vmatprep.subr.bf16.mxu0 %v585
  %657 = vmatpush1.bf16.msra.mxu0 %v584
  %658 = vmatprep.subr.bf16.mxu0 %v581
  %659 = vmatpush1.bf16.msra.mxu0 %v580
  %660 = vmatprep.subr.bf16.mxu0 0
  %661 = vmatpush2.bf16.msra.mxu0 0
  %662 = vmatprep.subr.bf16.mxu0 0
  %663 = vmatpush2.bf16.msra.mxu0 0
  %664 = vmatprep.subr.bf16.mxu0 0
  %665 = vmatpush2.bf16.msra.mxu0 0
  %666 = vmatprep.subr.bf16.mxu0 0
  %667 = vmatpush2.bf16.msra.mxu0 0
  %668 = vmatprep.subr.bf16.mxu0 0
  %669 = vmatpush2.bf16.msra.mxu0 0
  %670 = vmatprep.subr.bf16.mxu0 0
  %671 = vmatpush2.bf16.msra.mxu0 0
  %672 = vmatprep.subr.bf16.mxu0 0
  %673 = vmatpush2.bf16.msra.mxu0 0
  %674 = vmatprep.subr.bf16.mxu0 0
  %675 = vmatpush2.bf16.msra.mxu0 0
  %676 = vmatprep.mubr.bf16.mxu0 0
  %677 = vmatmul.mubr.bf16.gmra.mxu0 0
  %v678 = vpop.f32.mrf.mxu0
  %v679 = vadd.f32 0.0, %v678
  %v680 = vpop.f32.mrf.mxu0
  %v681 = vadd.f32 0.0, %v680
  %v682 = vpop.f32.mrf.mxu0
  %v683 = vpop.f32.mrf.mxu0
  %684 = vdwg.mxu0
  %685 = vmatprep.subr.bf16.mxu0 %v611
  %686 = vmatpush1.bf16.msra.mxu0 %v610
  %687 = vmatprep.subr.bf16.mxu0 %v607
  %688 = vmatpush1.bf16.msra.mxu0 %v606
  %689 = vmatprep.subr.bf16.mxu0 %v603
  %690 = vmatpush1.bf16.msra.mxu0 %v602
  %691 = vmatprep.subr.bf16.mxu0 %v599
  %692 = vmatpush1.bf16.msra.mxu0 %v598
  %693 = vmatprep.subr.bf16.mxu0 %v595
  %694 = vmatpush1.bf16.msra.mxu0 %v594
  %695 = vmatprep.subr.bf16.mxu0 %v591
  %696 = vmatpush1.bf16.msra.mxu0 %v590
  %697 = vmatprep.subr.bf16.mxu0 %v587
  %698 = vmatpush1.bf16.msra.mxu0 %v586
  %699 = vmatprep.subr.bf16.mxu0 %v583
  %700 = vmatpush1.bf16.msra.mxu0 %v582
  %701 = vmatprep.subr.bf16.mxu0 0
  %702 = vmatpush2.bf16.msra.mxu0 0
  %703 = vmatprep.subr.bf16.mxu0 0
  %704 = vmatpush2.bf16.msra.mxu0 0
  %705 = vmatprep.subr.bf16.mxu0 0
  %706 = vmatpush2.bf16.msra.mxu0 0
  %707 = vmatprep.subr.bf16.mxu0 0
  %708 = vmatpush2.bf16.msra.mxu0 0
  %709 = vmatprep.subr.bf16.mxu0 0
  %710 = vmatpush2.bf16.msra.mxu0 0
  %711 = vmatprep.subr.bf16.mxu0 0
  %712 = vmatpush2.bf16.msra.mxu0 0
  %713 = vmatprep.subr.bf16.mxu0 0
  %714 = vmatpush2.bf16.msra.mxu0 0
  %715 = vmatprep.subr.bf16.mxu0 0
  %716 = vmatpush2.bf16.msra.mxu0 0
  %717 = vmatprep.mubr.bf16.mxu0 0
  %718 = vmatmul.mubr.bf16.gmra.mxu0 0
  %v719 = vpop.f32.mrf.mxu0
  %v720 = vadd.f32 0.0, %v719
  %v721 = vpop.f32.mrf.mxu0
  %v722 = vadd.f32 0.0, %v721
  %v723 = vpop.f32.mrf.mxu0
  %v724 = vpop.f32.mrf.mxu0
  %725 = vdwg.mxu0
  %v726 = vadd.f32 %v480, %v679
  %v727 = vadd.f32 %v481, %v681
  %v728 = vadd.f32 %v482, %v720
  %v729 = vadd.f32 %v483, %v722
  %v730 = vxor.u32 %v726, 2147483648
  %v731 = vmul.f32 %v730, 1.442695
  %v732 = vpow.pop %v731
  %v733 = vadd.f32 %v732, 1.0
  %v734 = vrcp.pop %v733
  %v735 = vmul.f32 1.0, %v734
  %v736 = vxor.u32 %v727, 2147483648
  %v737 = vmul.f32 %v736, 1.442695
  %v738 = vpow.pop %v737
  %v739 = vadd.f32 %v738, 1.0
  %v740 = vrcp.pop %v739
  %v741 = vmul.f32 1.0, %v740
  %v742 = vtanh.pop %v728
  %v743 = vxor.u32 %v729, 2147483648
  %v744 = vmul.f32 %v743, 1.442695
  %v745 = vpow.pop %v744
  %v746 = vadd.f32 %v745, 1.0
  %v747 = vrcp.pop %v746
  %v748 = vmul.f32 1.0, %v747
  %v749 = vmul.f32 %v741, 0.0
  %v750 = vmul.f32 %v735, %v742
  %v751 = vadd.f32 %v749, %v750
  %v752 = vtanh.pop %v751
  %v753 = vmul.f32 %v748, %v752
  %vm754 = vcmp.gt.s32.totalorder %v42, 0
  %v755 = vsel %vm754, 1, 0
  %756 = vset.pattern.permute.xlu0 0
  %757 = vperm.xlu0 %756, %v755
  %v758 = vpop.permute.xlu0 %757
  %vm759 = vcmp.eq.s32.totalorder %v758, 1
  %v760 = vsel %vm759, %v751, 0.0
  %v761 = vsel %vm759, %v753, 0.0
  %762 = vst [vmem:[#allocation2] sm:$0xff] %v761
  %s763 = scalar_lea.vmem [#allocation3], 32
  %v764 = vld [vmem:[%s763] sm:$0xff]
  %v765 = vld [vmem:[%s763 + $0x8] sm:$0xff]
  %v766 = vld [vmem:[%s763 + $0x10] sm:$0xff]
  %v767 = vld [vmem:[%s763 + $0x18] sm:$0xff]
  %v768 = vpack.c.bf16 %v761, %v761
  %769 = vmatprep.subr.bf16.mxu0 %v609
  %770 = vmatpush1.bf16.msra.mxu0 %v608
  %771 = vmatprep.subr.bf16.mxu0 %v605
  %772 = vmatpush1.bf16.msra.mxu0 %v604
  %773 = vmatprep.subr.bf16.mxu0 %v601
  %774 = vmatpush1.bf16.msra.mxu0 %v600
  %775 = vmatprep.subr.bf16.mxu0 %v597
  %776 = vmatpush1.bf16.msra.mxu0 %v596
  %777 = vmatprep.subr.bf16.mxu0 %v593
  %778 = vmatpush1.bf16.msra.mxu0 %v592
  %779 = vmatprep.subr.bf16.mxu0 %v589
  %780 = vmatpush1.bf16.msra.mxu0 %v588
  %781 = vmatprep.subr.bf16.mxu0 %v585
  %782 = vmatpush1.bf16.msra.mxu0 %v584
  %783 = vmatprep.subr.bf16.mxu0 %v581
  %784 = vmatpush1.bf16.msra.mxu0 %v580
  %785 = vmatprep.subr.bf16.mxu0 0
  %786 = vmatpush2.bf16.msra.mxu0 0
  %787 = vmatprep.subr.bf16.mxu0 0
  %788 = vmatpush2.bf16.msra.mxu0 0
  %789 = vmatprep.subr.bf16.mxu0 0
  %790 = vmatpush2.bf16.msra.mxu0 0
  %791 = vmatprep.subr.bf16.mxu0 0
  %792 = vmatpush2.bf16.msra.mxu0 0
  %793 = vmatprep.subr.bf16.mxu0 0
  %794 = vmatpush2.bf16.msra.mxu0 0
  %795 = vmatprep.subr.bf16.mxu0 0
  %796 = vmatpush2.bf16.msra.mxu0 0
  %797 = vmatprep.subr.bf16.mxu0 0
  %798 = vmatpush2.bf16.msra.mxu0 0
  %799 = vmatprep.subr.bf16.mxu0 0
  %800 = vmatpush2.bf16.msra.mxu0 0
  %801 = vmatprep.mubr.bf16.mxu0 0
  %802 = vmatmul.mubr.bf16.gmra.mxu0 %v768
  %v803 = vpop.f32.mrf.mxu0
  %v804 = vadd.f32 0.0, %v803
  %v805 = vpop.f32.mrf.mxu0
  %v806 = vadd.f32 0.0, %v805
  %v807 = vpop.f32.mrf.mxu0
  %v808 = vpop.f32.mrf.mxu0
  %809 = vdwg.mxu0
  %810 = vmatprep.subr.bf16.mxu0 %v611
  %811 = vmatpush1.bf16.msra.mxu0 %v610
  %812 = vmatprep.subr.bf16.mxu0 %v607
  %813 = vmatpush1.bf16.msra.mxu0 %v606
  %814 = vmatprep.subr.bf16.mxu0 %v603
  %815 = vmatpush1.bf16.msra.mxu0 %v602
  %816 = vmatprep.subr.bf16.mxu0 %v599
  %817 = vmatpush1.bf16.msra.mxu0 %v598
  %818 = vmatprep.subr.bf16.mxu0 %v595
  %819 = vmatpush1.bf16.msra.mxu0 %v594
  %820 = vmatprep.subr.bf16.mxu0 %v591
  %821 = vmatpush1.bf16.msra.mxu0 %v590
  %822 = vmatprep.subr.bf16.mxu0 %v587
  %823 = vmatpush1.bf16.msra.mxu0 %v586
  %824 = vmatprep.subr.bf16.mxu0 %v583
  %825 = vmatpush1.bf16.msra.mxu0 %v582
  %826 = vmatprep.subr.bf16.mxu0 0
  %827 = vmatpush2.bf16.msra.mxu0 0
  %828 = vmatprep.subr.bf16.mxu0 0
  %829 = vmatpush2.bf16.msra.mxu0 0
  %830 = vmatprep.subr.bf16.mxu0 0
  %831 = vmatpush2.bf16.msra.mxu0 0
  %832 = vmatprep.subr.bf16.mxu0 0
  %833 = vmatpush2.bf16.msra.mxu0 0
  %834 = vmatprep.subr.bf16.mxu0 0
  %835 = vmatpush2.bf16.msra.mxu0 0
  %836 = vmatprep.subr.bf16.mxu0 0
  %837 = vmatpush2.bf16.msra.mxu0 0
  %838 = vmatprep.subr.bf16.mxu0 0
  %839 = vmatpush2.bf16.msra.mxu0 0
  %840 = vmatprep.subr.bf16.mxu0 0
  %841 = vmatpush2.bf16.msra.mxu0 0
  %842 = vmatprep.mubr.bf16.mxu0 0
  %843 = vmatmul.mubr.bf16.gmra.mxu0 %v768
  %v844 = vpop.f32.mrf.mxu0
  %v845 = vadd.f32 0.0, %v844
  %v846 = vpop.f32.mrf.mxu0
  %v847 = vadd.f32 0.0, %v846
  %v848 = vpop.f32.mrf.mxu0
  %v849 = vpop.f32.mrf.mxu0
  %850 = vdwg.mxu0
  %v851 = vadd.f32 %v764, %v804
  %v852 = vadd.f32 %v765, %v806
  %v853 = vadd.f32 %v766, %v845
  %v854 = vadd.f32 %v767, %v847
  %v855 = vxor.u32 %v851, 2147483648
  %v856 = vmul.f32 %v855, 1.442695
  %v857 = vpow.pop %v856
  %v858 = vadd.f32 %v857, 1.0
  %v859 = vrcp.pop %v858
  %v860 = vmul.f32 1.0, %v859
  %v861 = vxor.u32 %v852, 2147483648
  %v862 = vmul.f32 %v861, 1.442695
  %v863 = vpow.pop %v862
  %v864 = vadd.f32 %v863, 1.0
  %v865 = vrcp.pop %v864
  %v866 = vmul.f32 1.0, %v865
  %v867 = vtanh.pop %v853
  %v868 = vxor.u32 %v854, 2147483648
  %v869 = vmul.f32 %v868, 1.442695
  %v870 = vpow.pop %v869
  %v871 = vadd.f32 %v870, 1.0
  %v872 = vrcp.pop %v871
  %v873 = vmul.f32 1.0, %v872
  %v874 = vmul.f32 %v866, %v760
  %v875 = vmul.f32 %v860, %v867
  %v876 = vadd.f32 %v874, %v875
  %v877 = vtanh.pop %v876
  %v878 = vmul.f32 %v873, %v877
  %vm879 = vcmp.gt.s32.totalorder %v42, 1
  %v880 = vsel %vm879, 1, 0
  %881 = vset.pattern.permute.xlu0 0
  %882 = vperm.xlu0 %881, %v880
  %v883 = vpop.permute.xlu0 %882
  %vm884 = vcmp.eq.s32.totalorder %v883, 1
  %v885 = vsel %vm884, %v876, %v760
  %v886 = vsel %vm884, %v878, %v761
  %v887 = vsel %vm884, %v878, 0.0
  %s888 = scalar_lea.vmem [#allocation2], 8
  %889 = vst [vmem:[%s888] sm:$0xff] %v887
  %s890 = scalar_lea.vmem [#allocation3], 64
  %v891 = vld [vmem:[%s890] sm:$0xff]
  %v892 = vld [vmem:[%s890 + $0x8] sm:$0xff]
  %v893 = vld [vmem:[%s890 + $0x10] sm:$0xff]
  %v894 = vld [vmem:[%s890 + $0x18] sm:$0xff]
  %v895 = vpack.c.bf16 %v886, %v886
  %896 = vmatprep.subr.bf16.mxu0 %v609
  %897 = vmatpush1.bf16.msra.mxu0 %v608
  %898 = vmatprep.subr.bf16.mxu0 %v605
  %899 = vmatpush1.bf16.msra.mxu0 %v604
  %900 = vmatprep.subr.bf16.mxu0 %v601
  %901 = vmatpush1.bf16.msra.mxu0 %v600
  %902 = vmatprep.subr.bf16.mxu0 %v597
  %903 = vmatpush1.bf16.msra.mxu0 %v596
  %904 = vmatprep.subr.bf16.mxu0 %v593
  %905 = vmatpush1.bf16.msra.mxu0 %v592
  %906 = vmatprep.subr.bf16.mxu0 %v589
  %907 = vmatpush1.bf16.msra.mxu0 %v588
  %908 = vmatprep.subr.bf16.mxu0 %v585
  %909 = vmatpush1.bf16.msra.mxu0 %v584
  %910 = vmatprep.subr.bf16.mxu0 %v581
  %911 = vmatpush1.bf16.msra.mxu0 %v580
  %912 = vmatprep.subr.bf16.mxu0 0
  %913 = vmatpush2.bf16.msra.mxu0 0
  %914 = vmatprep.subr.bf16.mxu0 0
  %915 = vmatpush2.bf16.msra.mxu0 0
  %916 = vmatprep.subr.bf16.mxu0 0
  %917 = vmatpush2.bf16.msra.mxu0 0
  %918 = vmatprep.subr.bf16.mxu0 0
  %919 = vmatpush2.bf16.msra.mxu0 0
  %920 = vmatprep.subr.bf16.mxu0 0
  %921 = vmatpush2.bf16.msra.mxu0 0
  %922 = vmatprep.subr.bf16.mxu0 0
  %923 = vmatpush2.bf16.msra.mxu0 0
  %924 = vmatprep.subr.bf16.mxu0 0
  %925 = vmatpush2.bf16.msra.mxu0 0
  %926 = vmatprep.subr.bf16.mxu0 0
  %927 = vmatpush2.bf16.msra.mxu0 0
  %928 = vmatprep.mubr.bf16.mxu0 0
  %929 = vmatmul.mubr.bf16.gmra.mxu0 %v895
  %v930 = vpop.f32.mrf.mxu0
  %v931 = vadd.f32 0.0, %v930
  %v932 = vpop.f32.mrf.mxu0
  %v933 = vadd.f32 0.0, %v932
  %v934 = vpop.f32.mrf.mxu0
  %v935 = vpop.f32.mrf.mxu0
  %936 = vdwg.mxu0
  %937 = vmatprep.subr.bf16.mxu0 %v611
  %938 = vmatpush1.bf16.msra.mxu0 %v610
  %939 = vmatprep.subr.bf16.mxu0 %v607
  %940 = vmatpush1.bf16.msra.mxu0 %v606
  %941 = vmatprep.subr.bf16.mxu0 %v603
  %942 = vmatpush1.bf16.msra.mxu0 %v602
  %943 = vmatprep.subr.bf16.mxu0 %v599
  %944 = vmatpush1.bf16.msra.mxu0 %v598
  %945 = vmatprep.subr.bf16.mxu0 %v595
  %946 = vmatpush1.bf16.msra.mxu0 %v594
  %947 = vmatprep.subr.bf16.mxu0 %v591
  %948 = vmatpush1.bf16.msra.mxu0 %v590
  %949 = vmatprep.subr.bf16.mxu0 %v587
  %950 = vmatpush1.bf16.msra.mxu0 %v586
  %951 = vmatprep.subr.bf16.mxu0 %v583
  %952 = vmatpush1.bf16.msra.mxu0 %v582
  %953 = vmatprep.subr.bf16.mxu0 0
  %954 = vmatpush2.bf16.msra.mxu0 0
  %955 = vmatprep.subr.bf16.mxu0 0
  %956 = vmatpush2.bf16.msra.mxu0 0
  %957 = vmatprep.subr.bf16.mxu0 0
  %958 = vmatpush2.bf16.msra.mxu0 0
  %959 = vmatprep.subr.bf16.mxu0 0
  %960 = vmatpush2.bf16.msra.mxu0 0
  %961 = vmatprep.subr.bf16.mxu0 0
  %962 = vmatpush2.bf16.msra.mxu0 0
  %963 = vmatprep.subr.bf16.mxu0 0
  %964 = vmatpush2.bf16.msra.mxu0 0
  %965 = vmatprep.subr.bf16.mxu0 0
  %966 = vmatpush2.bf16.msra.mxu0 0
  %967 = vmatprep.subr.bf16.mxu0 0
  %968 = vmatpush2.bf16.msra.mxu0 0
  %969 = vmatprep.mubr.bf16.mxu0 0
  %970 = vmatmul.mubr.bf16.gmra.mxu0 %v895
  %v971 = vpop.f32.mrf.mxu0
  %v972 = vadd.f32 0.0, %v971
  %v973 = vpop.f32.mrf.mxu0
  %v974 = vadd.f32 0.0, %v973
  %v975 = vpop.f32.mrf.mxu0
  %v976 = vpop.f32.mrf.mxu0
  %977 = vdwg.mxu0
  %v978 = vadd.f32 %v891, %v931
  %v979 = vadd.f32 %v892, %v933
  %v980 = vadd.f32 %v893, %v972
  %v981 = vadd.f32 %v894, %v974
  %v982 = vxor.u32 %v978, 2147483648
  %v983 = vmul.f32 %v982, 1.442695
  %v984 = vpow.pop %v983
  %v985 = vadd.f32 %v984, 1.0
  %v986 = vrcp.pop %v985
  %v987 = vmul.f32 1.0, %v986
  %v988 = vxor.u32 %v979, 2147483648
  %v989 = vmul.f32 %v988, 1.442695
  %v990 = vpow.pop %v989
  %v991 = vadd.f32 %v990, 1.0
  %v992 = vrcp.pop %v991
  %v993 = vmul.f32 1.0, %v992
  %v994 = vtanh.pop %v980
  %v995 = vxor.u32 %v981, 2147483648
  %v996 = vmul.f32 %v995, 1.442695
  %v997 = vpow.pop %v996
  %v998 = vadd.f32 %v997, 1.0
  %v999 = vrcp.pop %v998
  %v1000 = vmul.f32 1.0, %v999
  %v1001 = vmul.f32 %v993, %v885
  %v1002 = vmul.f32 %v987, %v994
  %v1003 = vadd.f32 %v1001, %v1002
  %v1004 = vtanh.pop %v1003
  %v1005 = vmul.f32 %v1000, %v1004
  %vm1006 = vcmp.gt.s32.totalorder %v42, 2
  %v1007 = vsel %vm1006, 1, 0
  %1008 = vset.pattern.permute.xlu0 0
  %1009 = vperm.xlu0 %1008, %v1007
  %v1010 = vpop.permute.xlu0 %1009
  %vm1011 = vcmp.eq.s32.totalorder %v1010, 1
  %v1012 = vsel %vm1011, %v1003, %v885
  %v1013 = vsel %vm1011, %v1005, %v886
  %v1014 = vsel %vm1011, %v1005, 0.0
  %s1015 = scalar_lea.vmem [#allocation2], 16
  %1016 = vst [vmem:[%s1015] sm:$0xff] %v1014
  %s1017 = scalar_lea.vmem [#allocation3], 96
  %v1018 = vld [vmem:[%s1017] sm:$0xff]
  %v1019 = vld [vmem:[%s1017 + $0x8] sm:$0xff]
  %v1020 = vld [vmem:[%s1017 + $0x10] sm:$0xff]
  %v1021 = vld [vmem:[%s1017 + $0x18] sm:$0xff]
  %v1022 = vpack.c.bf16 %v1013, %v1013
  %1023 = vmatprep.subr.bf16.mxu0 %v609
  %1024 = vmatpush1.bf16.msra.mxu0 %v608
  %1025 = vmatprep.subr.bf16.mxu0 %v605
  %1026 = vmatpush1.bf16.msra.mxu0 %v604
  %1027 = vmatprep.subr.bf16.mxu0 %v601
  %1028 = vmatpush1.bf16.msra.mxu0 %v600
  %1029 = vmatprep.subr.bf16.mxu0 %v597
  %1030 = vmatpush1.bf16.msra.mxu0 %v596
  %1031 = vmatprep.subr.bf16.mxu0 %v593
  %1032 = vmatpush1.bf16.msra.mxu0 %v592
  %1033 = vmatprep.subr.bf16.mxu0 %v589
  %1034 = vmatpush1.bf16.msra.mxu0 %v588
  %1035 = vmatprep.subr.bf16.mxu0 %v585
  %1036 = vmatpush1.bf16.msra.mxu0 %v584
  %1037 = vmatprep.subr.bf16.mxu0 %v581
  %1038 = vmatpush1.bf16.msra.mxu0 %v580
  %1039 = vmatprep.subr.bf16.mxu0 0
  %1040 = vmatpush2.bf16.msra.mxu0 0
  %1041 = vmatprep.subr.bf16.mxu0 0
  %1042 = vmatpush2.bf16.msra.mxu0 0
  %1043 = vmatprep.subr.bf16.mxu0 0
  %1044 = vmatpush2.bf16.msra.mxu0 0
  %1045 = vmatprep.subr.bf16.mxu0 0
  %1046 = vmatpush2.bf16.msra.mxu0 0
  %1047 = vmatprep.subr.bf16.mxu0 0
  %1048 = vmatpush2.bf16.msra.mxu0 0
  %1049 = vmatprep.subr.bf16.mxu0 0
  %1050 = vmatpush2.bf16.msra.mxu0 0
  %1051 = vmatprep.subr.bf16.mxu0 0
  %1052 = vmatpush2.bf16.msra.mxu0 0
  %1053 = vmatprep.subr.bf16.mxu0 0
  %1054 = vmatpush2.bf16.msra.mxu0 0
  %1055 = vmatprep.mubr.bf16.mxu0 0
  %1056 = vmatmul.mubr.bf16.gmra.mxu0 %v1022
  %v1057 = vpop.f32.mrf.mxu0
  %v1058 = vadd.f32 0.0, %v1057
  %v1059 = vpop.f32.mrf.mxu0
  %v1060 = vadd.f32 0.0, %v1059
  %v1061 = vpop.f32.mrf.mxu0
  %v1062 = vpop.f32.mrf.mxu0
  %1063 = vdwg.mxu0
  %1064 = vmatprep.subr.bf16.mxu0 %v611
  %1065 = vmatpush1.bf16.msra.mxu0 %v610
  %1066 = vmatprep.subr.bf16.mxu0 %v607
  %1067 = vmatpush1.bf16.msra.mxu0 %v606
  %1068 = vmatprep.subr.bf16.mxu0 %v603
  %1069 = vmatpush1.bf16.msra.mxu0 %v602
  %1070 = vmatprep.subr.bf16.mxu0 %v599
  %1071 = vmatpush1.bf16.msra.mxu0 %v598
  %1072 = vmatprep.subr.bf16.mxu0 %v595
  %1073 = vmatpush1.bf16.msra.mxu0 %v594
  %1074 = vmatprep.subr.bf16.mxu0 %v591
  %1075 = vmatpush1.bf16.msra.mxu0 %v590
  %1076 = vmatprep.subr.bf16.mxu0 %v587
  %1077 = vmatpush1.bf16.msra.mxu0 %v586
  %1078 = vmatprep.subr.bf16.mxu0 %v583
  %1079 = vmatpush1.bf16.msra.mxu0 %v582
  %1080 = vmatprep.subr.bf16.mxu0 0
  %1081 = vmatpush2.bf16.msra.mxu0 0
  %1082 = vmatprep.subr.bf16.mxu0 0
  %1083 = vmatpush2.bf16.msra.mxu0 0
  %1084 = vmatprep.subr.bf16.mxu0 0
  %1085 = vmatpush2.bf16.msra.mxu0 0
  %1086 = vmatprep.subr.bf16.mxu0 0
  %1087 = vmatpush2.bf16.msra.mxu0 0
  %1088 = vmatprep.subr.bf16.mxu0 0
  %1089 = vmatpush2.bf16.msra.mxu0 0
  %1090 = vmatprep.subr.bf16.mxu0 0
  %1091 = vmatpush2.bf16.msra.mxu0 0
  %1092 = vmatprep.subr.bf16.mxu0 0
  %1093 = vmatpush2.bf16.msra.mxu0 0
  %1094 = vmatprep.subr.bf16.mxu0 0
  %1095 = vmatpush2.bf16.msra.mxu0 0
  %1096 = vmatprep.mubr.bf16.mxu0 0
  %1097 = vmatmul.mubr.bf16.gmra.mxu0 %v1022
  %v1098 = vpop.f32.mrf.mxu0
  %v1099 = vadd.f32 0.0, %v1098
  %v1100 = vpop.f32.mrf.mxu0
  %v1101 = vadd.f32 0.0, %v1100
  %v1102 = vpop.f32.mrf.mxu0
  %v1103 = vpop.f32.mrf.mxu0
  %1104 = vdwg.mxu0
  %v1105 = vadd.f32 %v1018, %v1058
  %v1106 = vadd.f32 %v1019, %v1060
  %v1107 = vadd.f32 %v1020, %v1099
  %v1108 = vadd.f32 %v1021, %v1101
  %v1109 = vxor.u32 %v1105, 2147483648
  %v1110 = vmul.f32 %v1109, 1.442695
  %v1111 = vpow.pop %v1110
  %v1112 = vadd.f32 %v1111, 1.0
  %v1113 = vrcp.pop %v1112
  %v1114 = vmul.f32 1.0, %v1113
  %v1115 = vxor.u32 %v1106, 2147483648
  %v1116 = vmul.f32 %v1115, 1.442695
  %v1117 = vpow.pop %v1116
  %v1118 = vadd.f32 %v1117, 1.0
  %v1119 = vrcp.pop %v1118
  %v1120 = vmul.f32 1.0, %v1119
  %v1121 = vtanh.pop %v1107
  %v1122 = vxor.u32 %v1108, 2147483648
  %v1123 = vmul.f32 %v1122, 1.442695
  %v1124 = vpow.pop %v1123
  %v1125 = vadd.f32 %v1124, 1.0
  %v1126 = vrcp.pop %v1125
  %v1127 = vmul.f32 1.0, %v1126
  %v1128 = vmul.f32 %v1120, %v1012
  %v1129 = vmul.f32 %v1114, %v1121
  %v1130 = vadd.f32 %v1128, %v1129
  %v1131 = vtanh.pop %v1130
  %v1132 = vmul.f32 %v1127, %v1131
  %vm1133 = vcmp.gt.s32.totalorder %v42, 3
  %v1134 = vsel %vm1133, 1, 0
  %1135 = vset.pattern.permute.xlu0 0
  %1136 = vperm.xlu0 %1135, %v1134
  %v1137 = vpop.permute.xlu0 %1136
  %vm1138 = vcmp.eq.s32.totalorder %v1137, 1
  %v1139 = vsel %vm1138, %v1130, %v1012
  %v1140 = vsel %vm1138, %v1132, %v1013
  %v1141 = vsel %vm1138, %v1132, 0.0
  %s1142 = scalar_lea.vmem [#allocation2], 24
  %1143 = vst [vmem:[%s1142] sm:$0xff] %v1141
  %s1144 = scalar_lea.vmem [#allocation3], 128
  %v1145 = vld [vmem:[%s1144] sm:$0xff]
  %v1146 = vld [vmem:[%s1144 + $0x8] sm:$0xff]
  %v1147 = vld [vmem:[%s1144 + $0x10] sm:$0xff]
  %v1148 = vld [vmem:[%s1144 + $0x18] sm:$0xff]
  %v1149 = vpack.c.bf16 %v1140, %v1140
  %1150 = vmatprep.subr.bf16.mxu0 %v609
  %1151 = vmatpush1.bf16.msra.mxu0 %v608
  %1152 = vmatprep.subr.bf16.mxu0 %v605
  %1153 = vmatpush1.bf16.msra.mxu0 %v604
  %1154 = vmatprep.subr.bf16.mxu0 %v601
  %1155 = vmatpush1.bf16.msra.mxu0 %v600
  %1156 = vmatprep.subr.bf16.mxu0 %v597
  %1157 = vmatpush1.bf16.msra.mxu0 %v596
  %1158 = vmatprep.subr.bf16.mxu0 %v593
  %1159 = vmatpush1.bf16.msra.mxu0 %v592
  %1160 = vmatprep.subr.bf16.mxu0 %v589
  %1161 = vmatpush1.bf16.msra.mxu0 %v588
  %1162 = vmatprep.subr.bf16.mxu0 %v585
  %1163 = vmatpush1.bf16.msra.mxu0 %v584
  %1164 = vmatprep.subr.bf16.mxu0 %v581
  %1165 = vmatpush1.bf16.msra.mxu0 %v580
  %1166 = vmatprep.subr.bf16.mxu0 0
  %1167 = vmatpush2.bf16.msra.mxu0 0
  %1168 = vmatprep.subr.bf16.mxu0 0
  %1169 = vmatpush2.bf16.msra.mxu0 0
  %1170 = vmatprep.subr.bf16.mxu0 0
  %1171 = vmatpush2.bf16.msra.mxu0 0
  %1172 = vmatprep.subr.bf16.mxu0 0
  %1173 = vmatpush2.bf16.msra.mxu0 0
  %1174 = vmatprep.subr.bf16.mxu0 0
  %1175 = vmatpush2.bf16.msra.mxu0 0
  %1176 = vmatprep.subr.bf16.mxu0 0
  %1177 = vmatpush2.bf16.msra.mxu0 0
  %1178 = vmatprep.subr.bf16.mxu0 0
  %1179 = vmatpush2.bf16.msra.mxu0 0
  %1180 = vmatprep.subr.bf16.mxu0 0
  %1181 = vmatpush2.bf16.msra.mxu0 0
  %1182 = vmatprep.mubr.bf16.mxu0 0
  %1183 = vmatmul.mubr.bf16.gmra.mxu0 %v1149
  %v1184 = vpop.f32.mrf.mxu0
  %v1185 = vadd.f32 0.0, %v1184
  %v1186 = vpop.f32.mrf.mxu0
  %v1187 = vadd.f32 0.0, %v1186
  %v1188 = vpop.f32.mrf.mxu0
  %v1189 = vpop.f32.mrf.mxu0
  %1190 = vdwg.mxu0
  %1191 = vmatprep.subr.bf16.mxu0 %v611
  %1192 = vmatpush1.bf16.msra.mxu0 %v610
  %1193 = vmatprep.subr.bf16.mxu0 %v607
  %1194 = vmatpush1.bf16.msra.mxu0 %v606
  %1195 = vmatprep.subr.bf16.mxu0 %v603
  %1196 = vmatpush1.bf16.msra.mxu0 %v602
  %1197 = vmatprep.subr.bf16.mxu0 %v599
  %1198 = vmatpush1.bf16.msra.mxu0 %v598
  %1199 = vmatprep.subr.bf16.mxu0 %v595
  %1200 = vmatpush1.bf16.msra.mxu0 %v594
  %1201 = vmatprep.subr.bf16.mxu0 %v591
  %1202 = vmatpush1.bf16.msra.mxu0 %v590
  %1203 = vmatprep.subr.bf16.mxu0 %v587
  %1204 = vmatpush1.bf16.msra.mxu0 %v586
  %1205 = vmatprep.subr.bf16.mxu0 %v583
  %1206 = vmatpush1.bf16.msra.mxu0 %v582
  %1207 = vmatprep.subr.bf16.mxu0 0
  %1208 = vmatpush2.bf16.msra.mxu0 0
  %1209 = vmatprep.subr.bf16.mxu0 0
  %1210 = vmatpush2.bf16.msra.mxu0 0
  %1211 = vmatprep.subr.bf16.mxu0 0
  %1212 = vmatpush2.bf16.msra.mxu0 0
  %1213 = vmatprep.subr.bf16.mxu0 0
  %1214 = vmatpush2.bf16.msra.mxu0 0
  %1215 = vmatprep.subr.bf16.mxu0 0
  %1216 = vmatpush2.bf16.msra.mxu0 0
  %1217 = vmatprep.subr.bf16.mxu0 0
  %1218 = vmatpush2.bf16.msra.mxu0 0
  %1219 = vmatprep.subr.bf16.mxu0 0
  %1220 = vmatpush2.bf16.msra.mxu0 0
  %1221 = vmatprep.subr.bf16.mxu0 0
  %1222 = vmatpush2.bf16.msra.mxu0 0
  %1223 = vmatprep.mubr.bf16.mxu0 0
  %1224 = vmatmul.mubr.bf16.gmra.mxu0 %v1149
  %v1225 = vpop.f32.mrf.mxu0
  %v1226 = vadd.f32 0.0, %v1225
  %v1227 = vpop.f32.mrf.mxu0
  %v1228 = vadd.f32 0.0, %v1227
  %v1229 = vpop.f32.mrf.mxu0
  %v1230 = vpop.f32.mrf.mxu0
  %1231 = vdwg.mxu0
  %v1232 = vadd.f32 %v1145, %v1185
  %v1233 = vadd.f32 %v1146, %v1187
  %v1234 = vadd.f32 %v1147, %v1226
  %v1235 = vadd.f32 %v1148, %v1228
  %v1236 = vxor.u32 %v1232, 2147483648
  %v1237 = vmul.f32 %v1236, 1.442695
  %v1238 = vpow.pop %v1237
  %v1239 = vadd.f32 %v1238, 1.0
  %v1240 = vrcp.pop %v1239
  %v1241 = vmul.f32 1.0, %v1240
  %v1242 = vxor.u32 %v1233, 2147483648
  %v1243 = vmul.f32 %v1242, 1.442695
  %v1244 = vpow.pop %v1243
  %v1245 = vadd.f32 %v1244, 1.0
  %v1246 = vrcp.pop %v1245
  %v1247 = vmul.f32 1.0, %v1246
  %v1248 = vtanh.pop %v1234
  %v1249 = vxor.u32 %v1235, 2147483648
  %v1250 = vmul.f32 %v1249, 1.442695
  %v1251 = vpow.pop %v1250
  %v1252 = vadd.f32 %v1251, 1.0
  %v1253 = vrcp.pop %v1252
  %v1254 = vmul.f32 1.0, %v1253
  %v1255 = vmul.f32 %v1247, %v1139
  %v1256 = vmul.f32 %v1241, %v1248
  %v1257 = vadd.f32 %v1255, %v1256
  %v1258 = vtanh.pop %v1257
  %v1259 = vmul.f32 %v1254, %v1258
  %vm1260 = vcmp.gt.s32.totalorder %v42, 4
  %v1261 = vsel %vm1260, 1, 0
  %1262 = vset.pattern.permute.xlu0 0
  %1263 = vperm.xlu0 %1262, %v1261
  %v1264 = vpop.permute.xlu0 %1263
  %vm1265 = vcmp.eq.s32.totalorder %v1264, 1
  %v1266 = vsel %vm1265, %v1257, %v1139
  %v1267 = vsel %vm1265, %v1259, %v1140
  %v1268 = vsel %vm1265, %v1259, 0.0
  %s1269 = scalar_lea.vmem [#allocation2], 32
  %1270 = vst [vmem:[%s1269] sm:$0xff] %v1268
  %s1271 = scalar_lea.vmem [#allocation3], 160
  %v1272 = vld [vmem:[%s1271] sm:$0xff]
  %v1273 = vld [vmem:[%s1271 + $0x8] sm:$0xff]
  %v1274 = vld [vmem:[%s1271 + $0x10] sm:$0xff]
  %v1275 = vld [vmem:[%s1271 + $0x18] sm:$0xff]
  %v1276 = vpack.c.bf16 %v1267, %v1267
  %1277 = vmatprep.subr.bf16.mxu0 %v609
  %1278 = vmatpush1.bf16.msra.mxu0 %v608
  %1279 = vmatprep.subr.bf16.mxu0 %v605
  %1280 = vmatpush1.bf16.msra.mxu0 %v604
  %1281 = vmatprep.subr.bf16.mxu0 %v601
  %1282 = vmatpush1.bf16.msra.mxu0 %v600
  %1283 = vmatprep.subr.bf16.mxu0 %v597
  %1284 = vmatpush1.bf16.msra.mxu0 %v596
  %1285 = vmatprep.subr.bf16.mxu0 %v593
  %1286 = vmatpush1.bf16.msra.mxu0 %v592
  %1287 = vmatprep.subr.bf16.mxu0 %v589
  %1288 = vmatpush1.bf16.msra.mxu0 %v588
  %1289 = vmatprep.subr.bf16.mxu0 %v585
  %1290 = vmatpush1.bf16.msra.mxu0 %v584
  %1291 = vmatprep.subr.bf16.mxu0 %v581
  %1292 = vmatpush1.bf16.msra.mxu0 %v580
  %1293 = vmatprep.subr.bf16.mxu0 0
  %1294 = vmatpush2.bf16.msra.mxu0 0
  %1295 = vmatprep.subr.bf16.mxu0 0
  %1296 = vmatpush2.bf16.msra.mxu0 0
  %1297 = vmatprep.subr.bf16.mxu0 0
  %1298 = vmatpush2.bf16.msra.mxu0 0
  %1299 = vmatprep.subr.bf16.mxu0 0
  %1300 = vmatpush2.bf16.msra.mxu0 0
  %1301 = vmatprep.subr.bf16.mxu0 0
  %1302 = vmatpush2.bf16.msra.mxu0 0
  %1303 = vmatprep.subr.bf16.mxu0 0
  %1304 = vmatpush2.bf16.msra.mxu0 0
  %1305 = vmatprep.subr.bf16.mxu0 0
  %1306 = vmatpush2.bf16.msra.mxu0 0
  %1307 = vmatprep.subr.bf16.mxu0 0
  %1308 = vmatpush2.bf16.msra.mxu0 0
  %1309 = vmatprep.mubr.bf16.mxu0 0
  %1310 = vmatmul.mubr.bf16.gmra.mxu0 %v1276
  %v1311 = vpop.f32.mrf.mxu0
  %v1312 = vadd.f32 0.0, %v1311
  %v1313 = vpop.f32.mrf.mxu0
  %v1314 = vadd.f32 0.0, %v1313
  %v1315 = vpop.f32.mrf.mxu0
  %v1316 = vpop.f32.mrf.mxu0
  %1317 = vdwg.mxu0
  %1318 = vmatprep.subr.bf16.mxu0 %v611
  %1319 = vmatpush1.bf16.msra.mxu0 %v610
  %1320 = vmatprep.subr.bf16.mxu0 %v607
  %1321 = vmatpush1.bf16.msra.mxu0 %v606
  %1322 = vmatprep.subr.bf16.mxu0 %v603
  %1323 = vmatpush1.bf16.msra.mxu0 %v602
  %1324 = vmatprep.subr.bf16.mxu0 %v599
  %1325 = vmatpush1.bf16.msra.mxu0 %v598
  %1326 = vmatprep.subr.bf16.mxu0 %v595
  %1327 = vmatpush1.bf16.msra.mxu0 %v594
  %1328 = vmatprep.subr.bf16.mxu0 %v591
  %1329 = vmatpush1.bf16.msra.mxu0 %v590
  %1330 = vmatprep.subr.bf16.mxu0 %v587
  %1331 = vmatpush1.bf16.msra.mxu0 %v586
  %1332 = vmatprep.subr.bf16.mxu0 %v583
  %1333 = vmatpush1.bf16.msra.mxu0 %v582
  %1334 = vmatprep.subr.bf16.mxu0 0
  %1335 = vmatpush2.bf16.msra.mxu0 0
  %1336 = vmatprep.subr.bf16.mxu0 0
  %1337 = vmatpush2.bf16.msra.mxu0 0
  %1338 = vmatprep.subr.bf16.mxu0 0
  %1339 = vmatpush2.bf16.msra.mxu0 0
  %1340 = vmatprep.subr.bf16.mxu0 0
  %1341 = vmatpush2.bf16.msra.mxu0 0
  %1342 = vmatprep.subr.bf16.mxu0 0
  %1343 = vmatpush2.bf16.msra.mxu0 0
  %1344 = vmatprep.subr.bf16.mxu0 0
  %1345 = vmatpush2.bf16.msra.mxu0 0
  %1346 = vmatprep.subr.bf16.mxu0 0
  %1347 = vmatpush2.bf16.msra.mxu0 0
  %1348 = vmatprep.subr.bf16.mxu0 0
  %1349 = vmatpush2.bf16.msra.mxu0 0
  %1350 = vmatprep.mubr.bf16.mxu0 0
  %1351 = vmatmul.mubr.bf16.gmra.mxu0 %v1276
  %v1352 = vpop.f32.mrf.mxu0
  %v1353 = vadd.f32 0.0, %v1352
  %v1354 = vpop.f32.mrf.mxu0
  %v1355 = vadd.f32 0.0, %v1354
  %v1356 = vpop.f32.mrf.mxu0
  %v1357 = vpop.f32.mrf.mxu0
  %1358 = vdwg.mxu0
  %v1359 = vadd.f32 %v1272, %v1312
  %v1360 = vadd.f32 %v1273, %v1314
  %v1361 = vadd.f32 %v1274, %v1353
  %v1362 = vadd.f32 %v1275, %v1355
  %v1363 = vxor.u32 %v1359, 2147483648
  %v1364 = vmul.f32 %v1363, 1.442695
  %v1365 = vpow.pop %v1364
  %v1366 = vadd.f32 %v1365, 1.0
  %v1367 = vrcp.pop %v1366
  %v1368 = vmul.f32 1.0, %v1367
  %v1369 = vxor.u32 %v1360, 2147483648
  %v1370 = vmul.f32 %v1369, 1.442695
  %v1371 = vpow.pop %v1370
  %v1372 = vadd.f32 %v1371, 1.0
  %v1373 = vrcp.pop %v1372
  %v1374 = vmul.f32 1.0, %v1373
  %v1375 = vtanh.pop %v1361
  %v1376 = vxor.u32 %v1362, 2147483648
  %v1377 = vmul.f32 %v1376, 1.442695
  %v1378 = vpow.pop %v1377
  %v1379 = vadd.f32 %v1378, 1.0
  %v1380 = vrcp.pop %v1379
  %v1381 = vmul.f32 1.0, %v1380
  %v1382 = vmul.f32 %v1374, %v1266
  %v1383 = vmul.f32 %v1368, %v1375
  %v1384 = vadd.f32 %v1382, %v1383
  %v1385 = vtanh.pop %v1384
  %v1386 = vmul.f32 %v1381, %v1385
  %vm1387 = vcmp.gt.s32.totalorder %v42, 5
  %v1388 = vsel %vm1387, 1, 0
  %1389 = vset.pattern.permute.xlu0 0
  %1390 = vperm.xlu0 %1389, %v1388
  %v1391 = vpop.permute.xlu0 %1390
  %vm1392 = vcmp.eq.s32.totalorder %v1391, 1
  %v1393 = vsel %vm1392, %v1384, %v1266
  %v1394 = vsel %vm1392, %v1386, %v1267
  %v1395 = vsel %vm1392, %v1386, 0.0
  %s1396 = scalar_lea.vmem [#allocation2], 40
  %1397 = vst [vmem:[%s1396] sm:$0xff] %v1395
  %s1398 = scalar_lea.vmem [#allocation3], 192
  %v1399 = vld [vmem:[%s1398] sm:$0xff]
  %v1400 = vld [vmem:[%s1398 + $0x8] sm:$0xff]
  %v1401 = vld [vmem:[%s1398 + $0x10] sm:$0xff]
  %v1402 = vld [vmem:[%s1398 + $0x18] sm:$0xff]
  %v1403 = vpack.c.bf16 %v1394, %v1394
  %1404 = vmatprep.subr.bf16.mxu0 %v609
  %1405 = vmatpush1.bf16.msra.mxu0 %v608
  %1406 = vmatprep.subr.bf16.mxu0 %v605
  %1407 = vmatpush1.bf16.msra.mxu0 %v604
  %1408 = vmatprep.subr.bf16.mxu0 %v601
  %1409 = vmatpush1.bf16.msra.mxu0 %v600
  %1410 = vmatprep.subr.bf16.mxu0 %v597
  %1411 = vmatpush1.bf16.msra.mxu0 %v596
  %1412 = vmatprep.subr.bf16.mxu0 %v593
  %1413 = vmatpush1.bf16.msra.mxu0 %v592
  %1414 = vmatprep.subr.bf16.mxu0 %v589
  %1415 = vmatpush1.bf16.msra.mxu0 %v588
  %1416 = vmatprep.subr.bf16.mxu0 %v585
  %1417 = vmatpush1.bf16.msra.mxu0 %v584
  %1418 = vmatprep.subr.bf16.mxu0 %v581
  %1419 = vmatpush1.bf16.msra.mxu0 %v580
  %1420 = vmatprep.subr.bf16.mxu0 0
  %1421 = vmatpush2.bf16.msra.mxu0 0
  %1422 = vmatprep.subr.bf16.mxu0 0
  %1423 = vmatpush2.bf16.msra.mxu0 0
  %1424 = vmatprep.subr.bf16.mxu0 0
  %1425 = vmatpush2.bf16.msra.mxu0 0
  %1426 = vmatprep.subr.bf16.mxu0 0
  %1427 = vmatpush2.bf16.msra.mxu0 0
  %1428 = vmatprep.subr.bf16.mxu0 0
  %1429 = vmatpush2.bf16.msra.mxu0 0
  %1430 = vmatprep.subr.bf16.mxu0 0
  %1431 = vmatpush2.bf16.msra.mxu0 0
  %1432 = vmatprep.subr.bf16.mxu0 0
  %1433 = vmatpush2.bf16.msra.mxu0 0
  %1434 = vmatprep.subr.bf16.mxu0 0
  %1435 = vmatpush2.bf16.msra.mxu0 0
  %1436 = vmatprep.mubr.bf16.mxu0 0
  %1437 = vmatmul.mubr.bf16.gmra.mxu0 %v1403
  %v1438 = vpop.f32.mrf.mxu0
  %v1439 = vadd.f32 0.0, %v1438
  %v1440 = vpop.f32.mrf.mxu0
  %v1441 = vadd.f32 0.0, %v1440
  %v1442 = vpop.f32.mrf.mxu0
  %v1443 = vpop.f32.mrf.mxu0
  %1444 = vdwg.mxu0
  %1445 = vmatprep.subr.bf16.mxu0 %v611
  %1446 = vmatpush1.bf16.msra.mxu0 %v610
  %1447 = vmatprep.subr.bf16.mxu0 %v607
  %1448 = vmatpush1.bf16.msra.mxu0 %v606
  %1449 = vmatprep.subr.bf16.mxu0 %v603
  %1450 = vmatpush1.bf16.msra.mxu0 %v602
  %1451 = vmatprep.subr.bf16.mxu0 %v599
  %1452 = vmatpush1.bf16.msra.mxu0 %v598
  %1453 = vmatprep.subr.bf16.mxu0 %v595
  %1454 = vmatpush1.bf16.msra.mxu0 %v594
  %1455 = vmatprep.subr.bf16.mxu0 %v591
  %1456 = vmatpush1.bf16.msra.mxu0 %v590
  %1457 = vmatprep.subr.bf16.mxu0 %v587
  %1458 = vmatpush1.bf16.msra.mxu0 %v586
  %1459 = vmatprep.subr.bf16.mxu0 %v583
  %1460 = vmatpush1.bf16.msra.mxu0 %v582
  %1461 = vmatprep.subr.bf16.mxu0 0
  %1462 = vmatpush2.bf16.msra.mxu0 0
  %1463 = vmatprep.subr.bf16.mxu0 0
  %1464 = vmatpush2.bf16.msra.mxu0 0
  %1465 = vmatprep.subr.bf16.mxu0 0
  %1466 = vmatpush2.bf16.msra.mxu0 0
  %1467 = vmatprep.subr.bf16.mxu0 0
  %1468 = vmatpush2.bf16.msra.mxu0 0
  %1469 = vmatprep.subr.bf16.mxu0 0
  %1470 = vmatpush2.bf16.msra.mxu0 0
  %1471 = vmatprep.subr.bf16.mxu0 0
  %1472 = vmatpush2.bf16.msra.mxu0 0
  %1473 = vmatprep.subr.bf16.mxu0 0
  %1474 = vmatpush2.bf16.msra.mxu0 0
  %1475 = vmatprep.subr.bf16.mxu0 0
  %1476 = vmatpush2.bf16.msra.mxu0 0
  %1477 = vmatprep.mubr.bf16.mxu0 0
  %1478 = vmatmul.mubr.bf16.gmra.mxu0 %v1403
  %v1479 = vpop.f32.mrf.mxu0
  %v1480 = vadd.f32 0.0, %v1479
  %v1481 = vpop.f32.mrf.mxu0
  %v1482 = vadd.f32 0.0, %v1481
  %v1483 = vpop.f32.mrf.mxu0
  %v1484 = vpop.f32.mrf.mxu0
  %1485 = vdwg.mxu0
  %v1486 = vadd.f32 %v1399, %v1439
  %v1487 = vadd.f32 %v1400, %v1441
  %v1488 = vadd.f32 %v1401, %v1480
  %v1489 = vadd.f32 %v1402, %v1482
  %v1490 = vxor.u32 %v1486, 2147483648
  %v1491 = vmul.f32 %v1490, 1.442695
  %v1492 = vpow.pop %v1491
  %v1493 = vadd.f32 %v1492, 1.0
  %v1494 = vrcp.pop %v1493
  %v1495 = vmul.f32 1.0, %v1494
  %v1496 = vxor.u32 %v1487, 2147483648
  %v1497 = vmul.f32 %v1496, 1.442695
  %v1498 = vpow.pop %v1497
  %v1499 = vadd.f32 %v1498, 1.0
  %v1500 = vrcp.pop %v1499
  %v1501 = vmul.f32 1.0, %v1500
  %v1502 = vtanh.pop %v1488
  %v1503 = vxor.u32 %v1489, 2147483648
  %v1504 = vmul.f32 %v1503, 1.442695
  %v1505 = vpow.pop %v1504
  %v1506 = vadd.f32 %v1505, 1.0
  %v1507 = vrcp.pop %v1506
  %v1508 = vmul.f32 1.0, %v1507
  %v1509 = vmul.f32 %v1501, %v1393
  %v1510 = vmul.f32 %v1495, %v1502
  %v1511 = vadd.f32 %v1509, %v1510
  %v1512 = vtanh.pop %v1511
  %v1513 = vmul.f32 %v1508, %v1512
  %vm1514 = vcmp.gt.s32.totalorder %v42, 6
  %v1515 = vsel %vm1514, 1, 0
  %1516 = vset.pattern.permute.xlu0 0
  %1517 = vperm.xlu0 %1516, %v1515
  %v1518 = vpop.permute.xlu0 %1517
  %vm1519 = vcmp.eq.s32.totalorder %v1518, 1
  %v1520 = vsel %vm1519, %v1511, %v1393
  %v1521 = vsel %vm1519, %v1513, %v1394
  %v1522 = vsel %vm1519, %v1513, 0.0
  %s1523 = scalar_lea.vmem [#allocation2], 48
  %1524 = vst [vmem:[%s1523] sm:$0xff] %v1522
  %s1525 = scalar_lea.vmem [#allocation3], 224
  %v1526 = vld [vmem:[%s1525] sm:$0xff]
  %v1527 = vld [vmem:[%s1525 + $0x8] sm:$0xff]
  %v1528 = vld [vmem:[%s1525 + $0x10] sm:$0xff]
  %v1529 = vld [vmem:[%s1525 + $0x18] sm:$0xff]
  %v1530 = vpack.c.bf16 %v1521, %v1521
  %1531 = vmatprep.subr.bf16.mxu0 %v609
  %1532 = vmatpush1.bf16.msra.mxu0 %v608
  %1533 = vmatprep.subr.bf16.mxu0 %v605
  %1534 = vmatpush1.bf16.msra.mxu0 %v604
  %1535 = vmatprep.subr.bf16.mxu0 %v601
  %1536 = vmatpush1.bf16.msra.mxu0 %v600
  %1537 = vmatprep.subr.bf16.mxu0 %v597
  %1538 = vmatpush1.bf16.msra.mxu0 %v596
  %1539 = vmatprep.subr.bf16.mxu0 %v593
  %1540 = vmatpush1.bf16.msra.mxu0 %v592
  %1541 = vmatprep.subr.bf16.mxu0 %v589
  %1542 = vmatpush1.bf16.msra.mxu0 %v588
  %1543 = vmatprep.subr.bf16.mxu0 %v585
  %1544 = vmatpush1.bf16.msra.mxu0 %v584
  %1545 = vmatprep.subr.bf16.mxu0 %v581
  %1546 = vmatpush1.bf16.msra.mxu0 %v580
  %1547 = vmatprep.subr.bf16.mxu0 0
  %1548 = vmatpush2.bf16.msra.mxu0 0
  %1549 = vmatprep.subr.bf16.mxu0 0
  %1550 = vmatpush2.bf16.msra.mxu0 0
  %1551 = vmatprep.subr.bf16.mxu0 0
  %1552 = vmatpush2.bf16.msra.mxu0 0
  %1553 = vmatprep.subr.bf16.mxu0 0
  %1554 = vmatpush2.bf16.msra.mxu0 0
  %1555 = vmatprep.subr.bf16.mxu0 0
  %1556 = vmatpush2.bf16.msra.mxu0 0
  %1557 = vmatprep.subr.bf16.mxu0 0
  %1558 = vmatpush2.bf16.msra.mxu0 0
  %1559 = vmatprep.subr.bf16.mxu0 0
  %1560 = vmatpush2.bf16.msra.mxu0 0
  %1561 = vmatprep.subr.bf16.mxu0 0
  %1562 = vmatpush2.bf16.msra.mxu0 0
  %1563 = vmatprep.mubr.bf16.mxu0 0
  %1564 = vmatmul.mubr.bf16.gmra.mxu0 %v1530
  %v1565 = vpop.f32.mrf.mxu0
  %v1566 = vadd.f32 0.0, %v1565
  %v1567 = vpop.f32.mrf.mxu0
  %v1568 = vadd.f32 0.0, %v1567
  %v1569 = vpop.f32.mrf.mxu0
  %v1570 = vpop.f32.mrf.mxu0
  %1571 = vdwg.mxu0
  %1572 = vmatprep.subr.bf16.mxu0 %v611
  %1573 = vmatpush1.bf16.msra.mxu0 %v610
  %1574 = vmatprep.subr.bf16.mxu0 %v607
  %1575 = vmatpush1.bf16.msra.mxu0 %v606
  %1576 = vmatprep.subr.bf16.mxu0 %v603
  %1577 = vmatpush1.bf16.msra.mxu0 %v602
  %1578 = vmatprep.subr.bf16.mxu0 %v599
  %1579 = vmatpush1.bf16.msra.mxu0 %v598
  %1580 = vmatprep.subr.bf16.mxu0 %v595
  %1581 = vmatpush1.bf16.msra.mxu0 %v594
  %1582 = vmatprep.subr.bf16.mxu0 %v591
  %1583 = vmatpush1.bf16.msra.mxu0 %v590
  %1584 = vmatprep.subr.bf16.mxu0 %v587
  %1585 = vmatpush1.bf16.msra.mxu0 %v586
  %1586 = vmatprep.subr.bf16.mxu0 %v583
  %1587 = vmatpush1.bf16.msra.mxu0 %v582
  %1588 = vmatprep.subr.bf16.mxu0 0
  %1589 = vmatpush2.bf16.msra.mxu0 0
  %1590 = vmatprep.subr.bf16.mxu0 0
  %1591 = vmatpush2.bf16.msra.mxu0 0
  %1592 = vmatprep.subr.bf16.mxu0 0
  %1593 = vmatpush2.bf16.msra.mxu0 0
  %1594 = vmatprep.subr.bf16.mxu0 0
  %1595 = vmatpush2.bf16.msra.mxu0 0
  %1596 = vmatprep.subr.bf16.mxu0 0
  %1597 = vmatpush2.bf16.msra.mxu0 0
  %1598 = vmatprep.subr.bf16.mxu0 0
  %1599 = vmatpush2.bf16.msra.mxu0 0
  %1600 = vmatprep.subr.bf16.mxu0 0
  %1601 = vmatpush2.bf16.msra.mxu0 0
  %1602 = vmatprep.subr.bf16.mxu0 0
  %1603 = vmatpush2.bf16.msra.mxu0 0
  %1604 = vmatprep.mubr.bf16.mxu0 0
  %1605 = vmatmul.mubr.bf16.gmra.mxu0 %v1530
  %v1606 = vpop.f32.mrf.mxu0
  %v1607 = vadd.f32 0.0, %v1606
  %v1608 = vpop.f32.mrf.mxu0
  %v1609 = vadd.f32 0.0, %v1608
  %v1610 = vpop.f32.mrf.mxu0
  %v1611 = vpop.f32.mrf.mxu0
  %1612 = vdwg.mxu0
  %v1613 = vadd.f32 %v1526, %v1566
  %v1614 = vadd.f32 %v1527, %v1568
  %v1615 = vadd.f32 %v1528, %v1607
  %v1616 = vadd.f32 %v1529, %v1609
  %v1617 = vxor.u32 %v1613, 2147483648
  %v1618 = vmul.f32 %v1617, 1.442695
  %v1619 = vpow.pop %v1618
  %v1620 = vadd.f32 %v1619, 1.0
  %v1621 = vrcp.pop %v1620
  %v1622 = vmul.f32 1.0, %v1621
  %v1623 = vxor.u32 %v1614, 2147483648
  %v1624 = vmul.f32 %v1623, 1.442695
  %v1625 = vpow.pop %v1624
  %v1626 = vadd.f32 %v1625, 1.0
  %v1627 = vrcp.pop %v1626
  %v1628 = vmul.f32 1.0, %v1627
  %v1629 = vtanh.pop %v1615
  %v1630 = vxor.u32 %v1616, 2147483648
  %v1631 = vmul.f32 %v1630, 1.442695
  %v1632 = vpow.pop %v1631
  %v1633 = vadd.f32 %v1632, 1.0
  %v1634 = vrcp.pop %v1633
  %v1635 = vmul.f32 1.0, %v1634
  %v1636 = vmul.f32 %v1628, %v1520
  %v1637 = vmul.f32 %v1622, %v1629
  %v1638 = vadd.f32 %v1636, %v1637
  %v1639 = vtanh.pop %v1638
  %v1640 = vmul.f32 %v1635, %v1639
  %vm1641 = vcmp.gt.s32.totalorder %v42, 7
  %v1642 = vsel %vm1641, 1, 0
  %1643 = vset.pattern.permute.xlu0 0
  %1644 = vperm.xlu0 %1643, %v1642
  %v1645 = vpop.permute.xlu0 %1644
  %vm1646 = vcmp.eq.s32.totalorder %v1645, 1
  %v1647 = vsel %vm1646, %v1638, %v1520
  %v1648 = vsel %vm1646, %v1640, %v1521
  %v1649 = vsel %vm1646, %v1640, 0.0
  %s1650 = scalar_lea.vmem [#allocation2], 56
  %1651 = vst [vmem:[%s1650] sm:$0xff] %v1649
  %v1652 = vld [vmem:[#allocation2] sm:$0xff]
  %v1653 = vld [vmem:[#allocation2 + $0x8] sm:$0xff]
  %v1654 = vld [vmem:[#allocation2 + $0x10] sm:$0xff]
  %v1655 = vld [vmem:[#allocation2 + $0x18] sm:$0xff]
  %v1656 = vld [vmem:[#allocation2 + $0x20] sm:$0xff]
  %v1657 = vld [vmem:[#allocation2 + $0x28] sm:$0xff]
  %v1658 = vld [vmem:[#allocation2 + $0x30] sm:$0xff]
  %v1659 = vld [vmem:[#allocation2 + $0x38] sm:$0xff]
  %s1660 = scalar_lea.vmem %s4, 256
  %v1661 = vld [vmem:[%s1660] sm:$0xff]
  %v1662 = vld [vmem:[%s1660 + $0x8] sm:$0xff]
  %v1663 = vld [vmem:[%s1660 + $0x10] sm:$0xff]
  %v1664 = vld [vmem:[%s1660 + $0x18] sm:$0xff]
  %v1665 = vld [vmem:[%s1660 + $0x20] sm:$0xff]
  %v1666 = vld [vmem:[%s1660 + $0x28] sm:$0xff]
  %v1667 = vld [vmem:[%s1660 + $0x30] sm:$0xff]
  %v1668 = vld [vmem:[%s1660 + $0x38] sm:$0xff]
  %v1669 = vld [vmem:[%s1660 + $0x40] sm:$0xff]
  %v1670 = vld [vmem:[%s1660 + $0x48] sm:$0xff]
  %v1671 = vld [vmem:[%s1660 + $0x50] sm:$0xff]
  %v1672 = vld [vmem:[%s1660 + $0x58] sm:$0xff]
  %v1673 = vld [vmem:[%s1660 + $0x60] sm:$0xff]
  %v1674 = vld [vmem:[%s1660 + $0x68] sm:$0xff]
  %v1675 = vld [vmem:[%s1660 + $0x70] sm:$0xff]
  %v1676 = vld [vmem:[%s1660 + $0x78] sm:$0xff]
  %v1677 = vld [vmem:[%s1660 + $0x80] sm:$0xff]
  %v1678 = vld [vmem:[%s1660 + $0x88] sm:$0xff]
  %v1679 = vld [vmem:[%s1660 + $0x90] sm:$0xff]
  %v1680 = vld [vmem:[%s1660 + $0x98] sm:$0xff]
  %v1681 = vld [vmem:[%s1660 + $0xa0] sm:$0xff]
  %v1682 = vld [vmem:[%s1660 + $0xa8] sm:$0xff]
  %v1683 = vld [vmem:[%s1660 + $0xb0] sm:$0xff]
  %v1684 = vld [vmem:[%s1660 + $0xb8] sm:$0xff]
  %v1685 = vld [vmem:[%s1660 + $0xc0] sm:$0xff]
  %v1686 = vld [vmem:[%s1660 + $0xc8] sm:$0xff]
  %v1687 = vld [vmem:[%s1660 + $0xd0] sm:$0xff]
  %v1688 = vld [vmem:[%s1660 + $0xd8] sm:$0xff]
  %v1689 = vld [vmem:[%s1660 + $0xe0] sm:$0xff]
  %v1690 = vld [vmem:[%s1660 + $0xe8] sm:$0xff]
  %v1691 = vld [vmem:[%s1660 + $0xf0] sm:$0xff]
  %v1692 = vld [vmem:[%s1660 + $0xf8] sm:$0xff]
  %s1693 = scalar_lea.vmem %s5, 256
  %v1694 = vld [vmem:[%s1693] sm:$0xff]
  %v1695 = vld [vmem:[%s1693 + $0x8] sm:$0xff]
  %v1696 = vld [vmem:[%s1693 + $0x10] sm:$0xff]
  %v1697 = vld [vmem:[%s1693 + $0x18] sm:$0xff]
  %v1698 = vld [vmem:[%s1693 + $0x20] sm:$0xff]
  %v1699 = vld [vmem:[%s1693 + $0x28] sm:$0xff]
  %v1700 = vld [vmem:[%s1693 + $0x30] sm:$0xff]
  %v1701 = vld [vmem:[%s1693 + $0x38] sm:$0xff]
  %v1702 = vld [vmem:[%s1693 + $0x40] sm:$0xff]
  %v1703 = vld [vmem:[%s1693 + $0x48] sm:$0xff]
  %v1704 = vld [vmem:[%s1693 + $0x50] sm:$0xff]
  %v1705 = vld [vmem:[%s1693 + $0x58] sm:$0xff]
  %v1706 = vld [vmem:[%s1693 + $0x60] sm:$0xff]
  %v1707 = vld [vmem:[%s1693 + $0x68] sm:$0xff]
  %v1708 = vld [vmem:[%s1693 + $0x70] sm:$0xff]
  %v1709 = vld [vmem:[%s1693 + $0x78] sm:$0xff]
  %v1710 = vld [vmem:[%s1693 + $0x80] sm:$0xff]
  %v1711 = vld [vmem:[%s1693 + $0x88] sm:$0xff]
  %v1712 = vld [vmem:[%s1693 + $0x90] sm:$0xff]
  %v1713 = vld [vmem:[%s1693 + $0x98] sm:$0xff]
  %v1714 = vld [vmem:[%s1693 + $0xa0] sm:$0xff]
  %v1715 = vld [vmem:[%s1693 + $0xa8] sm:$0xff]
  %v1716 = vld [vmem:[%s1693 + $0xb0] sm:$0xff]
  %v1717 = vld [vmem:[%s1693 + $0xb8] sm:$0xff]
  %v1718 = vld [vmem:[%s1693 + $0xc0] sm:$0xff]
  %v1719 = vld [vmem:[%s1693 + $0xc8] sm:$0xff]
  %v1720 = vld [vmem:[%s1693 + $0xd0] sm:$0xff]
  %v1721 = vld [vmem:[%s1693 + $0xd8] sm:$0xff]
  %v1722 = vld [vmem:[%s1693 + $0xe0] sm:$0xff]
  %v1723 = vld [vmem:[%s1693 + $0xe8] sm:$0xff]
  %v1724 = vld [vmem:[%s1693 + $0xf0] sm:$0xff]
  %v1725 = vld [vmem:[%s1693 + $0xf8] sm:$0xff]
  %s1726 = scalar_lea.vmem %s6, 4
  %v1727 = vld [vmem:[%s1726] sm:$0xf]
  %v1728 = vpack.c.bf16 %v1653, %v1652
  %v1729 = vpack.c.bf16 %v1655, %v1654
  %v1730 = vpack.c.bf16 %v1657, %v1656
  %v1731 = vpack.c.bf16 %v1659, %v1658
  %v1733 = vlaneseq
  %v1734 = vshrl.u32 %v1733, 7
  %v1735 = vsub.s32 0, %v1734
  %v1736 = vrot.slane %v1727, %v1735
  %v1737 = vlaneseq
  %v1738 = vshrl.u32 %v1737, 7
  %v1739 = vsub.s32 1, %v1738
  %v1740 = vrot.slane %v1727, %v1739
  %v1741 = vlaneseq
  %v1742 = vshrl.u32 %v1741, 7
  %v1743 = vsub.s32 2, %v1742
  %v1744 = vrot.slane %v1727, %v1743
  %v1745 = vlaneseq
  %v1746 = vshrl.u32 %v1745, 7
  %v1747 = vsub.s32 3, %v1746
  %v1748 = vrot.slane %v1727, %v1747
  %v1785 = vunpack.c.l.b16 %v1661
  %v1786 = vunpack.c.h.b16 %v1661
  %v1787 = vunpack.c.l.b16 %v1662
  %v1788 = vunpack.c.h.b16 %v1662
  %v1789 = vunpack.c.l.b16 %v1663
  %v1790 = vunpack.c.h.b16 %v1663
  %v1791 = vunpack.c.l.b16 %v1664
  %v1792 = vunpack.c.h.b16 %v1664
  %v1793 = vunpack.c.l.b16 %v1665
  %v1794 = vunpack.c.h.b16 %v1665
  %v1795 = vunpack.c.l.b16 %v1666
  %v1796 = vunpack.c.h.b16 %v1666
  %v1797 = vunpack.c.l.b16 %v1667
  %v1798 = vunpack.c.h.b16 %v1667
  %v1799 = vunpack.c.l.b16 %v1668
  %v1800 = vunpack.c.h.b16 %v1668
  %v1801 = vunpack.c.l.b16 %v1669
  %v1802 = vunpack.c.h.b16 %v1669
  %v1803 = vunpack.c.l.b16 %v1670
  %v1804 = vunpack.c.h.b16 %v1670
  %v1805 = vunpack.c.l.b16 %v1671
  %v1806 = vunpack.c.h.b16 %v1671
  %v1807 = vunpack.c.l.b16 %v1672
  %v1808 = vunpack.c.h.b16 %v1672
  %v1809 = vunpack.c.l.b16 %v1673
  %v1810 = vunpack.c.h.b16 %v1673
  %v1811 = vunpack.c.l.b16 %v1674
  %v1812 = vunpack.c.h.b16 %v1674
  %v1813 = vunpack.c.l.b16 %v1675
  %v1814 = vunpack.c.h.b16 %v1675
  %v1815 = vunpack.c.l.b16 %v1676
  %v1816 = vunpack.c.h.b16 %v1676
  %v1817 = vunpack.c.l.b16 %v1677
  %v1818 = vunpack.c.h.b16 %v1677
  %v1819 = vunpack.c.l.b16 %v1678
  %v1820 = vunpack.c.h.b16 %v1678
  %v1821 = vunpack.c.l.b16 %v1679
  %v1822 = vunpack.c.h.b16 %v1679
  %v1823 = vunpack.c.l.b16 %v1680
  %v1824 = vunpack.c.h.b16 %v1680
  %v1825 = vunpack.c.l.b16 %v1681
  %v1826 = vunpack.c.h.b16 %v1681
  %v1827 = vunpack.c.l.b16 %v1682
  %v1828 = vunpack.c.h.b16 %v1682
  %v1829 = vunpack.c.l.b16 %v1683
  %v1830 = vunpack.c.h.b16 %v1683
  %v1831 = vunpack.c.l.b16 %v1684
  %v1832 = vunpack.c.h.b16 %v1684
  %v1833 = vunpack.c.l.b16 %v1685
  %v1834 = vunpack.c.h.b16 %v1685
  %v1835 = vunpack.c.l.b16 %v1686
  %v1836 = vunpack.c.h.b16 %v1686
  %v1837 = vunpack.c.l.b16 %v1687
  %v1838 = vunpack.c.h.b16 %v1687
  %v1839 = vunpack.c.l.b16 %v1688
  %v1840 = vunpack.c.h.b16 %v1688
  %v1841 = vunpack.c.l.b16 %v1689
  %v1842 = vunpack.c.h.b16 %v1689
  %v1843 = vunpack.c.l.b16 %v1690
  %v1844 = vunpack.c.h.b16 %v1690
  %v1845 = vunpack.c.l.b16 %v1691
  %v1846 = vunpack.c.h.b16 %v1691
  %v1847 = vunpack.c.l.b16 %v1692
  %v1848 = vunpack.c.h.b16 %v1692
  %v1849 = vpack.c.b16 %v1789, %v1785
  %v1850 = vpack.c.b16 %v1790, %v1786
  %v1851 = vpack.c.b16 %v1791, %v1787
  %v1852 = vpack.c.b16 %v1792, %v1788
  %v1853 = vpack.c.b16 %v1797, %v1793
  %v1854 = vpack.c.b16 %v1798, %v1794
  %v1855 = vpack.c.b16 %v1799, %v1795
  %v1856 = vpack.c.b16 %v1800, %v1796
  %v1857 = vpack.c.b16 %v1805, %v1801
  %v1858 = vpack.c.b16 %v1806, %v1802
  %v1859 = vpack.c.b16 %v1807, %v1803
  %v1860 = vpack.c.b16 %v1808, %v1804
  %v1861 = vpack.c.b16 %v1813, %v1809
  %v1862 = vpack.c.b16 %v1814, %v1810
  %v1863 = vpack.c.b16 %v1815, %v1811
  %v1864 = vpack.c.b16 %v1816, %v1812
  %v1865 = vpack.c.b16 %v1821, %v1817
  %v1866 = vpack.c.b16 %v1822, %v1818
  %v1867 = vpack.c.b16 %v1823, %v1819
  %v1868 = vpack.c.b16 %v1824, %v1820
  %v1869 = vpack.c.b16 %v1829, %v1825
  %v1870 = vpack.c.b16 %v1830, %v1826
  %v1871 = vpack.c.b16 %v1831, %v1827
  %v1872 = vpack.c.b16 %v1832, %v1828
  %v1873 = vpack.c.b16 %v1837, %v1833
  %v1874 = vpack.c.b16 %v1838, %v1834
  %v1875 = vpack.c.b16 %v1839, %v1835
  %v1876 = vpack.c.b16 %v1840, %v1836
  %v1877 = vpack.c.b16 %v1845, %v1841
  %v1878 = vpack.c.b16 %v1846, %v1842
  %v1879 = vpack.c.b16 %v1847, %v1843
  %v1880 = vpack.c.b16 %v1848, %v1844
  %1913 = vmatprep.subr.bf16.mxu0 %v1878
  %1914 = vmatpush1.bf16.msra.mxu0 %v1877
  %1915 = vmatprep.subr.bf16.mxu0 %v1874
  %1916 = vmatpush1.bf16.msra.mxu0 %v1873
  %1917 = vmatprep.subr.bf16.mxu0 %v1870
  %1918 = vmatpush1.bf16.msra.mxu0 %v1869
  %1919 = vmatprep.subr.bf16.mxu0 %v1866
  %1920 = vmatpush1.bf16.msra.mxu0 %v1865
  %1921 = vmatprep.subr.bf16.mxu0 %v1862
  %1922 = vmatpush1.bf16.msra.mxu0 %v1861
  %1923 = vmatprep.subr.bf16.mxu0 %v1858
  %1924 = vmatpush1.bf16.msra.mxu0 %v1857
  %1925 = vmatprep.subr.bf16.mxu0 %v1854
  %1926 = vmatpush1.bf16.msra.mxu0 %v1853
  %1927 = vmatprep.subr.bf16.mxu0 %v1850
  %1928 = vmatpush1.bf16.msra.mxu0 %v1849
  %1929 = vmatprep.subr.bf16.mxu0 0
  %1930 = vmatpush2.bf16.msra.mxu0 0
  %1931 = vmatprep.subr.bf16.mxu0 0
  %1932 = vmatpush2.bf16.msra.mxu0 0
  %1933 = vmatprep.subr.bf16.mxu0 0
  %1934 = vmatpush2.bf16.msra.mxu0 0
  %1935 = vmatprep.subr.bf16.mxu0 0
  %1936 = vmatpush2.bf16.msra.mxu0 0
  %1937 = vmatprep.subr.bf16.mxu0 0
  %1938 = vmatpush2.bf16.msra.mxu0 0
  %1939 = vmatprep.subr.bf16.mxu0 0
  %1940 = vmatpush2.bf16.msra.mxu0 0
  %1941 = vmatprep.subr.bf16.mxu0 0
  %1942 = vmatpush2.bf16.msra.mxu0 0
  %1943 = vmatprep.subr.bf16.mxu0 0
  %1944 = vmatpush2.bf16.msra.mxu0 0
  %1945 = vmatprep.mubr.bf16.mxu0 0
  %1946 = vmatmul.mubr.bf16.gmra.mxu0 %v1728
  %v1947 = vpop.f32.mrf.mxu0
  %v1948 = vadd.f32 %v1736, %v1947
  %v1949 = vpop.f32.mrf.mxu0
  %v1950 = vadd.f32 %v1740, %v1949
  %v1951 = vpop.f32.mrf.mxu0
  %v1952 = vadd.f32 %v1736, %v1951
  %v1953 = vpop.f32.mrf.mxu0
  %v1954 = vadd.f32 %v1740, %v1953
  %1955 = vmatprep.mubr.bf16.mxu0 0
  %1956 = vmatmul.mubr.bf16.gmra.mxu0 %v1729
  %v1957 = vpop.f32.mrf.mxu0
  %v1958 = vadd.f32 %v1736, %v1957
  %v1959 = vpop.f32.mrf.mxu0
  %v1960 = vadd.f32 %v1740, %v1959
  %v1961 = vpop.f32.mrf.mxu0
  %v1962 = vadd.f32 %v1736, %v1961
  %v1963 = vpop.f32.mrf.mxu0
  %v1964 = vadd.f32 %v1740, %v1963
  %1965 = vmatprep.mubr.bf16.mxu0 0
  %1966 = vmatmul.mubr.bf16.gmra.mxu0 %v1730
  %v1967 = vpop.f32.mrf.mxu0
  %v1968 = vadd.f32 %v1736, %v1967
  %v1969 = vpop.f32.mrf.mxu0
  %v1970 = vadd.f32 %v1740, %v1969
  %v1971 = vpop.f32.mrf.mxu0
  %v1972 = vadd.f32 %v1736, %v1971
  %v1973 = vpop.f32.mrf.mxu0
  %v1974 = vadd.f32 %v1740, %v1973
  %1975 = vmatprep.mubr.bf16.mxu0 0
  %1976 = vmatmul.mubr.bf16.gmra.mxu0 %v1731
  %v1977 = vpop.f32.mrf.mxu0
  %v1978 = vadd.f32 %v1736, %v1977
  %v1979 = vpop.f32.mrf.mxu0
  %v1980 = vadd.f32 %v1740, %v1979
  %v1981 = vpop.f32.mrf.mxu0
  %v1982 = vadd.f32 %v1736, %v1981
  %v1983 = vpop.f32.mrf.mxu0
  %v1984 = vadd.f32 %v1740, %v1983
  %1985 = vdwg.mxu0
  %1986 = vmatprep.subr.bf16.mxu0 %v1880
  %1987 = vmatpush1.bf16.msra.mxu0 %v1879
  %1988 = vmatprep.subr.bf16.mxu0 %v1876
  %1989 = vmatpush1.bf16.msra.mxu0 %v1875
  %1990 = vmatprep.subr.bf16.mxu0 %v1872
  %1991 = vmatpush1.bf16.msra.mxu0 %v1871
  %1992 = vmatprep.subr.bf16.mxu0 %v1868
  %1993 = vmatpush1.bf16.msra.mxu0 %v1867
  %1994 = vmatprep.subr.bf16.mxu0 %v1864
  %1995 = vmatpush1.bf16.msra.mxu0 %v1863
  %1996 = vmatprep.subr.bf16.mxu0 %v1860
  %1997 = vmatpush1.bf16.msra.mxu0 %v1859
  %1998 = vmatprep.subr.bf16.mxu0 %v1856
  %1999 = vmatpush1.bf16.msra.mxu0 %v1855
  %2000 = vmatprep.subr.bf16.mxu0 %v1852
  %2001 = vmatpush1.bf16.msra.mxu0 %v1851
  %2002 = vmatprep.subr.bf16.mxu0 0
  %2003 = vmatpush2.bf16.msra.mxu0 0
  %2004 = vmatprep.subr.bf16.mxu0 0
  %2005 = vmatpush2.bf16.msra.mxu0 0
  %2006 = vmatprep.subr.bf16.mxu0 0
  %2007 = vmatpush2.bf16.msra.mxu0 0
  %2008 = vmatprep.subr.bf16.mxu0 0
  %2009 = vmatpush2.bf16.msra.mxu0 0
  %2010 = vmatprep.subr.bf16.mxu0 0
  %2011 = vmatpush2.bf16.msra.mxu0 0
  %2012 = vmatprep.subr.bf16.mxu0 0
  %2013 = vmatpush2.bf16.msra.mxu0 0
  %2014 = vmatprep.subr.bf16.mxu0 0
  %2015 = vmatpush2.bf16.msra.mxu0 0
  %2016 = vmatprep.subr.bf16.mxu0 0
  %2017 = vmatpush2.bf16.msra.mxu0 0
  %2018 = vmatprep.mubr.bf16.mxu0 0
  %2019 = vmatmul.mubr.bf16.gmra.mxu0 %v1728
  %v2020 = vpop.f32.mrf.mxu0
  %v2021 = vadd.f32 %v1744, %v2020
  %v2022 = vpop.f32.mrf.mxu0
  %v2023 = vadd.f32 %v1748, %v2022
  %v2024 = vpop.f32.mrf.mxu0
  %v2025 = vadd.f32 %v1744, %v2024
  %v2026 = vpop.f32.mrf.mxu0
  %v2027 = vadd.f32 %v1748, %v2026
  %2028 = vmatprep.mubr.bf16.mxu0 0
  %2029 = vmatmul.mubr.bf16.gmra.mxu0 %v1729
  %v2030 = vpop.f32.mrf.mxu0
  %v2031 = vadd.f32 %v1744, %v2030
  %v2032 = vpop.f32.mrf.mxu0
  %v2033 = vadd.f32 %v1748, %v2032
  %v2034 = vpop.f32.mrf.mxu0
  %v2035 = vadd.f32 %v1744, %v2034
  %v2036 = vpop.f32.mrf.mxu0
  %v2037 = vadd.f32 %v1748, %v2036
  %2038 = vmatprep.mubr.bf16.mxu0 0
  %2039 = vmatmul.mubr.bf16.gmra.mxu0 %v1730
  %v2040 = vpop.f32.mrf.mxu0
  %v2041 = vadd.f32 %v1744, %v2040
  %v2042 = vpop.f32.mrf.mxu0
  %v2043 = vadd.f32 %v1748, %v2042
  %v2044 = vpop.f32.mrf.mxu0
  %v2045 = vadd.f32 %v1744, %v2044
  %v2046 = vpop.f32.mrf.mxu0
  %v2047 = vadd.f32 %v1748, %v2046
  %2048 = vmatprep.mubr.bf16.mxu0 0
  %2049 = vmatmul.mubr.bf16.gmra.mxu0 %v1731
  %v2050 = vpop.f32.mrf.mxu0
  %v2051 = vadd.f32 %v1744, %v2050
  %v2052 = vpop.f32.mrf.mxu0
  %v2053 = vadd.f32 %v1748, %v2052
  %v2054 = vpop.f32.mrf.mxu0
  %v2055 = vadd.f32 %v1744, %v2054
  %v2056 = vpop.f32.mrf.mxu0
  %v2057 = vadd.f32 %v1748, %v2056
  %2058 = vdwg.mxu0
  %2059 = vst [vmem:[#allocation3] sm:$0xff] %v1948
  %2060 = vst [vmem:[#allocation3 + $0x8] sm:$0xff] %v1950
  %2061 = vst [vmem:[#allocation3 + $0x10] sm:$0xff] %v2021
  %2062 = vst [vmem:[#allocation3 + $0x18] sm:$0xff] %v2023
  %2063 = vst [vmem:[#allocation3 + $0x20] sm:$0xff] %v1952
  %2064 = vst [vmem:[#allocation3 + $0x28] sm:$0xff] %v1954
  %2065 = vst [vmem:[#allocation3 + $0x30] sm:$0xff] %v2025
  %2066 = vst [vmem:[#allocation3 + $0x38] sm:$0xff] %v2027
  %2067 = vst [vmem:[#allocation3 + $0x40] sm:$0xff] %v1958
  %2068 = vst [vmem:[#allocation3 + $0x48] sm:$0xff] %v1960
  %2069 = vst [vmem:[#allocation3 + $0x50] sm:$0xff] %v2031
  %2070 = vst [vmem:[#allocation3 + $0x58] sm:$0xff] %v2033
  %2071 = vst [vmem:[#allocation3 + $0x60] sm:$0xff] %v1962
  %2072 = vst [vmem:[#allocation3 + $0x68] sm:$0xff] %v1964
  %2073 = vst [vmem:[#allocation3 + $0x70] sm:$0xff] %v2035
  %2074 = vst [vmem:[#allocation3 + $0x78] sm:$0xff] %v2037
  %2075 = vst [vmem:[#allocation3 + $0x80] sm:$0xff] %v1968
  %2076 = vst [vmem:[#allocation3 + $0x88] sm:$0xff] %v1970
  %2077 = vst [vmem:[#allocation3 + $0x90] sm:$0xff] %v2041
  %2078 = vst [vmem:[#allocation3 + $0x98] sm:$0xff] %v2043
  %2079 = vst [vmem:[#allocation3 + $0xa0] sm:$0xff] %v1972
  %2080 = vst [vmem:[#allocation3 + $0xa8] sm:$0xff] %v1974
  %2081 = vst [vmem:[#allocation3 + $0xb0] sm:$0xff] %v2045
  %2082 = vst [vmem:[#allocation3 + $0xb8] sm:$0xff] %v2047
  %2083 = vst [vmem:[#allocation3 + $0xc0] sm:$0xff] %v1978
  %2084 = vst [vmem:[#allocation3 + $0xc8] sm:$0xff] %v1980
  %2085 = vst [vmem:[#allocation3 + $0xd0] sm:$0xff] %v2051
  %2086 = vst [vmem:[#allocation3 + $0xd8] sm:$0xff] %v2053
  %2087 = vst [vmem:[#allocation3 + $0xe0] sm:$0xff] %v1982
  %2088 = vst [vmem:[#allocation3 + $0xe8] sm:$0xff] %v1984
  %2089 = vst [vmem:[#allocation3 + $0xf0] sm:$0xff] %v2055
  %2090 = vst [vmem:[#allocation3 + $0xf8] sm:$0xff] %v2057
  %v2091 = vld [vmem:[#allocation3] sm:$0xff]
  %v2092 = vld [vmem:[#allocation3 + $0x8] sm:$0xff]
  %v2093 = vld [vmem:[#allocation3 + $0x10] sm:$0xff]
  %v2094 = vld [vmem:[#allocation3 + $0x18] sm:$0xff]
  %v2127 = vunpack.c.l.b16 %v1694
  %v2128 = vunpack.c.h.b16 %v1694
  %v2129 = vunpack.c.l.b16 %v1695
  %v2130 = vunpack.c.h.b16 %v1695
  %v2131 = vunpack.c.l.b16 %v1696
  %v2132 = vunpack.c.h.b16 %v1696
  %v2133 = vunpack.c.l.b16 %v1697
  %v2134 = vunpack.c.h.b16 %v1697
  %v2135 = vunpack.c.l.b16 %v1698
  %v2136 = vunpack.c.h.b16 %v1698
  %v2137 = vunpack.c.l.b16 %v1699
  %v2138 = vunpack.c.h.b16 %v1699
  %v2139 = vunpack.c.l.b16 %v1700
  %v2140 = vunpack.c.h.b16 %v1700
  %v2141 = vunpack.c.l.b16 %v1701
  %v2142 = vunpack.c.h.b16 %v1701
  %v2143 = vunpack.c.l.b16 %v1702
  %v2144 = vunpack.c.h.b16 %v1702
  %v2145 = vunpack.c.l.b16 %v1703
  %v2146 = vunpack.c.h.b16 %v1703
  %v2147 = vunpack.c.l.b16 %v1704
  %v2148 = vunpack.c.h.b16 %v1704
  %v2149 = vunpack.c.l.b16 %v1705
  %v2150 = vunpack.c.h.b16 %v1705
  %v2151 = vunpack.c.l.b16 %v1706
  %v2152 = vunpack.c.h.b16 %v1706
  %v2153 = vunpack.c.l.b16 %v1707
  %v2154 = vunpack.c.h.b16 %v1707
  %v2155 = vunpack.c.l.b16 %v1708
  %v2156 = vunpack.c.h.b16 %v1708
  %v2157 = vunpack.c.l.b16 %v1709
  %v2158 = vunpack.c.h.b16 %v1709
  %v2159 = vunpack.c.l.b16 %v1710
  %v2160 = vunpack.c.h.b16 %v1710
  %v2161 = vunpack.c.l.b16 %v1711
  %v2162 = vunpack.c.h.b16 %v1711
  %v2163 = vunpack.c.l.b16 %v1712
  %v2164 = vunpack.c.h.b16 %v1712
  %v2165 = vunpack.c.l.b16 %v1713
  %v2166 = vunpack.c.h.b16 %v1713
  %v2167 = vunpack.c.l.b16 %v1714
  %v2168 = vunpack.c.h.b16 %v1714
  %v2169 = vunpack.c.l.b16 %v1715
  %v2170 = vunpack.c.h.b16 %v1715
  %v2171 = vunpack.c.l.b16 %v1716
  %v2172 = vunpack.c.h.b16 %v1716
  %v2173 = vunpack.c.l.b16 %v1717
  %v2174 = vunpack.c.h.b16 %v1717
  %v2175 = vunpack.c.l.b16 %v1718
  %v2176 = vunpack.c.h.b16 %v1718
  %v2177 = vunpack.c.l.b16 %v1719
  %v2178 = vunpack.c.h.b16 %v1719
  %v2179 = vunpack.c.l.b16 %v1720
  %v2180 = vunpack.c.h.b16 %v1720
  %v2181 = vunpack.c.l.b16 %v1721
  %v2182 = vunpack.c.h.b16 %v1721
  %v2183 = vunpack.c.l.b16 %v1722
  %v2184 = vunpack.c.h.b16 %v1722
  %v2185 = vunpack.c.l.b16 %v1723
  %v2186 = vunpack.c.h.b16 %v1723
  %v2187 = vunpack.c.l.b16 %v1724
  %v2188 = vunpack.c.h.b16 %v1724
  %v2189 = vunpack.c.l.b16 %v1725
  %v2190 = vunpack.c.h.b16 %v1725
  %v2191 = vpack.c.b16 %v2131, %v2127
  %v2192 = vpack.c.b16 %v2132, %v2128
  %v2193 = vpack.c.b16 %v2133, %v2129
  %v2194 = vpack.c.b16 %v2134, %v2130
  %v2195 = vpack.c.b16 %v2139, %v2135
  %v2196 = vpack.c.b16 %v2140, %v2136
  %v2197 = vpack.c.b16 %v2141, %v2137
  %v2198 = vpack.c.b16 %v2142, %v2138
  %v2199 = vpack.c.b16 %v2147, %v2143
  %v2200 = vpack.c.b16 %v2148, %v2144
  %v2201 = vpack.c.b16 %v2149, %v2145
  %v2202 = vpack.c.b16 %v2150, %v2146
  %v2203 = vpack.c.b16 %v2155, %v2151
  %v2204 = vpack.c.b16 %v2156, %v2152
  %v2205 = vpack.c.b16 %v2157, %v2153
  %v2206 = vpack.c.b16 %v2158, %v2154
  %v2207 = vpack.c.b16 %v2163, %v2159
  %v2208 = vpack.c.b16 %v2164, %v2160
  %v2209 = vpack.c.b16 %v2165, %v2161
  %v2210 = vpack.c.b16 %v2166, %v2162
  %v2211 = vpack.c.b16 %v2171, %v2167
  %v2212 = vpack.c.b16 %v2172, %v2168
  %v2213 = vpack.c.b16 %v2173, %v2169
  %v2214 = vpack.c.b16 %v2174, %v2170
  %v2215 = vpack.c.b16 %v2179, %v2175
  %v2216 = vpack.c.b16 %v2180, %v2176
  %v2217 = vpack.c.b16 %v2181, %v2177
  %v2218 = vpack.c.b16 %v2182, %v2178
  %v2219 = vpack.c.b16 %v2187, %v2183
  %v2220 = vpack.c.b16 %v2188, %v2184
  %v2221 = vpack.c.b16 %v2189, %v2185
  %v2222 = vpack.c.b16 %v2190, %v2186
  %2255 = vmatprep.subr.bf16.mxu0 %v2220
  %2256 = vmatpush1.bf16.msra.mxu0 %v2219
  %2257 = vmatprep.subr.bf16.mxu0 %v2216
  %2258 = vmatpush1.bf16.msra.mxu0 %v2215
  %2259 = vmatprep.subr.bf16.mxu0 %v2212
  %2260 = vmatpush1.bf16.msra.mxu0 %v2211
  %2261 = vmatprep.subr.bf16.mxu0 %v2208
  %2262 = vmatpush1.bf16.msra.mxu0 %v2207
  %2263 = vmatprep.subr.bf16.mxu0 %v2204
  %2264 = vmatpush1.bf16.msra.mxu0 %v2203
  %2265 = vmatprep.subr.bf16.mxu0 %v2200
  %2266 = vmatpush1.bf16.msra.mxu0 %v2199
  %2267 = vmatprep.subr.bf16.mxu0 %v2196
  %2268 = vmatpush1.bf16.msra.mxu0 %v2195
  %2269 = vmatprep.subr.bf16.mxu0 %v2192
  %2270 = vmatpush1.bf16.msra.mxu0 %v2191
  %2271 = vmatprep.subr.bf16.mxu0 0
  %2272 = vmatpush2.bf16.msra.mxu0 0
  %2273 = vmatprep.subr.bf16.mxu0 0
  %2274 = vmatpush2.bf16.msra.mxu0 0
  %2275 = vmatprep.subr.bf16.mxu0 0
  %2276 = vmatpush2.bf16.msra.mxu0 0
  %2277 = vmatprep.subr.bf16.mxu0 0
  %2278 = vmatpush2.bf16.msra.mxu0 0
  %2279 = vmatprep.subr.bf16.mxu0 0
  %2280 = vmatpush2.bf16.msra.mxu0 0
  %2281 = vmatprep.subr.bf16.mxu0 0
  %2282 = vmatpush2.bf16.msra.mxu0 0
  %2283 = vmatprep.subr.bf16.mxu0 0
  %2284 = vmatpush2.bf16.msra.mxu0 0
  %2285 = vmatprep.subr.bf16.mxu0 0
  %2286 = vmatpush2.bf16.msra.mxu0 0
  %2287 = vmatprep.mubr.bf16.mxu0 0
  %2288 = vmatmul.mubr.bf16.gmra.mxu0 0
  %v2289 = vpop.f32.mrf.mxu0
  %v2290 = vadd.f32 0.0, %v2289
  %v2291 = vpop.f32.mrf.mxu0
  %v2292 = vadd.f32 0.0, %v2291
  %v2293 = vpop.f32.mrf.mxu0
  %v2294 = vpop.f32.mrf.mxu0
  %2295 = vdwg.mxu0
  %2296 = vmatprep.subr.bf16.mxu0 %v2222
  %2297 = vmatpush1.bf16.msra.mxu0 %v2221
  %2298 = vmatprep.subr.bf16.mxu0 %v2218
  %2299 = vmatpush1.bf16.msra.mxu0 %v2217
  %2300 = vmatprep.subr.bf16.mxu0 %v2214
  %2301 = vmatpush1.bf16.msra.mxu0 %v2213
  %2302 = vmatprep.subr.bf16.mxu0 %v2210
  %2303 = vmatpush1.bf16.msra.mxu0 %v2209
  %2304 = vmatprep.subr.bf16.mxu0 %v2206
  %2305 = vmatpush1.bf16.msra.mxu0 %v2205
  %2306 = vmatprep.subr.bf16.mxu0 %v2202
  %2307 = vmatpush1.bf16.msra.mxu0 %v2201
  %2308 = vmatprep.subr.bf16.mxu0 %v2198
  %2309 = vmatpush1.bf16.msra.mxu0 %v2197
  %2310 = vmatprep.subr.bf16.mxu0 %v2194
  %2311 = vmatpush1.bf16.msra.mxu0 %v2193
  %2312 = vmatprep.subr.bf16.mxu0 0
  %2313 = vmatpush2.bf16.msra.mxu0 0
  %2314 = vmatprep.subr.bf16.mxu0 0
  %2315 = vmatpush2.bf16.msra.mxu0 0
  %2316 = vmatprep.subr.bf16.mxu0 0
  %2317 = vmatpush2.bf16.msra.mxu0 0
  %2318 = vmatprep.subr.bf16.mxu0 0
  %2319 = vmatpush2.bf16.msra.mxu0 0
  %2320 = vmatprep.subr.bf16.mxu0 0
  %2321 = vmatpush2.bf16.msra.mxu0 0
  %2322 = vmatprep.subr.bf16.mxu0 0
  %2323 = vmatpush2.bf16.msra.mxu0 0
  %2324 = vmatprep.subr.bf16.mxu0 0
  %2325 = vmatpush2.bf16.msra.mxu0 0
  %2326 = vmatprep.subr.bf16.mxu0 0
  %2327 = vmatpush2.bf16.msra.mxu0 0
  %2328 = vmatprep.mubr.bf16.mxu0 0
  %2329 = vmatmul.mubr.bf16.gmra.mxu0 0
  %v2330 = vpop.f32.mrf.mxu0
  %v2331 = vadd.f32 0.0, %v2330
  %v2332 = vpop.f32.mrf.mxu0
  %v2333 = vadd.f32 0.0, %v2332
  %v2334 = vpop.f32.mrf.mxu0
  %v2335 = vpop.f32.mrf.mxu0
  %2336 = vdwg.mxu0
  %v2337 = vadd.f32 %v2091, %v2290
  %v2338 = vadd.f32 %v2092, %v2292
  %v2339 = vadd.f32 %v2093, %v2331
  %v2340 = vadd.f32 %v2094, %v2333
  %v2341 = vxor.u32 %v2337, 2147483648
  %v2342 = vmul.f32 %v2341, 1.442695
  %v2343 = vpow.pop %v2342
  %v2344 = vadd.f32 %v2343, 1.0
  %v2345 = vrcp.pop %v2344
  %v2346 = vmul.f32 1.0, %v2345
  %v2347 = vxor.u32 %v2338, 2147483648
  %v2348 = vmul.f32 %v2347, 1.442695
  %v2349 = vpow.pop %v2348
  %v2350 = vadd.f32 %v2349, 1.0
  %v2351 = vrcp.pop %v2350
  %v2352 = vmul.f32 1.0, %v2351
  %v2353 = vtanh.pop %v2339
  %v2354 = vxor.u32 %v2340, 2147483648
  %v2355 = vmul.f32 %v2354, 1.442695
  %v2356 = vpow.pop %v2355
  %v2357 = vadd.f32 %v2356, 1.0
  %v2358 = vrcp.pop %v2357
  %v2359 = vmul.f32 1.0, %v2358
  %v2360 = vmul.f32 %v2352, 0.0
  %v2361 = vmul.f32 %v2346, %v2353
  %v2362 = vadd.f32 %v2360, %v2361
  %v2363 = vtanh.pop %v2362
  %v2364 = vmul.f32 %v2359, %v2363
  %v2365 = vsel %vm759, %v2362, 0.0
  %v2366 = vsel %vm759, %v2364, 0.0
  %2367 = vst [vmem:[#allocation2] sm:$0xff] %v2366
  %v2368 = vld [vmem:[%s763] sm:$0xff]
  %v2369 = vld [vmem:[%s763 + $0x8] sm:$0xff]
  %v2370 = vld [vmem:[%s763 + $0x10] sm:$0xff]
  %v2371 = vld [vmem:[%s763 + $0x18] sm:$0xff]
  %v2372 = vpack.c.bf16 %v2366, %v2366
  %2373 = vmatprep.subr.bf16.mxu0 %v2220
  %2374 = vmatpush1.bf16.msra.mxu0 %v2219
  %2375 = vmatprep.subr.bf16.mxu0 %v2216
  %2376 = vmatpush1.bf16.msra.mxu0 %v2215
  %2377 = vmatprep.subr.bf16.mxu0 %v2212
  %2378 = vmatpush1.bf16.msra.mxu0 %v2211
  %2379 = vmatprep.subr.bf16.mxu0 %v2208
  %2380 = vmatpush1.bf16.msra.mxu0 %v2207
  %2381 = vmatprep.subr.bf16.mxu0 %v2204
  %2382 = vmatpush1.bf16.msra.mxu0 %v2203
  %2383 = vmatprep.subr.bf16.mxu0 %v2200
  %2384 = vmatpush1.bf16.msra.mxu0 %v2199
  %2385 = vmatprep.subr.bf16.mxu0 %v2196
  %2386 = vmatpush1.bf16.msra.mxu0 %v2195
  %2387 = vmatprep.subr.bf16.mxu0 %v2192
  %2388 = vmatpush1.bf16.msra.mxu0 %v2191
  %2389 = vmatprep.subr.bf16.mxu0 0
  %2390 = vmatpush2.bf16.msra.mxu0 0
  %2391 = vmatprep.subr.bf16.mxu0 0
  %2392 = vmatpush2.bf16.msra.mxu0 0
  %2393 = vmatprep.subr.bf16.mxu0 0
  %2394 = vmatpush2.bf16.msra.mxu0 0
  %2395 = vmatprep.subr.bf16.mxu0 0
  %2396 = vmatpush2.bf16.msra.mxu0 0
  %2397 = vmatprep.subr.bf16.mxu0 0
  %2398 = vmatpush2.bf16.msra.mxu0 0
  %2399 = vmatprep.subr.bf16.mxu0 0
  %2400 = vmatpush2.bf16.msra.mxu0 0
  %2401 = vmatprep.subr.bf16.mxu0 0
  %2402 = vmatpush2.bf16.msra.mxu0 0
  %2403 = vmatprep.subr.bf16.mxu0 0
  %2404 = vmatpush2.bf16.msra.mxu0 0
  %2405 = vmatprep.mubr.bf16.mxu0 0
  %2406 = vmatmul.mubr.bf16.gmra.mxu0 %v2372
  %v2407 = vpop.f32.mrf.mxu0
  %v2408 = vadd.f32 0.0, %v2407
  %v2409 = vpop.f32.mrf.mxu0
  %v2410 = vadd.f32 0.0, %v2409
  %v2411 = vpop.f32.mrf.mxu0
  %v2412 = vpop.f32.mrf.mxu0
  %2413 = vdwg.mxu0
  %2414 = vmatprep.subr.bf16.mxu0 %v2222
  %2415 = vmatpush1.bf16.msra.mxu0 %v2221
  %2416 = vmatprep.subr.bf16.mxu0 %v2218
  %2417 = vmatpush1.bf16.msra.mxu0 %v2217
  %2418 = vmatprep.subr.bf16.mxu0 %v2214
  %2419 = vmatpush1.bf16.msra.mxu0 %v2213
  %2420 = vmatprep.subr.bf16.mxu0 %v2210
  %2421 = vmatpush1.bf16.msra.mxu0 %v2209
  %2422 = vmatprep.subr.bf16.mxu0 %v2206
  %2423 = vmatpush1.bf16.msra.mxu0 %v2205
  %2424 = vmatprep.subr.bf16.mxu0 %v2202
  %2425 = vmatpush1.bf16.msra.mxu0 %v2201
  %2426 = vmatprep.subr.bf16.mxu0 %v2198
  %2427 = vmatpush1.bf16.msra.mxu0 %v2197
  %2428 = vmatprep.subr.bf16.mxu0 %v2194
  %2429 = vmatpush1.bf16.msra.mxu0 %v2193
  %2430 = vmatprep.subr.bf16.mxu0 0
  %2431 = vmatpush2.bf16.msra.mxu0 0
  %2432 = vmatprep.subr.bf16.mxu0 0
  %2433 = vmatpush2.bf16.msra.mxu0 0
  %2434 = vmatprep.subr.bf16.mxu0 0
  %2435 = vmatpush2.bf16.msra.mxu0 0
  %2436 = vmatprep.subr.bf16.mxu0 0
  %2437 = vmatpush2.bf16.msra.mxu0 0
  %2438 = vmatprep.subr.bf16.mxu0 0
  %2439 = vmatpush2.bf16.msra.mxu0 0
  %2440 = vmatprep.subr.bf16.mxu0 0
  %2441 = vmatpush2.bf16.msra.mxu0 0
  %2442 = vmatprep.subr.bf16.mxu0 0
  %2443 = vmatpush2.bf16.msra.mxu0 0
  %2444 = vmatprep.subr.bf16.mxu0 0
  %2445 = vmatpush2.bf16.msra.mxu0 0
  %2446 = vmatprep.mubr.bf16.mxu0 0
  %2447 = vmatmul.mubr.bf16.gmra.mxu0 %v2372
  %v2448 = vpop.f32.mrf.mxu0
  %v2449 = vadd.f32 0.0, %v2448
  %v2450 = vpop.f32.mrf.mxu0
  %v2451 = vadd.f32 0.0, %v2450
  %v2452 = vpop.f32.mrf.mxu0
  %v2453 = vpop.f32.mrf.mxu0
  %2454 = vdwg.mxu0
  %v2455 = vadd.f32 %v2368, %v2408
  %v2456 = vadd.f32 %v2369, %v2410
  %v2457 = vadd.f32 %v2370, %v2449
  %v2458 = vadd.f32 %v2371, %v2451
  %v2459 = vxor.u32 %v2455, 2147483648
  %v2460 = vmul.f32 %v2459, 1.442695
  %v2461 = vpow.pop %v2460
  %v2462 = vadd.f32 %v2461, 1.0
  %v2463 = vrcp.pop %v2462
  %v2464 = vmul.f32 1.0, %v2463
  %v2465 = vxor.u32 %v2456, 2147483648
  %v2466 = vmul.f32 %v2465, 1.442695
  %v2467 = vpow.pop %v2466
  %v2468 = vadd.f32 %v2467, 1.0
  %v2469 = vrcp.pop %v2468
  %v2470 = vmul.f32 1.0, %v2469
  %v2471 = vtanh.pop %v2457
  %v2472 = vxor.u32 %v2458, 2147483648
  %v2473 = vmul.f32 %v2472, 1.442695
  %v2474 = vpow.pop %v2473
  %v2475 = vadd.f32 %v2474, 1.0
  %v2476 = vrcp.pop %v2475
  %v2477 = vmul.f32 1.0, %v2476
  %v2478 = vmul.f32 %v2470, %v2365
  %v2479 = vmul.f32 %v2464, %v2471
  %v2480 = vadd.f32 %v2478, %v2479
  %v2481 = vtanh.pop %v2480
  %v2482 = vmul.f32 %v2477, %v2481
  %v2483 = vsel %vm884, %v2480, %v2365
  %v2484 = vsel %vm884, %v2482, %v2366
  %v2485 = vsel %vm884, %v2482, 0.0
  %2486 = vst [vmem:[%s888] sm:$0xff] %v2485
  %v2487 = vld [vmem:[%s890] sm:$0xff]
  %v2488 = vld [vmem:[%s890 + $0x8] sm:$0xff]
  %v2489 = vld [vmem:[%s890 + $0x10] sm:$0xff]
  %v2490 = vld [vmem:[%s890 + $0x18] sm:$0xff]
  %v2491 = vpack.c.bf16 %v2484, %v2484
  %2492 = vmatprep.subr.bf16.mxu0 %v2220
  %2493 = vmatpush1.bf16.msra.mxu0 %v2219
  %2494 = vmatprep.subr.bf16.mxu0 %v2216
  %2495 = vmatpush1.bf16.msra.mxu0 %v2215
  %2496 = vmatprep.subr.bf16.mxu0 %v2212
  %2497 = vmatpush1.bf16.msra.mxu0 %v2211
  %2498 = vmatprep.subr.bf16.mxu0 %v2208
  %2499 = vmatpush1.bf16.msra.mxu0 %v2207
  %2500 = vmatprep.subr.bf16.mxu0 %v2204
  %2501 = vmatpush1.bf16.msra.mxu0 %v2203
  %2502 = vmatprep.subr.bf16.mxu0 %v2200
  %2503 = vmatpush1.bf16.msra.mxu0 %v2199
  %2504 = vmatprep.subr.bf16.mxu0 %v2196
  %2505 = vmatpush1.bf16.msra.mxu0 %v2195
  %2506 = vmatprep.subr.bf16.mxu0 %v2192
  %2507 = vmatpush1.bf16.msra.mxu0 %v2191
  %2508 = vmatprep.subr.bf16.mxu0 0
  %2509 = vmatpush2.bf16.msra.mxu0 0
  %2510 = vmatprep.subr.bf16.mxu0 0
  %2511 = vmatpush2.bf16.msra.mxu0 0
  %2512 = vmatprep.subr.bf16.mxu0 0
  %2513 = vmatpush2.bf16.msra.mxu0 0
  %2514 = vmatprep.subr.bf16.mxu0 0
  %2515 = vmatpush2.bf16.msra.mxu0 0
  %2516 = vmatprep.subr.bf16.mxu0 0
  %2517 = vmatpush2.bf16.msra.mxu0 0
  %2518 = vmatprep.subr.bf16.mxu0 0
  %2519 = vmatpush2.bf16.msra.mxu0 0
  %2520 = vmatprep.subr.bf16.mxu0 0
  %2521 = vmatpush2.bf16.msra.mxu0 0
  %2522 = vmatprep.subr.bf16.mxu0 0
  %2523 = vmatpush2.bf16.msra.mxu0 0
  %2524 = vmatprep.mubr.bf16.mxu0 0
  %2525 = vmatmul.mubr.bf16.gmra.mxu0 %v2491
  %v2526 = vpop.f32.mrf.mxu0
  %v2527 = vadd.f32 0.0, %v2526
  %v2528 = vpop.f32.mrf.mxu0
  %v2529 = vadd.f32 0.0, %v2528
  %v2530 = vpop.f32.mrf.mxu0
  %v2531 = vpop.f32.mrf.mxu0
  %2532 = vdwg.mxu0
  %2533 = vmatprep.subr.bf16.mxu0 %v2222
  %2534 = vmatpush1.bf16.msra.mxu0 %v2221
  %2535 = vmatprep.subr.bf16.mxu0 %v2218
  %2536 = vmatpush1.bf16.msra.mxu0 %v2217
  %2537 = vmatprep.subr.bf16.mxu0 %v2214
  %2538 = vmatpush1.bf16.msra.mxu0 %v2213
  %2539 = vmatprep.subr.bf16.mxu0 %v2210
  %2540 = vmatpush1.bf16.msra.mxu0 %v2209
  %2541 = vmatprep.subr.bf16.mxu0 %v2206
  %2542 = vmatpush1.bf16.msra.mxu0 %v2205
  %2543 = vmatprep.subr.bf16.mxu0 %v2202
  %2544 = vmatpush1.bf16.msra.mxu0 %v2201
  %2545 = vmatprep.subr.bf16.mxu0 %v2198
  %2546 = vmatpush1.bf16.msra.mxu0 %v2197
  %2547 = vmatprep.subr.bf16.mxu0 %v2194
  %2548 = vmatpush1.bf16.msra.mxu0 %v2193
  %2549 = vmatprep.subr.bf16.mxu0 0
  %2550 = vmatpush2.bf16.msra.mxu0 0
  %2551 = vmatprep.subr.bf16.mxu0 0
  %2552 = vmatpush2.bf16.msra.mxu0 0
  %2553 = vmatprep.subr.bf16.mxu0 0
  %2554 = vmatpush2.bf16.msra.mxu0 0
  %2555 = vmatprep.subr.bf16.mxu0 0
  %2556 = vmatpush2.bf16.msra.mxu0 0
  %2557 = vmatprep.subr.bf16.mxu0 0
  %2558 = vmatpush2.bf16.msra.mxu0 0
  %2559 = vmatprep.subr.bf16.mxu0 0
  %2560 = vmatpush2.bf16.msra.mxu0 0
  %2561 = vmatprep.subr.bf16.mxu0 0
  %2562 = vmatpush2.bf16.msra.mxu0 0
  %2563 = vmatprep.subr.bf16.mxu0 0
  %2564 = vmatpush2.bf16.msra.mxu0 0
  %2565 = vmatprep.mubr.bf16.mxu0 0
  %2566 = vmatmul.mubr.bf16.gmra.mxu0 %v2491
  %v2567 = vpop.f32.mrf.mxu0
  %v2568 = vadd.f32 0.0, %v2567
  %v2569 = vpop.f32.mrf.mxu0
  %v2570 = vadd.f32 0.0, %v2569
  %v2571 = vpop.f32.mrf.mxu0
  %v2572 = vpop.f32.mrf.mxu0
  %2573 = vdwg.mxu0
  %v2574 = vadd.f32 %v2487, %v2527
  %v2575 = vadd.f32 %v2488, %v2529
  %v2576 = vadd.f32 %v2489, %v2568
  %v2577 = vadd.f32 %v2490, %v2570
  %v2578 = vxor.u32 %v2574, 2147483648
  %v2579 = vmul.f32 %v2578, 1.442695
  %v2580 = vpow.pop %v2579
  %v2581 = vadd.f32 %v2580, 1.0
  %v2582 = vrcp.pop %v2581
  %v2583 = vmul.f32 1.0, %v2582
  %v2584 = vxor.u32 %v2575, 2147483648
  %v2585 = vmul.f32 %v2584, 1.442695
  %v2586 = vpow.pop %v2585
  %v2587 = vadd.f32 %v2586, 1.0
  %v2588 = vrcp.pop %v2587
  %v2589 = vmul.f32 1.0, %v2588
  %v2590 = vtanh.pop %v2576
  %v2591 = vxor.u32 %v2577, 2147483648
  %v2592 = vmul.f32 %v2591, 1.442695
  %v2593 = vpow.pop %v2592
  %v2594 = vadd.f32 %v2593, 1.0
  %v2595 = vrcp.pop %v2594
  %v2596 = vmul.f32 1.0, %v2595
  %v2597 = vmul.f32 %v2589, %v2483
  %v2598 = vmul.f32 %v2583, %v2590
  %v2599 = vadd.f32 %v2597, %v2598
  %v2600 = vtanh.pop %v2599
  %v2601 = vmul.f32 %v2596, %v2600
  %v2602 = vsel %vm1011, %v2599, %v2483
  %v2603 = vsel %vm1011, %v2601, %v2484
  %v2604 = vsel %vm1011, %v2601, 0.0
  %2605 = vst [vmem:[%s1015] sm:$0xff] %v2604
  %v2606 = vld [vmem:[%s1017] sm:$0xff]
  %v2607 = vld [vmem:[%s1017 + $0x8] sm:$0xff]
  %v2608 = vld [vmem:[%s1017 + $0x10] sm:$0xff]
  %v2609 = vld [vmem:[%s1017 + $0x18] sm:$0xff]
  %v2610 = vpack.c.bf16 %v2603, %v2603
  %2611 = vmatprep.subr.bf16.mxu0 %v2220
  %2612 = vmatpush1.bf16.msra.mxu0 %v2219
  %2613 = vmatprep.subr.bf16.mxu0 %v2216
  %2614 = vmatpush1.bf16.msra.mxu0 %v2215
  %2615 = vmatprep.subr.bf16.mxu0 %v2212
  %2616 = vmatpush1.bf16.msra.mxu0 %v2211
  %2617 = vmatprep.subr.bf16.mxu0 %v2208
  %2618 = vmatpush1.bf16.msra.mxu0 %v2207
  %2619 = vmatprep.subr.bf16.mxu0 %v2204
  %2620 = vmatpush1.bf16.msra.mxu0 %v2203
  %2621 = vmatprep.subr.bf16.mxu0 %v2200
  %2622 = vmatpush1.bf16.msra.mxu0 %v2199
  %2623 = vmatprep.subr.bf16.mxu0 %v2196
  %2624 = vmatpush1.bf16.msra.mxu0 %v2195
  %2625 = vmatprep.subr.bf16.mxu0 %v2192
  %2626 = vmatpush1.bf16.msra.mxu0 %v2191
  %2627 = vmatprep.subr.bf16.mxu0 0
  %2628 = vmatpush2.bf16.msra.mxu0 0
  %2629 = vmatprep.subr.bf16.mxu0 0
  %2630 = vmatpush2.bf16.msra.mxu0 0
  %2631 = vmatprep.subr.bf16.mxu0 0
  %2632 = vmatpush2.bf16.msra.mxu0 0
  %2633 = vmatprep.subr.bf16.mxu0 0
  %2634 = vmatpush2.bf16.msra.mxu0 0
  %2635 = vmatprep.subr.bf16.mxu0 0
  %2636 = vmatpush2.bf16.msra.mxu0 0
  %2637 = vmatprep.subr.bf16.mxu0 0
  %2638 = vmatpush2.bf16.msra.mxu0 0
  %2639 = vmatprep.subr.bf16.mxu0 0
  %2640 = vmatpush2.bf16.msra.mxu0 0
  %2641 = vmatprep.subr.bf16.mxu0 0
  %2642 = vmatpush2.bf16.msra.mxu0 0
  %2643 = vmatprep.mubr.bf16.mxu0 0
  %2644 = vmatmul.mubr.bf16.gmra.mxu0 %v2610
  %v2645 = vpop.f32.mrf.mxu0
  %v2646 = vadd.f32 0.0, %v2645
  %v2647 = vpop.f32.mrf.mxu0
  %v2648 = vadd.f32 0.0, %v2647
  %v2649 = vpop.f32.mrf.mxu0
  %v2650 = vpop.f32.mrf.mxu0
  %2651 = vdwg.mxu0
  %2652 = vmatprep.subr.bf16.mxu0 %v2222
  %2653 = vmatpush1.bf16.msra.mxu0 %v2221
  %2654 = vmatprep.subr.bf16.mxu0 %v2218
  %2655 = vmatpush1.bf16.msra.mxu0 %v2217
  %2656 = vmatprep.subr.bf16.mxu0 %v2214
  %2657 = vmatpush1.bf16.msra.mxu0 %v2213
  %2658 = vmatprep.subr.bf16.mxu0 %v2210
  %2659 = vmatpush1.bf16.msra.mxu0 %v2209
  %2660 = vmatprep.subr.bf16.mxu0 %v2206
  %2661 = vmatpush1.bf16.msra.mxu0 %v2205
  %2662 = vmatprep.subr.bf16.mxu0 %v2202
  %2663 = vmatpush1.bf16.msra.mxu0 %v2201
  %2664 = vmatprep.subr.bf16.mxu0 %v2198
  %2665 = vmatpush1.bf16.msra.mxu0 %v2197
  %2666 = vmatprep.subr.bf16.mxu0 %v2194
  %2667 = vmatpush1.bf16.msra.mxu0 %v2193
  %2668 = vmatprep.subr.bf16.mxu0 0
  %2669 = vmatpush2.bf16.msra.mxu0 0
  %2670 = vmatprep.subr.bf16.mxu0 0
  %2671 = vmatpush2.bf16.msra.mxu0 0
  %2672 = vmatprep.subr.bf16.mxu0 0
  %2673 = vmatpush2.bf16.msra.mxu0 0
  %2674 = vmatprep.subr.bf16.mxu0 0
  %2675 = vmatpush2.bf16.msra.mxu0 0
  %2676 = vmatprep.subr.bf16.mxu0 0
  %2677 = vmatpush2.bf16.msra.mxu0 0
  %2678 = vmatprep.subr.bf16.mxu0 0
  %2679 = vmatpush2.bf16.msra.mxu0 0
  %2680 = vmatprep.subr.bf16.mxu0 0
  %2681 = vmatpush2.bf16.msra.mxu0 0
  %2682 = vmatprep.subr.bf16.mxu0 0
  %2683 = vmatpush2.bf16.msra.mxu0 0
  %2684 = vmatprep.mubr.bf16.mxu0 0
  %2685 = vmatmul.mubr.bf16.gmra.mxu0 %v2610
  %v2686 = vpop.f32.mrf.mxu0
  %v2687 = vadd.f32 0.0, %v2686
  %v2688 = vpop.f32.mrf.mxu0
  %v2689 = vadd.f32 0.0, %v2688
  %v2690 = vpop.f32.mrf.mxu0
  %v2691 = vpop.f32.mrf.mxu0
  %2692 = vdwg.mxu0
  %v2693 = vadd.f32 %v2606, %v2646
  %v2694 = vadd.f32 %v2607, %v2648
  %v2695 = vadd.f32 %v2608, %v2687
  %v2696 = vadd.f32 %v2609, %v2689
  %v2697 = vxor.u32 %v2693, 2147483648
  %v2698 = vmul.f32 %v2697, 1.442695
  %v2699 = vpow.pop %v2698
  %v2700 = vadd.f32 %v2699, 1.0
  %v2701 = vrcp.pop %v2700
  %v2702 = vmul.f32 1.0, %v2701
  %v2703 = vxor.u32 %v2694, 2147483648
  %v2704 = vmul.f32 %v2703, 1.442695
  %v2705 = vpow.pop %v2704
  %v2706 = vadd.f32 %v2705, 1.0
  %v2707 = vrcp.pop %v2706
  %v2708 = vmul.f32 1.0, %v2707
  %v2709 = vtanh.pop %v2695
  %v2710 = vxor.u32 %v2696, 2147483648
  %v2711 = vmul.f32 %v2710, 1.442695
  %v2712 = vpow.pop %v2711
  %v2713 = vadd.f32 %v2712, 1.0
  %v2714 = vrcp.pop %v2713
  %v2715 = vmul.f32 1.0, %v2714
  %v2716 = vmul.f32 %v2708, %v2602
  %v2717 = vmul.f32 %v2702, %v2709
  %v2718 = vadd.f32 %v2716, %v2717
  %v2719 = vtanh.pop %v2718
  %v2720 = vmul.f32 %v2715, %v2719
  %v2721 = vsel %vm1138, %v2718, %v2602
  %v2722 = vsel %vm1138, %v2720, %v2603
  %v2723 = vsel %vm1138, %v2720, 0.0
  %2724 = vst [vmem:[%s1142] sm:$0xff] %v2723
  %v2725 = vld [vmem:[%s1144] sm:$0xff]
  %v2726 = vld [vmem:[%s1144 + $0x8] sm:$0xff]
  %v2727 = vld [vmem:[%s1144 + $0x10] sm:$0xff]
  %v2728 = vld [vmem:[%s1144 + $0x18] sm:$0xff]
  %v2729 = vpack.c.bf16 %v2722, %v2722
  %2730 = vmatprep.subr.bf16.mxu0 %v2220
  %2731 = vmatpush1.bf16.msra.mxu0 %v2219
  %2732 = vmatprep.subr.bf16.mxu0 %v2216
  %2733 = vmatpush1.bf16.msra.mxu0 %v2215
  %2734 = vmatprep.subr.bf16.mxu0 %v2212
  %2735 = vmatpush1.bf16.msra.mxu0 %v2211
  %2736 = vmatprep.subr.bf16.mxu0 %v2208
  %2737 = vmatpush1.bf16.msra.mxu0 %v2207
  %2738 = vmatprep.subr.bf16.mxu0 %v2204
  %2739 = vmatpush1.bf16.msra.mxu0 %v2203
  %2740 = vmatprep.subr.bf16.mxu0 %v2200
  %2741 = vmatpush1.bf16.msra.mxu0 %v2199
  %2742 = vmatprep.subr.bf16.mxu0 %v2196
  %2743 = vmatpush1.bf16.msra.mxu0 %v2195
  %2744 = vmatprep.subr.bf16.mxu0 %v2192
  %2745 = vmatpush1.bf16.msra.mxu0 %v2191
  %2746 = vmatprep.subr.bf16.mxu0 0
  %2747 = vmatpush2.bf16.msra.mxu0 0
  %2748 = vmatprep.subr.bf16.mxu0 0
  %2749 = vmatpush2.bf16.msra.mxu0 0
  %2750 = vmatprep.subr.bf16.mxu0 0
  %2751 = vmatpush2.bf16.msra.mxu0 0
  %2752 = vmatprep.subr.bf16.mxu0 0
  %2753 = vmatpush2.bf16.msra.mxu0 0
  %2754 = vmatprep.subr.bf16.mxu0 0
  %2755 = vmatpush2.bf16.msra.mxu0 0
  %2756 = vmatprep.subr.bf16.mxu0 0
  %2757 = vmatpush2.bf16.msra.mxu0 0
  %2758 = vmatprep.subr.bf16.mxu0 0
  %2759 = vmatpush2.bf16.msra.mxu0 0
  %2760 = vmatprep.subr.bf16.mxu0 0
  %2761 = vmatpush2.bf16.msra.mxu0 0
  %2762 = vmatprep.mubr.bf16.mxu0 0
  %2763 = vmatmul.mubr.bf16.gmra.mxu0 %v2729
  %v2764 = vpop.f32.mrf.mxu0
  %v2765 = vadd.f32 0.0, %v2764
  %v2766 = vpop.f32.mrf.mxu0
  %v2767 = vadd.f32 0.0, %v2766
  %v2768 = vpop.f32.mrf.mxu0
  %v2769 = vpop.f32.mrf.mxu0
  %2770 = vdwg.mxu0
  %2771 = vmatprep.subr.bf16.mxu0 %v2222
  %2772 = vmatpush1.bf16.msra.mxu0 %v2221
  %2773 = vmatprep.subr.bf16.mxu0 %v2218
  %2774 = vmatpush1.bf16.msra.mxu0 %v2217
  %2775 = vmatprep.subr.bf16.mxu0 %v2214
  %2776 = vmatpush1.bf16.msra.mxu0 %v2213
  %2777 = vmatprep.subr.bf16.mxu0 %v2210
  %2778 = vmatpush1.bf16.msra.mxu0 %v2209
  %2779 = vmatprep.subr.bf16.mxu0 %v2206
  %2780 = vmatpush1.bf16.msra.mxu0 %v2205
  %2781 = vmatprep.subr.bf16.mxu0 %v2202
  %2782 = vmatpush1.bf16.msra.mxu0 %v2201
  %2783 = vmatprep.subr.bf16.mxu0 %v2198
  %2784 = vmatpush1.bf16.msra.mxu0 %v2197
  %2785 = vmatprep.subr.bf16.mxu0 %v2194
  %2786 = vmatpush1.bf16.msra.mxu0 %v2193
  %2787 = vmatprep.subr.bf16.mxu0 0
  %2788 = vmatpush2.bf16.msra.mxu0 0
  %2789 = vmatprep.subr.bf16.mxu0 0
  %2790 = vmatpush2.bf16.msra.mxu0 0
  %2791 = vmatprep.subr.bf16.mxu0 0
  %2792 = vmatpush2.bf16.msra.mxu0 0
  %2793 = vmatprep.subr.bf16.mxu0 0
  %2794 = vmatpush2.bf16.msra.mxu0 0
  %2795 = vmatprep.subr.bf16.mxu0 0
  %2796 = vmatpush2.bf16.msra.mxu0 0
  %2797 = vmatprep.subr.bf16.mxu0 0
  %2798 = vmatpush2.bf16.msra.mxu0 0
  %2799 = vmatprep.subr.bf16.mxu0 0
  %2800 = vmatpush2.bf16.msra.mxu0 0
  %2801 = vmatprep.subr.bf16.mxu0 0
  %2802 = vmatpush2.bf16.msra.mxu0 0
  %2803 = vmatprep.mubr.bf16.mxu0 0
  %2804 = vmatmul.mubr.bf16.gmra.mxu0 %v2729
  %v2805 = vpop.f32.mrf.mxu0
  %v2806 = vadd.f32 0.0, %v2805
  %v2807 = vpop.f32.mrf.mxu0
  %v2808 = vadd.f32 0.0, %v2807
  %v2809 = vpop.f32.mrf.mxu0
  %v2810 = vpop.f32.mrf.mxu0
  %2811 = vdwg.mxu0
  %v2812 = vadd.f32 %v2725, %v2765
  %v2813 = vadd.f32 %v2726, %v2767
  %v2814 = vadd.f32 %v2727, %v2806
  %v2815 = vadd.f32 %v2728, %v2808
  %v2816 = vxor.u32 %v2812, 2147483648
  %v2817 = vmul.f32 %v2816, 1.442695
  %v2818 = vpow.pop %v2817
  %v2819 = vadd.f32 %v2818, 1.0
  %v2820 = vrcp.pop %v2819
  %v2821 = vmul.f32 1.0, %v2820
  %v2822 = vxor.u32 %v2813, 2147483648
  %v2823 = vmul.f32 %v2822, 1.442695
  %v2824 = vpow.pop %v2823
  %v2825 = vadd.f32 %v2824, 1.0
  %v2826 = vrcp.pop %v2825
  %v2827 = vmul.f32 1.0, %v2826
  %v2828 = vtanh.pop %v2814
  %v2829 = vxor.u32 %v2815, 2147483648
  %v2830 = vmul.f32 %v2829, 1.442695
  %v2831 = vpow.pop %v2830
  %v2832 = vadd.f32 %v2831, 1.0
  %v2833 = vrcp.pop %v2832
  %v2834 = vmul.f32 1.0, %v2833
  %v2835 = vmul.f32 %v2827, %v2721
  %v2836 = vmul.f32 %v2821, %v2828
  %v2837 = vadd.f32 %v2835, %v2836
  %v2838 = vtanh.pop %v2837
  %v2839 = vmul.f32 %v2834, %v2838
  %v2840 = vsel %vm1265, %v2837, %v2721
  %v2841 = vsel %vm1265, %v2839, %v2722
  %v2842 = vsel %vm1265, %v2839, 0.0
  %2843 = vst [vmem:[%s1269] sm:$0xff] %v2842
  %v2844 = vld [vmem:[%s1271] sm:$0xff]
  %v2845 = vld [vmem:[%s1271 + $0x8] sm:$0xff]
  %v2846 = vld [vmem:[%s1271 + $0x10] sm:$0xff]
  %v2847 = vld [vmem:[%s1271 + $0x18] sm:$0xff]
  %v2848 = vpack.c.bf16 %v2841, %v2841
  %2849 = vmatprep.subr.bf16.mxu0 %v2220
  %2850 = vmatpush1.bf16.msra.mxu0 %v2219
  %2851 = vmatprep.subr.bf16.mxu0 %v2216
  %2852 = vmatpush1.bf16.msra.mxu0 %v2215
  %2853 = vmatprep.subr.bf16.mxu0 %v2212
  %2854 = vmatpush1.bf16.msra.mxu0 %v2211
  %2855 = vmatprep.subr.bf16.mxu0 %v2208
  %2856 = vmatpush1.bf16.msra.mxu0 %v2207
  %2857 = vmatprep.subr.bf16.mxu0 %v2204
  %2858 = vmatpush1.bf16.msra.mxu0 %v2203
  %2859 = vmatprep.subr.bf16.mxu0 %v2200
  %2860 = vmatpush1.bf16.msra.mxu0 %v2199
  %2861 = vmatprep.subr.bf16.mxu0 %v2196
  %2862 = vmatpush1.bf16.msra.mxu0 %v2195
  %2863 = vmatprep.subr.bf16.mxu0 %v2192
  %2864 = vmatpush1.bf16.msra.mxu0 %v2191
  %2865 = vmatprep.subr.bf16.mxu0 0
  %2866 = vmatpush2.bf16.msra.mxu0 0
  %2867 = vmatprep.subr.bf16.mxu0 0
  %2868 = vmatpush2.bf16.msra.mxu0 0
  %2869 = vmatprep.subr.bf16.mxu0 0
  %2870 = vmatpush2.bf16.msra.mxu0 0
  %2871 = vmatprep.subr.bf16.mxu0 0
  %2872 = vmatpush2.bf16.msra.mxu0 0
  %2873 = vmatprep.subr.bf16.mxu0 0
  %2874 = vmatpush2.bf16.msra.mxu0 0
  %2875 = vmatprep.subr.bf16.mxu0 0
  %2876 = vmatpush2.bf16.msra.mxu0 0
  %2877 = vmatprep.subr.bf16.mxu0 0
  %2878 = vmatpush2.bf16.msra.mxu0 0
  %2879 = vmatprep.subr.bf16.mxu0 0
  %2880 = vmatpush2.bf16.msra.mxu0 0
  %2881 = vmatprep.mubr.bf16.mxu0 0
  %2882 = vmatmul.mubr.bf16.gmra.mxu0 %v2848
  %v2883 = vpop.f32.mrf.mxu0
  %v2884 = vadd.f32 0.0, %v2883
  %v2885 = vpop.f32.mrf.mxu0
  %v2886 = vadd.f32 0.0, %v2885
  %v2887 = vpop.f32.mrf.mxu0
  %v2888 = vpop.f32.mrf.mxu0
  %2889 = vdwg.mxu0
  %2890 = vmatprep.subr.bf16.mxu0 %v2222
  %2891 = vmatpush1.bf16.msra.mxu0 %v2221
  %2892 = vmatprep.subr.bf16.mxu0 %v2218
  %2893 = vmatpush1.bf16.msra.mxu0 %v2217
  %2894 = vmatprep.subr.bf16.mxu0 %v2214
  %2895 = vmatpush1.bf16.msra.mxu0 %v2213
  %2896 = vmatprep.subr.bf16.mxu0 %v2210
  %2897 = vmatpush1.bf16.msra.mxu0 %v2209
  %2898 = vmatprep.subr.bf16.mxu0 %v2206
  %2899 = vmatpush1.bf16.msra.mxu0 %v2205
  %2900 = vmatprep.subr.bf16.mxu0 %v2202
  %2901 = vmatpush1.bf16.msra.mxu0 %v2201
  %2902 = vmatprep.subr.bf16.mxu0 %v2198
  %2903 = vmatpush1.bf16.msra.mxu0 %v2197
  %2904 = vmatprep.subr.bf16.mxu0 %v2194
  %2905 = vmatpush1.bf16.msra.mxu0 %v2193
  %2906 = vmatprep.subr.bf16.mxu0 0
  %2907 = vmatpush2.bf16.msra.mxu0 0
  %2908 = vmatprep.subr.bf16.mxu0 0
  %2909 = vmatpush2.bf16.msra.mxu0 0
  %2910 = vmatprep.subr.bf16.mxu0 0
  %2911 = vmatpush2.bf16.msra.mxu0 0
  %2912 = vmatprep.subr.bf16.mxu0 0
  %2913 = vmatpush2.bf16.msra.mxu0 0
  %2914 = vmatprep.subr.bf16.mxu0 0
  %2915 = vmatpush2.bf16.msra.mxu0 0
  %2916 = vmatprep.subr.bf16.mxu0 0
  %2917 = vmatpush2.bf16.msra.mxu0 0
  %2918 = vmatprep.subr.bf16.mxu0 0
  %2919 = vmatpush2.bf16.msra.mxu0 0
  %2920 = vmatprep.subr.bf16.mxu0 0
  %2921 = vmatpush2.bf16.msra.mxu0 0
  %2922 = vmatprep.mubr.bf16.mxu0 0
  %2923 = vmatmul.mubr.bf16.gmra.mxu0 %v2848
  %v2924 = vpop.f32.mrf.mxu0
  %v2925 = vadd.f32 0.0, %v2924
  %v2926 = vpop.f32.mrf.mxu0
  %v2927 = vadd.f32 0.0, %v2926
  %v2928 = vpop.f32.mrf.mxu0
  %v2929 = vpop.f32.mrf.mxu0
  %2930 = vdwg.mxu0
  %v2931 = vadd.f32 %v2844, %v2884
  %v2932 = vadd.f32 %v2845, %v2886
  %v2933 = vadd.f32 %v2846, %v2925
  %v2934 = vadd.f32 %v2847, %v2927
  %v2935 = vxor.u32 %v2931, 2147483648
  %v2936 = vmul.f32 %v2935, 1.442695
  %v2937 = vpow.pop %v2936
  %v2938 = vadd.f32 %v2937, 1.0
  %v2939 = vrcp.pop %v2938
  %v2940 = vmul.f32 1.0, %v2939
  %v2941 = vxor.u32 %v2932, 2147483648
  %v2942 = vmul.f32 %v2941, 1.442695
  %v2943 = vpow.pop %v2942
  %v2944 = vadd.f32 %v2943, 1.0
  %v2945 = vrcp.pop %v2944
  %v2946 = vmul.f32 1.0, %v2945
  %v2947 = vtanh.pop %v2933
  %v2948 = vxor.u32 %v2934, 2147483648
  %v2949 = vmul.f32 %v2948, 1.442695
  %v2950 = vpow.pop %v2949
  %v2951 = vadd.f32 %v2950, 1.0
  %v2952 = vrcp.pop %v2951
  %v2953 = vmul.f32 1.0, %v2952
  %v2954 = vmul.f32 %v2946, %v2840
  %v2955 = vmul.f32 %v2940, %v2947
  %v2956 = vadd.f32 %v2954, %v2955
  %v2957 = vtanh.pop %v2956
  %v2958 = vmul.f32 %v2953, %v2957
  %v2959 = vsel %vm1392, %v2956, %v2840
  %v2960 = vsel %vm1392, %v2958, %v2841
  %v2961 = vsel %vm1392, %v2958, 0.0
  %2962 = vst [vmem:[%s1396] sm:$0xff] %v2961
  %v2963 = vld [vmem:[%s1398] sm:$0xff]
  %v2964 = vld [vmem:[%s1398 + $0x8] sm:$0xff]
  %v2965 = vld [vmem:[%s1398 + $0x10] sm:$0xff]
  %v2966 = vld [vmem:[%s1398 + $0x18] sm:$0xff]
  %v2967 = vpack.c.bf16 %v2960, %v2960
  %2968 = vmatprep.subr.bf16.mxu0 %v2220
  %2969 = vmatpush1.bf16.msra.mxu0 %v2219
  %2970 = vmatprep.subr.bf16.mxu0 %v2216
  %2971 = vmatpush1.bf16.msra.mxu0 %v2215
  %2972 = vmatprep.subr.bf16.mxu0 %v2212
  %2973 = vmatpush1.bf16.msra.mxu0 %v2211
  %2974 = vmatprep.subr.bf16.mxu0 %v2208
  %2975 = vmatpush1.bf16.msra.mxu0 %v2207
  %2976 = vmatprep.subr.bf16.mxu0 %v2204
  %2977 = vmatpush1.bf16.msra.mxu0 %v2203
  %2978 = vmatprep.subr.bf16.mxu0 %v2200
  %2979 = vmatpush1.bf16.msra.mxu0 %v2199
  %2980 = vmatprep.subr.bf16.mxu0 %v2196
  %2981 = vmatpush1.bf16.msra.mxu0 %v2195
  %2982 = vmatprep.subr.bf16.mxu0 %v2192
  %2983 = vmatpush1.bf16.msra.mxu0 %v2191
  %2984 = vmatprep.subr.bf16.mxu0 0
  %2985 = vmatpush2.bf16.msra.mxu0 0
  %2986 = vmatprep.subr.bf16.mxu0 0
  %2987 = vmatpush2.bf16.msra.mxu0 0
  %2988 = vmatprep.subr.bf16.mxu0 0
  %2989 = vmatpush2.bf16.msra.mxu0 0
  %2990 = vmatprep.subr.bf16.mxu0 0
  %2991 = vmatpush2.bf16.msra.mxu0 0
  %2992 = vmatprep.subr.bf16.mxu0 0
  %2993 = vmatpush2.bf16.msra.mxu0 0
  %2994 = vmatprep.subr.bf16.mxu0 0
  %2995 = vmatpush2.bf16.msra.mxu0 0
  %2996 = vmatprep.subr.bf16.mxu0 0
  %2997 = vmatpush2.bf16.msra.mxu0 0
  %2998 = vmatprep.subr.bf16.mxu0 0
  %2999 = vmatpush2.bf16.msra.mxu0 0
  %3000 = vmatprep.mubr.bf16.mxu0 0
  %3001 = vmatmul.mubr.bf16.gmra.mxu0 %v2967
  %v3002 = vpop.f32.mrf.mxu0
  %v3003 = vadd.f32 0.0, %v3002
  %v3004 = vpop.f32.mrf.mxu0
  %v3005 = vadd.f32 0.0, %v3004
  %v3006 = vpop.f32.mrf.mxu0
  %v3007 = vpop.f32.mrf.mxu0
  %3008 = vdwg.mxu0
  %3009 = vmatprep.subr.bf16.mxu0 %v2222
  %3010 = vmatpush1.bf16.msra.mxu0 %v2221
  %3011 = vmatprep.subr.bf16.mxu0 %v2218
  %3012 = vmatpush1.bf16.msra.mxu0 %v2217
  %3013 = vmatprep.subr.bf16.mxu0 %v2214
  %3014 = vmatpush1.bf16.msra.mxu0 %v2213
  %3015 = vmatprep.subr.bf16.mxu0 %v2210
  %3016 = vmatpush1.bf16.msra.mxu0 %v2209
  %3017 = vmatprep.subr.bf16.mxu0 %v2206
  %3018 = vmatpush1.bf16.msra.mxu0 %v2205
  %3019 = vmatprep.subr.bf16.mxu0 %v2202
  %3020 = vmatpush1.bf16.msra.mxu0 %v2201
  %3021 = vmatprep.subr.bf16.mxu0 %v2198
  %3022 = vmatpush1.bf16.msra.mxu0 %v2197
  %3023 = vmatprep.subr.bf16.mxu0 %v2194
  %3024 = vmatpush1.bf16.msra.mxu0 %v2193
  %3025 = vmatprep.subr.bf16.mxu0 0
  %3026 = vmatpush2.bf16.msra.mxu0 0
  %3027 = vmatprep.subr.bf16.mxu0 0
  %3028 = vmatpush2.bf16.msra.mxu0 0
  %3029 = vmatprep.subr.bf16.mxu0 0
  %3030 = vmatpush2.bf16.msra.mxu0 0
  %3031 = vmatprep.subr.bf16.mxu0 0
  %3032 = vmatpush2.bf16.msra.mxu0 0
  %3033 = vmatprep.subr.bf16.mxu0 0
  %3034 = vmatpush2.bf16.msra.mxu0 0
  %3035 = vmatprep.subr.bf16.mxu0 0
  %3036 = vmatpush2.bf16.msra.mxu0 0
  %3037 = vmatprep.subr.bf16.mxu0 0
  %3038 = vmatpush2.bf16.msra.mxu0 0
  %3039 = vmatprep.subr.bf16.mxu0 0
  %3040 = vmatpush2.bf16.msra.mxu0 0
  %3041 = vmatprep.mubr.bf16.mxu0 0
  %3042 = vmatmul.mubr.bf16.gmra.mxu0 %v2967
  %v3043 = vpop.f32.mrf.mxu0
  %v3044 = vadd.f32 0.0, %v3043
  %v3045 = vpop.f32.mrf.mxu0
  %v3046 = vadd.f32 0.0, %v3045
  %v3047 = vpop.f32.mrf.mxu0
  %v3048 = vpop.f32.mrf.mxu0
  %3049 = vdwg.mxu0
  %v3050 = vadd.f32 %v2963, %v3003
  %v3051 = vadd.f32 %v2964, %v3005
  %v3052 = vadd.f32 %v2965, %v3044
  %v3053 = vadd.f32 %v2966, %v3046
  %v3054 = vxor.u32 %v3050, 2147483648
  %v3055 = vmul.f32 %v3054, 1.442695
  %v3056 = vpow.pop %v3055
  %v3057 = vadd.f32 %v3056, 1.0
  %v3058 = vrcp.pop %v3057
  %v3059 = vmul.f32 1.0, %v3058
  %v3060 = vxor.u32 %v3051, 2147483648
  %v3061 = vmul.f32 %v3060, 1.442695
  %v3062 = vpow.pop %v3061
  %v3063 = vadd.f32 %v3062, 1.0
  %v3064 = vrcp.pop %v3063
  %v3065 = vmul.f32 1.0, %v3064
  %v3066 = vtanh.pop %v3052
  %v3067 = vxor.u32 %v3053, 2147483648
  %v3068 = vmul.f32 %v3067, 1.442695
  %v3069 = vpow.pop %v3068
  %v3070 = vadd.f32 %v3069, 1.0
  %v3071 = vrcp.pop %v3070
  %v3072 = vmul.f32 1.0, %v3071
  %v3073 = vmul.f32 %v3065, %v2959
  %v3074 = vmul.f32 %v3059, %v3066
  %v3075 = vadd.f32 %v3073, %v3074
  %v3076 = vtanh.pop %v3075
  %v3077 = vmul.f32 %v3072, %v3076
  %v3078 = vsel %vm1519, %v3075, %v2959
  %v3079 = vsel %vm1519, %v3077, %v2960
  %v3080 = vsel %vm1519, %v3077, 0.0
  %3081 = vst [vmem:[%s1523] sm:$0xff] %v3080
  %v3082 = vld [vmem:[%s1525] sm:$0xff]
  %v3083 = vld [vmem:[%s1525 + $0x8] sm:$0xff]
  %v3084 = vld [vmem:[%s1525 + $0x10] sm:$0xff]
  %v3085 = vld [vmem:[%s1525 + $0x18] sm:$0xff]
  %v3086 = vpack.c.bf16 %v3079, %v3079
  %3087 = vmatprep.subr.bf16.mxu0 %v2220
  %3088 = vmatpush1.bf16.msra.mxu0 %v2219
  %3089 = vmatprep.subr.bf16.mxu0 %v2216
  %3090 = vmatpush1.bf16.msra.mxu0 %v2215
  %3091 = vmatprep.subr.bf16.mxu0 %v2212
  %3092 = vmatpush1.bf16.msra.mxu0 %v2211
  %3093 = vmatprep.subr.bf16.mxu0 %v2208
  %3094 = vmatpush1.bf16.msra.mxu0 %v2207
  %3095 = vmatprep.subr.bf16.mxu0 %v2204
  %3096 = vmatpush1.bf16.msra.mxu0 %v2203
  %3097 = vmatprep.subr.bf16.mxu0 %v2200
  %3098 = vmatpush1.bf16.msra.mxu0 %v2199
  %3099 = vmatprep.subr.bf16.mxu0 %v2196
  %3100 = vmatpush1.bf16.msra.mxu0 %v2195
  %3101 = vmatprep.subr.bf16.mxu0 %v2192
  %3102 = vmatpush1.bf16.msra.mxu0 %v2191
  %3103 = vmatprep.subr.bf16.mxu0 0
  %3104 = vmatpush2.bf16.msra.mxu0 0
  %3105 = vmatprep.subr.bf16.mxu0 0
  %3106 = vmatpush2.bf16.msra.mxu0 0
  %3107 = vmatprep.subr.bf16.mxu0 0
  %3108 = vmatpush2.bf16.msra.mxu0 0
  %3109 = vmatprep.subr.bf16.mxu0 0
  %3110 = vmatpush2.bf16.msra.mxu0 0
  %3111 = vmatprep.subr.bf16.mxu0 0
  %3112 = vmatpush2.bf16.msra.mxu0 0
  %3113 = vmatprep.subr.bf16.mxu0 0
  %3114 = vmatpush2.bf16.msra.mxu0 0
  %3115 = vmatprep.subr.bf16.mxu0 0
  %3116 = vmatpush2.bf16.msra.mxu0 0
  %3117 = vmatprep.subr.bf16.mxu0 0
  %3118 = vmatpush2.bf16.msra.mxu0 0
  %3119 = vmatprep.mubr.bf16.mxu0 0
  %3120 = vmatmul.mubr.bf16.gmra.mxu0 %v3086
  %v3121 = vpop.f32.mrf.mxu0
  %v3122 = vadd.f32 0.0, %v3121
  %v3123 = vpop.f32.mrf.mxu0
  %v3124 = vadd.f32 0.0, %v3123
  %v3125 = vpop.f32.mrf.mxu0
  %v3126 = vpop.f32.mrf.mxu0
  %3127 = vdwg.mxu0
  %3128 = vmatprep.subr.bf16.mxu0 %v2222
  %3129 = vmatpush1.bf16.msra.mxu0 %v2221
  %3130 = vmatprep.subr.bf16.mxu0 %v2218
  %3131 = vmatpush1.bf16.msra.mxu0 %v2217
  %3132 = vmatprep.subr.bf16.mxu0 %v2214
  %3133 = vmatpush1.bf16.msra.mxu0 %v2213
  %3134 = vmatprep.subr.bf16.mxu0 %v2210
  %3135 = vmatpush1.bf16.msra.mxu0 %v2209
  %3136 = vmatprep.subr.bf16.mxu0 %v2206
  %3137 = vmatpush1.bf16.msra.mxu0 %v2205
  %3138 = vmatprep.subr.bf16.mxu0 %v2202
  %3139 = vmatpush1.bf16.msra.mxu0 %v2201
  %3140 = vmatprep.subr.bf16.mxu0 %v2198
  %3141 = vmatpush1.bf16.msra.mxu0 %v2197
  %3142 = vmatprep.subr.bf16.mxu0 %v2194
  %3143 = vmatpush1.bf16.msra.mxu0 %v2193
  %3144 = vmatprep.subr.bf16.mxu0 0
  %3145 = vmatpush2.bf16.msra.mxu0 0
  %3146 = vmatprep.subr.bf16.mxu0 0
  %3147 = vmatpush2.bf16.msra.mxu0 0
  %3148 = vmatprep.subr.bf16.mxu0 0
  %3149 = vmatpush2.bf16.msra.mxu0 0
  %3150 = vmatprep.subr.bf16.mxu0 0
  %3151 = vmatpush2.bf16.msra.mxu0 0
  %3152 = vmatprep.subr.bf16.mxu0 0
  %3153 = vmatpush2.bf16.msra.mxu0 0
  %3154 = vmatprep.subr.bf16.mxu0 0
  %3155 = vmatpush2.bf16.msra.mxu0 0
  %3156 = vmatprep.subr.bf16.mxu0 0
  %3157 = vmatpush2.bf16.msra.mxu0 0
  %3158 = vmatprep.subr.bf16.mxu0 0
  %3159 = vmatpush2.bf16.msra.mxu0 0
  %3160 = vmatprep.mubr.bf16.mxu0 0
  %3161 = vmatmul.mubr.bf16.gmra.mxu0 %v3086
  %v3162 = vpop.f32.mrf.mxu0
  %v3163 = vadd.f32 0.0, %v3162
  %v3164 = vpop.f32.mrf.mxu0
  %v3165 = vadd.f32 0.0, %v3164
  %v3166 = vpop.f32.mrf.mxu0
  %v3167 = vpop.f32.mrf.mxu0
  %3168 = vdwg.mxu0
  %v3169 = vadd.f32 %v3082, %v3122
  %v3170 = vadd.f32 %v3083, %v3124
  %v3171 = vadd.f32 %v3084, %v3163
  %v3172 = vadd.f32 %v3085, %v3165
  %v3173 = vxor.u32 %v3169, 2147483648
  %v3174 = vmul.f32 %v3173, 1.442695
  %v3175 = vpow.pop %v3174
  %v3176 = vadd.f32 %v3175, 1.0
  %v3177 = vrcp.pop %v3176
  %v3178 = vmul.f32 1.0, %v3177
  %v3179 = vxor.u32 %v3170, 2147483648
  %v3180 = vmul.f32 %v3179, 1.442695
  %v3181 = vpow.pop %v3180
  %v3182 = vadd.f32 %v3181, 1.0
  %v3183 = vrcp.pop %v3182
  %v3184 = vmul.f32 1.0, %v3183
  %v3185 = vtanh.pop %v3171
  %v3186 = vxor.u32 %v3172, 2147483648
  %v3187 = vmul.f32 %v3186, 1.442695
  %v3188 = vpow.pop %v3187
  %v3189 = vadd.f32 %v3188, 1.0
  %v3190 = vrcp.pop %v3189
  %v3191 = vmul.f32 1.0, %v3190
  %v3192 = vmul.f32 %v3184, %v3078
  %v3193 = vmul.f32 %v3178, %v3185
  %v3194 = vadd.f32 %v3192, %v3193
  %v3195 = vtanh.pop %v3194
  %v3196 = vmul.f32 %v3191, %v3195
  %v3197 = vsel %vm1646, %v3194, %v3078
  %v3198 = vsel %vm1646, %v3196, %v3079
  %v3199 = vsel %vm1646, %v3196, 0.0
  %3200 = vst [vmem:[%s1650] sm:$0xff] %v3199
  %v3201 = vld [vmem:[%s1] sm:$0xff]
  %v3202 = vld [vmem:[%s1 + $0x8] sm:$0xff]
  %v3203 = vld [vmem:[%s1 + $0x10] sm:$0xff]
  %v3204 = vld [vmem:[%s1 + $0x18] sm:$0xff]
  %v3205 = vld [vmem:[%s1 + $0x20] sm:$0xff]
  %v3206 = vld [vmem:[%s1 + $0x28] sm:$0xff]
  %v3207 = vld [vmem:[%s1 + $0x30] sm:$0xff]
  %v3208 = vld [vmem:[%s1 + $0x38] sm:$0xff]
  %v3209 = vld [vmem:[%s7] sm:$0xff]
  %v3210 = vld [vmem:[%s7 + $0x8] sm:$0xff]
  %v3211 = vld [vmem:[%s7 + $0x10] sm:$0xff]
  %v3212 = vld [vmem:[%s7 + $0x18] sm:$0xff]
  %v3213 = vld [vmem:[%s7 + $0x20] sm:$0xff]
  %v3214 = vld [vmem:[%s7 + $0x28] sm:$0xff]
  %v3215 = vld [vmem:[%s7 + $0x30] sm:$0xff]
  %v3216 = vld [vmem:[%s7 + $0x38] sm:$0xff]
  %v3217 = vld [vmem:[%s7 + $0x40] sm:$0xff]
  %v3218 = vld [vmem:[%s7 + $0x48] sm:$0xff]
  %v3219 = vld [vmem:[%s7 + $0x50] sm:$0xff]
  %v3220 = vld [vmem:[%s7 + $0x58] sm:$0xff]
  %v3221 = vld [vmem:[%s7 + $0x60] sm:$0xff]
  %v3222 = vld [vmem:[%s7 + $0x68] sm:$0xff]
  %v3223 = vld [vmem:[%s7 + $0x70] sm:$0xff]
  %v3224 = vld [vmem:[%s7 + $0x78] sm:$0xff]
  %v3225 = vld [vmem:[%s7 + $0x80] sm:$0xff]
  %v3226 = vld [vmem:[%s7 + $0x88] sm:$0xff]
  %v3227 = vld [vmem:[%s7 + $0x90] sm:$0xff]
  %v3228 = vld [vmem:[%s7 + $0x98] sm:$0xff]
  %v3229 = vld [vmem:[%s7 + $0xa0] sm:$0xff]
  %v3230 = vld [vmem:[%s7 + $0xa8] sm:$0xff]
  %v3231 = vld [vmem:[%s7 + $0xb0] sm:$0xff]
  %v3232 = vld [vmem:[%s7 + $0xb8] sm:$0xff]
  %v3233 = vld [vmem:[%s7 + $0xc0] sm:$0xff]
  %v3234 = vld [vmem:[%s7 + $0xc8] sm:$0xff]
  %v3235 = vld [vmem:[%s7 + $0xd0] sm:$0xff]
  %v3236 = vld [vmem:[%s7 + $0xd8] sm:$0xff]
  %v3237 = vld [vmem:[%s7 + $0xe0] sm:$0xff]
  %v3238 = vld [vmem:[%s7 + $0xe8] sm:$0xff]
  %v3239 = vld [vmem:[%s7 + $0xf0] sm:$0xff]
  %v3240 = vld [vmem:[%s7 + $0xf8] sm:$0xff]
  %v3241 = vld [vmem:[%s8] sm:$0xff]
  %v3242 = vld [vmem:[%s8 + $0x8] sm:$0xff]
  %v3243 = vld [vmem:[%s8 + $0x10] sm:$0xff]
  %v3244 = vld [vmem:[%s8 + $0x18] sm:$0xff]
  %v3245 = vld [vmem:[%s8 + $0x20] sm:$0xff]
  %v3246 = vld [vmem:[%s8 + $0x28] sm:$0xff]
  %v3247 = vld [vmem:[%s8 + $0x30] sm:$0xff]
  %v3248 = vld [vmem:[%s8 + $0x38] sm:$0xff]
  %v3249 = vld [vmem:[%s8 + $0x40] sm:$0xff]
  %v3250 = vld [vmem:[%s8 + $0x48] sm:$0xff]
  %v3251 = vld [vmem:[%s8 + $0x50] sm:$0xff]
  %v3252 = vld [vmem:[%s8 + $0x58] sm:$0xff]
  %v3253 = vld [vmem:[%s8 + $0x60] sm:$0xff]
  %v3254 = vld [vmem:[%s8 + $0x68] sm:$0xff]
  %v3255 = vld [vmem:[%s8 + $0x70] sm:$0xff]
  %v3256 = vld [vmem:[%s8 + $0x78] sm:$0xff]
  %v3257 = vld [vmem:[%s8 + $0x80] sm:$0xff]
  %v3258 = vld [vmem:[%s8 + $0x88] sm:$0xff]
  %v3259 = vld [vmem:[%s8 + $0x90] sm:$0xff]
  %v3260 = vld [vmem:[%s8 + $0x98] sm:$0xff]
  %v3261 = vld [vmem:[%s8 + $0xa0] sm:$0xff]
  %v3262 = vld [vmem:[%s8 + $0xa8] sm:$0xff]
  %v3263 = vld [vmem:[%s8 + $0xb0] sm:$0xff]
  %v3264 = vld [vmem:[%s8 + $0xb8] sm:$0xff]
  %v3265 = vld [vmem:[%s8 + $0xc0] sm:$0xff]
  %v3266 = vld [vmem:[%s8 + $0xc8] sm:$0xff]
  %v3267 = vld [vmem:[%s8 + $0xd0] sm:$0xff]
  %v3268 = vld [vmem:[%s8 + $0xd8] sm:$0xff]
  %v3269 = vld [vmem:[%s8 + $0xe0] sm:$0xff]
  %v3270 = vld [vmem:[%s8 + $0xe8] sm:$0xff]
  %v3271 = vld [vmem:[%s8 + $0xf0] sm:$0xff]
  %v3272 = vld [vmem:[%s8 + $0xf8] sm:$0xff]
  %v3273 = vld [vmem:[%s9] sm:$0xf]
  %v3274 = vpack.c.bf16 %v3202, %v3201
  %v3275 = vpack.c.bf16 %v3204, %v3203
  %v3276 = vpack.c.bf16 %v3206, %v3205
  %v3277 = vpack.c.bf16 %v3208, %v3207
  %v3279 = vlaneseq
  %v3280 = vshrl.u32 %v3279, 7
  %v3281 = vsub.s32 0, %v3280
  %v3282 = vrot.slane %v3273, %v3281
  %v3283 = vlaneseq
  %v3284 = vshrl.u32 %v3283, 7
  %v3285 = vsub.s32 1, %v3284
  %v3286 = vrot.slane %v3273, %v3285
  %v3287 = vlaneseq
  %v3288 = vshrl.u32 %v3287, 7
  %v3289 = vsub.s32 2, %v3288
  %v3290 = vrot.slane %v3273, %v3289
  %v3291 = vlaneseq
  %v3292 = vshrl.u32 %v3291, 7
  %v3293 = vsub.s32 3, %v3292
  %v3294 = vrot.slane %v3273, %v3293
  %v3331 = vunpack.c.l.b16 %v3209
  %v3332 = vunpack.c.h.b16 %v3209
  %v3333 = vunpack.c.l.b16 %v3210
  %v3334 = vunpack.c.h.b16 %v3210
  %v3335 = vunpack.c.l.b16 %v3211
  %v3336 = vunpack.c.h.b16 %v3211
  %v3337 = vunpack.c.l.b16 %v3212
  %v3338 = vunpack.c.h.b16 %v3212
  %v3339 = vunpack.c.l.b16 %v3213
  %v3340 = vunpack.c.h.b16 %v3213
  %v3341 = vunpack.c.l.b16 %v3214
  %v3342 = vunpack.c.h.b16 %v3214
  %v3343 = vunpack.c.l.b16 %v3215
  %v3344 = vunpack.c.h.b16 %v3215
  %v3345 = vunpack.c.l.b16 %v3216
  %v3346 = vunpack.c.h.b16 %v3216
  %v3347 = vunpack.c.l.b16 %v3217
  %v3348 = vunpack.c.h.b16 %v3217
  %v3349 = vunpack.c.l.b16 %v3218
  %v3350 = vunpack.c.h.b16 %v3218
  %v3351 = vunpack.c.l.b16 %v3219
  %v3352 = vunpack.c.h.b16 %v3219
  %v3353 = vunpack.c.l.b16 %v3220
  %v3354 = vunpack.c.h.b16 %v3220
  %v3355 = vunpack.c.l.b16 %v3221
  %v3356 = vunpack.c.h.b16 %v3221
  %v3357 = vunpack.c.l.b16 %v3222
  %v3358 = vunpack.c.h.b16 %v3222
  %v3359 = vunpack.c.l.b16 %v3223
  %v3360 = vunpack.c.h.b16 %v3223
  %v3361 = vunpack.c.l.b16 %v3224
  %v3362 = vunpack.c.h.b16 %v3224
  %v3363 = vunpack.c.l.b16 %v3225
  %v3364 = vunpack.c.h.b16 %v3225
  %v3365 = vunpack.c.l.b16 %v3226
  %v3366 = vunpack.c.h.b16 %v3226
  %v3367 = vunpack.c.l.b16 %v3227
  %v3368 = vunpack.c.h.b16 %v3227
  %v3369 = vunpack.c.l.b16 %v3228
  %v3370 = vunpack.c.h.b16 %v3228
  %v3371 = vunpack.c.l.b16 %v3229
  %v3372 = vunpack.c.h.b16 %v3229
  %v3373 = vunpack.c.l.b16 %v3230
  %v3374 = vunpack.c.h.b16 %v3230
  %v3375 = vunpack.c.l.b16 %v3231
  %v3376 = vunpack.c.h.b16 %v3231
  %v3377 = vunpack.c.l.b16 %v3232
  %v3378 = vunpack.c.h.b16 %v3232
  %v3379 = vunpack.c.l.b16 %v3233
  %v3380 = vunpack.c.h.b16 %v3233
  %v3381 = vunpack.c.l.b16 %v3234
  %v3382 = vunpack.c.h.b16 %v3234
  %v3383 = vunpack.c.l.b16 %v3235
  %v3384 = vunpack.c.h.b16 %v3235
  %v3385 = vunpack.c.l.b16 %v3236
  %v3386 = vunpack.c.h.b16 %v3236
  %v3387 = vunpack.c.l.b16 %v3237
  %v3388 = vunpack.c.h.b16 %v3237
  %v3389 = vunpack.c.l.b16 %v3238
  %v3390 = vunpack.c.h.b16 %v3238
  %v3391 = vunpack.c.l.b16 %v3239
  %v3392 = vunpack.c.h.b16 %v3239
  %v3393 = vunpack.c.l.b16 %v3240
  %v3394 = vunpack.c.h.b16 %v3240
  %v3395 = vpack.c.b16 %v3335, %v3331
  %v3396 = vpack.c.b16 %v3336, %v3332
  %v3397 = vpack.c.b16 %v3337, %v3333
  %v3398 = vpack.c.b16 %v3338, %v3334
  %v3399 = vpack.c.b16 %v3343, %v3339
  %v3400 = vpack.c.b16 %v3344, %v3340
  %v3401 = vpack.c.b16 %v3345, %v3341
  %v3402 = vpack.c.b16 %v3346, %v3342
  %v3403 = vpack.c.b16 %v3351, %v3347
  %v3404 = vpack.c.b16 %v3352, %v3348
  %v3405 = vpack.c.b16 %v3353, %v3349
  %v3406 = vpack.c.b16 %v3354, %v3350
  %v3407 = vpack.c.b16 %v3359, %v3355
  %v3408 = vpack.c.b16 %v3360, %v3356
  %v3409 = vpack.c.b16 %v3361, %v3357
  %v3410 = vpack.c.b16 %v3362, %v3358
  %v3411 = vpack.c.b16 %v3367, %v3363
  %v3412 = vpack.c.b16 %v3368, %v3364
  %v3413 = vpack.c.b16 %v3369, %v3365
  %v3414 = vpack.c.b16 %v3370, %v3366
  %v3415 = vpack.c.b16 %v3375, %v3371
  %v3416 = vpack.c.b16 %v3376, %v3372
  %v3417 = vpack.c.b16 %v3377, %v3373
  %v3418 = vpack.c.b16 %v3378, %v3374
  %v3419 = vpack.c.b16 %v3383, %v3379
  %v3420 = vpack.c.b16 %v3384, %v3380
  %v3421 = vpack.c.b16 %v3385, %v3381
  %v3422 = vpack.c.b16 %v3386, %v3382
  %v3423 = vpack.c.b16 %v3391, %v3387
  %v3424 = vpack.c.b16 %v3392, %v3388
  %v3425 = vpack.c.b16 %v3393, %v3389
  %v3426 = vpack.c.b16 %v3394, %v3390
  %3459 = vmatprep.subr.bf16.mxu0 %v3424
  %3460 = vmatpush1.bf16.msra.mxu0 %v3423
  %3461 = vmatprep.subr.bf16.mxu0 %v3420
  %3462 = vmatpush1.bf16.msra.mxu0 %v3419
  %3463 = vmatprep.subr.bf16.mxu0 %v3416
  %3464 = vmatpush1.bf16.msra.mxu0 %v3415
  %3465 = vmatprep.subr.bf16.mxu0 %v3412
  %3466 = vmatpush1.bf16.msra.mxu0 %v3411
  %3467 = vmatprep.subr.bf16.mxu0 %v3408
  %3468 = vmatpush1.bf16.msra.mxu0 %v3407
  %3469 = vmatprep.subr.bf16.mxu0 %v3404
  %3470 = vmatpush1.bf16.msra.mxu0 %v3403
  %3471 = vmatprep.subr.bf16.mxu0 %v3400
  %3472 = vmatpush1.bf16.msra.mxu0 %v3399
  %3473 = vmatprep.subr.bf16.mxu0 %v3396
  %3474 = vmatpush1.bf16.msra.mxu0 %v3395
  %3475 = vmatprep.subr.bf16.mxu0 0
  %3476 = vmatpush2.bf16.msra.mxu0 0
  %3477 = vmatprep.subr.bf16.mxu0 0
  %3478 = vmatpush2.bf16.msra.mxu0 0
  %3479 = vmatprep.subr.bf16.mxu0 0
  %3480 = vmatpush2.bf16.msra.mxu0 0
  %3481 = vmatprep.subr.bf16.mxu0 0
  %3482 = vmatpush2.bf16.msra.mxu0 0
  %3483 = vmatprep.subr.bf16.mxu0 0
  %3484 = vmatpush2.bf16.msra.mxu0 0
  %3485 = vmatprep.subr.bf16.mxu0 0
  %3486 = vmatpush2.bf16.msra.mxu0 0
  %3487 = vmatprep.subr.bf16.mxu0 0
  %3488 = vmatpush2.bf16.msra.mxu0 0
  %3489 = vmatprep.subr.bf16.mxu0 0
  %3490 = vmatpush2.bf16.msra.mxu0 0
  %3491 = vmatprep.mubr.bf16.mxu0 0
  %3492 = vmatmul.mubr.bf16.gmra.mxu0 %v3274
  %v3493 = vpop.f32.mrf.mxu0
  %v3494 = vadd.f32 %v3282, %v3493
  %v3495 = vpop.f32.mrf.mxu0
  %v3496 = vadd.f32 %v3286, %v3495
  %v3497 = vpop.f32.mrf.mxu0
  %v3498 = vadd.f32 %v3282, %v3497
  %v3499 = vpop.f32.mrf.mxu0
  %v3500 = vadd.f32 %v3286, %v3499
  %3501 = vmatprep.mubr.bf16.mxu0 0
  %3502 = vmatmul.mubr.bf16.gmra.mxu0 %v3275
  %v3503 = vpop.f32.mrf.mxu0
  %v3504 = vadd.f32 %v3282, %v3503
  %v3505 = vpop.f32.mrf.mxu0
  %v3506 = vadd.f32 %v3286, %v3505
  %v3507 = vpop.f32.mrf.mxu0
  %v3508 = vadd.f32 %v3282, %v3507
  %v3509 = vpop.f32.mrf.mxu0
  %v3510 = vadd.f32 %v3286, %v3509
  %3511 = vmatprep.mubr.bf16.mxu0 0
  %3512 = vmatmul.mubr.bf16.gmra.mxu0 %v3276
  %v3513 = vpop.f32.mrf.mxu0
  %v3514 = vadd.f32 %v3282, %v3513
  %v3515 = vpop.f32.mrf.mxu0
  %v3516 = vadd.f32 %v3286, %v3515
  %v3517 = vpop.f32.mrf.mxu0
  %v3518 = vadd.f32 %v3282, %v3517
  %v3519 = vpop.f32.mrf.mxu0
  %v3520 = vadd.f32 %v3286, %v3519
  %3521 = vmatprep.mubr.bf16.mxu0 0
  %3522 = vmatmul.mubr.bf16.gmra.mxu0 %v3277
  %v3523 = vpop.f32.mrf.mxu0
  %v3524 = vadd.f32 %v3282, %v3523
  %v3525 = vpop.f32.mrf.mxu0
  %v3526 = vadd.f32 %v3286, %v3525
  %v3527 = vpop.f32.mrf.mxu0
  %v3528 = vadd.f32 %v3282, %v3527
  %v3529 = vpop.f32.mrf.mxu0
  %v3530 = vadd.f32 %v3286, %v3529
  %3531 = vdwg.mxu0
  %3532 = vmatprep.subr.bf16.mxu0 %v3426
  %3533 = vmatpush1.bf16.msra.mxu0 %v3425
  %3534 = vmatprep.subr.bf16.mxu0 %v3422
  %3535 = vmatpush1.bf16.msra.mxu0 %v3421
  %3536 = vmatprep.subr.bf16.mxu0 %v3418
  %3537 = vmatpush1.bf16.msra.mxu0 %v3417
  %3538 = vmatprep.subr.bf16.mxu0 %v3414
  %3539 = vmatpush1.bf16.msra.mxu0 %v3413
  %3540 = vmatprep.subr.bf16.mxu0 %v3410
  %3541 = vmatpush1.bf16.msra.mxu0 %v3409
  %3542 = vmatprep.subr.bf16.mxu0 %v3406
  %3543 = vmatpush1.bf16.msra.mxu0 %v3405
  %3544 = vmatprep.subr.bf16.mxu0 %v3402
  %3545 = vmatpush1.bf16.msra.mxu0 %v3401
  %3546 = vmatprep.subr.bf16.mxu0 %v3398
  %3547 = vmatpush1.bf16.msra.mxu0 %v3397
  %3548 = vmatprep.subr.bf16.mxu0 0
  %3549 = vmatpush2.bf16.msra.mxu0 0
  %3550 = vmatprep.subr.bf16.mxu0 0
  %3551 = vmatpush2.bf16.msra.mxu0 0
  %3552 = vmatprep.subr.bf16.mxu0 0
  %3553 = vmatpush2.bf16.msra.mxu0 0
  %3554 = vmatprep.subr.bf16.mxu0 0
  %3555 = vmatpush2.bf16.msra.mxu0 0
  %3556 = vmatprep.subr.bf16.mxu0 0
  %3557 = vmatpush2.bf16.msra.mxu0 0
  %3558 = vmatprep.subr.bf16.mxu0 0
  %3559 = vmatpush2.bf16.msra.mxu0 0
  %3560 = vmatprep.subr.bf16.mxu0 0
  %3561 = vmatpush2.bf16.msra.mxu0 0
  %3562 = vmatprep.subr.bf16.mxu0 0
  %3563 = vmatpush2.bf16.msra.mxu0 0
  %3564 = vmatprep.mubr.bf16.mxu0 0
  %3565 = vmatmul.mubr.bf16.gmra.mxu0 %v3274
  %v3566 = vpop.f32.mrf.mxu0
  %v3567 = vadd.f32 %v3290, %v3566
  %v3568 = vpop.f32.mrf.mxu0
  %v3569 = vadd.f32 %v3294, %v3568
  %v3570 = vpop.f32.mrf.mxu0
  %v3571 = vadd.f32 %v3290, %v3570
  %v3572 = vpop.f32.mrf.mxu0
  %v3573 = vadd.f32 %v3294, %v3572
  %3574 = vmatprep.mubr.bf16.mxu0 0
  %3575 = vmatmul.mubr.bf16.gmra.mxu0 %v3275
  %v3576 = vpop.f32.mrf.mxu0
  %v3577 = vadd.f32 %v3290, %v3576
  %v3578 = vpop.f32.mrf.mxu0
  %v3579 = vadd.f32 %v3294, %v3578
  %v3580 = vpop.f32.mrf.mxu0
  %v3581 = vadd.f32 %v3290, %v3580
  %v3582 = vpop.f32.mrf.mxu0
  %v3583 = vadd.f32 %v3294, %v3582
  %3584 = vmatprep.mubr.bf16.mxu0 0
  %3585 = vmatmul.mubr.bf16.gmra.mxu0 %v3276
  %v3586 = vpop.f32.mrf.mxu0
  %v3587 = vadd.f32 %v3290, %v3586
  %v3588 = vpop.f32.mrf.mxu0
  %v3589 = vadd.f32 %v3294, %v3588
  %v3590 = vpop.f32.mrf.mxu0
  %v3591 = vadd.f32 %v3290, %v3590
  %v3592 = vpop.f32.mrf.mxu0
  %v3593 = vadd.f32 %v3294, %v3592
  %3594 = vmatprep.mubr.bf16.mxu0 0
  %3595 = vmatmul.mubr.bf16.gmra.mxu0 %v3277
  %v3596 = vpop.f32.mrf.mxu0
  %v3597 = vadd.f32 %v3290, %v3596
  %v3598 = vpop.f32.mrf.mxu0
  %v3599 = vadd.f32 %v3294, %v3598
  %v3600 = vpop.f32.mrf.mxu0
  %v3601 = vadd.f32 %v3290, %v3600
  %v3602 = vpop.f32.mrf.mxu0
  %v3603 = vadd.f32 %v3294, %v3602
  %3604 = vdwg.mxu0
  %3605 = vst [vmem:[#allocation3] sm:$0xff] %v3494
  %3606 = vst [vmem:[#allocation3 + $0x8] sm:$0xff] %v3496
  %3607 = vst [vmem:[#allocation3 + $0x10] sm:$0xff] %v3567
  %3608 = vst [vmem:[#allocation3 + $0x18] sm:$0xff] %v3569
  %3609 = vst [vmem:[#allocation3 + $0x20] sm:$0xff] %v3498
  %3610 = vst [vmem:[#allocation3 + $0x28] sm:$0xff] %v3500
  %3611 = vst [vmem:[#allocation3 + $0x30] sm:$0xff] %v3571
  %3612 = vst [vmem:[#allocation3 + $0x38] sm:$0xff] %v3573
  %3613 = vst [vmem:[#allocation3 + $0x40] sm:$0xff] %v3504
  %3614 = vst [vmem:[#allocation3 + $0x48] sm:$0xff] %v3506
  %3615 = vst [vmem:[#allocation3 + $0x50] sm:$0xff] %v3577
  %3616 = vst [vmem:[#allocation3 + $0x58] sm:$0xff] %v3579
  %3617 = vst [vmem:[#allocation3 + $0x60] sm:$0xff] %v3508
  %3618 = vst [vmem:[#allocation3 + $0x68] sm:$0xff] %v3510
  %3619 = vst [vmem:[#allocation3 + $0x70] sm:$0xff] %v3581
  %3620 = vst [vmem:[#allocation3 + $0x78] sm:$0xff] %v3583
  %3621 = vst [vmem:[#allocation3 + $0x80] sm:$0xff] %v3514
  %3622 = vst [vmem:[#allocation3 + $0x88] sm:$0xff] %v3516
  %3623 = vst [vmem:[#allocation3 + $0x90] sm:$0xff] %v3587
  %3624 = vst [vmem:[#allocation3 + $0x98] sm:$0xff] %v3589
  %3625 = vst [vmem:[#allocation3 + $0xa0] sm:$0xff] %v3518
  %3626 = vst [vmem:[#allocation3 + $0xa8] sm:$0xff] %v3520
  %3627 = vst [vmem:[#allocation3 + $0xb0] sm:$0xff] %v3591
  %3628 = vst [vmem:[#allocation3 + $0xb8] sm:$0xff] %v3593
  %3629 = vst [vmem:[#allocation3 + $0xc0] sm:$0xff] %v3524
  %3630 = vst [vmem:[#allocation3 + $0xc8] sm:$0xff] %v3526
  %3631 = vst [vmem:[#allocation3 + $0xd0] sm:$0xff] %v3597
  %3632 = vst [vmem:[#allocation3 + $0xd8] sm:$0xff] %v3599
  %3633 = vst [vmem:[#allocation3 + $0xe0] sm:$0xff] %v3528
  %3634 = vst [vmem:[#allocation3 + $0xe8] sm:$0xff] %v3530
  %3635 = vst [vmem:[#allocation3 + $0xf0] sm:$0xff] %v3601
  %3636 = vst [vmem:[#allocation3 + $0xf8] sm:$0xff] %v3603
  %v3637 = vld [vmem:[#allocation3] sm:$0xff]
  %v3638 = vld [vmem:[#allocation3 + $0x8] sm:$0xff]
  %v3639 = vld [vmem:[#allocation3 + $0x10] sm:$0xff]
  %v3640 = vld [vmem:[#allocation3 + $0x18] sm:$0xff]
  %v3641 = vpack.c.bf16 %v1648, %v1648
  %v3674 = vunpack.c.l.b16 %v3241
  %v3675 = vunpack.c.h.b16 %v3241
  %v3676 = vunpack.c.l.b16 %v3242
  %v3677 = vunpack.c.h.b16 %v3242
  %v3678 = vunpack.c.l.b16 %v3243
  %v3679 = vunpack.c.h.b16 %v3243
  %v3680 = vunpack.c.l.b16 %v3244
  %v3681 = vunpack.c.h.b16 %v3244
  %v3682 = vunpack.c.l.b16 %v3245
  %v3683 = vunpack.c.h.b16 %v3245
  %v3684 = vunpack.c.l.b16 %v3246
  %v3685 = vunpack.c.h.b16 %v3246
  %v3686 = vunpack.c.l.b16 %v3247
  %v3687 = vunpack.c.h.b16 %v3247
  %v3688 = vunpack.c.l.b16 %v3248
  %v3689 = vunpack.c.h.b16 %v3248
  %v3690 = vunpack.c.l.b16 %v3249
  %v3691 = vunpack.c.h.b16 %v3249
  %v3692 = vunpack.c.l.b16 %v3250
  %v3693 = vunpack.c.h.b16 %v3250
  %v3694 = vunpack.c.l.b16 %v3251
  %v3695 = vunpack.c.h.b16 %v3251
  %v3696 = vunpack.c.l.b16 %v3252
  %v3697 = vunpack.c.h.b16 %v3252
  %v3698 = vunpack.c.l.b16 %v3253
  %v3699 = vunpack.c.h.b16 %v3253
  %v3700 = vunpack.c.l.b16 %v3254
  %v3701 = vunpack.c.h.b16 %v3254
  %v3702 = vunpack.c.l.b16 %v3255
  %v3703 = vunpack.c.h.b16 %v3255
  %v3704 = vunpack.c.l.b16 %v3256
  %v3705 = vunpack.c.h.b16 %v3256
  %v3706 = vunpack.c.l.b16 %v3257
  %v3707 = vunpack.c.h.b16 %v3257
  %v3708 = vunpack.c.l.b16 %v3258
  %v3709 = vunpack.c.h.b16 %v3258
  %v3710 = vunpack.c.l.b16 %v3259
  %v3711 = vunpack.c.h.b16 %v3259
  %v3712 = vunpack.c.l.b16 %v3260
  %v3713 = vunpack.c.h.b16 %v3260
  %v3714 = vunpack.c.l.b16 %v3261
  %v3715 = vunpack.c.h.b16 %v3261
  %v3716 = vunpack.c.l.b16 %v3262
  %v3717 = vunpack.c.h.b16 %v3262
  %v3718 = vunpack.c.l.b16 %v3263
  %v3719 = vunpack.c.h.b16 %v3263
  %v3720 = vunpack.c.l.b16 %v3264
  %v3721 = vunpack.c.h.b16 %v3264
  %v3722 = vunpack.c.l.b16 %v3265
  %v3723 = vunpack.c.h.b16 %v3265
  %v3724 = vunpack.c.l.b16 %v3266
  %v3725 = vunpack.c.h.b16 %v3266
  %v3726 = vunpack.c.l.b16 %v3267
  %v3727 = vunpack.c.h.b16 %v3267
  %v3728 = vunpack.c.l.b16 %v3268
  %v3729 = vunpack.c.h.b16 %v3268
  %v3730 = vunpack.c.l.b16 %v3269
  %v3731 = vunpack.c.h.b16 %v3269
  %v3732 = vunpack.c.l.b16 %v3270
  %v3733 = vunpack.c.h.b16 %v3270
  %v3734 = vunpack.c.l.b16 %v3271
  %v3735 = vunpack.c.h.b16 %v3271
  %v3736 = vunpack.c.l.b16 %v3272
  %v3737 = vunpack.c.h.b16 %v3272
  %v3738 = vpack.c.b16 %v3678, %v3674
  %v3739 = vpack.c.b16 %v3679, %v3675
  %v3740 = vpack.c.b16 %v3680, %v3676
  %v3741 = vpack.c.b16 %v3681, %v3677
  %v3742 = vpack.c.b16 %v3686, %v3682
  %v3743 = vpack.c.b16 %v3687, %v3683
  %v3744 = vpack.c.b16 %v3688, %v3684
  %v3745 = vpack.c.b16 %v3689, %v3685
  %v3746 = vpack.c.b16 %v3694, %v3690
  %v3747 = vpack.c.b16 %v3695, %v3691
  %v3748 = vpack.c.b16 %v3696, %v3692
  %v3749 = vpack.c.b16 %v3697, %v3693
  %v3750 = vpack.c.b16 %v3702, %v3698
  %v3751 = vpack.c.b16 %v3703, %v3699
  %v3752 = vpack.c.b16 %v3704, %v3700
  %v3753 = vpack.c.b16 %v3705, %v3701
  %v3754 = vpack.c.b16 %v3710, %v3706
  %v3755 = vpack.c.b16 %v3711, %v3707
  %v3756 = vpack.c.b16 %v3712, %v3708
  %v3757 = vpack.c.b16 %v3713, %v3709
  %v3758 = vpack.c.b16 %v3718, %v3714
  %v3759 = vpack.c.b16 %v3719, %v3715
  %v3760 = vpack.c.b16 %v3720, %v3716
  %v3761 = vpack.c.b16 %v3721, %v3717
  %v3762 = vpack.c.b16 %v3726, %v3722
  %v3763 = vpack.c.b16 %v3727, %v3723
  %v3764 = vpack.c.b16 %v3728, %v3724
  %v3765 = vpack.c.b16 %v3729, %v3725
  %v3766 = vpack.c.b16 %v3734, %v3730
  %v3767 = vpack.c.b16 %v3735, %v3731
  %v3768 = vpack.c.b16 %v3736, %v3732
  %v3769 = vpack.c.b16 %v3737, %v3733
  %3802 = vmatprep.subr.bf16.mxu0 %v3767
  %3803 = vmatpush1.bf16.msra.mxu0 %v3766
  %3804 = vmatprep.subr.bf16.mxu0 %v3763
  %3805 = vmatpush1.bf16.msra.mxu0 %v3762
  %3806 = vmatprep.subr.bf16.mxu0 %v3759
  %3807 = vmatpush1.bf16.msra.mxu0 %v3758
  %3808 = vmatprep.subr.bf16.mxu0 %v3755
  %3809 = vmatpush1.bf16.msra.mxu0 %v3754
  %3810 = vmatprep.subr.bf16.mxu0 %v3751
  %3811 = vmatpush1.bf16.msra.mxu0 %v3750
  %3812 = vmatprep.subr.bf16.mxu0 %v3747
  %3813 = vmatpush1.bf16.msra.mxu0 %v3746
  %3814 = vmatprep.subr.bf16.mxu0 %v3743
  %3815 = vmatpush1.bf16.msra.mxu0 %v3742
  %3816 = vmatprep.subr.bf16.mxu0 %v3739
  %3817 = vmatpush1.bf16.msra.mxu0 %v3738
  %3818 = vmatprep.subr.bf16.mxu0 0
  %3819 = vmatpush2.bf16.msra.mxu0 0
  %3820 = vmatprep.subr.bf16.mxu0 0
  %3821 = vmatpush2.bf16.msra.mxu0 0
  %3822 = vmatprep.subr.bf16.mxu0 0
  %3823 = vmatpush2.bf16.msra.mxu0 0
  %3824 = vmatprep.subr.bf16.mxu0 0
  %3825 = vmatpush2.bf16.msra.mxu0 0
  %3826 = vmatprep.subr.bf16.mxu0 0
  %3827 = vmatpush2.bf16.msra.mxu0 0
  %3828 = vmatprep.subr.bf16.mxu0 0
  %3829 = vmatpush2.bf16.msra.mxu0 0
  %3830 = vmatprep.subr.bf16.mxu0 0
  %3831 = vmatpush2.bf16.msra.mxu0 0
  %3832 = vmatprep.subr.bf16.mxu0 0
  %3833 = vmatpush2.bf16.msra.mxu0 0
  %3834 = vmatprep.mubr.bf16.mxu0 0
  %3835 = vmatmul.mubr.bf16.gmra.mxu0 %v3641
  %v3836 = vpop.f32.mrf.mxu0
  %v3837 = vadd.f32 0.0, %v3836
  %v3838 = vpop.f32.mrf.mxu0
  %v3839 = vadd.f32 0.0, %v3838
  %v3840 = vpop.f32.mrf.mxu0
  %v3841 = vpop.f32.mrf.mxu0
  %3842 = vdwg.mxu0
  %3843 = vmatprep.subr.bf16.mxu0 %v3769
  %3844 = vmatpush1.bf16.msra.mxu0 %v3768
  %3845 = vmatprep.subr.bf16.mxu0 %v3765
  %3846 = vmatpush1.bf16.msra.mxu0 %v3764
  %3847 = vmatprep.subr.bf16.mxu0 %v3761
  %3848 = vmatpush1.bf16.msra.mxu0 %v3760
  %3849 = vmatprep.subr.bf16.mxu0 %v3757
  %3850 = vmatpush1.bf16.msra.mxu0 %v3756
  %3851 = vmatprep.subr.bf16.mxu0 %v3753
  %3852 = vmatpush1.bf16.msra.mxu0 %v3752
  %3853 = vmatprep.subr.bf16.mxu0 %v3749
  %3854 = vmatpush1.bf16.msra.mxu0 %v3748
  %3855 = vmatprep.subr.bf16.mxu0 %v3745
  %3856 = vmatpush1.bf16.msra.mxu0 %v3744
  %3857 = vmatprep.subr.bf16.mxu0 %v3741
  %3858 = vmatpush1.bf16.msra.mxu0 %v3740
  %3859 = vmatprep.subr.bf16.mxu0 0
  %3860 = vmatpush2.bf16.msra.mxu0 0
  %3861 = vmatprep.subr.bf16.mxu0 0
  %3862 = vmatpush2.bf16.msra.mxu0 0
  %3863 = vmatprep.subr.bf16.mxu0 0
  %3864 = vmatpush2.bf16.msra.mxu0 0
  %3865 = vmatprep.subr.bf16.mxu0 0
  %3866 = vmatpush2.bf16.msra.mxu0 0
  %3867 = vmatprep.subr.bf16.mxu0 0
  %3868 = vmatpush2.bf16.msra.mxu0 0
  %3869 = vmatprep.subr.bf16.mxu0 0
  %3870 = vmatpush2.bf16.msra.mxu0 0
  %3871 = vmatprep.subr.bf16.mxu0 0
  %3872 = vmatpush2.bf16.msra.mxu0 0
  %3873 = vmatprep.subr.bf16.mxu0 0
  %3874 = vmatpush2.bf16.msra.mxu0 0
  %3875 = vmatprep.mubr.bf16.mxu0 0
  %3876 = vmatmul.mubr.bf16.gmra.mxu0 %v3641
  %v3877 = vpop.f32.mrf.mxu0
  %v3878 = vadd.f32 0.0, %v3877
  %v3879 = vpop.f32.mrf.mxu0
  %v3880 = vadd.f32 0.0, %v3879
  %v3881 = vpop.f32.mrf.mxu0
  %v3882 = vpop.f32.mrf.mxu0
  %3883 = vdwg.mxu0
  %v3884 = vadd.f32 %v3637, %v3837
  %v3885 = vadd.f32 %v3638, %v3839
  %v3886 = vadd.f32 %v3639, %v3878
  %v3887 = vadd.f32 %v3640, %v3880
  %v3888 = vxor.u32 %v3884, 2147483648
  %v3889 = vmul.f32 %v3888, 1.442695
  %v3890 = vpow.pop %v3889
  %v3891 = vadd.f32 %v3890, 1.0
  %v3892 = vrcp.pop %v3891
  %v3893 = vmul.f32 1.0, %v3892
  %v3894 = vxor.u32 %v3885, 2147483648
  %v3895 = vmul.f32 %v3894, 1.442695
  %v3896 = vpow.pop %v3895
  %v3897 = vadd.f32 %v3896, 1.0
  %v3898 = vrcp.pop %v3897
  %v3899 = vmul.f32 1.0, %v3898
  %v3900 = vtanh.pop %v3886
  %v3901 = vxor.u32 %v3887, 2147483648
  %v3902 = vmul.f32 %v3901, 1.442695
  %v3903 = vpow.pop %v3902
  %v3904 = vadd.f32 %v3903, 1.0
  %v3905 = vrcp.pop %v3904
  %v3906 = vmul.f32 1.0, %v3905
  %v3907 = vmul.f32 %v3899, %v1647
  %v3908 = vmul.f32 %v3893, %v3900
  %v3909 = vadd.f32 %v3907, %v3908
  %v3910 = vtanh.pop %v3909
  %v3911 = vmul.f32 %v3906, %v3910
  %vm3912 = vcmp.gt.s32.totalorder %v43, 0
  %v3913 = vsel %vm3912, 1, 0
  %3914 = vset.pattern.permute.xlu0 0
  %3915 = vperm.xlu0 %3914, %v3913
  %v3916 = vpop.permute.xlu0 %3915
  %vm3917 = vcmp.eq.s32.totalorder %v3916, 1
  %v3918 = vsel %vm3917, %v3909, %v1647
  %v3919 = vsel %vm3917, %v3911, %v1648
  %v3920 = vsel %vm3917, %v3911, 0.0
  %3921 = vst [vmem:[#allocation2] sm:$0xff] %v3920
  %v3922 = vld [vmem:[%s763] sm:$0xff]
  %v3923 = vld [vmem:[%s763 + $0x8] sm:$0xff]
  %v3924 = vld [vmem:[%s763 + $0x10] sm:$0xff]
  %v3925 = vld [vmem:[%s763 + $0x18] sm:$0xff]
  %v3926 = vpack.c.bf16 %v3919, %v3919
  %3927 = vmatprep.subr.bf16.mxu0 %v3767
  %3928 = vmatpush1.bf16.msra.mxu0 %v3766
  %3929 = vmatprep.subr.bf16.mxu0 %v3763
  %3930 = vmatpush1.bf16.msra.mxu0 %v3762
  %3931 = vmatprep.subr.bf16.mxu0 %v3759
  %3932 = vmatpush1.bf16.msra.mxu0 %v3758
  %3933 = vmatprep.subr.bf16.mxu0 %v3755
  %3934 = vmatpush1.bf16.msra.mxu0 %v3754
  %3935 = vmatprep.subr.bf16.mxu0 %v3751
  %3936 = vmatpush1.bf16.msra.mxu0 %v3750
  %3937 = vmatprep.subr.bf16.mxu0 %v3747
  %3938 = vmatpush1.bf16.msra.mxu0 %v3746
  %3939 = vmatprep.subr.bf16.mxu0 %v3743
  %3940 = vmatpush1.bf16.msra.mxu0 %v3742
  %3941 = vmatprep.subr.bf16.mxu0 %v3739
  %3942 = vmatpush1.bf16.msra.mxu0 %v3738
  %3943 = vmatprep.subr.bf16.mxu0 0
  %3944 = vmatpush2.bf16.msra.mxu0 0
  %3945 = vmatprep.subr.bf16.mxu0 0
  %3946 = vmatpush2.bf16.msra.mxu0 0
  %3947 = vmatprep.subr.bf16.mxu0 0
  %3948 = vmatpush2.bf16.msra.mxu0 0
  %3949 = vmatprep.subr.bf16.mxu0 0
  %3950 = vmatpush2.bf16.msra.mxu0 0
  %3951 = vmatprep.subr.bf16.mxu0 0
  %3952 = vmatpush2.bf16.msra.mxu0 0
  %3953 = vmatprep.subr.bf16.mxu0 0
  %3954 = vmatpush2.bf16.msra.mxu0 0
  %3955 = vmatprep.subr.bf16.mxu0 0
  %3956 = vmatpush2.bf16.msra.mxu0 0
  %3957 = vmatprep.subr.bf16.mxu0 0
  %3958 = vmatpush2.bf16.msra.mxu0 0
  %3959 = vmatprep.mubr.bf16.mxu0 0
  %3960 = vmatmul.mubr.bf16.gmra.mxu0 %v3926
  %v3961 = vpop.f32.mrf.mxu0
  %v3962 = vadd.f32 0.0, %v3961
  %v3963 = vpop.f32.mrf.mxu0
  %v3964 = vadd.f32 0.0, %v3963
  %v3965 = vpop.f32.mrf.mxu0
  %v3966 = vpop.f32.mrf.mxu0
  %3967 = vdwg.mxu0
  %3968 = vmatprep.subr.bf16.mxu0 %v3769
  %3969 = vmatpush1.bf16.msra.mxu0 %v3768
  %3970 = vmatprep.subr.bf16.mxu0 %v3765
  %3971 = vmatpush1.bf16.msra.mxu0 %v3764
  %3972 = vmatprep.subr.bf16.mxu0 %v3761
  %3973 = vmatpush1.bf16.msra.mxu0 %v3760
  %3974 = vmatprep.subr.bf16.mxu0 %v3757
  %3975 = vmatpush1.bf16.msra.mxu0 %v3756
  %3976 = vmatprep.subr.bf16.mxu0 %v3753
  %3977 = vmatpush1.bf16.msra.mxu0 %v3752
  %3978 = vmatprep.subr.bf16.mxu0 %v3749
  %3979 = vmatpush1.bf16.msra.mxu0 %v3748
  %3980 = vmatprep.subr.bf16.mxu0 %v3745
  %3981 = vmatpush1.bf16.msra.mxu0 %v3744
  %3982 = vmatprep.subr.bf16.mxu0 %v3741
  %3983 = vmatpush1.bf16.msra.mxu0 %v3740
  %3984 = vmatprep.subr.bf16.mxu0 0
  %3985 = vmatpush2.bf16.msra.mxu0 0
  %3986 = vmatprep.subr.bf16.mxu0 0
  %3987 = vmatpush2.bf16.msra.mxu0 0
  %3988 = vmatprep.subr.bf16.mxu0 0
  %3989 = vmatpush2.bf16.msra.mxu0 0
  %3990 = vmatprep.subr.bf16.mxu0 0
  %3991 = vmatpush2.bf16.msra.mxu0 0
  %3992 = vmatprep.subr.bf16.mxu0 0
  %3993 = vmatpush2.bf16.msra.mxu0 0
  %3994 = vmatprep.subr.bf16.mxu0 0
  %3995 = vmatpush2.bf16.msra.mxu0 0
  %3996 = vmatprep.subr.bf16.mxu0 0
  %3997 = vmatpush2.bf16.msra.mxu0 0
  %3998 = vmatprep.subr.bf16.mxu0 0
  %3999 = vmatpush2.bf16.msra.mxu0 0
  %4000 = vmatprep.mubr.bf16.mxu0 0
  %4001 = vmatmul.mubr.bf16.gmra.mxu0 %v3926
  %v4002 = vpop.f32.mrf.mxu0
  %v4003 = vadd.f32 0.0, %v4002
  %v4004 = vpop.f32.mrf.mxu0
  %v4005 = vadd.f32 0.0, %v4004
  %v4006 = vpop.f32.mrf.mxu0
  %v4007 = vpop.f32.mrf.mxu0
  %4008 = vdwg.mxu0
  %v4009 = vadd.f32 %v3922, %v3962
  %v4010 = vadd.f32 %v3923, %v3964
  %v4011 = vadd.f32 %v3924, %v4003
  %v4012 = vadd.f32 %v3925, %v4005
  %v4013 = vxor.u32 %v4009, 2147483648
  %v4014 = vmul.f32 %v4013, 1.442695
  %v4015 = vpow.pop %v4014
  %v4016 = vadd.f32 %v4015, 1.0
  %v4017 = vrcp.pop %v4016
  %v4018 = vmul.f32 1.0, %v4017
  %v4019 = vxor.u32 %v4010, 2147483648
  %v4020 = vmul.f32 %v4019, 1.442695
  %v4021 = vpow.pop %v4020
  %v4022 = vadd.f32 %v4021, 1.0
  %v4023 = vrcp.pop %v4022
  %v4024 = vmul.f32 1.0, %v4023
  %v4025 = vtanh.pop %v4011
  %v4026 = vxor.u32 %v4012, 2147483648
  %v4027 = vmul.f32 %v4026, 1.442695
  %v4028 = vpow.pop %v4027
  %v4029 = vadd.f32 %v4028, 1.0
  %v4030 = vrcp.pop %v4029
  %v4031 = vmul.f32 1.0, %v4030
  %v4032 = vmul.f32 %v4024, %v3918
  %v4033 = vmul.f32 %v4018, %v4025
  %v4034 = vadd.f32 %v4032, %v4033
  %v4035 = vtanh.pop %v4034
  %v4036 = vmul.f32 %v4031, %v4035
  %vm4037 = vcmp.gt.s32.totalorder %v43, 1
  %v4038 = vsel %vm4037, 1, 0
  %4039 = vset.pattern.permute.xlu0 0
  %4040 = vperm.xlu0 %4039, %v4038
  %v4041 = vpop.permute.xlu0 %4040
  %vm4042 = vcmp.eq.s32.totalorder %v4041, 1
  %v4043 = vsel %vm4042, %v4034, %v3918
  %v4044 = vsel %vm4042, %v4036, %v3919
  %v4045 = vsel %vm4042, %v4036, 0.0
  %4046 = vst [vmem:[%s888] sm:$0xff] %v4045
  %v4047 = vld [vmem:[%s890] sm:$0xff]
  %v4048 = vld [vmem:[%s890 + $0x8] sm:$0xff]
  %v4049 = vld [vmem:[%s890 + $0x10] sm:$0xff]
  %v4050 = vld [vmem:[%s890 + $0x18] sm:$0xff]
  %v4051 = vpack.c.bf16 %v4044, %v4044
  %4052 = vmatprep.subr.bf16.mxu0 %v3767
  %4053 = vmatpush1.bf16.msra.mxu0 %v3766
  %4054 = vmatprep.subr.bf16.mxu0 %v3763
  %4055 = vmatpush1.bf16.msra.mxu0 %v3762
  %4056 = vmatprep.subr.bf16.mxu0 %v3759
  %4057 = vmatpush1.bf16.msra.mxu0 %v3758
  %4058 = vmatprep.subr.bf16.mxu0 %v3755
  %4059 = vmatpush1.bf16.msra.mxu0 %v3754
  %4060 = vmatprep.subr.bf16.mxu0 %v3751
  %4061 = vmatpush1.bf16.msra.mxu0 %v3750
  %4062 = vmatprep.subr.bf16.mxu0 %v3747
  %4063 = vmatpush1.bf16.msra.mxu0 %v3746
  %4064 = vmatprep.subr.bf16.mxu0 %v3743
  %4065 = vmatpush1.bf16.msra.mxu0 %v3742
  %4066 = vmatprep.subr.bf16.mxu0 %v3739
  %4067 = vmatpush1.bf16.msra.mxu0 %v3738
  %4068 = vmatprep.subr.bf16.mxu0 0
  %4069 = vmatpush2.bf16.msra.mxu0 0
  %4070 = vmatprep.subr.bf16.mxu0 0
  %4071 = vmatpush2.bf16.msra.mxu0 0
  %4072 = vmatprep.subr.bf16.mxu0 0
  %4073 = vmatpush2.bf16.msra.mxu0 0
  %4074 = vmatprep.subr.bf16.mxu0 0
  %4075 = vmatpush2.bf16.msra.mxu0 0
  %4076 = vmatprep.subr.bf16.mxu0 0
  %4077 = vmatpush2.bf16.msra.mxu0 0
  %4078 = vmatprep.subr.bf16.mxu0 0
  %4079 = vmatpush2.bf16.msra.mxu0 0
  %4080 = vmatprep.subr.bf16.mxu0 0
  %4081 = vmatpush2.bf16.msra.mxu0 0
  %4082 = vmatprep.subr.bf16.mxu0 0
  %4083 = vmatpush2.bf16.msra.mxu0 0
  %4084 = vmatprep.mubr.bf16.mxu0 0
  %4085 = vmatmul.mubr.bf16.gmra.mxu0 %v4051
  %v4086 = vpop.f32.mrf.mxu0
  %v4087 = vadd.f32 0.0, %v4086
  %v4088 = vpop.f32.mrf.mxu0
  %v4089 = vadd.f32 0.0, %v4088
  %v4090 = vpop.f32.mrf.mxu0
  %v4091 = vpop.f32.mrf.mxu0
  %4092 = vdwg.mxu0
  %4093 = vmatprep.subr.bf16.mxu0 %v3769
  %4094 = vmatpush1.bf16.msra.mxu0 %v3768
  %4095 = vmatprep.subr.bf16.mxu0 %v3765
  %4096 = vmatpush1.bf16.msra.mxu0 %v3764
  %4097 = vmatprep.subr.bf16.mxu0 %v3761
  %4098 = vmatpush1.bf16.msra.mxu0 %v3760
  %4099 = vmatprep.subr.bf16.mxu0 %v3757
  %4100 = vmatpush1.bf16.msra.mxu0 %v3756
  %4101 = vmatprep.subr.bf16.mxu0 %v3753
  %4102 = vmatpush1.bf16.msra.mxu0 %v3752
  %4103 = vmatprep.subr.bf16.mxu0 %v3749
  %4104 = vmatpush1.bf16.msra.mxu0 %v3748
  %4105 = vmatprep.subr.bf16.mxu0 %v3745
  %4106 = vmatpush1.bf16.msra.mxu0 %v3744
  %4107 = vmatprep.subr.bf16.mxu0 %v3741
  %4108 = vmatpush1.bf16.msra.mxu0 %v3740
  %4109 = vmatprep.subr.bf16.mxu0 0
  %4110 = vmatpush2.bf16.msra.mxu0 0
  %4111 = vmatprep.subr.bf16.mxu0 0
  %4112 = vmatpush2.bf16.msra.mxu0 0
  %4113 = vmatprep.subr.bf16.mxu0 0
  %4114 = vmatpush2.bf16.msra.mxu0 0
  %4115 = vmatprep.subr.bf16.mxu0 0
  %4116 = vmatpush2.bf16.msra.mxu0 0
  %4117 = vmatprep.subr.bf16.mxu0 0
  %4118 = vmatpush2.bf16.msra.mxu0 0
  %4119 = vmatprep.subr.bf16.mxu0 0
  %4120 = vmatpush2.bf16.msra.mxu0 0
  %4121 = vmatprep.subr.bf16.mxu0 0
  %4122 = vmatpush2.bf16.msra.mxu0 0
  %4123 = vmatprep.subr.bf16.mxu0 0
  %4124 = vmatpush2.bf16.msra.mxu0 0
  %4125 = vmatprep.mubr.bf16.mxu0 0
  %4126 = vmatmul.mubr.bf16.gmra.mxu0 %v4051
  %v4127 = vpop.f32.mrf.mxu0
  %v4128 = vadd.f32 0.0, %v4127
  %v4129 = vpop.f32.mrf.mxu0
  %v4130 = vadd.f32 0.0, %v4129
  %v4131 = vpop.f32.mrf.mxu0
  %v4132 = vpop.f32.mrf.mxu0
  %4133 = vdwg.mxu0
  %v4134 = vadd.f32 %v4047, %v4087
  %v4135 = vadd.f32 %v4048, %v4089
  %v4136 = vadd.f32 %v4049, %v4128
  %v4137 = vadd.f32 %v4050, %v4130
  %v4138 = vxor.u32 %v4134, 2147483648
  %v4139 = vmul.f32 %v4138, 1.442695
  %v4140 = vpow.pop %v4139
  %v4141 = vadd.f32 %v4140, 1.0
  %v4142 = vrcp.pop %v4141
  %v4143 = vmul.f32 1.0, %v4142
  %v4144 = vxor.u32 %v4135, 2147483648
  %v4145 = vmul.f32 %v4144, 1.442695
  %v4146 = vpow.pop %v4145
  %v4147 = vadd.f32 %v4146, 1.0
  %v4148 = vrcp.pop %v4147
  %v4149 = vmul.f32 1.0, %v4148
  %v4150 = vtanh.pop %v4136
  %v4151 = vxor.u32 %v4137, 2147483648
  %v4152 = vmul.f32 %v4151, 1.442695
  %v4153 = vpow.pop %v4152
  %v4154 = vadd.f32 %v4153, 1.0
  %v4155 = vrcp.pop %v4154
  %v4156 = vmul.f32 1.0, %v4155
  %v4157 = vmul.f32 %v4149, %v4043
  %v4158 = vmul.f32 %v4143, %v4150
  %v4159 = vadd.f32 %v4157, %v4158
  %v4160 = vtanh.pop %v4159
  %v4161 = vmul.f32 %v4156, %v4160
  %vm4162 = vcmp.gt.s32.totalorder %v43, 2
  %v4163 = vsel %vm4162, 1, 0
  %4164 = vset.pattern.permute.xlu0 0
  %4165 = vperm.xlu0 %4164, %v4163
  %v4166 = vpop.permute.xlu0 %4165
  %vm4167 = vcmp.eq.s32.totalorder %v4166, 1
  %v4168 = vsel %vm4167, %v4159, %v4043
  %v4169 = vsel %vm4167, %v4161, %v4044
  %v4170 = vsel %vm4167, %v4161, 0.0
  %4171 = vst [vmem:[%s1015] sm:$0xff] %v4170
  %v4172 = vld [vmem:[%s1017] sm:$0xff]
  %v4173 = vld [vmem:[%s1017 + $0x8] sm:$0xff]
  %v4174 = vld [vmem:[%s1017 + $0x10] sm:$0xff]
  %v4175 = vld [vmem:[%s1017 + $0x18] sm:$0xff]
  %v4176 = vpack.c.bf16 %v4169, %v4169
  %4177 = vmatprep.subr.bf16.mxu0 %v3767
  %4178 = vmatpush1.bf16.msra.mxu0 %v3766
  %4179 = vmatprep.subr.bf16.mxu0 %v3763
  %4180 = vmatpush1.bf16.msra.mxu0 %v3762
  %4181 = vmatprep.subr.bf16.mxu0 %v3759
  %4182 = vmatpush1.bf16.msra.mxu0 %v3758
  %4183 = vmatprep.subr.bf16.mxu0 %v3755
  %4184 = vmatpush1.bf16.msra.mxu0 %v3754
  %4185 = vmatprep.subr.bf16.mxu0 %v3751
  %4186 = vmatpush1.bf16.msra.mxu0 %v3750
  %4187 = vmatprep.subr.bf16.mxu0 %v3747
  %4188 = vmatpush1.bf16.msra.mxu0 %v3746
  %4189 = vmatprep.subr.bf16.mxu0 %v3743
  %4190 = vmatpush1.bf16.msra.mxu0 %v3742
  %4191 = vmatprep.subr.bf16.mxu0 %v3739
  %4192 = vmatpush1.bf16.msra.mxu0 %v3738
  %4193 = vmatprep.subr.bf16.mxu0 0
  %4194 = vmatpush2.bf16.msra.mxu0 0
  %4195 = vmatprep.subr.bf16.mxu0 0
  %4196 = vmatpush2.bf16.msra.mxu0 0
  %4197 = vmatprep.subr.bf16.mxu0 0
  %4198 = vmatpush2.bf16.msra.mxu0 0
  %4199 = vmatprep.subr.bf16.mxu0 0
  %4200 = vmatpush2.bf16.msra.mxu0 0
  %4201 = vmatprep.subr.bf16.mxu0 0
  %4202 = vmatpush2.bf16.msra.mxu0 0
  %4203 = vmatprep.subr.bf16.mxu0 0
  %4204 = vmatpush2.bf16.msra.mxu0 0
  %4205 = vmatprep.subr.bf16.mxu0 0
  %4206 = vmatpush2.bf16.msra.mxu0 0
  %4207 = vmatprep.subr.bf16.mxu0 0
  %4208 = vmatpush2.bf16.msra.mxu0 0
  %4209 = vmatprep.mubr.bf16.mxu0 0
  %4210 = vmatmul.mubr.bf16.gmra.mxu0 %v4176
  %v4211 = vpop.f32.mrf.mxu0
  %v4212 = vadd.f32 0.0, %v4211
  %v4213 = vpop.f32.mrf.mxu0
  %v4214 = vadd.f32 0.0, %v4213
  %v4215 = vpop.f32.mrf.mxu0
  %v4216 = vpop.f32.mrf.mxu0
  %4217 = vdwg.mxu0
  %4218 = vmatprep.subr.bf16.mxu0 %v3769
  %4219 = vmatpush1.bf16.msra.mxu0 %v3768
  %4220 = vmatprep.subr.bf16.mxu0 %v3765
  %4221 = vmatpush1.bf16.msra.mxu0 %v3764
  %4222 = vmatprep.subr.bf16.mxu0 %v3761
  %4223 = vmatpush1.bf16.msra.mxu0 %v3760
  %4224 = vmatprep.subr.bf16.mxu0 %v3757
  %4225 = vmatpush1.bf16.msra.mxu0 %v3756
  %4226 = vmatprep.subr.bf16.mxu0 %v3753
  %4227 = vmatpush1.bf16.msra.mxu0 %v3752
  %4228 = vmatprep.subr.bf16.mxu0 %v3749
  %4229 = vmatpush1.bf16.msra.mxu0 %v3748
  %4230 = vmatprep.subr.bf16.mxu0 %v3745
  %4231 = vmatpush1.bf16.msra.mxu0 %v3744
  %4232 = vmatprep.subr.bf16.mxu0 %v3741
  %4233 = vmatpush1.bf16.msra.mxu0 %v3740
  %4234 = vmatprep.subr.bf16.mxu0 0
  %4235 = vmatpush2.bf16.msra.mxu0 0
  %4236 = vmatprep.subr.bf16.mxu0 0
  %4237 = vmatpush2.bf16.msra.mxu0 0
  %4238 = vmatprep.subr.bf16.mxu0 0
  %4239 = vmatpush2.bf16.msra.mxu0 0
  %4240 = vmatprep.subr.bf16.mxu0 0
  %4241 = vmatpush2.bf16.msra.mxu0 0
  %4242 = vmatprep.subr.bf16.mxu0 0
  %4243 = vmatpush2.bf16.msra.mxu0 0
  %4244 = vmatprep.subr.bf16.mxu0 0
  %4245 = vmatpush2.bf16.msra.mxu0 0
  %4246 = vmatprep.subr.bf16.mxu0 0
  %4247 = vmatpush2.bf16.msra.mxu0 0
  %4248 = vmatprep.subr.bf16.mxu0 0
  %4249 = vmatpush2.bf16.msra.mxu0 0
  %4250 = vmatprep.mubr.bf16.mxu0 0
  %4251 = vmatmul.mubr.bf16.gmra.mxu0 %v4176
  %v4252 = vpop.f32.mrf.mxu0
  %v4253 = vadd.f32 0.0, %v4252
  %v4254 = vpop.f32.mrf.mxu0
  %v4255 = vadd.f32 0.0, %v4254
  %v4256 = vpop.f32.mrf.mxu0
  %v4257 = vpop.f32.mrf.mxu0
  %4258 = vdwg.mxu0
  %v4259 = vadd.f32 %v4172, %v4212
  %v4260 = vadd.f32 %v4173, %v4214
  %v4261 = vadd.f32 %v4174, %v4253
  %v4262 = vadd.f32 %v4175, %v4255
  %v4263 = vxor.u32 %v4259, 2147483648
  %v4264 = vmul.f32 %v4263, 1.442695
  %v4265 = vpow.pop %v4264
  %v4266 = vadd.f32 %v4265, 1.0
  %v4267 = vrcp.pop %v4266
  %v4268 = vmul.f32 1.0, %v4267
  %v4269 = vxor.u32 %v4260, 2147483648
  %v4270 = vmul.f32 %v4269, 1.442695
  %v4271 = vpow.pop %v4270
  %v4272 = vadd.f32 %v4271, 1.0
  %v4273 = vrcp.pop %v4272
  %v4274 = vmul.f32 1.0, %v4273
  %v4275 = vtanh.pop %v4261
  %v4276 = vxor.u32 %v4262, 2147483648
  %v4277 = vmul.f32 %v4276, 1.442695
  %v4278 = vpow.pop %v4277
  %v4279 = vadd.f32 %v4278, 1.0
  %v4280 = vrcp.pop %v4279
  %v4281 = vmul.f32 1.0, %v4280
  %v4282 = vmul.f32 %v4274, %v4168
  %v4283 = vmul.f32 %v4268, %v4275
  %v4284 = vadd.f32 %v4282, %v4283
  %v4285 = vtanh.pop %v4284
  %v4286 = vmul.f32 %v4281, %v4285
  %vm4287 = vcmp.gt.s32.totalorder %v43, 3
  %v4288 = vsel %vm4287, 1, 0
  %4289 = vset.pattern.permute.xlu0 0
  %4290 = vperm.xlu0 %4289, %v4288
  %v4291 = vpop.permute.xlu0 %4290
  %vm4292 = vcmp.eq.s32.totalorder %v4291, 1
  %v4293 = vsel %vm4292, %v4284, %v4168
  %v4294 = vsel %vm4292, %v4286, %v4169
  %v4295 = vsel %vm4292, %v4286, 0.0
  %4296 = vst [vmem:[%s1142] sm:$0xff] %v4295
  %v4297 = vld [vmem:[%s1144] sm:$0xff]
  %v4298 = vld [vmem:[%s1144 + $0x8] sm:$0xff]
  %v4299 = vld [vmem:[%s1144 + $0x10] sm:$0xff]
  %v4300 = vld [vmem:[%s1144 + $0x18] sm:$0xff]
  %v4301 = vpack.c.bf16 %v4294, %v4294
  %4302 = vmatprep.subr.bf16.mxu0 %v3767
  %4303 = vmatpush1.bf16.msra.mxu0 %v3766
  %4304 = vmatprep.subr.bf16.mxu0 %v3763
  %4305 = vmatpush1.bf16.msra.mxu0 %v3762
  %4306 = vmatprep.subr.bf16.mxu0 %v3759
  %4307 = vmatpush1.bf16.msra.mxu0 %v3758
  %4308 = vmatprep.subr.bf16.mxu0 %v3755
  %4309 = vmatpush1.bf16.msra.mxu0 %v3754
  %4310 = vmatprep.subr.bf16.mxu0 %v3751
  %4311 = vmatpush1.bf16.msra.mxu0 %v3750
  %4312 = vmatprep.subr.bf16.mxu0 %v3747
  %4313 = vmatpush1.bf16.msra.mxu0 %v3746
  %4314 = vmatprep.subr.bf16.mxu0 %v3743
  %4315 = vmatpush1.bf16.msra.mxu0 %v3742
  %4316 = vmatprep.subr.bf16.mxu0 %v3739
  %4317 = vmatpush1.bf16.msra.mxu0 %v3738
  %4318 = vmatprep.subr.bf16.mxu0 0
  %4319 = vmatpush2.bf16.msra.mxu0 0
  %4320 = vmatprep.subr.bf16.mxu0 0
  %4321 = vmatpush2.bf16.msra.mxu0 0
  %4322 = vmatprep.subr.bf16.mxu0 0
  %4323 = vmatpush2.bf16.msra.mxu0 0
  %4324 = vmatprep.subr.bf16.mxu0 0
  %4325 = vmatpush2.bf16.msra.mxu0 0
  %4326 = vmatprep.subr.bf16.mxu0 0
  %4327 = vmatpush2.bf16.msra.mxu0 0
  %4328 = vmatprep.subr.bf16.mxu0 0
  %4329 = vmatpush2.bf16.msra.mxu0 0
  %4330 = vmatprep.subr.bf16.mxu0 0
  %4331 = vmatpush2.bf16.msra.mxu0 0
  %4332 = vmatprep.subr.bf16.mxu0 0
  %4333 = vmatpush2.bf16.msra.mxu0 0
  %4334 = vmatprep.mubr.bf16.mxu0 0
  %4335 = vmatmul.mubr.bf16.gmra.mxu0 %v4301
  %v4336 = vpop.f32.mrf.mxu0
  %v4337 = vadd.f32 0.0, %v4336
  %v4338 = vpop.f32.mrf.mxu0
  %v4339 = vadd.f32 0.0, %v4338
  %v4340 = vpop.f32.mrf.mxu0
  %v4341 = vpop.f32.mrf.mxu0
  %4342 = vdwg.mxu0
  %4343 = vmatprep.subr.bf16.mxu0 %v3769
  %4344 = vmatpush1.bf16.msra.mxu0 %v3768
  %4345 = vmatprep.subr.bf16.mxu0 %v3765
  %4346 = vmatpush1.bf16.msra.mxu0 %v3764
  %4347 = vmatprep.subr.bf16.mxu0 %v3761
  %4348 = vmatpush1.bf16.msra.mxu0 %v3760
  %4349 = vmatprep.subr.bf16.mxu0 %v3757
  %4350 = vmatpush1.bf16.msra.mxu0 %v3756
  %4351 = vmatprep.subr.bf16.mxu0 %v3753
  %4352 = vmatpush1.bf16.msra.mxu0 %v3752
  %4353 = vmatprep.subr.bf16.mxu0 %v3749
  %4354 = vmatpush1.bf16.msra.mxu0 %v3748
  %4355 = vmatprep.subr.bf16.mxu0 %v3745
  %4356 = vmatpush1.bf16.msra.mxu0 %v3744
  %4357 = vmatprep.subr.bf16.mxu0 %v3741
  %4358 = vmatpush1.bf16.msra.mxu0 %v3740
  %4359 = vmatprep.subr.bf16.mxu0 0
  %4360 = vmatpush2.bf16.msra.mxu0 0
  %4361 = vmatprep.subr.bf16.mxu0 0
  %4362 = vmatpush2.bf16.msra.mxu0 0
  %4363 = vmatprep.subr.bf16.mxu0 0
  %4364 = vmatpush2.bf16.msra.mxu0 0
  %4365 = vmatprep.subr.bf16.mxu0 0
  %4366 = vmatpush2.bf16.msra.mxu0 0
  %4367 = vmatprep.subr.bf16.mxu0 0
  %4368 = vmatpush2.bf16.msra.mxu0 0
  %4369 = vmatprep.subr.bf16.mxu0 0
  %4370 = vmatpush2.bf16.msra.mxu0 0
  %4371 = vmatprep.subr.bf16.mxu0 0
  %4372 = vmatpush2.bf16.msra.mxu0 0
  %4373 = vmatprep.subr.bf16.mxu0 0
  %4374 = vmatpush2.bf16.msra.mxu0 0
  %4375 = vmatprep.mubr.bf16.mxu0 0
  %4376 = vmatmul.mubr.bf16.gmra.mxu0 %v4301
  %v4377 = vpop.f32.mrf.mxu0
  %v4378 = vadd.f32 0.0, %v4377
  %v4379 = vpop.f32.mrf.mxu0
  %v4380 = vadd.f32 0.0, %v4379
  %v4381 = vpop.f32.mrf.mxu0
  %v4382 = vpop.f32.mrf.mxu0
  %4383 = vdwg.mxu0
  %v4384 = vadd.f32 %v4297, %v4337
  %v4385 = vadd.f32 %v4298, %v4339
  %v4386 = vadd.f32 %v4299, %v4378
  %v4387 = vadd.f32 %v4300, %v4380
  %v4388 = vxor.u32 %v4384, 2147483648
  %v4389 = vmul.f32 %v4388, 1.442695
  %v4390 = vpow.pop %v4389
  %v4391 = vadd.f32 %v4390, 1.0
  %v4392 = vrcp.pop %v4391
  %v4393 = vmul.f32 1.0, %v4392
  %v4394 = vxor.u32 %v4385, 2147483648
  %v4395 = vmul.f32 %v4394, 1.442695
  %v4396 = vpow.pop %v4395
  %v4397 = vadd.f32 %v4396, 1.0
  %v4398 = vrcp.pop %v4397
  %v4399 = vmul.f32 1.0, %v4398
  %v4400 = vtanh.pop %v4386
  %v4401 = vxor.u32 %v4387, 2147483648
  %v4402 = vmul.f32 %v4401, 1.442695
  %v4403 = vpow.pop %v4402
  %v4404 = vadd.f32 %v4403, 1.0
  %v4405 = vrcp.pop %v4404
  %v4406 = vmul.f32 1.0, %v4405
  %v4407 = vmul.f32 %v4399, %v4293
  %v4408 = vmul.f32 %v4393, %v4400
  %v4409 = vadd.f32 %v4407, %v4408
  %v4410 = vtanh.pop %v4409
  %v4411 = vmul.f32 %v4406, %v4410
  %vm4412 = vcmp.gt.s32.totalorder %v43, 4
  %v4413 = vsel %vm4412, 1, 0
  %4414 = vset.pattern.permute.xlu0 0
  %4415 = vperm.xlu0 %4414, %v4413
  %v4416 = vpop.permute.xlu0 %4415
  %vm4417 = vcmp.eq.s32.totalorder %v4416, 1
  %v4418 = vsel %vm4417, %v4409, %v4293
  %v4419 = vsel %vm4417, %v4411, %v4294
  %v4420 = vsel %vm4417, %v4411, 0.0
  %4421 = vst [vmem:[%s1269] sm:$0xff] %v4420
  %v4422 = vld [vmem:[%s1271] sm:$0xff]
  %v4423 = vld [vmem:[%s1271 + $0x8] sm:$0xff]
  %v4424 = vld [vmem:[%s1271 + $0x10] sm:$0xff]
  %v4425 = vld [vmem:[%s1271 + $0x18] sm:$0xff]
  %v4426 = vpack.c.bf16 %v4419, %v4419
  %4427 = vmatprep.subr.bf16.mxu0 %v3767
  %4428 = vmatpush1.bf16.msra.mxu0 %v3766
  %4429 = vmatprep.subr.bf16.mxu0 %v3763
  %4430 = vmatpush1.bf16.msra.mxu0 %v3762
  %4431 = vmatprep.subr.bf16.mxu0 %v3759
  %4432 = vmatpush1.bf16.msra.mxu0 %v3758
  %4433 = vmatprep.subr.bf16.mxu0 %v3755
  %4434 = vmatpush1.bf16.msra.mxu0 %v3754
  %4435 = vmatprep.subr.bf16.mxu0 %v3751
  %4436 = vmatpush1.bf16.msra.mxu0 %v3750
  %4437 = vmatprep.subr.bf16.mxu0 %v3747
  %4438 = vmatpush1.bf16.msra.mxu0 %v3746
  %4439 = vmatprep.subr.bf16.mxu0 %v3743
  %4440 = vmatpush1.bf16.msra.mxu0 %v3742
  %4441 = vmatprep.subr.bf16.mxu0 %v3739
  %4442 = vmatpush1.bf16.msra.mxu0 %v3738
  %4443 = vmatprep.subr.bf16.mxu0 0
  %4444 = vmatpush2.bf16.msra.mxu0 0
  %4445 = vmatprep.subr.bf16.mxu0 0
  %4446 = vmatpush2.bf16.msra.mxu0 0
  %4447 = vmatprep.subr.bf16.mxu0 0
  %4448 = vmatpush2.bf16.msra.mxu0 0
  %4449 = vmatprep.subr.bf16.mxu0 0
  %4450 = vmatpush2.bf16.msra.mxu0 0
  %4451 = vmatprep.subr.bf16.mxu0 0
  %4452 = vmatpush2.bf16.msra.mxu0 0
  %4453 = vmatprep.subr.bf16.mxu0 0
  %4454 = vmatpush2.bf16.msra.mxu0 0
  %4455 = vmatprep.subr.bf16.mxu0 0
  %4456 = vmatpush2.bf16.msra.mxu0 0
  %4457 = vmatprep.subr.bf16.mxu0 0
  %4458 = vmatpush2.bf16.msra.mxu0 0
  %4459 = vmatprep.mubr.bf16.mxu0 0
  %4460 = vmatmul.mubr.bf16.gmra.mxu0 %v4426
  %v4461 = vpop.f32.mrf.mxu0
  %v4462 = vadd.f32 0.0, %v4461
  %v4463 = vpop.f32.mrf.mxu0
  %v4464 = vadd.f32 0.0, %v4463
  %v4465 = vpop.f32.mrf.mxu0
  %v4466 = vpop.f32.mrf.mxu0
  %4467 = vdwg.mxu0
  %4468 = vmatprep.subr.bf16.mxu0 %v3769
  %4469 = vmatpush1.bf16.msra.mxu0 %v3768
  %4470 = vmatprep.subr.bf16.mxu0 %v3765
  %4471 = vmatpush1.bf16.msra.mxu0 %v3764
  %4472 = vmatprep.subr.bf16.mxu0 %v3761
  %4473 = vmatpush1.bf16.msra.mxu0 %v3760
  %4474 = vmatprep.subr.bf16.mxu0 %v3757
  %4475 = vmatpush1.bf16.msra.mxu0 %v3756
  %4476 = vmatprep.subr.bf16.mxu0 %v3753
  %4477 = vmatpush1.bf16.msra.mxu0 %v3752
  %4478 = vmatprep.subr.bf16.mxu0 %v3749
  %4479 = vmatpush1.bf16.msra.mxu0 %v3748
  %4480 = vmatprep.subr.bf16.mxu0 %v3745
  %4481 = vmatpush1.bf16.msra.mxu0 %v3744
  %4482 = vmatprep.subr.bf16.mxu0 %v3741
  %4483 = vmatpush1.bf16.msra.mxu0 %v3740
  %4484 = vmatprep.subr.bf16.mxu0 0
  %4485 = vmatpush2.bf16.msra.mxu0 0
  %4486 = vmatprep.subr.bf16.mxu0 0
  %4487 = vmatpush2.bf16.msra.mxu0 0
  %4488 = vmatprep.subr.bf16.mxu0 0
  %4489 = vmatpush2.bf16.msra.mxu0 0
  %4490 = vmatprep.subr.bf16.mxu0 0
  %4491 = vmatpush2.bf16.msra.mxu0 0
  %4492 = vmatprep.subr.bf16.mxu0 0
  %4493 = vmatpush2.bf16.msra.mxu0 0
  %4494 = vmatprep.subr.bf16.mxu0 0
  %4495 = vmatpush2.bf16.msra.mxu0 0
  %4496 = vmatprep.subr.bf16.mxu0 0
  %4497 = vmatpush2.bf16.msra.mxu0 0
  %4498 = vmatprep.subr.bf16.mxu0 0
  %4499 = vmatpush2.bf16.msra.mxu0 0
  %4500 = vmatprep.mubr.bf16.mxu0 0
  %4501 = vmatmul.mubr.bf16.gmra.mxu0 %v4426
  %v4502 = vpop.f32.mrf.mxu0
  %v4503 = vadd.f32 0.0, %v4502
  %v4504 = vpop.f32.mrf.mxu0
  %v4505 = vadd.f32 0.0, %v4504
  %v4506 = vpop.f32.mrf.mxu0
  %v4507 = vpop.f32.mrf.mxu0
  %4508 = vdwg.mxu0
  %v4509 = vadd.f32 %v4422, %v4462
  %v4510 = vadd.f32 %v4423, %v4464
  %v4511 = vadd.f32 %v4424, %v4503
  %v4512 = vadd.f32 %v4425, %v4505
  %v4513 = vxor.u32 %v4509, 2147483648
  %v4514 = vmul.f32 %v4513, 1.442695
  %v4515 = vpow.pop %v4514
  %v4516 = vadd.f32 %v4515, 1.0
  %v4517 = vrcp.pop %v4516
  %v4518 = vmul.f32 1.0, %v4517
  %v4519 = vxor.u32 %v4510, 2147483648
  %v4520 = vmul.f32 %v4519, 1.442695
  %v4521 = vpow.pop %v4520
  %v4522 = vadd.f32 %v4521, 1.0
  %v4523 = vrcp.pop %v4522
  %v4524 = vmul.f32 1.0, %v4523
  %v4525 = vtanh.pop %v4511
  %v4526 = vxor.u32 %v4512, 2147483648
  %v4527 = vmul.f32 %v4526, 1.442695
  %v4528 = vpow.pop %v4527
  %v4529 = vadd.f32 %v4528, 1.0
  %v4530 = vrcp.pop %v4529
  %v4531 = vmul.f32 1.0, %v4530
  %v4532 = vmul.f32 %v4524, %v4418
  %v4533 = vmul.f32 %v4518, %v4525
  %v4534 = vadd.f32 %v4532, %v4533
  %v4535 = vtanh.pop %v4534
  %v4536 = vmul.f32 %v4531, %v4535
  %vm4537 = vcmp.gt.s32.totalorder %v43, 5
  %v4538 = vsel %vm4537, 1, 0
  %4539 = vset.pattern.permute.xlu0 0
  %4540 = vperm.xlu0 %4539, %v4538
  %v4541 = vpop.permute.xlu0 %4540
  %vm4542 = vcmp.eq.s32.totalorder %v4541, 1
  %v4543 = vsel %vm4542, %v4534, %v4418
  %v4544 = vsel %vm4542, %v4536, %v4419
  %v4545 = vsel %vm4542, %v4536, 0.0
  %4546 = vst [vmem:[%s1396] sm:$0xff] %v4545
  %v4547 = vld [vmem:[%s1398] sm:$0xff]
  %v4548 = vld [vmem:[%s1398 + $0x8] sm:$0xff]
  %v4549 = vld [vmem:[%s1398 + $0x10] sm:$0xff]
  %v4550 = vld [vmem:[%s1398 + $0x18] sm:$0xff]
  %v4551 = vpack.c.bf16 %v4544, %v4544
  %4552 = vmatprep.subr.bf16.mxu0 %v3767
  %4553 = vmatpush1.bf16.msra.mxu0 %v3766
  %4554 = vmatprep.subr.bf16.mxu0 %v3763
  %4555 = vmatpush1.bf16.msra.mxu0 %v3762
  %4556 = vmatprep.subr.bf16.mxu0 %v3759
  %4557 = vmatpush1.bf16.msra.mxu0 %v3758
  %4558 = vmatprep.subr.bf16.mxu0 %v3755
  %4559 = vmatpush1.bf16.msra.mxu0 %v3754
  %4560 = vmatprep.subr.bf16.mxu0 %v3751
  %4561 = vmatpush1.bf16.msra.mxu0 %v3750
  %4562 = vmatprep.subr.bf16.mxu0 %v3747
  %4563 = vmatpush1.bf16.msra.mxu0 %v3746
  %4564 = vmatprep.subr.bf16.mxu0 %v3743
  %4565 = vmatpush1.bf16.msra.mxu0 %v3742
  %4566 = vmatprep.subr.bf16.mxu0 %v3739
  %4567 = vmatpush1.bf16.msra.mxu0 %v3738
  %4568 = vmatprep.subr.bf16.mxu0 0
  %4569 = vmatpush2.bf16.msra.mxu0 0
  %4570 = vmatprep.subr.bf16.mxu0 0
  %4571 = vmatpush2.bf16.msra.mxu0 0
  %4572 = vmatprep.subr.bf16.mxu0 0
  %4573 = vmatpush2.bf16.msra.mxu0 0
  %4574 = vmatprep.subr.bf16.mxu0 0
  %4575 = vmatpush2.bf16.msra.mxu0 0
  %4576 = vmatprep.subr.bf16.mxu0 0
  %4577 = vmatpush2.bf16.msra.mxu0 0
  %4578 = vmatprep.subr.bf16.mxu0 0
  %4579 = vmatpush2.bf16.msra.mxu0 0
  %4580 = vmatprep.subr.bf16.mxu0 0
  %4581 = vmatpush2.bf16.msra.mxu0 0
  %4582 = vmatprep.subr.bf16.mxu0 0
  %4583 = vmatpush2.bf16.msra.mxu0 0
  %4584 = vmatprep.mubr.bf16.mxu0 0
  %4585 = vmatmul.mubr.bf16.gmra.mxu0 %v4551
  %v4586 = vpop.f32.mrf.mxu0
  %v4587 = vadd.f32 0.0, %v4586
  %v4588 = vpop.f32.mrf.mxu0
  %v4589 = vadd.f32 0.0, %v4588
  %v4590 = vpop.f32.mrf.mxu0
  %v4591 = vpop.f32.mrf.mxu0
  %4592 = vdwg.mxu0
  %4593 = vmatprep.subr.bf16.mxu0 %v3769
  %4594 = vmatpush1.bf16.msra.mxu0 %v3768
  %4595 = vmatprep.subr.bf16.mxu0 %v3765
  %4596 = vmatpush1.bf16.msra.mxu0 %v3764
  %4597 = vmatprep.subr.bf16.mxu0 %v3761
  %4598 = vmatpush1.bf16.msra.mxu0 %v3760
  %4599 = vmatprep.subr.bf16.mxu0 %v3757
  %4600 = vmatpush1.bf16.msra.mxu0 %v3756
  %4601 = vmatprep.subr.bf16.mxu0 %v3753
  %4602 = vmatpush1.bf16.msra.mxu0 %v3752
  %4603 = vmatprep.subr.bf16.mxu0 %v3749
  %4604 = vmatpush1.bf16.msra.mxu0 %v3748
  %4605 = vmatprep.subr.bf16.mxu0 %v3745
  %4606 = vmatpush1.bf16.msra.mxu0 %v3744
  %4607 = vmatprep.subr.bf16.mxu0 %v3741
  %4608 = vmatpush1.bf16.msra.mxu0 %v3740
  %4609 = vmatprep.subr.bf16.mxu0 0
  %4610 = vmatpush2.bf16.msra.mxu0 0
  %4611 = vmatprep.subr.bf16.mxu0 0
  %4612 = vmatpush2.bf16.msra.mxu0 0
  %4613 = vmatprep.subr.bf16.mxu0 0
  %4614 = vmatpush2.bf16.msra.mxu0 0
  %4615 = vmatprep.subr.bf16.mxu0 0
  %4616 = vmatpush2.bf16.msra.mxu0 0
  %4617 = vmatprep.subr.bf16.mxu0 0
  %4618 = vmatpush2.bf16.msra.mxu0 0
  %4619 = vmatprep.subr.bf16.mxu0 0
  %4620 = vmatpush2.bf16.msra.mxu0 0
  %4621 = vmatprep.subr.bf16.mxu0 0
  %4622 = vmatpush2.bf16.msra.mxu0 0
  %4623 = vmatprep.subr.bf16.mxu0 0
  %4624 = vmatpush2.bf16.msra.mxu0 0
  %4625 = vmatprep.mubr.bf16.mxu0 0
  %4626 = vmatmul.mubr.bf16.gmra.mxu0 %v4551
  %v4627 = vpop.f32.mrf.mxu0
  %v4628 = vadd.f32 0.0, %v4627
  %v4629 = vpop.f32.mrf.mxu0
  %v4630 = vadd.f32 0.0, %v4629
  %v4631 = vpop.f32.mrf.mxu0
  %v4632 = vpop.f32.mrf.mxu0
  %4633 = vdwg.mxu0
  %v4634 = vadd.f32 %v4547, %v4587
  %v4635 = vadd.f32 %v4548, %v4589
  %v4636 = vadd.f32 %v4549, %v4628
  %v4637 = vadd.f32 %v4550, %v4630
  %v4638 = vxor.u32 %v4634, 2147483648
  %v4639 = vmul.f32 %v4638, 1.442695
  %v4640 = vpow.pop %v4639
  %v4641 = vadd.f32 %v4640, 1.0
  %v4642 = vrcp.pop %v4641
  %v4643 = vmul.f32 1.0, %v4642
  %v4644 = vxor.u32 %v4635, 2147483648
  %v4645 = vmul.f32 %v4644, 1.442695
  %v4646 = vpow.pop %v4645
  %v4647 = vadd.f32 %v4646, 1.0
  %v4648 = vrcp.pop %v4647
  %v4649 = vmul.f32 1.0, %v4648
  %v4650 = vtanh.pop %v4636
  %v4651 = vxor.u32 %v4637, 2147483648
  %v4652 = vmul.f32 %v4651, 1.442695
  %v4653 = vpow.pop %v4652
  %v4654 = vadd.f32 %v4653, 1.0
  %v4655 = vrcp.pop %v4654
  %v4656 = vmul.f32 1.0, %v4655
  %v4657 = vmul.f32 %v4649, %v4543
  %v4658 = vmul.f32 %v4643, %v4650
  %v4659 = vadd.f32 %v4657, %v4658
  %v4660 = vtanh.pop %v4659
  %v4661 = vmul.f32 %v4656, %v4660
  %vm4662 = vcmp.gt.s32.totalorder %v43, 6
  %v4663 = vsel %vm4662, 1, 0
  %4664 = vset.pattern.permute.xlu0 0
  %4665 = vperm.xlu0 %4664, %v4663
  %v4666 = vpop.permute.xlu0 %4665
  %vm4667 = vcmp.eq.s32.totalorder %v4666, 1
  %v4668 = vsel %vm4667, %v4659, %v4543
  %v4669 = vsel %vm4667, %v4661, %v4544
  %v4670 = vsel %vm4667, %v4661, 0.0
  %4671 = vst [vmem:[%s1523] sm:$0xff] %v4670
  %v4672 = vld [vmem:[%s1525] sm:$0xff]
  %v4673 = vld [vmem:[%s1525 + $0x8] sm:$0xff]
  %v4674 = vld [vmem:[%s1525 + $0x10] sm:$0xff]
  %v4675 = vld [vmem:[%s1525 + $0x18] sm:$0xff]
  %v4676 = vpack.c.bf16 %v4669, %v4669
  %4677 = vmatprep.subr.bf16.mxu0 %v3767
  %4678 = vmatpush1.bf16.msra.mxu0 %v3766
  %4679 = vmatprep.subr.bf16.mxu0 %v3763
  %4680 = vmatpush1.bf16.msra.mxu0 %v3762
  %4681 = vmatprep.subr.bf16.mxu0 %v3759
  %4682 = vmatpush1.bf16.msra.mxu0 %v3758
  %4683 = vmatprep.subr.bf16.mxu0 %v3755
  %4684 = vmatpush1.bf16.msra.mxu0 %v3754
  %4685 = vmatprep.subr.bf16.mxu0 %v3751
  %4686 = vmatpush1.bf16.msra.mxu0 %v3750
  %4687 = vmatprep.subr.bf16.mxu0 %v3747
  %4688 = vmatpush1.bf16.msra.mxu0 %v3746
  %4689 = vmatprep.subr.bf16.mxu0 %v3743
  %4690 = vmatpush1.bf16.msra.mxu0 %v3742
  %4691 = vmatprep.subr.bf16.mxu0 %v3739
  %4692 = vmatpush1.bf16.msra.mxu0 %v3738
  %4693 = vmatprep.subr.bf16.mxu0 0
  %4694 = vmatpush2.bf16.msra.mxu0 0
  %4695 = vmatprep.subr.bf16.mxu0 0
  %4696 = vmatpush2.bf16.msra.mxu0 0
  %4697 = vmatprep.subr.bf16.mxu0 0
  %4698 = vmatpush2.bf16.msra.mxu0 0
  %4699 = vmatprep.subr.bf16.mxu0 0
  %4700 = vmatpush2.bf16.msra.mxu0 0
  %4701 = vmatprep.subr.bf16.mxu0 0
  %4702 = vmatpush2.bf16.msra.mxu0 0
  %4703 = vmatprep.subr.bf16.mxu0 0
  %4704 = vmatpush2.bf16.msra.mxu0 0
  %4705 = vmatprep.subr.bf16.mxu0 0
  %4706 = vmatpush2.bf16.msra.mxu0 0
  %4707 = vmatprep.subr.bf16.mxu0 0
  %4708 = vmatpush2.bf16.msra.mxu0 0
  %4709 = vmatprep.mubr.bf16.mxu0 0
  %4710 = vmatmul.mubr.bf16.gmra.mxu0 %v4676
  %v4711 = vpop.f32.mrf.mxu0
  %v4712 = vadd.f32 0.0, %v4711
  %v4713 = vpop.f32.mrf.mxu0
  %v4714 = vadd.f32 0.0, %v4713
  %v4715 = vpop.f32.mrf.mxu0
  %v4716 = vpop.f32.mrf.mxu0
  %4717 = vdwg.mxu0
  %4718 = vmatprep.subr.bf16.mxu0 %v3769
  %4719 = vmatpush1.bf16.msra.mxu0 %v3768
  %4720 = vmatprep.subr.bf16.mxu0 %v3765
  %4721 = vmatpush1.bf16.msra.mxu0 %v3764
  %4722 = vmatprep.subr.bf16.mxu0 %v3761
  %4723 = vmatpush1.bf16.msra.mxu0 %v3760
  %4724 = vmatprep.subr.bf16.mxu0 %v3757
  %4725 = vmatpush1.bf16.msra.mxu0 %v3756
  %4726 = vmatprep.subr.bf16.mxu0 %v3753
  %4727 = vmatpush1.bf16.msra.mxu0 %v3752
  %4728 = vmatprep.subr.bf16.mxu0 %v3749
  %4729 = vmatpush1.bf16.msra.mxu0 %v3748
  %4730 = vmatprep.subr.bf16.mxu0 %v3745
  %4731 = vmatpush1.bf16.msra.mxu0 %v3744
  %4732 = vmatprep.subr.bf16.mxu0 %v3741
  %4733 = vmatpush1.bf16.msra.mxu0 %v3740
  %4734 = vmatprep.subr.bf16.mxu0 0
  %4735 = vmatpush2.bf16.msra.mxu0 0
  %4736 = vmatprep.subr.bf16.mxu0 0
  %4737 = vmatpush2.bf16.msra.mxu0 0
  %4738 = vmatprep.subr.bf16.mxu0 0
  %4739 = vmatpush2.bf16.msra.mxu0 0
  %4740 = vmatprep.subr.bf16.mxu0 0
  %4741 = vmatpush2.bf16.msra.mxu0 0
  %4742 = vmatprep.subr.bf16.mxu0 0
  %4743 = vmatpush2.bf16.msra.mxu0 0
  %4744 = vmatprep.subr.bf16.mxu0 0
  %4745 = vmatpush2.bf16.msra.mxu0 0
  %4746 = vmatprep.subr.bf16.mxu0 0
  %4747 = vmatpush2.bf16.msra.mxu0 0
  %4748 = vmatprep.subr.bf16.mxu0 0
  %4749 = vmatpush2.bf16.msra.mxu0 0
  %4750 = vmatprep.mubr.bf16.mxu0 0
  %4751 = vmatmul.mubr.bf16.gmra.mxu0 %v4676
  %v4752 = vpop.f32.mrf.mxu0
  %v4753 = vadd.f32 0.0, %v4752
  %v4754 = vpop.f32.mrf.mxu0
  %v4755 = vadd.f32 0.0, %v4754
  %v4756 = vpop.f32.mrf.mxu0
  %v4757 = vpop.f32.mrf.mxu0
  %4758 = vdwg.mxu0
  %v4759 = vadd.f32 %v4672, %v4712
  %v4760 = vadd.f32 %v4673, %v4714
  %v4761 = vadd.f32 %v4674, %v4753
  %v4762 = vadd.f32 %v4675, %v4755
  %v4763 = vxor.u32 %v4759, 2147483648
  %v4764 = vmul.f32 %v4763, 1.442695
  %v4765 = vpow.pop %v4764
  %v4766 = vadd.f32 %v4765, 1.0
  %v4767 = vrcp.pop %v4766
  %v4768 = vmul.f32 1.0, %v4767
  %v4769 = vxor.u32 %v4760, 2147483648
  %v4770 = vmul.f32 %v4769, 1.442695
  %v4771 = vpow.pop %v4770
  %v4772 = vadd.f32 %v4771, 1.0
  %v4773 = vrcp.pop %v4772
  %v4774 = vmul.f32 1.0, %v4773
  %v4775 = vtanh.pop %v4761
  %v4776 = vxor.u32 %v4762, 2147483648
  %v4777 = vmul.f32 %v4776, 1.442695
  %v4778 = vpow.pop %v4777
  %v4779 = vadd.f32 %v4778, 1.0
  %v4780 = vrcp.pop %v4779
  %v4781 = vmul.f32 1.0, %v4780
  %v4782 = vmul.f32 %v4774, %v4668
  %v4783 = vmul.f32 %v4768, %v4775
  %v4784 = vadd.f32 %v4782, %v4783
  %v4785 = vtanh.pop %v4784
  %v4786 = vmul.f32 %v4781, %v4785
  %vm4787 = vcmp.gt.s32.totalorder %v43, 7
  %v4788 = vsel %vm4787, 1, 0
  %4789 = vset.pattern.permute.xlu0 0
  %4790 = vperm.xlu0 %4789, %v4788
  %v4791 = vpop.permute.xlu0 %4790
  %vm4792 = vcmp.eq.s32.totalorder %v4791, 1
  %v4793 = vsel %vm4792, %v4786, 0.0
  %4794 = vst [vmem:[%s1650] sm:$0xff] %v4793
  %v4795 = vld [vmem:[#allocation2] sm:$0xff]
  %v4796 = vld [vmem:[#allocation2 + $0x8] sm:$0xff]
  %v4797 = vld [vmem:[#allocation2 + $0x10] sm:$0xff]
  %v4798 = vld [vmem:[#allocation2 + $0x18] sm:$0xff]
  %v4799 = vld [vmem:[#allocation2 + $0x20] sm:$0xff]
  %v4800 = vld [vmem:[#allocation2 + $0x28] sm:$0xff]
  %v4801 = vld [vmem:[#allocation2 + $0x30] sm:$0xff]
  %v4802 = vld [vmem:[#allocation2 + $0x38] sm:$0xff]
  %s4803 = scalar_lea.vmem %s7, 256
  %v4804 = vld [vmem:[%s4803] sm:$0xff]
  %v4805 = vld [vmem:[%s4803 + $0x8] sm:$0xff]
  %v4806 = vld [vmem:[%s4803 + $0x10] sm:$0xff]
  %v4807 = vld [vmem:[%s4803 + $0x18] sm:$0xff]
  %v4808 = vld [vmem:[%s4803 + $0x20] sm:$0xff]
  %v4809 = vld [vmem:[%s4803 + $0x28] sm:$0xff]
  %v4810 = vld [vmem:[%s4803 + $0x30] sm:$0xff]
  %v4811 = vld [vmem:[%s4803 + $0x38] sm:$0xff]
  %v4812 = vld [vmem:[%s4803 + $0x40] sm:$0xff]
  %v4813 = vld [vmem:[%s4803 + $0x48] sm:$0xff]
  %v4814 = vld [vmem:[%s4803 + $0x50] sm:$0xff]
  %v4815 = vld [vmem:[%s4803 + $0x58] sm:$0xff]
  %v4816 = vld [vmem:[%s4803 + $0x60] sm:$0xff]
  %v4817 = vld [vmem:[%s4803 + $0x68] sm:$0xff]
  %v4818 = vld [vmem:[%s4803 + $0x70] sm:$0xff]
  %v4819 = vld [vmem:[%s4803 + $0x78] sm:$0xff]
  %v4820 = vld [vmem:[%s4803 + $0x80] sm:$0xff]
  %v4821 = vld [vmem:[%s4803 + $0x88] sm:$0xff]
  %v4822 = vld [vmem:[%s4803 + $0x90] sm:$0xff]
  %v4823 = vld [vmem:[%s4803 + $0x98] sm:$0xff]
  %v4824 = vld [vmem:[%s4803 + $0xa0] sm:$0xff]
  %v4825 = vld [vmem:[%s4803 + $0xa8] sm:$0xff]
  %v4826 = vld [vmem:[%s4803 + $0xb0] sm:$0xff]
  %v4827 = vld [vmem:[%s4803 + $0xb8] sm:$0xff]
  %v4828 = vld [vmem:[%s4803 + $0xc0] sm:$0xff]
  %v4829 = vld [vmem:[%s4803 + $0xc8] sm:$0xff]
  %v4830 = vld [vmem:[%s4803 + $0xd0] sm:$0xff]
  %v4831 = vld [vmem:[%s4803 + $0xd8] sm:$0xff]
  %v4832 = vld [vmem:[%s4803 + $0xe0] sm:$0xff]
  %v4833 = vld [vmem:[%s4803 + $0xe8] sm:$0xff]
  %v4834 = vld [vmem:[%s4803 + $0xf0] sm:$0xff]
  %v4835 = vld [vmem:[%s4803 + $0xf8] sm:$0xff]
  %s4836 = scalar_lea.vmem %s8, 256
  %v4837 = vld [vmem:[%s4836] sm:$0xff]
  %v4838 = vld [vmem:[%s4836 + $0x8] sm:$0xff]
  %v4839 = vld [vmem:[%s4836 + $0x10] sm:$0xff]
  %v4840 = vld [vmem:[%s4836 + $0x18] sm:$0xff]
  %v4841 = vld [vmem:[%s4836 + $0x20] sm:$0xff]
  %v4842 = vld [vmem:[%s4836 + $0x28] sm:$0xff]
  %v4843 = vld [vmem:[%s4836 + $0x30] sm:$0xff]
  %v4844 = vld [vmem:[%s4836 + $0x38] sm:$0xff]
  %v4845 = vld [vmem:[%s4836 + $0x40] sm:$0xff]
  %v4846 = vld [vmem:[%s4836 + $0x48] sm:$0xff]
  %v4847 = vld [vmem:[%s4836 + $0x50] sm:$0xff]
  %v4848 = vld [vmem:[%s4836 + $0x58] sm:$0xff]
  %v4849 = vld [vmem:[%s4836 + $0x60] sm:$0xff]
  %v4850 = vld [vmem:[%s4836 + $0x68] sm:$0xff]
  %v4851 = vld [vmem:[%s4836 + $0x70] sm:$0xff]
  %v4852 = vld [vmem:[%s4836 + $0x78] sm:$0xff]
  %v4853 = vld [vmem:[%s4836 + $0x80] sm:$0xff]
  %v4854 = vld [vmem:[%s4836 + $0x88] sm:$0xff]
  %v4855 = vld [vmem:[%s4836 + $0x90] sm:$0xff]
  %v4856 = vld [vmem:[%s4836 + $0x98] sm:$0xff]
  %v4857 = vld [vmem:[%s4836 + $0xa0] sm:$0xff]
  %v4858 = vld [vmem:[%s4836 + $0xa8] sm:$0xff]
  %v4859 = vld [vmem:[%s4836 + $0xb0] sm:$0xff]
  %v4860 = vld [vmem:[%s4836 + $0xb8] sm:$0xff]
  %v4861 = vld [vmem:[%s4836 + $0xc0] sm:$0xff]
  %v4862 = vld [vmem:[%s4836 + $0xc8] sm:$0xff]
  %v4863 = vld [vmem:[%s4836 + $0xd0] sm:$0xff]
  %v4864 = vld [vmem:[%s4836 + $0xd8] sm:$0xff]
  %v4865 = vld [vmem:[%s4836 + $0xe0] sm:$0xff]
  %v4866 = vld [vmem:[%s4836 + $0xe8] sm:$0xff]
  %v4867 = vld [vmem:[%s4836 + $0xf0] sm:$0xff]
  %v4868 = vld [vmem:[%s4836 + $0xf8] sm:$0xff]
  %s4869 = scalar_lea.vmem %s9, 4
  %v4870 = vld [vmem:[%s4869] sm:$0xf]
  %v4871 = vpack.c.bf16 %v4796, %v4795
  %v4872 = vpack.c.bf16 %v4798, %v4797
  %v4873 = vpack.c.bf16 %v4800, %v4799
  %v4874 = vpack.c.bf16 %v4802, %v4801
  %v4876 = vlaneseq
  %v4877 = vshrl.u32 %v4876, 7
  %v4878 = vsub.s32 0, %v4877
  %v4879 = vrot.slane %v4870, %v4878
  %v4880 = vlaneseq
  %v4881 = vshrl.u32 %v4880, 7
  %v4882 = vsub.s32 1, %v4881
  %v4883 = vrot.slane %v4870, %v4882
  %v4884 = vlaneseq
  %v4885 = vshrl.u32 %v4884, 7
  %v4886 = vsub.s32 2, %v4885
  %v4887 = vrot.slane %v4870, %v4886
  %v4888 = vlaneseq
  %v4889 = vshrl.u32 %v4888, 7
  %v4890 = vsub.s32 3, %v4889
  %v4891 = vrot.slane %v4870, %v4890
  %v4928 = vunpack.c.l.b16 %v4804
  %v4929 = vunpack.c.h.b16 %v4804
  %v4930 = vunpack.c.l.b16 %v4805
  %v4931 = vunpack.c.h.b16 %v4805
  %v4932 = vunpack.c.l.b16 %v4806
  %v4933 = vunpack.c.h.b16 %v4806
  %v4934 = vunpack.c.l.b16 %v4807
  %v4935 = vunpack.c.h.b16 %v4807
  %v4936 = vunpack.c.l.b16 %v4808
  %v4937 = vunpack.c.h.b16 %v4808
  %v4938 = vunpack.c.l.b16 %v4809
  %v4939 = vunpack.c.h.b16 %v4809
  %v4940 = vunpack.c.l.b16 %v4810
  %v4941 = vunpack.c.h.b16 %v4810
  %v4942 = vunpack.c.l.b16 %v4811
  %v4943 = vunpack.c.h.b16 %v4811
  %v4944 = vunpack.c.l.b16 %v4812
  %v4945 = vunpack.c.h.b16 %v4812
  %v4946 = vunpack.c.l.b16 %v4813
  %v4947 = vunpack.c.h.b16 %v4813
  %v4948 = vunpack.c.l.b16 %v4814
  %v4949 = vunpack.c.h.b16 %v4814
  %v4950 = vunpack.c.l.b16 %v4815
  %v4951 = vunpack.c.h.b16 %v4815
  %v4952 = vunpack.c.l.b16 %v4816
  %v4953 = vunpack.c.h.b16 %v4816
  %v4954 = vunpack.c.l.b16 %v4817
  %v4955 = vunpack.c.h.b16 %v4817
  %v4956 = vunpack.c.l.b16 %v4818
  %v4957 = vunpack.c.h.b16 %v4818
  %v4958 = vunpack.c.l.b16 %v4819
  %v4959 = vunpack.c.h.b16 %v4819
  %v4960 = vunpack.c.l.b16 %v4820
  %v4961 = vunpack.c.h.b16 %v4820
  %v4962 = vunpack.c.l.b16 %v4821
  %v4963 = vunpack.c.h.b16 %v4821
  %v4964 = vunpack.c.l.b16 %v4822
  %v4965 = vunpack.c.h.b16 %v4822
  %v4966 = vunpack.c.l.b16 %v4823
  %v4967 = vunpack.c.h.b16 %v4823
  %v4968 = vunpack.c.l.b16 %v4824
  %v4969 = vunpack.c.h.b16 %v4824
  %v4970 = vunpack.c.l.b16 %v4825
  %v4971 = vunpack.c.h.b16 %v4825
  %v4972 = vunpack.c.l.b16 %v4826
  %v4973 = vunpack.c.h.b16 %v4826
  %v4974 = vunpack.c.l.b16 %v4827
  %v4975 = vunpack.c.h.b16 %v4827
  %v4976 = vunpack.c.l.b16 %v4828
  %v4977 = vunpack.c.h.b16 %v4828
  %v4978 = vunpack.c.l.b16 %v4829
  %v4979 = vunpack.c.h.b16 %v4829
  %v4980 = vunpack.c.l.b16 %v4830
  %v4981 = vunpack.c.h.b16 %v4830
  %v4982 = vunpack.c.l.b16 %v4831
  %v4983 = vunpack.c.h.b16 %v4831
  %v4984 = vunpack.c.l.b16 %v4832
  %v4985 = vunpack.c.h.b16 %v4832
  %v4986 = vunpack.c.l.b16 %v4833
  %v4987 = vunpack.c.h.b16 %v4833
  %v4988 = vunpack.c.l.b16 %v4834
  %v4989 = vunpack.c.h.b16 %v4834
  %v4990 = vunpack.c.l.b16 %v4835
  %v4991 = vunpack.c.h.b16 %v4835
  %v4992 = vpack.c.b16 %v4932, %v4928
  %v4993 = vpack.c.b16 %v4933, %v4929
  %v4994 = vpack.c.b16 %v4934, %v4930
  %v4995 = vpack.c.b16 %v4935, %v4931
  %v4996 = vpack.c.b16 %v4940, %v4936
  %v4997 = vpack.c.b16 %v4941, %v4937
  %v4998 = vpack.c.b16 %v4942, %v4938
  %v4999 = vpack.c.b16 %v4943, %v4939
  %v5000 = vpack.c.b16 %v4948, %v4944
  %v5001 = vpack.c.b16 %v4949, %v4945
  %v5002 = vpack.c.b16 %v4950, %v4946
  %v5003 = vpack.c.b16 %v4951, %v4947
  %v5004 = vpack.c.b16 %v4956, %v4952
  %v5005 = vpack.c.b16 %v4957, %v4953
  %v5006 = vpack.c.b16 %v4958, %v4954
  %v5007 = vpack.c.b16 %v4959, %v4955
  %v5008 = vpack.c.b16 %v4964, %v4960
  %v5009 = vpack.c.b16 %v4965, %v4961
  %v5010 = vpack.c.b16 %v4966, %v4962
  %v5011 = vpack.c.b16 %v4967, %v4963
  %v5012 = vpack.c.b16 %v4972, %v4968
  %v5013 = vpack.c.b16 %v4973, %v4969
  %v5014 = vpack.c.b16 %v4974, %v4970
  %v5015 = vpack.c.b16 %v4975, %v4971
  %v5016 = vpack.c.b16 %v4980, %v4976
  %v5017 = vpack.c.b16 %v4981, %v4977
  %v5018 = vpack.c.b16 %v4982, %v4978
  %v5019 = vpack.c.b16 %v4983, %v4979
  %v5020 = vpack.c.b16 %v4988, %v4984
  %v5021 = vpack.c.b16 %v4989, %v4985
  %v5022 = vpack.c.b16 %v4990, %v4986
  %v5023 = vpack.c.b16 %v4991, %v4987
  %5056 = vmatprep.subr.bf16.mxu0 %v5021
  %5057 = vmatpush1.bf16.msra.mxu0 %v5020
  %5058 = vmatprep.subr.bf16.mxu0 %v5017
  %5059 = vmatpush1.bf16.msra.mxu0 %v5016
  %5060 = vmatprep.subr.bf16.mxu0 %v5013
  %5061 = vmatpush1.bf16.msra.mxu0 %v5012
  %5062 = vmatprep.subr.bf16.mxu0 %v5009
  %5063 = vmatpush1.bf16.msra.mxu0 %v5008
  %5064 = vmatprep.subr.bf16.mxu0 %v5005
  %5065 = vmatpush1.bf16.msra.mxu0 %v5004
  %5066 = vmatprep.subr.bf16.mxu0 %v5001
  %5067 = vmatpush1.bf16.msra.mxu0 %v5000
  %5068 = vmatprep.subr.bf16.mxu0 %v4997
  %5069 = vmatpush1.bf16.msra.mxu0 %v4996
  %5070 = vmatprep.subr.bf16.mxu0 %v4993
  %5071 = vmatpush1.bf16.msra.mxu0 %v4992
  %5072 = vmatprep.subr.bf16.mxu0 0
  %5073 = vmatpush2.bf16.msra.mxu0 0
  %5074 = vmatprep.subr.bf16.mxu0 0
  %5075 = vmatpush2.bf16.msra.mxu0 0
  %5076 = vmatprep.subr.bf16.mxu0 0
  %5077 = vmatpush2.bf16.msra.mxu0 0
  %5078 = vmatprep.subr.bf16.mxu0 0
  %5079 = vmatpush2.bf16.msra.mxu0 0
  %5080 = vmatprep.subr.bf16.mxu0 0
  %5081 = vmatpush2.bf16.msra.mxu0 0
  %5082 = vmatprep.subr.bf16.mxu0 0
  %5083 = vmatpush2.bf16.msra.mxu0 0
  %5084 = vmatprep.subr.bf16.mxu0 0
  %5085 = vmatpush2.bf16.msra.mxu0 0
  %5086 = vmatprep.subr.bf16.mxu0 0
  %5087 = vmatpush2.bf16.msra.mxu0 0
  %5088 = vmatprep.mubr.bf16.mxu0 0
  %5089 = vmatmul.mubr.bf16.gmra.mxu0 %v4871
  %v5090 = vpop.f32.mrf.mxu0
  %v5091 = vadd.f32 %v4879, %v5090
  %v5092 = vpop.f32.mrf.mxu0
  %v5093 = vadd.f32 %v4883, %v5092
  %v5094 = vpop.f32.mrf.mxu0
  %v5095 = vadd.f32 %v4879, %v5094
  %v5096 = vpop.f32.mrf.mxu0
  %v5097 = vadd.f32 %v4883, %v5096
  %5098 = vmatprep.mubr.bf16.mxu0 0
  %5099 = vmatmul.mubr.bf16.gmra.mxu0 %v4872
  %v5100 = vpop.f32.mrf.mxu0
  %v5101 = vadd.f32 %v4879, %v5100
  %v5102 = vpop.f32.mrf.mxu0
  %v5103 = vadd.f32 %v4883, %v5102
  %v5104 = vpop.f32.mrf.mxu0
  %v5105 = vadd.f32 %v4879, %v5104
  %v5106 = vpop.f32.mrf.mxu0
  %v5107 = vadd.f32 %v4883, %v5106
  %5108 = vmatprep.mubr.bf16.mxu0 0
  %5109 = vmatmul.mubr.bf16.gmra.mxu0 %v4873
  %v5110 = vpop.f32.mrf.mxu0
  %v5111 = vadd.f32 %v4879, %v5110
  %v5112 = vpop.f32.mrf.mxu0
  %v5113 = vadd.f32 %v4883, %v5112
  %v5114 = vpop.f32.mrf.mxu0
  %v5115 = vadd.f32 %v4879, %v5114
  %v5116 = vpop.f32.mrf.mxu0
  %v5117 = vadd.f32 %v4883, %v5116
  %5118 = vmatprep.mubr.bf16.mxu0 0
  %5119 = vmatmul.mubr.bf16.gmra.mxu0 %v4874
  %v5120 = vpop.f32.mrf.mxu0
  %v5121 = vadd.f32 %v4879, %v5120
  %v5122 = vpop.f32.mrf.mxu0
  %v5123 = vadd.f32 %v4883, %v5122
  %v5124 = vpop.f32.mrf.mxu0
  %v5125 = vadd.f32 %v4879, %v5124
  %v5126 = vpop.f32.mrf.mxu0
  %v5127 = vadd.f32 %v4883, %v5126
  %5128 = vdwg.mxu0
  %5129 = vmatprep.subr.bf16.mxu0 %v5023
  %5130 = vmatpush1.bf16.msra.mxu0 %v5022
  %5131 = vmatprep.subr.bf16.mxu0 %v5019
  %5132 = vmatpush1.bf16.msra.mxu0 %v5018
  %5133 = vmatprep.subr.bf16.mxu0 %v5015
  %5134 = vmatpush1.bf16.msra.mxu0 %v5014
  %5135 = vmatprep.subr.bf16.mxu0 %v5011
  %5136 = vmatpush1.bf16.msra.mxu0 %v5010
  %5137 = vmatprep.subr.bf16.mxu0 %v5007
  %5138 = vmatpush1.bf16.msra.mxu0 %v5006
  %5139 = vmatprep.subr.bf16.mxu0 %v5003
  %5140 = vmatpush1.bf16.msra.mxu0 %v5002
  %5141 = vmatprep.subr.bf16.mxu0 %v4999
  %5142 = vmatpush1.bf16.msra.mxu0 %v4998
  %5143 = vmatprep.subr.bf16.mxu0 %v4995
  %5144 = vmatpush1.bf16.msra.mxu0 %v4994
  %5145 = vmatprep.subr.bf16.mxu0 0
  %5146 = vmatpush2.bf16.msra.mxu0 0
  %5147 = vmatprep.subr.bf16.mxu0 0
  %5148 = vmatpush2.bf16.msra.mxu0 0
  %5149 = vmatprep.subr.bf16.mxu0 0
  %5150 = vmatpush2.bf16.msra.mxu0 0
  %5151 = vmatprep.subr.bf16.mxu0 0
  %5152 = vmatpush2.bf16.msra.mxu0 0
  %5153 = vmatprep.subr.bf16.mxu0 0
  %5154 = vmatpush2.bf16.msra.mxu0 0
  %5155 = vmatprep.subr.bf16.mxu0 0
  %5156 = vmatpush2.bf16.msra.mxu0 0
  %5157 = vmatprep.subr.bf16.mxu0 0
  %5158 = vmatpush2.bf16.msra.mxu0 0
  %5159 = vmatprep.subr.bf16.mxu0 0
  %5160 = vmatpush2.bf16.msra.mxu0 0
  %5161 = vmatprep.mubr.bf16.mxu0 0
  %5162 = vmatmul.mubr.bf16.gmra.mxu0 %v4871
  %v5163 = vpop.f32.mrf.mxu0
  %v5164 = vadd.f32 %v4887, %v5163
  %v5165 = vpop.f32.mrf.mxu0
  %v5166 = vadd.f32 %v4891, %v5165
  %v5167 = vpop.f32.mrf.mxu0
  %v5168 = vadd.f32 %v4887, %v5167
  %v5169 = vpop.f32.mrf.mxu0
  %v5170 = vadd.f32 %v4891, %v5169
  %5171 = vmatprep.mubr.bf16.mxu0 0
  %5172 = vmatmul.mubr.bf16.gmra.mxu0 %v4872
  %v5173 = vpop.f32.mrf.mxu0
  %v5174 = vadd.f32 %v4887, %v5173
  %v5175 = vpop.f32.mrf.mxu0
  %v5176 = vadd.f32 %v4891, %v5175
  %v5177 = vpop.f32.mrf.mxu0
  %v5178 = vadd.f32 %v4887, %v5177
  %v5179 = vpop.f32.mrf.mxu0
  %v5180 = vadd.f32 %v4891, %v5179
  %5181 = vmatprep.mubr.bf16.mxu0 0
  %5182 = vmatmul.mubr.bf16.gmra.mxu0 %v4873
  %v5183 = vpop.f32.mrf.mxu0
  %v5184 = vadd.f32 %v4887, %v5183
  %v5185 = vpop.f32.mrf.mxu0
  %v5186 = vadd.f32 %v4891, %v5185
  %v5187 = vpop.f32.mrf.mxu0
  %v5188 = vadd.f32 %v4887, %v5187
  %v5189 = vpop.f32.mrf.mxu0
  %v5190 = vadd.f32 %v4891, %v5189
  %5191 = vmatprep.mubr.bf16.mxu0 0
  %5192 = vmatmul.mubr.bf16.gmra.mxu0 %v4874
  %v5193 = vpop.f32.mrf.mxu0
  %v5194 = vadd.f32 %v4887, %v5193
  %v5195 = vpop.f32.mrf.mxu0
  %v5196 = vadd.f32 %v4891, %v5195
  %v5197 = vpop.f32.mrf.mxu0
  %v5198 = vadd.f32 %v4887, %v5197
  %v5199 = vpop.f32.mrf.mxu0
  %v5200 = vadd.f32 %v4891, %v5199
  %5201 = vdwg.mxu0
  %5202 = vst [vmem:[#allocation3] sm:$0xff] %v5091
  %5203 = vst [vmem:[#allocation3 + $0x8] sm:$0xff] %v5093
  %5204 = vst [vmem:[#allocation3 + $0x10] sm:$0xff] %v5164
  %5205 = vst [vmem:[#allocation3 + $0x18] sm:$0xff] %v5166
  %5206 = vst [vmem:[#allocation3 + $0x20] sm:$0xff] %v5095
  %5207 = vst [vmem:[#allocation3 + $0x28] sm:$0xff] %v5097
  %5208 = vst [vmem:[#allocation3 + $0x30] sm:$0xff] %v5168
  %5209 = vst [vmem:[#allocation3 + $0x38] sm:$0xff] %v5170
  %5210 = vst [vmem:[#allocation3 + $0x40] sm:$0xff] %v5101
  %5211 = vst [vmem:[#allocation3 + $0x48] sm:$0xff] %v5103
  %5212 = vst [vmem:[#allocation3 + $0x50] sm:$0xff] %v5174
  %5213 = vst [vmem:[#allocation3 + $0x58] sm:$0xff] %v5176
  %5214 = vst [vmem:[#allocation3 + $0x60] sm:$0xff] %v5105
  %5215 = vst [vmem:[#allocation3 + $0x68] sm:$0xff] %v5107
  %5216 = vst [vmem:[#allocation3 + $0x70] sm:$0xff] %v5178
  %5217 = vst [vmem:[#allocation3 + $0x78] sm:$0xff] %v5180
  %5218 = vst [vmem:[#allocation3 + $0x80] sm:$0xff] %v5111
  %5219 = vst [vmem:[#allocation3 + $0x88] sm:$0xff] %v5113
  %5220 = vst [vmem:[#allocation3 + $0x90] sm:$0xff] %v5184
  %5221 = vst [vmem:[#allocation3 + $0x98] sm:$0xff] %v5186
  %5222 = vst [vmem:[#allocation3 + $0xa0] sm:$0xff] %v5115
  %5223 = vst [vmem:[#allocation3 + $0xa8] sm:$0xff] %v5117
  %5224 = vst [vmem:[#allocation3 + $0xb0] sm:$0xff] %v5188
  %5225 = vst [vmem:[#allocation3 + $0xb8] sm:$0xff] %v5190
  %5226 = vst [vmem:[#allocation3 + $0xc0] sm:$0xff] %v5121
  %5227 = vst [vmem:[#allocation3 + $0xc8] sm:$0xff] %v5123
  %5228 = vst [vmem:[#allocation3 + $0xd0] sm:$0xff] %v5194
  %5229 = vst [vmem:[#allocation3 + $0xd8] sm:$0xff] %v5196
  %5230 = vst [vmem:[#allocation3 + $0xe0] sm:$0xff] %v5125
  %5231 = vst [vmem:[#allocation3 + $0xe8] sm:$0xff] %v5127
  %5232 = vst [vmem:[#allocation3 + $0xf0] sm:$0xff] %v5198
  %5233 = vst [vmem:[#allocation3 + $0xf8] sm:$0xff] %v5200
  %v5234 = vld [vmem:[#allocation3] sm:$0xff]
  %v5235 = vld [vmem:[#allocation3 + $0x8] sm:$0xff]
  %v5236 = vld [vmem:[#allocation3 + $0x10] sm:$0xff]
  %v5237 = vld [vmem:[#allocation3 + $0x18] sm:$0xff]
  %v5238 = vpack.c.bf16 %v3198, %v3198
  %v5271 = vunpack.c.l.b16 %v4837
  %v5272 = vunpack.c.h.b16 %v4837
  %v5273 = vunpack.c.l.b16 %v4838
  %v5274 = vunpack.c.h.b16 %v4838
  %v5275 = vunpack.c.l.b16 %v4839
  %v5276 = vunpack.c.h.b16 %v4839
  %v5277 = vunpack.c.l.b16 %v4840
  %v5278 = vunpack.c.h.b16 %v4840
  %v5279 = vunpack.c.l.b16 %v4841
  %v5280 = vunpack.c.h.b16 %v4841
  %v5281 = vunpack.c.l.b16 %v4842
  %v5282 = vunpack.c.h.b16 %v4842
  %v5283 = vunpack.c.l.b16 %v4843
  %v5284 = vunpack.c.h.b16 %v4843
  %v5285 = vunpack.c.l.b16 %v4844
  %v5286 = vunpack.c.h.b16 %v4844
  %v5287 = vunpack.c.l.b16 %v4845
  %v5288 = vunpack.c.h.b16 %v4845
  %v5289 = vunpack.c.l.b16 %v4846
  %v5290 = vunpack.c.h.b16 %v4846
  %v5291 = vunpack.c.l.b16 %v4847
  %v5292 = vunpack.c.h.b16 %v4847
  %v5293 = vunpack.c.l.b16 %v4848
  %v5294 = vunpack.c.h.b16 %v4848
  %v5295 = vunpack.c.l.b16 %v4849
  %v5296 = vunpack.c.h.b16 %v4849
  %v5297 = vunpack.c.l.b16 %v4850
  %v5298 = vunpack.c.h.b16 %v4850
  %v5299 = vunpack.c.l.b16 %v4851
  %v5300 = vunpack.c.h.b16 %v4851
  %v5301 = vunpack.c.l.b16 %v4852
  %v5302 = vunpack.c.h.b16 %v4852
  %v5303 = vunpack.c.l.b16 %v4853
  %v5304 = vunpack.c.h.b16 %v4853
  %v5305 = vunpack.c.l.b16 %v4854
  %v5306 = vunpack.c.h.b16 %v4854
  %v5307 = vunpack.c.l.b16 %v4855
  %v5308 = vunpack.c.h.b16 %v4855
  %v5309 = vunpack.c.l.b16 %v4856
  %v5310 = vunpack.c.h.b16 %v4856
  %v5311 = vunpack.c.l.b16 %v4857
  %v5312 = vunpack.c.h.b16 %v4857
  %v5313 = vunpack.c.l.b16 %v4858
  %v5314 = vunpack.c.h.b16 %v4858
  %v5315 = vunpack.c.l.b16 %v4859
  %v5316 = vunpack.c.h.b16 %v4859
  %v5317 = vunpack.c.l.b16 %v4860
  %v5318 = vunpack.c.h.b16 %v4860
  %v5319 = vunpack.c.l.b16 %v4861
  %v5320 = vunpack.c.h.b16 %v4861
  %v5321 = vunpack.c.l.b16 %v4862
  %v5322 = vunpack.c.h.b16 %v4862
  %v5323 = vunpack.c.l.b16 %v4863
  %v5324 = vunpack.c.h.b16 %v4863
  %v5325 = vunpack.c.l.b16 %v4864
  %v5326 = vunpack.c.h.b16 %v4864
  %v5327 = vunpack.c.l.b16 %v4865
  %v5328 = vunpack.c.h.b16 %v4865
  %v5329 = vunpack.c.l.b16 %v4866
  %v5330 = vunpack.c.h.b16 %v4866
  %v5331 = vunpack.c.l.b16 %v4867
  %v5332 = vunpack.c.h.b16 %v4867
  %v5333 = vunpack.c.l.b16 %v4868
  %v5334 = vunpack.c.h.b16 %v4868
  %v5335 = vpack.c.b16 %v5275, %v5271
  %v5336 = vpack.c.b16 %v5276, %v5272
  %v5337 = vpack.c.b16 %v5277, %v5273
  %v5338 = vpack.c.b16 %v5278, %v5274
  %v5339 = vpack.c.b16 %v5283, %v5279
  %v5340 = vpack.c.b16 %v5284, %v5280
  %v5341 = vpack.c.b16 %v5285, %v5281
  %v5342 = vpack.c.b16 %v5286, %v5282
  %v5343 = vpack.c.b16 %v5291, %v5287
  %v5344 = vpack.c.b16 %v5292, %v5288
  %v5345 = vpack.c.b16 %v5293, %v5289
  %v5346 = vpack.c.b16 %v5294, %v5290
  %v5347 = vpack.c.b16 %v5299, %v5295
  %v5348 = vpack.c.b16 %v5300, %v5296
  %v5349 = vpack.c.b16 %v5301, %v5297
  %v5350 = vpack.c.b16 %v5302, %v5298
  %v5351 = vpack.c.b16 %v5307, %v5303
  %v5352 = vpack.c.b16 %v5308, %v5304
  %v5353 = vpack.c.b16 %v5309, %v5305
  %v5354 = vpack.c.b16 %v5310, %v5306
  %v5355 = vpack.c.b16 %v5315, %v5311
  %v5356 = vpack.c.b16 %v5316, %v5312
  %v5357 = vpack.c.b16 %v5317, %v5313
  %v5358 = vpack.c.b16 %v5318, %v5314
  %v5359 = vpack.c.b16 %v5323, %v5319
  %v5360 = vpack.c.b16 %v5324, %v5320
  %v5361 = vpack.c.b16 %v5325, %v5321
  %v5362 = vpack.c.b16 %v5326, %v5322
  %v5363 = vpack.c.b16 %v5331, %v5327
  %v5364 = vpack.c.b16 %v5332, %v5328
  %v5365 = vpack.c.b16 %v5333, %v5329
  %v5366 = vpack.c.b16 %v5334, %v5330
  %5399 = vmatprep.subr.bf16.mxu0 %v5364
  %5400 = vmatpush1.bf16.msra.mxu0 %v5363
  %5401 = vmatprep.subr.bf16.mxu0 %v5360
  %5402 = vmatpush1.bf16.msra.mxu0 %v5359
  %5403 = vmatprep.subr.bf16.mxu0 %v5356
  %5404 = vmatpush1.bf16.msra.mxu0 %v5355
  %5405 = vmatprep.subr.bf16.mxu0 %v5352
  %5406 = vmatpush1.bf16.msra.mxu0 %v5351
  %5407 = vmatprep.subr.bf16.mxu0 %v5348
  %5408 = vmatpush1.bf16.msra.mxu0 %v5347
  %5409 = vmatprep.subr.bf16.mxu0 %v5344
  %5410 = vmatpush1.bf16.msra.mxu0 %v5343
  %5411 = vmatprep.subr.bf16.mxu0 %v5340
  %5412 = vmatpush1.bf16.msra.mxu0 %v5339
  %5413 = vmatprep.subr.bf16.mxu0 %v5336
  %5414 = vmatpush1.bf16.msra.mxu0 %v5335
  %5415 = vmatprep.subr.bf16.mxu0 0
  %5416 = vmatpush2.bf16.msra.mxu0 0
  %5417 = vmatprep.subr.bf16.mxu0 0
  %5418 = vmatpush2.bf16.msra.mxu0 0
  %5419 = vmatprep.subr.bf16.mxu0 0
  %5420 = vmatpush2.bf16.msra.mxu0 0
  %5421 = vmatprep.subr.bf16.mxu0 0
  %5422 = vmatpush2.bf16.msra.mxu0 0
  %5423 = vmatprep.subr.bf16.mxu0 0
  %5424 = vmatpush2.bf16.msra.mxu0 0
  %5425 = vmatprep.subr.bf16.mxu0 0
  %5426 = vmatpush2.bf16.msra.mxu0 0
  %5427 = vmatprep.subr.bf16.mxu0 0
  %5428 = vmatpush2.bf16.msra.mxu0 0
  %5429 = vmatprep.subr.bf16.mxu0 0
  %5430 = vmatpush2.bf16.msra.mxu0 0
  %5431 = vmatprep.mubr.bf16.mxu0 0
  %5432 = vmatmul.mubr.bf16.gmra.mxu0 %v5238
  %v5433 = vpop.f32.mrf.mxu0
  %v5434 = vadd.f32 0.0, %v5433
  %v5435 = vpop.f32.mrf.mxu0
  %v5436 = vadd.f32 0.0, %v5435
  %v5437 = vpop.f32.mrf.mxu0
  %v5438 = vpop.f32.mrf.mxu0
  %5439 = vdwg.mxu0
  %5440 = vmatprep.subr.bf16.mxu0 %v5366
  %5441 = vmatpush1.bf16.msra.mxu0 %v5365
  %5442 = vmatprep.subr.bf16.mxu0 %v5362
  %5443 = vmatpush1.bf16.msra.mxu0 %v5361
  %5444 = vmatprep.subr.bf16.mxu0 %v5358
  %5445 = vmatpush1.bf16.msra.mxu0 %v5357
  %5446 = vmatprep.subr.bf16.mxu0 %v5354
  %5447 = vmatpush1.bf16.msra.mxu0 %v5353
  %5448 = vmatprep.subr.bf16.mxu0 %v5350
  %5449 = vmatpush1.bf16.msra.mxu0 %v5349
  %5450 = vmatprep.subr.bf16.mxu0 %v5346
  %5451 = vmatpush1.bf16.msra.mxu0 %v5345
  %5452 = vmatprep.subr.bf16.mxu0 %v5342
  %5453 = vmatpush1.bf16.msra.mxu0 %v5341
  %5454 = vmatprep.subr.bf16.mxu0 %v5338
  %5455 = vmatpush1.bf16.msra.mxu0 %v5337
  %5456 = vmatprep.subr.bf16.mxu0 0
  %5457 = vmatpush2.bf16.msra.mxu0 0
  %5458 = vmatprep.subr.bf16.mxu0 0
  %5459 = vmatpush2.bf16.msra.mxu0 0
  %5460 = vmatprep.subr.bf16.mxu0 0
  %5461 = vmatpush2.bf16.msra.mxu0 0
  %5462 = vmatprep.subr.bf16.mxu0 0
  %5463 = vmatpush2.bf16.msra.mxu0 0
  %5464 = vmatprep.subr.bf16.mxu0 0
  %5465 = vmatpush2.bf16.msra.mxu0 0
  %5466 = vmatprep.subr.bf16.mxu0 0
  %5467 = vmatpush2.bf16.msra.mxu0 0
  %5468 = vmatprep.subr.bf16.mxu0 0
  %5469 = vmatpush2.bf16.msra.mxu0 0
  %5470 = vmatprep.subr.bf16.mxu0 0
  %5471 = vmatpush2.bf16.msra.mxu0 0
  %5472 = vmatprep.mubr.bf16.mxu0 0
  %5473 = vmatmul.mubr.bf16.gmra.mxu0 %v5238
  %v5474 = vpop.f32.mrf.mxu0
  %v5475 = vadd.f32 0.0, %v5474
  %v5476 = vpop.f32.mrf.mxu0
  %v5477 = vadd.f32 0.0, %v5476
  %v5478 = vpop.f32.mrf.mxu0
  %v5479 = vpop.f32.mrf.mxu0
  %5480 = vdwg.mxu0
  %v5481 = vadd.f32 %v5234, %v5434
  %v5482 = vadd.f32 %v5235, %v5436
  %v5483 = vadd.f32 %v5236, %v5475
  %v5484 = vadd.f32 %v5237, %v5477
  %v5485 = vxor.u32 %v5481, 2147483648
  %v5486 = vmul.f32 %v5485, 1.442695
  %v5487 = vpow.pop %v5486
  %v5488 = vadd.f32 %v5487, 1.0
  %v5489 = vrcp.pop %v5488
  %v5490 = vmul.f32 1.0, %v5489
  %v5491 = vxor.u32 %v5482, 2147483648
  %v5492 = vmul.f32 %v5491, 1.442695
  %v5493 = vpow.pop %v5492
  %v5494 = vadd.f32 %v5493, 1.0
  %v5495 = vrcp.pop %v5494
  %v5496 = vmul.f32 1.0, %v5495
  %v5497 = vtanh.pop %v5483
  %v5498 = vxor.u32 %v5484, 2147483648
  %v5499 = vmul.f32 %v5498, 1.442695
  %v5500 = vpow.pop %v5499
  %v5501 = vadd.f32 %v5500, 1.0
  %v5502 = vrcp.pop %v5501
  %v5503 = vmul.f32 1.0, %v5502
  %v5504 = vmul.f32 %v5496, %v3197
  %v5505 = vmul.f32 %v5490, %v5497
  %v5506 = vadd.f32 %v5504, %v5505
  %v5507 = vtanh.pop %v5506
  %v5508 = vmul.f32 %v5503, %v5507
  %v5509 = vsel %vm3917, %v5506, %v3197
  %v5510 = vsel %vm3917, %v5508, %v3198
  %v5511 = vsel %vm3917, %v5508, 0.0
  %5512 = vst [vmem:[#allocation2] sm:$0xff] %v5511
  %v5513 = vld [vmem:[%s763] sm:$0xff]
  %v5514 = vld [vmem:[%s763 + $0x8] sm:$0xff]
  %v5515 = vld [vmem:[%s763 + $0x10] sm:$0xff]
  %v5516 = vld [vmem:[%s763 + $0x18] sm:$0xff]
  %v5517 = vpack.c.bf16 %v5510, %v5510
  %5518 = vmatprep.subr.bf16.mxu0 %v5364
  %5519 = vmatpush1.bf16.msra.mxu0 %v5363
  %5520 = vmatprep.subr.bf16.mxu0 %v5360
  %5521 = vmatpush1.bf16.msra.mxu0 %v5359
  %5522 = vmatprep.subr.bf16.mxu0 %v5356
  %5523 = vmatpush1.bf16.msra.mxu0 %v5355
  %5524 = vmatprep.subr.bf16.mxu0 %v5352
  %5525 = vmatpush1.bf16.msra.mxu0 %v5351
  %5526 = vmatprep.subr.bf16.mxu0 %v5348
  %5527 = vmatpush1.bf16.msra.mxu0 %v5347
  %5528 = vmatprep.subr.bf16.mxu0 %v5344
  %5529 = vmatpush1.bf16.msra.mxu0 %v5343
  %5530 = vmatprep.subr.bf16.mxu0 %v5340
  %5531 = vmatpush1.bf16.msra.mxu0 %v5339
  %5532 = vmatprep.subr.bf16.mxu0 %v5336
  %5533 = vmatpush1.bf16.msra.mxu0 %v5335
  %5534 = vmatprep.subr.bf16.mxu0 0
  %5535 = vmatpush2.bf16.msra.mxu0 0
  %5536 = vmatprep.subr.bf16.mxu0 0
  %5537 = vmatpush2.bf16.msra.mxu0 0
  %5538 = vmatprep.subr.bf16.mxu0 0
  %5539 = vmatpush2.bf16.msra.mxu0 0
  %5540 = vmatprep.subr.bf16.mxu0 0
  %5541 = vmatpush2.bf16.msra.mxu0 0
  %5542 = vmatprep.subr.bf16.mxu0 0
  %5543 = vmatpush2.bf16.msra.mxu0 0
  %5544 = vmatprep.subr.bf16.mxu0 0
  %5545 = vmatpush2.bf16.msra.mxu0 0
  %5546 = vmatprep.subr.bf16.mxu0 0
  %5547 = vmatpush2.bf16.msra.mxu0 0
  %5548 = vmatprep.subr.bf16.mxu0 0
  %5549 = vmatpush2.bf16.msra.mxu0 0
  %5550 = vmatprep.mubr.bf16.mxu0 0
  %5551 = vmatmul.mubr.bf16.gmra.mxu0 %v5517
  %v5552 = vpop.f32.mrf.mxu0
  %v5553 = vadd.f32 0.0, %v5552
  %v5554 = vpop.f32.mrf.mxu0
  %v5555 = vadd.f32 0.0, %v5554
  %v5556 = vpop.f32.mrf.mxu0
  %v5557 = vpop.f32.mrf.mxu0
  %5558 = vdwg.mxu0
  %5559 = vmatprep.subr.bf16.mxu0 %v5366
  %5560 = vmatpush1.bf16.msra.mxu0 %v5365
  %5561 = vmatprep.subr.bf16.mxu0 %v5362
  %5562 = vmatpush1.bf16.msra.mxu0 %v5361
  %5563 = vmatprep.subr.bf16.mxu0 %v5358
  %5564 = vmatpush1.bf16.msra.mxu0 %v5357
  %5565 = vmatprep.subr.bf16.mxu0 %v5354
  %5566 = vmatpush1.bf16.msra.mxu0 %v5353
  %5567 = vmatprep.subr.bf16.mxu0 %v5350
  %5568 = vmatpush1.bf16.msra.mxu0 %v5349
  %5569 = vmatprep.subr.bf16.mxu0 %v5346
  %5570 = vmatpush1.bf16.msra.mxu0 %v5345
  %5571 = vmatprep.subr.bf16.mxu0 %v5342
  %5572 = vmatpush1.bf16.msra.mxu0 %v5341
  %5573 = vmatprep.subr.bf16.mxu0 %v5338
  %5574 = vmatpush1.bf16.msra.mxu0 %v5337
  %5575 = vmatprep.subr.bf16.mxu0 0
  %5576 = vmatpush2.bf16.msra.mxu0 0
  %5577 = vmatprep.subr.bf16.mxu0 0
  %5578 = vmatpush2.bf16.msra.mxu0 0
  %5579 = vmatprep.subr.bf16.mxu0 0
  %5580 = vmatpush2.bf16.msra.mxu0 0
  %5581 = vmatprep.subr.bf16.mxu0 0
  %5582 = vmatpush2.bf16.msra.mxu0 0
  %5583 = vmatprep.subr.bf16.mxu0 0
  %5584 = vmatpush2.bf16.msra.mxu0 0
  %5585 = vmatprep.subr.bf16.mxu0 0
  %5586 = vmatpush2.bf16.msra.mxu0 0
  %5587 = vmatprep.subr.bf16.mxu0 0
  %5588 = vmatpush2.bf16.msra.mxu0 0
  %5589 = vmatprep.subr.bf16.mxu0 0
  %5590 = vmatpush2.bf16.msra.mxu0 0
  %5591 = vmatprep.mubr.bf16.mxu0 0
  %5592 = vmatmul.mubr.bf16.gmra.mxu0 %v5517
  %v5593 = vpop.f32.mrf.mxu0
  %v5594 = vadd.f32 0.0, %v5593
  %v5595 = vpop.f32.mrf.mxu0
  %v5596 = vadd.f32 0.0, %v5595
  %v5597 = vpop.f32.mrf.mxu0
  %v5598 = vpop.f32.mrf.mxu0
  %5599 = vdwg.mxu0
  %v5600 = vadd.f32 %v5513, %v5553
  %v5601 = vadd.f32 %v5514, %v5555
  %v5602 = vadd.f32 %v5515, %v5594
  %v5603 = vadd.f32 %v5516, %v5596
  %v5604 = vxor.u32 %v5600, 2147483648
  %v5605 = vmul.f32 %v5604, 1.442695
  %v5606 = vpow.pop %v5605
  %v5607 = vadd.f32 %v5606, 1.0
  %v5608 = vrcp.pop %v5607
  %v5609 = vmul.f32 1.0, %v5608
  %v5610 = vxor.u32 %v5601, 2147483648
  %v5611 = vmul.f32 %v5610, 1.442695
  %v5612 = vpow.pop %v5611
  %v5613 = vadd.f32 %v5612, 1.0
  %v5614 = vrcp.pop %v5613
  %v5615 = vmul.f32 1.0, %v5614
  %v5616 = vtanh.pop %v5602
  %v5617 = vxor.u32 %v5603, 2147483648
  %v5618 = vmul.f32 %v5617, 1.442695
  %v5619 = vpow.pop %v5618
  %v5620 = vadd.f32 %v5619, 1.0
  %v5621 = vrcp.pop %v5620
  %v5622 = vmul.f32 1.0, %v5621
  %v5623 = vmul.f32 %v5615, %v5509
  %v5624 = vmul.f32 %v5609, %v5616
  %v5625 = vadd.f32 %v5623, %v5624
  %v5626 = vtanh.pop %v5625
  %v5627 = vmul.f32 %v5622, %v5626
  %v5628 = vsel %vm4042, %v5625, %v5509
  %v5629 = vsel %vm4042, %v5627, %v5510
  %v5630 = vsel %vm4042, %v5627, 0.0
  %5631 = vst [vmem:[%s888] sm:$0xff] %v5630
  %v5632 = vld [vmem:[%s890] sm:$0xff]
  %v5633 = vld [vmem:[%s890 + $0x8] sm:$0xff]
  %v5634 = vld [vmem:[%s890 + $0x10] sm:$0xff]
  %v5635 = vld [vmem:[%s890 + $0x18] sm:$0xff]
  %v5636 = vpack.c.bf16 %v5629, %v5629
  %5637 = vmatprep.subr.bf16.mxu0 %v5364
  %5638 = vmatpush1.bf16.msra.mxu0 %v5363
  %5639 = vmatprep.subr.bf16.mxu0 %v5360
  %5640 = vmatpush1.bf16.msra.mxu0 %v5359
  %5641 = vmatprep.subr.bf16.mxu0 %v5356
  %5642 = vmatpush1.bf16.msra.mxu0 %v5355
  %5643 = vmatprep.subr.bf16.mxu0 %v5352
  %5644 = vmatpush1.bf16.msra.mxu0 %v5351
  %5645 = vmatprep.subr.bf16.mxu0 %v5348
  %5646 = vmatpush1.bf16.msra.mxu0 %v5347
  %5647 = vmatprep.subr.bf16.mxu0 %v5344
  %5648 = vmatpush1.bf16.msra.mxu0 %v5343
  %5649 = vmatprep.subr.bf16.mxu0 %v5340
  %5650 = vmatpush1.bf16.msra.mxu0 %v5339
  %5651 = vmatprep.subr.bf16.mxu0 %v5336
  %5652 = vmatpush1.bf16.msra.mxu0 %v5335
  %5653 = vmatprep.subr.bf16.mxu0 0
  %5654 = vmatpush2.bf16.msra.mxu0 0
  %5655 = vmatprep.subr.bf16.mxu0 0
  %5656 = vmatpush2.bf16.msra.mxu0 0
  %5657 = vmatprep.subr.bf16.mxu0 0
  %5658 = vmatpush2.bf16.msra.mxu0 0
  %5659 = vmatprep.subr.bf16.mxu0 0
  %5660 = vmatpush2.bf16.msra.mxu0 0
  %5661 = vmatprep.subr.bf16.mxu0 0
  %5662 = vmatpush2.bf16.msra.mxu0 0
  %5663 = vmatprep.subr.bf16.mxu0 0
  %5664 = vmatpush2.bf16.msra.mxu0 0
  %5665 = vmatprep.subr.bf16.mxu0 0
  %5666 = vmatpush2.bf16.msra.mxu0 0
  %5667 = vmatprep.subr.bf16.mxu0 0
  %5668 = vmatpush2.bf16.msra.mxu0 0
  %5669 = vmatprep.mubr.bf16.mxu0 0
  %5670 = vmatmul.mubr.bf16.gmra.mxu0 %v5636
  %v5671 = vpop.f32.mrf.mxu0
  %v5672 = vadd.f32 0.0, %v5671
  %v5673 = vpop.f32.mrf.mxu0
  %v5674 = vadd.f32 0.0, %v5673
  %v5675 = vpop.f32.mrf.mxu0
  %v5676 = vpop.f32.mrf.mxu0
  %5677 = vdwg.mxu0
  %5678 = vmatprep.subr.bf16.mxu0 %v5366
  %5679 = vmatpush1.bf16.msra.mxu0 %v5365
  %5680 = vmatprep.subr.bf16.mxu0 %v5362
  %5681 = vmatpush1.bf16.msra.mxu0 %v5361
  %5682 = vmatprep.subr.bf16.mxu0 %v5358
  %5683 = vmatpush1.bf16.msra.mxu0 %v5357
  %5684 = vmatprep.subr.bf16.mxu0 %v5354
  %5685 = vmatpush1.bf16.msra.mxu0 %v5353
  %5686 = vmatprep.subr.bf16.mxu0 %v5350
  %5687 = vmatpush1.bf16.msra.mxu0 %v5349
  %5688 = vmatprep.subr.bf16.mxu0 %v5346
  %5689 = vmatpush1.bf16.msra.mxu0 %v5345
  %5690 = vmatprep.subr.bf16.mxu0 %v5342
  %5691 = vmatpush1.bf16.msra.mxu0 %v5341
  %5692 = vmatprep.subr.bf16.mxu0 %v5338
  %5693 = vmatpush1.bf16.msra.mxu0 %v5337
  %5694 = vmatprep.subr.bf16.mxu0 0
  %5695 = vmatpush2.bf16.msra.mxu0 0
  %5696 = vmatprep.subr.bf16.mxu0 0
  %5697 = vmatpush2.bf16.msra.mxu0 0
  %5698 = vmatprep.subr.bf16.mxu0 0
  %5699 = vmatpush2.bf16.msra.mxu0 0
  %5700 = vmatprep.subr.bf16.mxu0 0
  %5701 = vmatpush2.bf16.msra.mxu0 0
  %5702 = vmatprep.subr.bf16.mxu0 0
  %5703 = vmatpush2.bf16.msra.mxu0 0
  %5704 = vmatprep.subr.bf16.mxu0 0
  %5705 = vmatpush2.bf16.msra.mxu0 0
  %5706 = vmatprep.subr.bf16.mxu0 0
  %5707 = vmatpush2.bf16.msra.mxu0 0
  %5708 = vmatprep.subr.bf16.mxu0 0
  %5709 = vmatpush2.bf16.msra.mxu0 0
  %5710 = vmatprep.mubr.bf16.mxu0 0
  %5711 = vmatmul.mubr.bf16.gmra.mxu0 %v5636
  %v5712 = vpop.f32.mrf.mxu0
  %v5713 = vadd.f32 0.0, %v5712
  %v5714 = vpop.f32.mrf.mxu0
  %v5715 = vadd.f32 0.0, %v5714
  %v5716 = vpop.f32.mrf.mxu0
  %v5717 = vpop.f32.mrf.mxu0
  %5718 = vdwg.mxu0
  %v5719 = vadd.f32 %v5632, %v5672
  %v5720 = vadd.f32 %v5633, %v5674
  %v5721 = vadd.f32 %v5634, %v5713
  %v5722 = vadd.f32 %v5635, %v5715
  %v5723 = vxor.u32 %v5719, 2147483648
  %v5724 = vmul.f32 %v5723, 1.442695
  %v5725 = vpow.pop %v5724
  %v5726 = vadd.f32 %v5725, 1.0
  %v5727 = vrcp.pop %v5726
  %v5728 = vmul.f32 1.0, %v5727
  %v5729 = vxor.u32 %v5720, 2147483648
  %v5730 = vmul.f32 %v5729, 1.442695
  %v5731 = vpow.pop %v5730
  %v5732 = vadd.f32 %v5731, 1.0
  %v5733 = vrcp.pop %v5732
  %v5734 = vmul.f32 1.0, %v5733
  %v5735 = vtanh.pop %v5721
  %v5736 = vxor.u32 %v5722, 2147483648
  %v5737 = vmul.f32 %v5736, 1.442695
  %v5738 = vpow.pop %v5737
  %v5739 = vadd.f32 %v5738, 1.0
  %v5740 = vrcp.pop %v5739
  %v5741 = vmul.f32 1.0, %v5740
  %v5742 = vmul.f32 %v5734, %v5628
  %v5743 = vmul.f32 %v5728, %v5735
  %v5744 = vadd.f32 %v5742, %v5743
  %v5745 = vtanh.pop %v5744
  %v5746 = vmul.f32 %v5741, %v5745
  %v5747 = vsel %vm4167, %v5744, %v5628
  %v5748 = vsel %vm4167, %v5746, %v5629
  %v5749 = vsel %vm4167, %v5746, 0.0
  %5750 = vst [vmem:[%s1015] sm:$0xff] %v5749
  %v5751 = vld [vmem:[%s1017] sm:$0xff]
  %v5752 = vld [vmem:[%s1017 + $0x8] sm:$0xff]
  %v5753 = vld [vmem:[%s1017 + $0x10] sm:$0xff]
  %v5754 = vld [vmem:[%s1017 + $0x18] sm:$0xff]
  %v5755 = vpack.c.bf16 %v5748, %v5748
  %5756 = vmatprep.subr.bf16.mxu0 %v5364
  %5757 = vmatpush1.bf16.msra.mxu0 %v5363
  %5758 = vmatprep.subr.bf16.mxu0 %v5360
  %5759 = vmatpush1.bf16.msra.mxu0 %v5359
  %5760 = vmatprep.subr.bf16.mxu0 %v5356
  %5761 = vmatpush1.bf16.msra.mxu0 %v5355
  %5762 = vmatprep.subr.bf16.mxu0 %v5352
  %5763 = vmatpush1.bf16.msra.mxu0 %v5351
  %5764 = vmatprep.subr.bf16.mxu0 %v5348
  %5765 = vmatpush1.bf16.msra.mxu0 %v5347
  %5766 = vmatprep.subr.bf16.mxu0 %v5344
  %5767 = vmatpush1.bf16.msra.mxu0 %v5343
  %5768 = vmatprep.subr.bf16.mxu0 %v5340
  %5769 = vmatpush1.bf16.msra.mxu0 %v5339
  %5770 = vmatprep.subr.bf16.mxu0 %v5336
  %5771 = vmatpush1.bf16.msra.mxu0 %v5335
  %5772 = vmatprep.subr.bf16.mxu0 0
  %5773 = vmatpush2.bf16.msra.mxu0 0
  %5774 = vmatprep.subr.bf16.mxu0 0
  %5775 = vmatpush2.bf16.msra.mxu0 0
  %5776 = vmatprep.subr.bf16.mxu0 0
  %5777 = vmatpush2.bf16.msra.mxu0 0
  %5778 = vmatprep.subr.bf16.mxu0 0
  %5779 = vmatpush2.bf16.msra.mxu0 0
  %5780 = vmatprep.subr.bf16.mxu0 0
  %5781 = vmatpush2.bf16.msra.mxu0 0
  %5782 = vmatprep.subr.bf16.mxu0 0
  %5783 = vmatpush2.bf16.msra.mxu0 0
  %5784 = vmatprep.subr.bf16.mxu0 0
  %5785 = vmatpush2.bf16.msra.mxu0 0
  %5786 = vmatprep.subr.bf16.mxu0 0
  %5787 = vmatpush2.bf16.msra.mxu0 0
  %5788 = vmatprep.mubr.bf16.mxu0 0
  %5789 = vmatmul.mubr.bf16.gmra.mxu0 %v5755
  %v5790 = vpop.f32.mrf.mxu0
  %v5791 = vadd.f32 0.0, %v5790
  %v5792 = vpop.f32.mrf.mxu0
  %v5793 = vadd.f32 0.0, %v5792
  %v5794 = vpop.f32.mrf.mxu0
  %v5795 = vpop.f32.mrf.mxu0
  %5796 = vdwg.mxu0
  %5797 = vmatprep.subr.bf16.mxu0 %v5366
  %5798 = vmatpush1.bf16.msra.mxu0 %v5365
  %5799 = vmatprep.subr.bf16.mxu0 %v5362
  %5800 = vmatpush1.bf16.msra.mxu0 %v5361
  %5801 = vmatprep.subr.bf16.mxu0 %v5358
  %5802 = vmatpush1.bf16.msra.mxu0 %v5357
  %5803 = vmatprep.subr.bf16.mxu0 %v5354
  %5804 = vmatpush1.bf16.msra.mxu0 %v5353
  %5805 = vmatprep.subr.bf16.mxu0 %v5350
  %5806 = vmatpush1.bf16.msra.mxu0 %v5349
  %5807 = vmatprep.subr.bf16.mxu0 %v5346
  %5808 = vmatpush1.bf16.msra.mxu0 %v5345
  %5809 = vmatprep.subr.bf16.mxu0 %v5342
  %5810 = vmatpush1.bf16.msra.mxu0 %v5341
  %5811 = vmatprep.subr.bf16.mxu0 %v5338
  %5812 = vmatpush1.bf16.msra.mxu0 %v5337
  %5813 = vmatprep.subr.bf16.mxu0 0
  %5814 = vmatpush2.bf16.msra.mxu0 0
  %5815 = vmatprep.subr.bf16.mxu0 0
  %5816 = vmatpush2.bf16.msra.mxu0 0
  %5817 = vmatprep.subr.bf16.mxu0 0
  %5818 = vmatpush2.bf16.msra.mxu0 0
  %5819 = vmatprep.subr.bf16.mxu0 0
  %5820 = vmatpush2.bf16.msra.mxu0 0
  %5821 = vmatprep.subr.bf16.mxu0 0
  %5822 = vmatpush2.bf16.msra.mxu0 0
  %5823 = vmatprep.subr.bf16.mxu0 0
  %5824 = vmatpush2.bf16.msra.mxu0 0
  %5825 = vmatprep.subr.bf16.mxu0 0
  %5826 = vmatpush2.bf16.msra.mxu0 0
  %5827 = vmatprep.subr.bf16.mxu0 0
  %5828 = vmatpush2.bf16.msra.mxu0 0
  %5829 = vmatprep.mubr.bf16.mxu0 0
  %5830 = vmatmul.mubr.bf16.gmra.mxu0 %v5755
  %v5831 = vpop.f32.mrf.mxu0
  %v5832 = vadd.f32 0.0, %v5831
  %v5833 = vpop.f32.mrf.mxu0
  %v5834 = vadd.f32 0.0, %v5833
  %v5835 = vpop.f32.mrf.mxu0
  %v5836 = vpop.f32.mrf.mxu0
  %5837 = vdwg.mxu0
  %v5838 = vadd.f32 %v5751, %v5791
  %v5839 = vadd.f32 %v5752, %v5793
  %v5840 = vadd.f32 %v5753, %v5832
  %v5841 = vadd.f32 %v5754, %v5834
  %v5842 = vxor.u32 %v5838, 2147483648
  %v5843 = vmul.f32 %v5842, 1.442695
  %v5844 = vpow.pop %v5843
  %v5845 = vadd.f32 %v5844, 1.0
  %v5846 = vrcp.pop %v5845
  %v5847 = vmul.f32 1.0, %v5846
  %v5848 = vxor.u32 %v5839, 2147483648
  %v5849 = vmul.f32 %v5848, 1.442695
  %v5850 = vpow.pop %v5849
  %v5851 = vadd.f32 %v5850, 1.0
  %v5852 = vrcp.pop %v5851
  %v5853 = vmul.f32 1.0, %v5852
  %v5854 = vtanh.pop %v5840
  %v5855 = vxor.u32 %v5841, 2147483648
  %v5856 = vmul.f32 %v5855, 1.442695
  %v5857 = vpow.pop %v5856
  %v5858 = vadd.f32 %v5857, 1.0
  %v5859 = vrcp.pop %v5858
  %v5860 = vmul.f32 1.0, %v5859
  %v5861 = vmul.f32 %v5853, %v5747
  %v5862 = vmul.f32 %v5847, %v5854
  %v5863 = vadd.f32 %v5861, %v5862
  %v5864 = vtanh.pop %v5863
  %v5865 = vmul.f32 %v5860, %v5864
  %v5866 = vsel %vm4292, %v5863, %v5747
  %v5867 = vsel %vm4292, %v5865, %v5748
  %v5868 = vsel %vm4292, %v5865, 0.0
  %5869 = vst [vmem:[%s1142] sm:$0xff] %v5868
  %v5870 = vld [vmem:[%s1144] sm:$0xff]
  %v5871 = vld [vmem:[%s1144 + $0x8] sm:$0xff]
  %v5872 = vld [vmem:[%s1144 + $0x10] sm:$0xff]
  %v5873 = vld [vmem:[%s1144 + $0x18] sm:$0xff]
  %v5874 = vpack.c.bf16 %v5867, %v5867
  %5875 = vmatprep.subr.bf16.mxu0 %v5364
  %5876 = vmatpush1.bf16.msra.mxu0 %v5363
  %5877 = vmatprep.subr.bf16.mxu0 %v5360
  %5878 = vmatpush1.bf16.msra.mxu0 %v5359
  %5879 = vmatprep.subr.bf16.mxu0 %v5356
  %5880 = vmatpush1.bf16.msra.mxu0 %v5355
  %5881 = vmatprep.subr.bf16.mxu0 %v5352
  %5882 = vmatpush1.bf16.msra.mxu0 %v5351
  %5883 = vmatprep.subr.bf16.mxu0 %v5348
  %5884 = vmatpush1.bf16.msra.mxu0 %v5347
  %5885 = vmatprep.subr.bf16.mxu0 %v5344
  %5886 = vmatpush1.bf16.msra.mxu0 %v5343
  %5887 = vmatprep.subr.bf16.mxu0 %v5340
  %5888 = vmatpush1.bf16.msra.mxu0 %v5339
  %5889 = vmatprep.subr.bf16.mxu0 %v5336
  %5890 = vmatpush1.bf16.msra.mxu0 %v5335
  %5891 = vmatprep.subr.bf16.mxu0 0
  %5892 = vmatpush2.bf16.msra.mxu0 0
  %5893 = vmatprep.subr.bf16.mxu0 0
  %5894 = vmatpush2.bf16.msra.mxu0 0
  %5895 = vmatprep.subr.bf16.mxu0 0
  %5896 = vmatpush2.bf16.msra.mxu0 0
  %5897 = vmatprep.subr.bf16.mxu0 0
  %5898 = vmatpush2.bf16.msra.mxu0 0
  %5899 = vmatprep.subr.bf16.mxu0 0
  %5900 = vmatpush2.bf16.msra.mxu0 0
  %5901 = vmatprep.subr.bf16.mxu0 0
  %5902 = vmatpush2.bf16.msra.mxu0 0
  %5903 = vmatprep.subr.bf16.mxu0 0
  %5904 = vmatpush2.bf16.msra.mxu0 0
  %5905 = vmatprep.subr.bf16.mxu0 0
  %5906 = vmatpush2.bf16.msra.mxu0 0
  %5907 = vmatprep.mubr.bf16.mxu0 0
  %5908 = vmatmul.mubr.bf16.gmra.mxu0 %v5874
  %v5909 = vpop.f32.mrf.mxu0
  %v5910 = vadd.f32 0.0, %v5909
  %v5911 = vpop.f32.mrf.mxu0
  %v5912 = vadd.f32 0.0, %v5911
  %v5913 = vpop.f32.mrf.mxu0
  %v5914 = vpop.f32.mrf.mxu0
  %5915 = vdwg.mxu0
  %5916 = vmatprep.subr.bf16.mxu0 %v5366
  %5917 = vmatpush1.bf16.msra.mxu0 %v5365
  %5918 = vmatprep.subr.bf16.mxu0 %v5362
  %5919 = vmatpush1.bf16.msra.mxu0 %v5361
  %5920 = vmatprep.subr.bf16.mxu0 %v5358
  %5921 = vmatpush1.bf16.msra.mxu0 %v5357
  %5922 = vmatprep.subr.bf16.mxu0 %v5354
  %5923 = vmatpush1.bf16.msra.mxu0 %v5353
  %5924 = vmatprep.subr.bf16.mxu0 %v5350
  %5925 = vmatpush1.bf16.msra.mxu0 %v5349
  %5926 = vmatprep.subr.bf16.mxu0 %v5346
  %5927 = vmatpush1.bf16.msra.mxu0 %v5345
  %5928 = vmatprep.subr.bf16.mxu0 %v5342
  %5929 = vmatpush1.bf16.msra.mxu0 %v5341
  %5930 = vmatprep.subr.bf16.mxu0 %v5338
  %5931 = vmatpush1.bf16.msra.mxu0 %v5337
  %5932 = vmatprep.subr.bf16.mxu0 0
  %5933 = vmatpush2.bf16.msra.mxu0 0
  %5934 = vmatprep.subr.bf16.mxu0 0
  %5935 = vmatpush2.bf16.msra.mxu0 0
  %5936 = vmatprep.subr.bf16.mxu0 0
  %5937 = vmatpush2.bf16.msra.mxu0 0
  %5938 = vmatprep.subr.bf16.mxu0 0
  %5939 = vmatpush2.bf16.msra.mxu0 0
  %5940 = vmatprep.subr.bf16.mxu0 0
  %5941 = vmatpush2.bf16.msra.mxu0 0
  %5942 = vmatprep.subr.bf16.mxu0 0
  %5943 = vmatpush2.bf16.msra.mxu0 0
  %5944 = vmatprep.subr.bf16.mxu0 0
  %5945 = vmatpush2.bf16.msra.mxu0 0
  %5946 = vmatprep.subr.bf16.mxu0 0
  %5947 = vmatpush2.bf16.msra.mxu0 0
  %5948 = vmatprep.mubr.bf16.mxu0 0
  %5949 = vmatmul.mubr.bf16.gmra.mxu0 %v5874
  %v5950 = vpop.f32.mrf.mxu0
  %v5951 = vadd.f32 0.0, %v5950
  %v5952 = vpop.f32.mrf.mxu0
  %v5953 = vadd.f32 0.0, %v5952
  %v5954 = vpop.f32.mrf.mxu0
  %v5955 = vpop.f32.mrf.mxu0
  %5956 = vdwg.mxu0
  %v5957 = vadd.f32 %v5870, %v5910
  %v5958 = vadd.f32 %v5871, %v5912
  %v5959 = vadd.f32 %v5872, %v5951
  %v5960 = vadd.f32 %v5873, %v5953
  %v5961 = vxor.u32 %v5957, 2147483648
  %v5962 = vmul.f32 %v5961, 1.442695
  %v5963 = vpow.pop %v5962
  %v5964 = vadd.f32 %v5963, 1.0
  %v5965 = vrcp.pop %v5964
  %v5966 = vmul.f32 1.0, %v5965
  %v5967 = vxor.u32 %v5958, 2147483648
  %v5968 = vmul.f32 %v5967, 1.442695
  %v5969 = vpow.pop %v5968
  %v5970 = vadd.f32 %v5969, 1.0
  %v5971 = vrcp.pop %v5970
  %v5972 = vmul.f32 1.0, %v5971
  %v5973 = vtanh.pop %v5959
  %v5974 = vxor.u32 %v5960, 2147483648
  %v5975 = vmul.f32 %v5974, 1.442695
  %v5976 = vpow.pop %v5975
  %v5977 = vadd.f32 %v5976, 1.0
  %v5978 = vrcp.pop %v5977
  %v5979 = vmul.f32 1.0, %v5978
  %v5980 = vmul.f32 %v5972, %v5866
  %v5981 = vmul.f32 %v5966, %v5973
  %v5982 = vadd.f32 %v5980, %v5981
  %v5983 = vtanh.pop %v5982
  %v5984 = vmul.f32 %v5979, %v5983
  %v5985 = vsel %vm4417, %v5982, %v5866
  %v5986 = vsel %vm4417, %v5984, %v5867
  %v5987 = vsel %vm4417, %v5984, 0.0
  %5988 = vst [vmem:[%s1269] sm:$0xff] %v5987
  %v5989 = vld [vmem:[%s1271] sm:$0xff]
  %v5990 = vld [vmem:[%s1271 + $0x8] sm:$0xff]
  %v5991 = vld [vmem:[%s1271 + $0x10] sm:$0xff]
  %v5992 = vld [vmem:[%s1271 + $0x18] sm:$0xff]
  %v5993 = vpack.c.bf16 %v5986, %v5986
  %5994 = vmatprep.subr.bf16.mxu0 %v5364
  %5995 = vmatpush1.bf16.msra.mxu0 %v5363
  %5996 = vmatprep.subr.bf16.mxu0 %v5360
  %5997 = vmatpush1.bf16.msra.mxu0 %v5359
  %5998 = vmatprep.subr.bf16.mxu0 %v5356
  %5999 = vmatpush1.bf16.msra.mxu0 %v5355
  %6000 = vmatprep.subr.bf16.mxu0 %v5352
  %6001 = vmatpush1.bf16.msra.mxu0 %v5351
  %6002 = vmatprep.subr.bf16.mxu0 %v5348
  %6003 = vmatpush1.bf16.msra.mxu0 %v5347
  %6004 = vmatprep.subr.bf16.mxu0 %v5344
  %6005 = vmatpush1.bf16.msra.mxu0 %v5343
  %6006 = vmatprep.subr.bf16.mxu0 %v5340
  %6007 = vmatpush1.bf16.msra.mxu0 %v5339
  %6008 = vmatprep.subr.bf16.mxu0 %v5336
  %6009 = vmatpush1.bf16.msra.mxu0 %v5335
  %6010 = vmatprep.subr.bf16.mxu0 0
  %6011 = vmatpush2.bf16.msra.mxu0 0
  %6012 = vmatprep.subr.bf16.mxu0 0
  %6013 = vmatpush2.bf16.msra.mxu0 0
  %6014 = vmatprep.subr.bf16.mxu0 0
  %6015 = vmatpush2.bf16.msra.mxu0 0
  %6016 = vmatprep.subr.bf16.mxu0 0
  %6017 = vmatpush2.bf16.msra.mxu0 0
  %6018 = vmatprep.subr.bf16.mxu0 0
  %6019 = vmatpush2.bf16.msra.mxu0 0
  %6020 = vmatprep.subr.bf16.mxu0 0
  %6021 = vmatpush2.bf16.msra.mxu0 0
  %6022 = vmatprep.subr.bf16.mxu0 0
  %6023 = vmatpush2.bf16.msra.mxu0 0
  %6024 = vmatprep.subr.bf16.mxu0 0
  %6025 = vmatpush2.bf16.msra.mxu0 0
  %6026 = vmatprep.mubr.bf16.mxu0 0
  %6027 = vmatmul.mubr.bf16.gmra.mxu0 %v5993
  %v6028 = vpop.f32.mrf.mxu0
  %v6029 = vadd.f32 0.0, %v6028
  %v6030 = vpop.f32.mrf.mxu0
  %v6031 = vadd.f32 0.0, %v6030
  %v6032 = vpop.f32.mrf.mxu0
  %v6033 = vpop.f32.mrf.mxu0
  %6034 = vdwg.mxu0
  %6035 = vmatprep.subr.bf16.mxu0 %v5366
  %6036 = vmatpush1.bf16.msra.mxu0 %v5365
  %6037 = vmatprep.subr.bf16.mxu0 %v5362
  %6038 = vmatpush1.bf16.msra.mxu0 %v5361
  %6039 = vmatprep.subr.bf16.mxu0 %v5358
  %6040 = vmatpush1.bf16.msra.mxu0 %v5357
  %6041 = vmatprep.subr.bf16.mxu0 %v5354
  %6042 = vmatpush1.bf16.msra.mxu0 %v5353
  %6043 = vmatprep.subr.bf16.mxu0 %v5350
  %6044 = vmatpush1.bf16.msra.mxu0 %v5349
  %6045 = vmatprep.subr.bf16.mxu0 %v5346
  %6046 = vmatpush1.bf16.msra.mxu0 %v5345
  %6047 = vmatprep.subr.bf16.mxu0 %v5342
  %6048 = vmatpush1.bf16.msra.mxu0 %v5341
  %6049 = vmatprep.subr.bf16.mxu0 %v5338
  %6050 = vmatpush1.bf16.msra.mxu0 %v5337
  %6051 = vmatprep.subr.bf16.mxu0 0
  %6052 = vmatpush2.bf16.msra.mxu0 0
  %6053 = vmatprep.subr.bf16.mxu0 0
  %6054 = vmatpush2.bf16.msra.mxu0 0
  %6055 = vmatprep.subr.bf16.mxu0 0
  %6056 = vmatpush2.bf16.msra.mxu0 0
  %6057 = vmatprep.subr.bf16.mxu0 0
  %6058 = vmatpush2.bf16.msra.mxu0 0
  %6059 = vmatprep.subr.bf16.mxu0 0
  %6060 = vmatpush2.bf16.msra.mxu0 0
  %6061 = vmatprep.subr.bf16.mxu0 0
  %6062 = vmatpush2.bf16.msra.mxu0 0
  %6063 = vmatprep.subr.bf16.mxu0 0
  %6064 = vmatpush2.bf16.msra.mxu0 0
  %6065 = vmatprep.subr.bf16.mxu0 0
  %6066 = vmatpush2.bf16.msra.mxu0 0
  %6067 = vmatprep.mubr.bf16.mxu0 0
  %6068 = vmatmul.mubr.bf16.gmra.mxu0 %v5993
  %v6069 = vpop.f32.mrf.mxu0
  %v6070 = vadd.f32 0.0, %v6069
  %v6071 = vpop.f32.mrf.mxu0
  %v6072 = vadd.f32 0.0, %v6071
  %v6073 = vpop.f32.mrf.mxu0
  %v6074 = vpop.f32.mrf.mxu0
  %6075 = vdwg.mxu0
  %v6076 = vadd.f32 %v5989, %v6029
  %v6077 = vadd.f32 %v5990, %v6031
  %v6078 = vadd.f32 %v5991, %v6070
  %v6079 = vadd.f32 %v5992, %v6072
  %v6080 = vxor.u32 %v6076, 2147483648
  %v6081 = vmul.f32 %v6080, 1.442695
  %v6082 = vpow.pop %v6081
  %v6083 = vadd.f32 %v6082, 1.0
  %v6084 = vrcp.pop %v6083
  %v6085 = vmul.f32 1.0, %v6084
  %v6086 = vxor.u32 %v6077, 2147483648
  %v6087 = vmul.f32 %v6086, 1.442695
  %v6088 = vpow.pop %v6087
  %v6089 = vadd.f32 %v6088, 1.0
  %v6090 = vrcp.pop %v6089
  %v6091 = vmul.f32 1.0, %v6090
  %v6092 = vtanh.pop %v6078
  %v6093 = vxor.u32 %v6079, 2147483648
  %v6094 = vmul.f32 %v6093, 1.442695
  %v6095 = vpow.pop %v6094
  %v6096 = vadd.f32 %v6095, 1.0
  %v6097 = vrcp.pop %v6096
  %v6098 = vmul.f32 1.0, %v6097
  %v6099 = vmul.f32 %v6091, %v5985
  %v6100 = vmul.f32 %v6085, %v6092
  %v6101 = vadd.f32 %v6099, %v6100
  %v6102 = vtanh.pop %v6101
  %v6103 = vmul.f32 %v6098, %v6102
  %v6104 = vsel %vm4542, %v6101, %v5985
  %v6105 = vsel %vm4542, %v6103, %v5986
  %v6106 = vsel %vm4542, %v6103, 0.0
  %6107 = vst [vmem:[%s1396] sm:$0xff] %v6106
  %v6108 = vld [vmem:[%s1398] sm:$0xff]
  %v6109 = vld [vmem:[%s1398 + $0x8] sm:$0xff]
  %v6110 = vld [vmem:[%s1398 + $0x10] sm:$0xff]
  %v6111 = vld [vmem:[%s1398 + $0x18] sm:$0xff]
  %v6112 = vpack.c.bf16 %v6105, %v6105
  %6113 = vmatprep.subr.bf16.mxu0 %v5364
  %6114 = vmatpush1.bf16.msra.mxu0 %v5363
  %6115 = vmatprep.subr.bf16.mxu0 %v5360
  %6116 = vmatpush1.bf16.msra.mxu0 %v5359
  %6117 = vmatprep.subr.bf16.mxu0 %v5356
  %6118 = vmatpush1.bf16.msra.mxu0 %v5355
  %6119 = vmatprep.subr.bf16.mxu0 %v5352
  %6120 = vmatpush1.bf16.msra.mxu0 %v5351
  %6121 = vmatprep.subr.bf16.mxu0 %v5348
  %6122 = vmatpush1.bf16.msra.mxu0 %v5347
  %6123 = vmatprep.subr.bf16.mxu0 %v5344
  %6124 = vmatpush1.bf16.msra.mxu0 %v5343
  %6125 = vmatprep.subr.bf16.mxu0 %v5340
  %6126 = vmatpush1.bf16.msra.mxu0 %v5339
  %6127 = vmatprep.subr.bf16.mxu0 %v5336
  %6128 = vmatpush1.bf16.msra.mxu0 %v5335
  %6129 = vmatprep.subr.bf16.mxu0 0
  %6130 = vmatpush2.bf16.msra.mxu0 0
  %6131 = vmatprep.subr.bf16.mxu0 0
  %6132 = vmatpush2.bf16.msra.mxu0 0
  %6133 = vmatprep.subr.bf16.mxu0 0
  %6134 = vmatpush2.bf16.msra.mxu0 0
  %6135 = vmatprep.subr.bf16.mxu0 0
  %6136 = vmatpush2.bf16.msra.mxu0 0
  %6137 = vmatprep.subr.bf16.mxu0 0
  %6138 = vmatpush2.bf16.msra.mxu0 0
  %6139 = vmatprep.subr.bf16.mxu0 0
  %6140 = vmatpush2.bf16.msra.mxu0 0
  %6141 = vmatprep.subr.bf16.mxu0 0
  %6142 = vmatpush2.bf16.msra.mxu0 0
  %6143 = vmatprep.subr.bf16.mxu0 0
  %6144 = vmatpush2.bf16.msra.mxu0 0
  %6145 = vmatprep.mubr.bf16.mxu0 0
  %6146 = vmatmul.mubr.bf16.gmra.mxu0 %v6112
  %v6147 = vpop.f32.mrf.mxu0
  %v6148 = vadd.f32 0.0, %v6147
  %v6149 = vpop.f32.mrf.mxu0
  %v6150 = vadd.f32 0.0, %v6149
  %v6151 = vpop.f32.mrf.mxu0
  %v6152 = vpop.f32.mrf.mxu0
  %6153 = vdwg.mxu0
  %6154 = vmatprep.subr.bf16.mxu0 %v5366
  %6155 = vmatpush1.bf16.msra.mxu0 %v5365
  %6156 = vmatprep.subr.bf16.mxu0 %v5362
  %6157 = vmatpush1.bf16.msra.mxu0 %v5361
  %6158 = vmatprep.subr.bf16.mxu0 %v5358
  %6159 = vmatpush1.bf16.msra.mxu0 %v5357
  %6160 = vmatprep.subr.bf16.mxu0 %v5354
  %6161 = vmatpush1.bf16.msra.mxu0 %v5353
  %6162 = vmatprep.subr.bf16.mxu0 %v5350
  %6163 = vmatpush1.bf16.msra.mxu0 %v5349
  %6164 = vmatprep.subr.bf16.mxu0 %v5346
  %6165 = vmatpush1.bf16.msra.mxu0 %v5345
  %6166 = vmatprep.subr.bf16.mxu0 %v5342
  %6167 = vmatpush1.bf16.msra.mxu0 %v5341
  %6168 = vmatprep.subr.bf16.mxu0 %v5338
  %6169 = vmatpush1.bf16.msra.mxu0 %v5337
  %6170 = vmatprep.subr.bf16.mxu0 0
  %6171 = vmatpush2.bf16.msra.mxu0 0
  %6172 = vmatprep.subr.bf16.mxu0 0
  %6173 = vmatpush2.bf16.msra.mxu0 0
  %6174 = vmatprep.subr.bf16.mxu0 0
  %6175 = vmatpush2.bf16.msra.mxu0 0
  %6176 = vmatprep.subr.bf16.mxu0 0
  %6177 = vmatpush2.bf16.msra.mxu0 0
  %6178 = vmatprep.subr.bf16.mxu0 0
  %6179 = vmatpush2.bf16.msra.mxu0 0
  %6180 = vmatprep.subr.bf16.mxu0 0
  %6181 = vmatpush2.bf16.msra.mxu0 0
  %6182 = vmatprep.subr.bf16.mxu0 0
  %6183 = vmatpush2.bf16.msra.mxu0 0
  %6184 = vmatprep.subr.bf16.mxu0 0
  %6185 = vmatpush2.bf16.msra.mxu0 0
  %6186 = vmatprep.mubr.bf16.mxu0 0
  %6187 = vmatmul.mubr.bf16.gmra.mxu0 %v6112
  %v6188 = vpop.f32.mrf.mxu0
  %v6189 = vadd.f32 0.0, %v6188
  %v6190 = vpop.f32.mrf.mxu0
  %v6191 = vadd.f32 0.0, %v6190
  %v6192 = vpop.f32.mrf.mxu0
  %v6193 = vpop.f32.mrf.mxu0
  %6194 = vdwg.mxu0
  %v6195 = vadd.f32 %v6108, %v6148
  %v6196 = vadd.f32 %v6109, %v6150
  %v6197 = vadd.f32 %v6110, %v6189
  %v6198 = vadd.f32 %v6111, %v6191
  %v6199 = vxor.u32 %v6195, 2147483648
  %v6200 = vmul.f32 %v6199, 1.442695
  %v6201 = vpow.pop %v6200
  %v6202 = vadd.f32 %v6201, 1.0
  %v6203 = vrcp.pop %v6202
  %v6204 = vmul.f32 1.0, %v6203
  %v6205 = vxor.u32 %v6196, 2147483648
  %v6206 = vmul.f32 %v6205, 1.442695
  %v6207 = vpow.pop %v6206
  %v6208 = vadd.f32 %v6207, 1.0
  %v6209 = vrcp.pop %v6208
  %v6210 = vmul.f32 1.0, %v6209
  %v6211 = vtanh.pop %v6197
  %v6212 = vxor.u32 %v6198, 2147483648
  %v6213 = vmul.f32 %v6212, 1.442695
  %v6214 = vpow.pop %v6213
  %v6215 = vadd.f32 %v6214, 1.0
  %v6216 = vrcp.pop %v6215
  %v6217 = vmul.f32 1.0, %v6216
  %v6218 = vmul.f32 %v6210, %v6104
  %v6219 = vmul.f32 %v6204, %v6211
  %v6220 = vadd.f32 %v6218, %v6219
  %v6221 = vtanh.pop %v6220
  %v6222 = vmul.f32 %v6217, %v6221
  %v6223 = vsel %vm4667, %v6220, %v6104
  %v6224 = vsel %vm4667, %v6222, %v6105
  %v6225 = vsel %vm4667, %v6222, 0.0
  %6226 = vst [vmem:[%s1523] sm:$0xff] %v6225
  %v6227 = vld [vmem:[%s1525] sm:$0xff]
  %v6228 = vld [vmem:[%s1525 + $0x8] sm:$0xff]
  %v6229 = vld [vmem:[%s1525 + $0x10] sm:$0xff]
  %v6230 = vld [vmem:[%s1525 + $0x18] sm:$0xff]
  %v6231 = vpack.c.bf16 %v6224, %v6224
  %6232 = vmatprep.subr.bf16.mxu0 %v5364
  %6233 = vmatpush1.bf16.msra.mxu0 %v5363
  %6234 = vmatprep.subr.bf16.mxu0 %v5360
  %6235 = vmatpush1.bf16.msra.mxu0 %v5359
  %6236 = vmatprep.subr.bf16.mxu0 %v5356
  %6237 = vmatpush1.bf16.msra.mxu0 %v5355
  %6238 = vmatprep.subr.bf16.mxu0 %v5352
  %6239 = vmatpush1.bf16.msra.mxu0 %v5351
  %6240 = vmatprep.subr.bf16.mxu0 %v5348
  %6241 = vmatpush1.bf16.msra.mxu0 %v5347
  %6242 = vmatprep.subr.bf16.mxu0 %v5344
  %6243 = vmatpush1.bf16.msra.mxu0 %v5343
  %6244 = vmatprep.subr.bf16.mxu0 %v5340
  %6245 = vmatpush1.bf16.msra.mxu0 %v5339
  %6246 = vmatprep.subr.bf16.mxu0 %v5336
  %6247 = vmatpush1.bf16.msra.mxu0 %v5335
  %6248 = vmatprep.subr.bf16.mxu0 0
  %6249 = vmatpush2.bf16.msra.mxu0 0
  %6250 = vmatprep.subr.bf16.mxu0 0
  %6251 = vmatpush2.bf16.msra.mxu0 0
  %6252 = vmatprep.subr.bf16.mxu0 0
  %6253 = vmatpush2.bf16.msra.mxu0 0
  %6254 = vmatprep.subr.bf16.mxu0 0
  %6255 = vmatpush2.bf16.msra.mxu0 0
  %6256 = vmatprep.subr.bf16.mxu0 0
  %6257 = vmatpush2.bf16.msra.mxu0 0
  %6258 = vmatprep.subr.bf16.mxu0 0
  %6259 = vmatpush2.bf16.msra.mxu0 0
  %6260 = vmatprep.subr.bf16.mxu0 0
  %6261 = vmatpush2.bf16.msra.mxu0 0
  %6262 = vmatprep.subr.bf16.mxu0 0
  %6263 = vmatpush2.bf16.msra.mxu0 0
  %6264 = vmatprep.mubr.bf16.mxu0 0
  %6265 = vmatmul.mubr.bf16.gmra.mxu0 %v6231
  %v6266 = vpop.f32.mrf.mxu0
  %v6267 = vadd.f32 0.0, %v6266
  %v6268 = vpop.f32.mrf.mxu0
  %v6269 = vadd.f32 0.0, %v6268
  %v6270 = vpop.f32.mrf.mxu0
  %v6271 = vpop.f32.mrf.mxu0
  %6272 = vdwg.mxu0
  %6273 = vmatprep.subr.bf16.mxu0 %v5366
  %6274 = vmatpush1.bf16.msra.mxu0 %v5365
  %6275 = vmatprep.subr.bf16.mxu0 %v5362
  %6276 = vmatpush1.bf16.msra.mxu0 %v5361
  %6277 = vmatprep.subr.bf16.mxu0 %v5358
  %6278 = vmatpush1.bf16.msra.mxu0 %v5357
  %6279 = vmatprep.subr.bf16.mxu0 %v5354
  %6280 = vmatpush1.bf16.msra.mxu0 %v5353
  %6281 = vmatprep.subr.bf16.mxu0 %v5350
  %6282 = vmatpush1.bf16.msra.mxu0 %v5349
  %6283 = vmatprep.subr.bf16.mxu0 %v5346
  %6284 = vmatpush1.bf16.msra.mxu0 %v5345
  %6285 = vmatprep.subr.bf16.mxu0 %v5342
  %6286 = vmatpush1.bf16.msra.mxu0 %v5341
  %6287 = vmatprep.subr.bf16.mxu0 %v5338
  %6288 = vmatpush1.bf16.msra.mxu0 %v5337
  %6289 = vmatprep.subr.bf16.mxu0 0
  %6290 = vmatpush2.bf16.msra.mxu0 0
  %6291 = vmatprep.subr.bf16.mxu0 0
  %6292 = vmatpush2.bf16.msra.mxu0 0
  %6293 = vmatprep.subr.bf16.mxu0 0
  %6294 = vmatpush2.bf16.msra.mxu0 0
  %6295 = vmatprep.subr.bf16.mxu0 0
  %6296 = vmatpush2.bf16.msra.mxu0 0
  %6297 = vmatprep.subr.bf16.mxu0 0
  %6298 = vmatpush2.bf16.msra.mxu0 0
  %6299 = vmatprep.subr.bf16.mxu0 0
  %6300 = vmatpush2.bf16.msra.mxu0 0
  %6301 = vmatprep.subr.bf16.mxu0 0
  %6302 = vmatpush2.bf16.msra.mxu0 0
  %6303 = vmatprep.subr.bf16.mxu0 0
  %6304 = vmatpush2.bf16.msra.mxu0 0
  %6305 = vmatprep.mubr.bf16.mxu0 0
  %6306 = vmatmul.mubr.bf16.gmra.mxu0 %v6231
  %v6307 = vpop.f32.mrf.mxu0
  %v6308 = vadd.f32 0.0, %v6307
  %v6309 = vpop.f32.mrf.mxu0
  %v6310 = vadd.f32 0.0, %v6309
  %v6311 = vpop.f32.mrf.mxu0
  %v6312 = vpop.f32.mrf.mxu0
  %6313 = vdwg.mxu0
  %v6314 = vadd.f32 %v6227, %v6267
  %v6315 = vadd.f32 %v6228, %v6269
  %v6316 = vadd.f32 %v6229, %v6308
  %v6317 = vadd.f32 %v6230, %v6310
  %v6318 = vxor.u32 %v6314, 2147483648
  %v6319 = vmul.f32 %v6318, 1.442695
  %v6320 = vpow.pop %v6319
  %v6321 = vadd.f32 %v6320, 1.0
  %v6322 = vrcp.pop %v6321
  %v6323 = vmul.f32 1.0, %v6322
  %v6324 = vxor.u32 %v6315, 2147483648
  %v6325 = vmul.f32 %v6324, 1.442695
  %v6326 = vpow.pop %v6325
  %v6327 = vadd.f32 %v6326, 1.0
  %v6328 = vrcp.pop %v6327
  %v6329 = vmul.f32 1.0, %v6328
  %v6330 = vtanh.pop %v6316
  %v6331 = vxor.u32 %v6317, 2147483648
  %v6332 = vmul.f32 %v6331, 1.442695
  %v6333 = vpow.pop %v6332
  %v6334 = vadd.f32 %v6333, 1.0
  %v6335 = vrcp.pop %v6334
  %v6336 = vmul.f32 1.0, %v6335
  %v6337 = vmul.f32 %v6329, %v6223
  %v6338 = vmul.f32 %v6323, %v6330
  %v6339 = vadd.f32 %v6337, %v6338
  %v6340 = vtanh.pop %v6339
  %v6341 = vmul.f32 %v6336, %v6340
  %v6342 = vsel %vm4792, %v6341, 0.0
  %6343 = vst [vmem:[%s1650] sm:$0xff] %v6342
  %v6344 = vld [vmem:[#allocation2] sm:$0xff]
  %v6345 = vld [vmem:[#allocation2 + $0x8] sm:$0xff]
  %v6346 = vld [vmem:[#allocation2 + $0x10] sm:$0xff]
  %v6347 = vld [vmem:[#allocation2 + $0x18] sm:$0xff]
  %v6348 = vld [vmem:[#allocation2 + $0x20] sm:$0xff]
  %v6349 = vld [vmem:[#allocation2 + $0x28] sm:$0xff]
  %v6350 = vld [vmem:[#allocation2 + $0x30] sm:$0xff]
  %v6351 = vld [vmem:[#allocation2 + $0x38] sm:$0xff]
  %v6352 = vpack.c.bf16 %v6345, %v6344
  %v6353 = vpack.c.bf16 %v6347, %v6346
  %v6354 = vpack.c.bf16 %v6349, %v6348
  %v6355 = vpack.c.bf16 %v6351, %v6350
  %v6356 = vld [vmem:[%s10] sm:$0xf]
  %v6357 = vld [vmem:[%s10 + $0x4] sm:$0xf]
  %v6358 = vld [vmem:[%s10 + $0x8] sm:$0xf]
  %v6359 = vld [vmem:[%s10 + $0xc] sm:$0xf]
  %v6360 = vld [vmem:[%s10 + $0x10] sm:$0xf]
  %v6361 = vld [vmem:[%s10 + $0x14] sm:$0xf]
  %v6362 = vld [vmem:[%s10 + $0x18] sm:$0xf]
  %v6363 = vld [vmem:[%s10 + $0x1c] sm:$0xf]
  %v6364 = vld [vmem:[%s10 + $0x20] sm:$0xf]
  %v6365 = vld [vmem:[%s10 + $0x24] sm:$0xf]
  %v6366 = vld [vmem:[%s10 + $0x28] sm:$0xf]
  %v6367 = vld [vmem:[%s10 + $0x2c] sm:$0xf]
  %v6368 = vld [vmem:[%s10 + $0x30] sm:$0xf]
  %v6369 = vld [vmem:[%s10 + $0x34] sm:$0xf]
  %v6370 = vld [vmem:[%s10 + $0x38] sm:$0xf]
  %v6371 = vld [vmem:[%s10 + $0x3c] sm:$0xf]
  %v6372 = vld [vmem:[%s11] sm:$0x1]
  %v6374 = vlaneseq
  %v6375 = vshrl.u32 %v6374, 7
  %v6376 = vsub.s32 0, %v6375
  %v6377 = vrot.slane %v6372, %v6376
  %v6395 = vunpack.c.l.b16 %v6356
  %v6396 = vunpack.c.l.b16 %v6357
  %v6397 = vunpack.c.l.b16 %v6358
  %v6398 = vunpack.c.l.b16 %v6359
  %v6399 = vunpack.c.l.b16 %v6360
  %v6400 = vunpack.c.l.b16 %v6361
  %v6401 = vunpack.c.l.b16 %v6362
  %v6402 = vunpack.c.l.b16 %v6363
  %v6403 = vunpack.c.l.b16 %v6364
  %v6404 = vunpack.c.l.b16 %v6365
  %v6405 = vunpack.c.l.b16 %v6366
  %v6406 = vunpack.c.l.b16 %v6367
  %v6407 = vunpack.c.l.b16 %v6368
  %v6408 = vunpack.c.l.b16 %v6369
  %v6409 = vunpack.c.l.b16 %v6370
  %v6410 = vunpack.c.l.b16 %v6371
  %v6411 = vpack.c.b16 %v6396, %v6395
  %v6412 = vpack.c.b16 %v6398, %v6397
  %v6413 = vpack.c.b16 %v6400, %v6399
  %v6414 = vpack.c.b16 %v6402, %v6401
  %v6415 = vpack.c.b16 %v6404, %v6403
  %v6416 = vpack.c.b16 %v6406, %v6405
  %v6417 = vpack.c.b16 %v6408, %v6407
  %v6418 = vpack.c.b16 %v6410, %v6409
  %6427 = vmatprep.subr.bf16.mxu0 0
  %6428 = vmatpush1.bf16.msra.mxu0 %v6418
  %6429 = vmatprep.subr.bf16.mxu0 0
  %6430 = vmatpush1.bf16.msra.mxu0 %v6417
  %6431 = vmatprep.subr.bf16.mxu0 0
  %6432 = vmatpush1.bf16.msra.mxu0 %v6416
  %6433 = vmatprep.subr.bf16.mxu0 0
  %6434 = vmatpush1.bf16.msra.mxu0 %v6415
  %6435 = vmatprep.subr.bf16.mxu0 0
  %6436 = vmatpush1.bf16.msra.mxu0 %v6414
  %6437 = vmatprep.subr.bf16.mxu0 0
  %6438 = vmatpush1.bf16.msra.mxu0 %v6413
  %6439 = vmatprep.subr.bf16.mxu0 0
  %6440 = vmatpush1.bf16.msra.mxu0 %v6412
  %6441 = vmatprep.subr.bf16.mxu0 0
  %6442 = vmatpush1.bf16.msra.mxu0 %v6411
  %6443 = vmatprep.subr.bf16.mxu0 0
  %6444 = vmatpush2.bf16.msra.mxu0 0
  %6445 = vmatprep.subr.bf16.mxu0 0
  %6446 = vmatpush2.bf16.msra.mxu0 0
  %6447 = vmatprep.subr.bf16.mxu0 0
  %6448 = vmatpush2.bf16.msra.mxu0 0
  %6449 = vmatprep.subr.bf16.mxu0 0
  %6450 = vmatpush2.bf16.msra.mxu0 0
  %6451 = vmatprep.subr.bf16.mxu0 0
  %6452 = vmatpush2.bf16.msra.mxu0 0
  %6453 = vmatprep.subr.bf16.mxu0 0
  %6454 = vmatpush2.bf16.msra.mxu0 0
  %6455 = vmatprep.subr.bf16.mxu0 0
  %6456 = vmatpush2.bf16.msra.mxu0 0
  %6457 = vmatprep.subr.bf16.mxu0 0
  %6458 = vmatpush2.bf16.msra.mxu0 0
  %6459 = vmatprep.mubr.bf16.mxu0 0
  %6460 = vmatmul.mubr.bf16.gmra.mxu0 %v6352
  %v6461 = vpop.f32.mrf.mxu0
  %v6462 = vadd.f32 %v6377, %v6461
  %v6463 = vpop.f32.mrf.mxu0
  %v6464 = vpop.f32.mrf.mxu0
  %v6465 = vadd.f32 %v6377, %v6464
  %v6466 = vpop.f32.mrf.mxu0
  %6467 = vmatprep.mubr.bf16.mxu0 0
  %6468 = vmatmul.mubr.bf16.gmra.mxu0 %v6353
  %v6469 = vpop.f32.mrf.mxu0
  %v6470 = vadd.f32 %v6377, %v6469
  %v6471 = vpop.f32.mrf.mxu0
  %v6472 = vpop.f32.mrf.mxu0
  %v6473 = vadd.f32 %v6377, %v6472
  %v6474 = vpop.f32.mrf.mxu0
  %6475 = vmatprep.mubr.bf16.mxu0 0
  %6476 = vmatmul.mubr.bf16.gmra.mxu0 %v6354
  %v6477 = vpop.f32.mrf.mxu0
  %v6478 = vadd.f32 %v6377, %v6477
  %v6479 = vpop.f32.mrf.mxu0
  %v6480 = vpop.f32.mrf.mxu0
  %v6481 = vadd.f32 %v6377, %v6480
  %v6482 = vpop.f32.mrf.mxu0
  %6483 = vmatprep.mubr.bf16.mxu0 0
  %6484 = vmatmul.mubr.bf16.gmra.mxu0 %v6355
  %v6485 = vpop.f32.mrf.mxu0
  %v6486 = vadd.f32 %v6377, %v6485
  %v6487 = vpop.f32.mrf.mxu0
  %v6488 = vpop.f32.mrf.mxu0
  %v6489 = vadd.f32 %v6377, %v6488
  %v6490 = vpop.f32.mrf.mxu0
  %6491 = vdwg.mxu0
  %6492 = vst [vmem:[%s12] sm:$0xff] %v6462
  %6493 = vst [vmem:[%s12 + $0x8] sm:$0xff] %v6465
  %6494 = vst [vmem:[%s12 + $0x10] sm:$0xff] %v6470
  %6495 = vst [vmem:[%s12 + $0x18] sm:$0xff] %v6473
  %6496 = vst [vmem:[%s12 + $0x20] sm:$0xff] %v6478
  %6497 = vst [vmem:[%s12 + $0x28] sm:$0xff] %v6481
  %6498 = vst [vmem:[%s12 + $0x30] sm:$0xff] %v6486
  %6499 = vst [vmem:[%s12 + $0x38] sm:$0xff] %v6489
  // Predicated region
  $region50: #{rnn_enc_dec_forward.1} parent=0 // pred_check
    _
  $region51: #{rnn_enc_dec_forward.1} parent=0 // pred_check_branch
    %6501 = sbr.rel (0) target = $region53
  $region52: #{rnn_enc_dec_forward.1} parent=0 // pred_region
    _
  $region53: #{rnn_enc_dec_forward.1} parent=0 // pred_fallthru
    _
  // Predicated region
  $region54: #{rnn_enc_dec_forward.1} parent=0 // pred_check
    _
  $region55: #{rnn_enc_dec_forward.1} parent=0 // pred_check_branch
    %6503 = sbr.rel (0) target = $region57
  $region56: #{rnn_enc_dec_forward.1} parent=0 // pred_region
    _
  $region57: #{rnn_enc_dec_forward.1} parent=0 // pred_fallthru
    _

</llo_original>
